<compile_context>
chip_gen: v5e
topology: v5e:2x2
jax: 0.10.0
libtpu: 0.0.40
codegen_flags: <defaults>
</compile_context>

<pallas_src>
import jax
import jax.numpy as jnp
from jax.experimental import pallas as pl
from jax.experimental.pallas import tpu as pltpu


# ----------------------------- Pallas kernels ------------------------------

def conv_mm_relu_kernel(p_ref, w_ref, b_ref, o_ref):
    # p_ref: (1, K, P) patches^T for one sample (bf16), w_ref: (Cout, K) bf16,
    # b_ref: (Cout, 1) f32, o_ref: (1, Cout, P) bf16.
    acc = jnp.dot(w_ref[...], p_ref[0], preferred_element_type=jnp.float32)
    acc = acc + b_ref[...]
    o_ref[0] = jnp.maximum(acc, 0.0).astype(o_ref.dtype)


def fc_kernel(x_ref, w_ref, b_ref, o_ref):
    # x: (TM, K) bf16, w: (K, N) bf16, b: (1, N) f32 -> o: (TM, N) f32
    acc = jnp.dot(x_ref[...], w_ref[...], preferred_element_type=jnp.float32)
    o_ref[...] = (acc + b_ref[...]).astype(o_ref.dtype)


def conv_relu_forward(patches_t, wc, cb):
    """patches_t: (B, K, P) bf16, wc: (Cout, K) bf16, cb: (Cout, 1) f32
    -> (B, Cout, P) bf16 = relu(conv1(x))."""
    B, K, P = patches_t.shape
    Cout = wc.shape[0]
    return pl.pallas_call(
        conv_mm_relu_kernel,
        out_shape=jax.ShapeDtypeStruct((B, Cout, P), jnp.bfloat16),
        grid=(B,),
        in_specs=[
            pl.BlockSpec((1, K, P), lambda b: (b, 0, 0)),
            pl.BlockSpec((Cout, K), lambda b: (0, 0)),   # resident, no re-DMA
            pl.BlockSpec((Cout, 1), lambda b: (0, 0)),
        ],
        out_specs=pl.BlockSpec((1, Cout, P), lambda b: (b, 0, 0)),
        compiler_params=pltpu.CompilerParams(
            dimension_semantics=("parallel",)),
    )(patches_t, wc, cb)


def fc_forward(flat, fc_w_t, fc_b):
    """flat: (M, K) bf16, fc_w_t: (K, N) bf16, fc_b: (1, N) f32 -> (M, N) f32."""
    M, K = flat.shape
    N = fc_w_t.shape[1]
    tile_m = 128 if (M % 128 == 0) else M
    return pl.pallas_call(
        fc_kernel,
        out_shape=jax.ShapeDtypeStruct((M, N), jnp.float32),
        grid=(M // tile_m,),
        in_specs=[
            pl.BlockSpec((tile_m, K), lambda i: (i, 0)),
            pl.BlockSpec((K, N), lambda i: (0, 0)),
            pl.BlockSpec((1, N), lambda i: (0, 0)),
        ],
        out_specs=pl.BlockSpec((tile_m, N), lambda i: (i, 0)),
        compiler_params=pltpu.CompilerParams(
            dimension_semantics=("parallel",)),
    )(flat, fc_w_t, fc_b)


# ------------------------------- glue / model ------------------------------

def im2col_transposed(x, kh, kw):
    """x: (B, C, H, W) -> (B, C*kh*kw, OH*OW). K ordered (c, ki, kj) to match
    torch Conv2d weight flattening; P ordered (oh, ow) row-major."""
    B, C, H, W = x.shape
    OH, OW = H - kh + 1, W - kw + 1
    cols = []
    for ki in range(kh):
        for kj in range(kw):
            cols.append(x[:, :, ki:ki + OH, kj:kj + OW].reshape(B, C, OH * OW))
    patches = jnp.stack(cols, axis=2)              # (B, C, kh*kw, OH*OW)
    return patches.reshape(B, C * kh * kw, OH * OW)


def init_params(key, num_channels, num_classes):
    """Matches torch's default Conv2d / Linear init (uniform +-1/sqrt(fan_in))."""
    k1, k2, k3, k4 = jax.random.split(key, 4)
    fan_c = num_channels * 7 * 7
    bnd_c = 1.0 / jnp.sqrt(fan_c)
    conv_w = jax.random.uniform(k1, (28, num_channels, 7, 7), jnp.float32,
                                -bnd_c, bnd_c)
    conv_b = jax.random.uniform(k2, (28,), jnp.float32, -bnd_c, bnd_c)
    fan_f = 28 * 26 * 26
    bnd_f = 1.0 / jnp.sqrt(fan_f)
    fc_w = jax.random.uniform(k3, (num_classes, fan_f), jnp.float32,
                              -bnd_f, bnd_f)
    fc_b = jax.random.uniform(k4, (num_classes,), jnp.float32, -bnd_f, bnd_f)
    return conv_w, conv_b, fc_w, fc_b


def prepare_params(params):
    """One-time, hot-path-hoisted layout/dtype prep:
      - conv weight flattened to (28, C*49) bf16 (matmul LHS, no transpose),
      - conv bias as (28, 1) f32 column (broadcasts across the lane axis),
      - fc weight pre-transposed to (28*26*26, N) bf16 (kills per-call fc_w.T),
      - fc bias as (1, N) f32."""
    conv_w, conv_b, fc_w, fc_b = params
    c_out = conv_w.shape[0]
    wc = conv_w.reshape(c_out, -1).astype(jnp.bfloat16)     # (28, C*49)
    cb = conv_b.reshape(c_out, 1).astype(jnp.float32)       # (28, 1)
    fc_w_t = fc_w.T.astype(jnp.bfloat16)                    # (18928, N)
    fc_b2 = fc_b.reshape(1, -1).astype(jnp.float32)         # (1, N)
    return wc, cb, fc_w_t, fc_b2


@jax.jit
def model_forward(x, prepared):
    """x: (B, C, 32, 32) NCHW f32 -> logits (B, num_classes) f32."""
    wc, cb, fc_w_t, fc_b2 = prepared
    B, C, H, W = x.shape
    OH, OW = H - 7 + 1, W - 7 + 1                 # 26, 26
    c_out = wc.shape[0]                           # 28

    # conv1 + relu: im2col (transposed layout, glue) + Pallas matmul kernel.
    # TODO(synk): move the 49-shift patch extraction into the kernel (halo
    # BlockSpec on the raw input) to avoid the 49x im2col HBM expansion, and
    # fold the FC in as an accumulated reduction so conv_out never hits HBM.
    patches_t = im2col_transposed(x.astype(jnp.bfloat16), 7, 7)  # (B, C*49, 676)
    conv_out = conv_relu_forward(patches_t, wc, cb)              # (B, 28, 676)

    # (B, 28, 676) is already contiguous in torch's view(-1, 28*26*26) order,
    # so this flatten is a free metadata reshape (no transpose, no copy).
    flat = conv_out.reshape(B, c_out * OH * OW)                  # (B, 18928)

    # fc1: Pallas matmul kernel with the pre-transposed bf16 weight.
    return fc_forward(flat, fc_w_t, fc_b2)


if __name__ == "__main__":
    num_channels, num_classes = 3, 10
    B, H, W = 2, 32, 32   # 32x32 input -> 26x26 conv output (matches 28*26*26)

    key = jax.random.PRNGKey(0)
    kp, kx = jax.random.split(key)
    params = init_params(kp, num_channels, num_classes)
    prepared = prepare_params(params)
    x = jax.random.normal(kx, (B, num_channels, H, W), jnp.float32)

    out = model_forward(x, prepared)
    out = jax.block_until_ready(out)
    assert out.shape == (B, num_classes)
    assert bool(jnp.all(jnp.isfinite(out)))
    print("KERNEL_OK")
</pallas_src>

<mosaic_0001>
module attributes {stable_mosaic.version = 11 : i64} {
  func.func @conv_mm_relu_kernel(%arg0: i32, %arg1: memref<1x147x676xbf16, #tpu.memory_space<vmem>>, %arg2: memref<28x147xbf16, #tpu.memory_space<vmem>>, %arg3: memref<28x1xf32, #tpu.memory_space<vmem>>, %arg4: memref<1x28x676xbf16, #tpu.memory_space<vmem>>) attributes {dimension_semantics = [#tpu.dimension_semantics<parallel>], iteration_bounds = array<i64: 2>, scalar_prefetch = 0 : i64, scratch_operands = 0 : i64, tpu.core_type = #tpu.core_type<tc>, window_params = [{transform_indices = @transform_0, window_bounds = array<i64: 1, 147, 676>}, {pipeline_mode = #tpu.pipeline_mode<synchronous>, transform_indices = @transform_1, window_bounds = array<i64: 28, 147>}, {pipeline_mode = #tpu.pipeline_mode<synchronous>, transform_indices = @transform_2, window_bounds = array<i64: 28, 1>}, {transform_indices = @transform_3, window_bounds = array<i64: 1, 28, 676>}]} {
    %c0 = arith.constant 0 : index
    %c0_0 = arith.constant 0 : index
    %0 = vector.load %arg2[%c0, %c0_0] : memref<28x147xbf16, #tpu.memory_space<vmem>>, vector<28x147xbf16>
    %c0_1 = arith.constant 0 : index
    %c0_2 = arith.constant 0 : index
    %c0_3 = arith.constant 0 : index
    %1 = vector.load %arg1[%c0_1, %c0_2, %c0_3] : memref<1x147x676xbf16, #tpu.memory_space<vmem>>, vector<1x147x676xbf16>
    %2 = vector.shape_cast %1 : vector<1x147x676xbf16> to vector<147x676xbf16>
    %cst = arith.constant dense<0.000000e+00> : vector<28x676xf32>
    %3 = tpu.matmul %0, %2, %cst {dimension_numbers = #tpu.dot_dimension_numbers<[1], [0], [0], [1], [0, 0, 1, 1], [], []>} : vector<28x147xbf16>, vector<147x676xbf16>, vector<28x676xf32> -> vector<28x676xf32>
    %c0_4 = arith.constant 0 : index
    %c0_5 = arith.constant 0 : index
    %4 = vector.load %arg3[%c0_4, %c0_5] : memref<28x1xf32, #tpu.memory_space<vmem>>, vector<28x1xf32>
    %5 = vector.broadcast %4 : vector<28x1xf32> to vector<28x676xf32>
    %6 = arith.addf %3, %5 : vector<28x676xf32>
    %cst_6 = arith.constant 0.000000e+00 : f32
    %7 = vector.broadcast %cst_6 : f32 to vector<28x676xf32>
    %8 = arith.maximumf %6, %7 : vector<28x676xf32>
    %9 = arith.truncf %8 : vector<28x676xf32> to vector<28x676xbf16>
    %c0_7 = arith.constant 0 : index
    %c0_8 = arith.constant 0 : index
    %c0_9 = arith.constant 0 : index
    %10 = vector.load %arg4[%c0_7, %c0_8, %c0_9] : memref<1x28x676xbf16, #tpu.memory_space<vmem>>, vector<1x28x676xbf16>
    %11 = vector.shape_cast %10 : vector<1x28x676xbf16> to vector<28x676xbf16>
    %12 = vector.shape_cast %9 : vector<28x676xbf16> to vector<1x28x676xbf16>
    tpu.vector_store %arg4[%c0_7, %c0_8, %c0_9], %12 {strides = array<i32>} : memref<1x28x676xbf16, #tpu.memory_space<vmem>>, vector<1x28x676xbf16>,
    return
  }
  func.func @transform_0(%arg0: i32) -> (i32, i32, i32) {
    %c0_i32 = arith.constant 0 : i32
    %c0_i32_0 = arith.constant 0 : i32
    %c0_i32_1 = arith.constant 0 : i32
    return %arg0, %c0_i32, %c0_i32_0 : i32, i32, i32
  }
  func.func @transform_1(%arg0: i32) -> (i32, i32) {
    %c0_i32 = arith.constant 0 : i32
    %c0_i32_0 = arith.constant 0 : i32
    %c0_i32_1 = arith.constant 0 : i32
    return %c0_i32, %c0_i32_0 : i32, i32
  }
  func.func @transform_2(%arg0: i32) -> (i32, i32) {
    %c0_i32 = arith.constant 0 : i32
    %c0_i32_0 = arith.constant 0 : i32
    %c0_i32_1 = arith.constant 0 : i32
    return %c0_i32, %c0_i32_0 : i32, i32
  }
  func.func @transform_3(%arg0: i32) -> (i32, i32, i32) {
    %c0_i32 = arith.constant 0 : i32
    %c0_i32_0 = arith.constant 0 : i32
    %c0_i32_1 = arith.constant 0 : i32
    return %arg0, %c0_i32, %c0_i32_0 : i32, i32, i32
  }
}

module attributes {stable_mosaic.version = 11 : i64} {
  func.func @fc_kernel(%arg0: i32, %arg1: memref<2x18928xbf16, #tpu.memory_space<vmem>>, %arg2: memref<18928x10xbf16, #tpu.memory_space<vmem>>, %arg3: memref<1x10xf32, #tpu.memory_space<vmem>>, %arg4: memref<2x10xf32, #tpu.memory_space<vmem>>) attributes {dimension_semantics = [#tpu.dimension_semantics<parallel>], iteration_bounds = array<i64: 1>, scalar_prefetch = 0 : i64, scratch_operands = 0 : i64, tpu.core_type = #tpu.core_type<tc>, window_params = [{transform_indices = @transform_0, window_bounds = array<i64: 2, 18928>}, {pipeline_mode = #tpu.pipeline_mode<synchronous>, transform_indices = @transform_1, window_bounds = array<i64: 18928, 10>}, {pipeline_mode = #tpu.pipeline_mode<synchronous>, transform_indices = @transform_2, window_bounds = array<i64: 1, 10>}, {transform_indices = @transform_3, window_bounds = array<i64: 2, 10>}]} {
    %c0 = arith.constant 0 : index
    %c0_0 = arith.constant 0 : index
    %0 = vector.load %arg1[%c0, %c0_0] : memref<2x18928xbf16, #tpu.memory_space<vmem>>, vector<2x18928xbf16>
    %c0_1 = arith.constant 0 : index
    %c0_2 = arith.constant 0 : index
    %1 = vector.load %arg2[%c0_1, %c0_2] : memref<18928x10xbf16, #tpu.memory_space<vmem>>, vector<18928x10xbf16>
    %cst = arith.constant dense<0.000000e+00> : vector<2x10xf32>
    %2 = tpu.matmul %0, %1, %cst {dimension_numbers = #tpu.dot_dimension_numbers<[1], [0], [0], [1], [0, 0, 1, 1], [], []>} : vector<2x18928xbf16>, vector<18928x10xbf16>, vector<2x10xf32> -> vector<2x10xf32>
    %c0_3 = arith.constant 0 : index
    %c0_4 = arith.constant 0 : index
    %3 = vector.load %arg3[%c0_3, %c0_4] : memref<1x10xf32, #tpu.memory_space<vmem>>, vector<1x10xf32>
    %4 = vector.broadcast %3 : vector<1x10xf32> to vector<2x10xf32>
    %5 = arith.addf %2, %4 : vector<2x10xf32>
    %c0_5 = arith.constant 0 : index
    %c0_6 = arith.constant 0 : index
    %6 = vector.load %arg4[%c0_5, %c0_6] : memref<2x10xf32, #tpu.memory_space<vmem>>, vector<2x10xf32>
    tpu.vector_store %arg4[%c0_5, %c0_6], %5 {strides = array<i32>} : memref<2x10xf32, #tpu.memory_space<vmem>>, vector<2x10xf32>,
    return
  }
  func.func @transform_0(%arg0: i32) -> (i32, i32) {
    %c0_i32 = arith.constant 0 : i32
    %c0_i32_0 = arith.constant 0 : i32
    return %arg0, %c0_i32 : i32, i32
  }
  func.func @transform_1(%arg0: i32) -> (i32, i32) {
    %c0_i32 = arith.constant 0 : i32
    %c0_i32_0 = arith.constant 0 : i32
    %c0_i32_1 = arith.constant 0 : i32
    return %c0_i32, %c0_i32_0 : i32, i32
  }
  func.func @transform_2(%arg0: i32) -> (i32, i32) {
    %c0_i32 = arith.constant 0 : i32
    %c0_i32_0 = arith.constant 0 : i32
    %c0_i32_1 = arith.constant 0 : i32
    return %c0_i32, %c0_i32_0 : i32, i32
  }
  func.func @transform_3(%arg0: i32) -> (i32, i32) {
    %c0_i32 = arith.constant 0 : i32
    %c0_i32_0 = arith.constant 0 : i32
    return %arg0, %c0_i32 : i32, i32
  }
}

</mosaic_0001>

<llo_original>
// kernel: model_forward.2
$region0: #{model_forward.2}
  #allocation0 [shape = 'u32[]', space=smem, size = 0x4, offset = 0x4, fixed_abs, tag = 'smem constant byte address 0x4 - core index']
  #allocation1 [shape = 'u32[72,128]{1,0:T(1,128)}', space=vmem, size = 0x9000, scoped, tag = 'internal scratch']
  %s0 = inlined_call_operand.vmem [shape: bf16[2,147,676], index: 0, kind: input, shape index: {}]
  %s1 = inlined_call_operand.vmem [shape: bf16[28,147], index: 1, kind: input, shape index: {}]
  %s2 = inlined_call_operand.vmem [shape: f32[28,1], index: 2, kind: input, shape index: {}]
  %s3 = inlined_call_operand.vmem [shape: bf16[2,28,676], index: 3, kind: output, shape index: {}]
  %s4 = sld [smem:[#allocation0]]
  $region45: #{model_forward.2} parent=0
    _
  %s6 = ssub.s32 1, %s4
  %s7 = scalar_select 0, %s6, %s4
  loop: start=0, step=1, limit=4
  $region2: #{model_forward.2} parent=0 // loop_pre_header
    _
  $region3: #{model_forward.2} parent=0 // loop_header
    %s9 = sphi 0, %s13
    %p10 = scmp.ge.s32.totalorder %s9, 4
    %s19 = sphi 0, %s21
    %s22 = sphi 0, %s19
    %s23 = sphi 0, %s22
    %s39 = sphi 0, %s23
    %s43 = sphi 0, %s43
    %s45 = sphi 0, %s43
    %s46 = sphi 0, %s45
    %s60 = sphi 0, %s46
    %s64 = sphi 0, %s64
    %s66 = sphi 0, %s64
    %s67 = sphi 0, %s66
    %s81 = sphi 0, %s67
    %s87 = sphi 0, %s89
    %s90 = sphi 0, %s87
    %s91 = sphi 0, %s90
    %s107 = sphi 0, %s91
  $region4: #{model_forward.2} parent=0 // loop_header_branch
    %12 = sbr.rel (%p10) target = $region8
  $region5: #{model_forward.2} parent=0 // loop_body
    %s14 = ssub.s32 %s9, 1
    %s15 = ssub.s32 %s9, 2
    %s16 = sadd.s32 %s9, 1
    %s17 = ssub.s32 %s9, %s16
    %p18 = scmp.eq.s32.totalorder %s17, 0
    %s20 = sadd.s32 %s19, 1
    %s21 = scalar_select %p18, %s19, %s20
    %p24 = pneg %p18
    %p25 = scmp.eq.s32.totalorder %s9, 1
    %p26 = por %p24, %p25
    %p27 = scmp.ne.s32.totalorder %s19, %s22
    %p28 = scmp.eq.s32.totalorder %s9, 0
    %p29 = por %p27, %p28
    %p30 = scmp.ne.s32.totalorder %s19, %s22
    %p31 = scmp.eq.s32.totalorder %s14, 1
    %p32 = por %p30, %p31
    %p33 = scmp.ne.s32.totalorder %s22, %s23
    %p34 = scmp.eq.s32.totalorder %s14, 0
    %p35 = por %p33, %p34
    %p36 = scmp.ne.s32.totalorder %s22, %s23
    %p37 = scmp.eq.s32.totalorder %s15, 1
    %p38 = por %p36, %p37
    %p40 = scmp.ne.s32.totalorder %s23, %s39
    %p41 = scmp.eq.s32.totalorder %s15, 0
    %p42 = por %p40, %p41
    %s44 = sadd.s32 %s43, 1
    %p47 = scmp.eq.s32.totalorder %s9, 1
    %p48 = scmp.ne.s32.totalorder %s43, %s45
    %p49 = scmp.eq.s32.totalorder %s9, 0
    %p50 = por %p48, %p49
    %p51 = scmp.ne.s32.totalorder %s43, %s45
    %p52 = scmp.eq.s32.totalorder %s14, 1
    %p53 = por %p51, %p52
    %p54 = scmp.ne.s32.totalorder %s45, %s46
    %p55 = scmp.eq.s32.totalorder %s14, 0
    %p56 = por %p54, %p55
    %p57 = scmp.ne.s32.totalorder %s45, %s46
    %p58 = scmp.eq.s32.totalorder %s15, 1
    %p59 = por %p57, %p58
    %p61 = scmp.ne.s32.totalorder %s46, %s60
    %p62 = scmp.eq.s32.totalorder %s15, 0
    %p63 = por %p61, %p62
    %s65 = sadd.s32 %s64, 1
    %p68 = scmp.eq.s32.totalorder %s9, 1
    %p69 = scmp.ne.s32.totalorder %s64, %s66
    %p70 = scmp.eq.s32.totalorder %s9, 0
    %p71 = por %p69, %p70
    %p72 = scmp.ne.s32.totalorder %s64, %s66
    %p73 = scmp.eq.s32.totalorder %s14, 1
    %p74 = por %p72, %p73
    %p75 = scmp.ne.s32.totalorder %s66, %s67
    %p76 = scmp.eq.s32.totalorder %s14, 0
    %p77 = por %p75, %p76
    %p78 = scmp.ne.s32.totalorder %s66, %s67
    %p79 = scmp.eq.s32.totalorder %s15, 1
    %p80 = por %p78, %p79
    %p82 = scmp.ne.s32.totalorder %s67, %s81
    %p83 = scmp.eq.s32.totalorder %s15, 0
    %p84 = por %p82, %p83
    %s85 = ssub.s32 %s9, %s16
    %p86 = scmp.eq.s32.totalorder %s85, 0
    %s88 = sadd.s32 %s87, 1
    %s89 = scalar_select %p86, %s87, %s88
    %p92 = pneg %p86
    %p93 = scmp.eq.s32.totalorder %s9, 1
    %p94 = por %p92, %p93
    %p95 = scmp.ne.s32.totalorder %s87, %s90
    %p96 = scmp.eq.s32.totalorder %s9, 0
    %p97 = por %p95, %p96
    %p98 = scmp.ne.s32.totalorder %s87, %s90
    %p99 = scmp.eq.s32.totalorder %s14, 1
    %p100 = por %p98, %p99
    %p101 = scmp.ne.s32.totalorder %s90, %s91
    %p102 = scmp.eq.s32.totalorder %s14, 0
    %p103 = por %p101, %p102
    %p104 = scmp.ne.s32.totalorder %s90, %s91
    %p105 = scmp.eq.s32.totalorder %s15, 1
    %p106 = por %p104, %p105
    %p108 = scmp.ne.s32.totalorder %s91, %s107
    %p109 = scmp.eq.s32.totalorder %s15, 0
    %p110 = por %p108, %p109
    %p111 = scmp.le.s32.totalorder 1, %s9
    %p112 = scmp.lt.s32.totalorder %s9, 3
    %p113 = pnand %p111, %p112
    %p114 = pneg %p113
    // Predicated region
    $region9: #{model_forward.2} parent=5 // pred_check
      _
    $region10: #{model_forward.2} parent=5 // pred_check_branch
      %116 = sbr.rel (%p113) target = $region12
    $region11: #{model_forward.2} parent=5 // pred_region
      %s117 = ssub.s32 %s9, 1
      // Predicated region
      $region13: #{model_forward.2} parent=11 // pred_check
        %p118 = pneg %p56
      $region14: #{model_forward.2} parent=11 // pred_check_branch
        %120 = sbr.rel (%p118) target = $region16
      $region15: #{model_forward.2} parent=11 // pred_region
        _
      $region16: #{model_forward.2} parent=11 // pred_fallthru
        _
      // Predicated region
      $region17: #{model_forward.2} parent=11 // pred_check
        %p121 = pneg %p77
      $region18: #{model_forward.2} parent=11 // pred_check_branch
        %123 = sbr.rel (%p121) target = $region20
      $region19: #{model_forward.2} parent=11 // pred_region
        _
      $region20: #{model_forward.2} parent=11 // pred_fallthru
        _
    $region12: #{model_forward.2} parent=5 // pred_fallthru
      _
    %p124 = scmp.lt.s32.totalorder %s9, 2
    // Predicated region
    $region21: #{model_forward.2} parent=5 // pred_check
      %p125 = pneg %p124
    $region22: #{model_forward.2} parent=5 // pred_check_branch
      %127 = sbr.rel (%p125) target = $region24
    $region23: #{model_forward.2} parent=5 // pred_region
      // Predicated region
      $region25: #{model_forward.2} parent=23 // pred_check
        %p128 = pneg %p29
      $region26: #{model_forward.2} parent=23 // pred_check_branch
        %130 = sbr.rel (%p128) target = $region28
      $region27: #{model_forward.2} parent=23 // pred_region
        %p131 = scmp.lt.s32.totalorder %s9, 1
        %s132 = scalar_select %p131, %s9, 1
        %s133 = smul.addr %s132, 114
        %s134 = smul.addr %s133, 4
        %s135 = scalar_lea.vmem %s0, %s134
      $region28: #{model_forward.2} parent=23 // pred_fallthru
        _
    $region24: #{model_forward.2} parent=5 // pred_fallthru
      _
    %p136 = scmp.le.s32.totalorder 1, %s9
    %p137 = scmp.lt.s32.totalorder %s9, 3
    %p138 = pnand %p136, %p137
    %p139 = pneg %p138
    // Predicated region
    $region29: #{model_forward.2} parent=5 // pred_check
      _
    $region30: #{model_forward.2} parent=5 // pred_check_branch
      %141 = sbr.rel (%p138) target = $region32
    $region31: #{model_forward.2} parent=5 // pred_region
      %s142 = ssub.s32 %s9, 1
      %p143 = scmp.lt.s32.totalorder %s14, 1
      %s144 = scalar_select %p143, %s14, 1
      %s145 = smul.addr %s144, 114
      %s146 = smul.addr %s145, 4
      %s147 = scalar_lea.vmem %s0, %s146
      %p148 = pneg %p35
      %p149 = pneg %p32
      %p150 = pneg %p56
      %p151 = pneg %p53
      %p152 = pneg %p77
      %p153 = pneg %p74
      %p154 = pneg %p103
      %p155 = pneg %p100
      %p156 = scmp.lt.s32.totalorder %s14, 1
      %s157 = scalar_select %p156, %s14, 1
      %s158 = smul.addr %s157, 24
      %s159 = smul.addr %s158, 4
      %s160 = scalar_lea.vmem %s3, %s159
      %p161 = scmp.lt.s32.totalorder %s14, 1
      %s162 = scalar_select %p161, %s14, 1
      %s163 = smul.addr %s162, 114
      %s164 = smul.addr %s163, 4
      %s165 = scalar_lea.vmem %s0, %s164
      %p166 = scmp.lt.s32.totalorder %s14, 1
      %s167 = scalar_select %p166, %s14, 1
      %s168 = smul.addr %s167, 24
      %s169 = smul.addr %s168, 4
      %s170 = scalar_lea.vmem %s3, %s169
      %v172 = vld [vmem:[%s1] sm:$0xff]
      %v173 = vld [vmem:[%s1 + $0x8] sm:$0xff]
      %v174 = vld [vmem:[%s1 + $0x10] sm:$0xff]
      %v175 = vld [vmem:[%s1 + $0x18] sm:$0x33]
      %v176 = vld [vmem:[%s165] sm:$0xff]
      %v177 = vld [vmem:[%s165 + $0x8] sm:$0xff]
      %v178 = vld [vmem:[%s165 + $0x10] sm:$0xff]
      %v179 = vld [vmem:[%s165 + $0x18] sm:$0xff]
      %v180 = vld [vmem:[%s165 + $0x20] sm:$0xff]
      %v181 = vld [vmem:[%s165 + $0x28] sm:$0xff]
      %v182 = vld [vmem:[%s165 + $0x30] sm:$0xff]
      %v183 = vld [vmem:[%s165 + $0x38] sm:$0xff]
      %v184 = vld [vmem:[%s165 + $0x40] sm:$0xff]
      %v185 = vld [vmem:[%s165 + $0x48] sm:$0xff]
      %v186 = vld [vmem:[%s165 + $0x50] sm:$0xff]
      %v187 = vld [vmem:[%s165 + $0x58] sm:$0xff]
      %v188 = vld [vmem:[%s165 + $0x60] sm:$0xff]
      %v189 = vld [vmem:[%s165 + $0x68] sm:$0xff]
      %v190 = vld [vmem:[%s165 + $0x70] sm:$0xff]
      %v191 = vld [vmem:[%s165 + $0x78] sm:$0xff]
      %v192 = vld [vmem:[%s165 + $0x80] sm:$0xff]
      %v193 = vld [vmem:[%s165 + $0x88] sm:$0xff]
      %v194 = vld [vmem:[%s165 + $0x90] sm:$0xff]
      %v195 = vld [vmem:[%s165 + $0x98] sm:$0xff]
      %v196 = vld [vmem:[%s165 + $0xa0] sm:$0xff]
      %v197 = vld [vmem:[%s165 + $0xa8] sm:$0xff]
      %v198 = vld [vmem:[%s165 + $0xb0] sm:$0xff]
      %v199 = vld [vmem:[%s165 + $0xb8] sm:$0xff]
      %v200 = vld [vmem:[%s165 + $0xc0] sm:$0xff]
      %v201 = vld [vmem:[%s165 + $0xc8] sm:$0xff]
      %v202 = vld [vmem:[%s165 + $0xd0] sm:$0xff]
      %v203 = vld [vmem:[%s165 + $0xd8] sm:$0xff]
      %v204 = vld [vmem:[%s165 + $0xe0] sm:$0xff]
      %v205 = vld [vmem:[%s165 + $0xe8] sm:$0xff]
      %v206 = vld [vmem:[%s165 + $0xf0] sm:$0xff]
      %v207 = vld [vmem:[%s165 + $0xf8] sm:$0xff]
      %v208 = vld [vmem:[%s165 + $0x100] sm:$0xff]
      %v209 = vld [vmem:[%s165 + $0x108] sm:$0xff]
      %v210 = vld [vmem:[%s165 + $0x110] sm:$0xff]
      %v211 = vld [vmem:[%s165 + $0x118] sm:$0xff]
      %v212 = vld [vmem:[%s165 + $0x120] sm:$0xff]
      %v213 = vld [vmem:[%s165 + $0x128] sm:$0xff]
      %v214 = vld [vmem:[%s165 + $0x130] sm:$0xff]
      %v215 = vld [vmem:[%s165 + $0x138] sm:$0xff]
      %v216 = vld [vmem:[%s165 + $0x140] sm:$0xff]
      %v217 = vld [vmem:[%s165 + $0x148] sm:$0xff]
      %v218 = vld [vmem:[%s165 + $0x150] sm:$0xff]
      %v219 = vld [vmem:[%s165 + $0x158] sm:$0xff]
      %v220 = vld [vmem:[%s165 + $0x160] sm:$0xff]
      %v221 = vld [vmem:[%s165 + $0x168] sm:$0xff]
      %v222 = vld [vmem:[%s165 + $0x170] sm:$0xff]
      %v223 = vld [vmem:[%s165 + $0x178] sm:$0xff]
      %v224 = vld [vmem:[%s165 + $0x180] sm:$0xff]
      %v225 = vld [vmem:[%s165 + $0x188] sm:$0xff]
      %v226 = vld [vmem:[%s165 + $0x190] sm:$0xff]
      %v227 = vld [vmem:[%s165 + $0x198] sm:$0xff]
      %v228 = vld [vmem:[%s165 + $0x1a0] sm:$0xff]
      %v229 = vld [vmem:[%s165 + $0x1a8] sm:$0xff]
      %v230 = vld [vmem:[%s165 + $0x1b0] sm:$0x33]
      %v231 = vld [vmem:[%s165 + $0x1b8] sm:$0x33]
      %v232 = vld [vmem:[%s165 + $0x1c0] sm:$0x33]
      %v233 = vld [vmem:[%s2] sm:$0xff]
      %v234 = vld [vmem:[%s2 + $0x8] sm:$0xff]
      %v235 = vld [vmem:[%s2 + $0x10] sm:$0xff]
      %v236 = vld [vmem:[%s2 + $0x18] sm:$0xf]
      %238 = vset.pattern.permute.xlu0 0
      %239 = vperm.xlu0 %238, %v233
      %v240 = vpop.permute.xlu0 %239
      %243 = vset.pattern.permute.xlu0 0
      %244 = vperm.xlu0 %243, %v234
      %v245 = vpop.permute.xlu0 %244
      %248 = vset.pattern.permute.xlu0 0
      %249 = vperm.xlu0 %248, %v235
      %v250 = vpop.permute.xlu0 %249
      %253 = vset.pattern.permute.xlu0 0
      %254 = vperm.xlu0 %253, %v236
      %v255 = vpop.permute.xlu0 %254
      %v261 = vunpack.c.l.b16 %v172
      %v262 = vunpack.c.h.b16 %v172
      %v263 = vunpack.c.l.b16 %v173
      %v264 = vunpack.c.h.b16 %v173
      %v265 = vunpack.c.l.b16 %v174
      %v266 = vunpack.c.h.b16 %v174
      %v267 = vunpack.c.l.b16 %v175
      %v268 = vunpack.c.h.b16 %v175
      %v269 = vpack.c.b16 %v263, %v261
      %v270 = vpack.c.b16 %v264, %v262
      %v271 = vpack.c.b16 %v267, %v265
      %v272 = vpack.c.b16 %v268, %v266
      %v332 = vunpack.c.l.b16 %v176
      %v333 = vunpack.c.h.b16 %v176
      %v334 = vunpack.c.l.b16 %v177
      %v335 = vunpack.c.h.b16 %v177
      %v336 = vunpack.c.l.b16 %v178
      %v337 = vunpack.c.h.b16 %v178
      %v338 = vunpack.c.l.b16 %v179
      %v339 = vunpack.c.h.b16 %v179
      %v340 = vunpack.c.l.b16 %v180
      %v341 = vunpack.c.h.b16 %v180
      %v342 = vunpack.c.l.b16 %v181
      %v343 = vunpack.c.h.b16 %v181
      %v344 = vunpack.c.l.b16 %v182
      %v345 = vunpack.c.h.b16 %v182
      %v346 = vunpack.c.l.b16 %v183
      %v347 = vunpack.c.h.b16 %v183
      %v348 = vunpack.c.l.b16 %v184
      %v349 = vunpack.c.h.b16 %v184
      %v350 = vunpack.c.l.b16 %v185
      %v351 = vunpack.c.h.b16 %v185
      %v352 = vunpack.c.l.b16 %v186
      %v353 = vunpack.c.h.b16 %v186
      %v354 = vunpack.c.l.b16 %v187
      %v355 = vunpack.c.h.b16 %v187
      %v356 = vunpack.c.l.b16 %v188
      %v357 = vunpack.c.h.b16 %v188
      %v358 = vunpack.c.l.b16 %v189
      %v359 = vunpack.c.h.b16 %v189
      %v360 = vunpack.c.l.b16 %v190
      %v361 = vunpack.c.h.b16 %v190
      %v362 = vunpack.c.l.b16 %v191
      %v363 = vunpack.c.h.b16 %v191
      %v364 = vunpack.c.l.b16 %v192
      %v365 = vunpack.c.h.b16 %v192
      %v366 = vunpack.c.l.b16 %v193
      %v367 = vunpack.c.h.b16 %v193
      %v368 = vunpack.c.l.b16 %v194
      %v369 = vunpack.c.h.b16 %v194
      %v370 = vunpack.c.l.b16 %v195
      %v371 = vunpack.c.h.b16 %v195
      %v372 = vunpack.c.l.b16 %v196
      %v373 = vunpack.c.h.b16 %v196
      %v374 = vunpack.c.l.b16 %v197
      %v375 = vunpack.c.h.b16 %v197
      %v376 = vunpack.c.l.b16 %v198
      %v377 = vunpack.c.h.b16 %v198
      %v378 = vunpack.c.l.b16 %v199
      %v379 = vunpack.c.h.b16 %v199
      %v380 = vunpack.c.l.b16 %v200
      %v381 = vunpack.c.h.b16 %v200
      %v382 = vunpack.c.l.b16 %v201
      %v383 = vunpack.c.h.b16 %v201
      %v384 = vunpack.c.l.b16 %v202
      %v385 = vunpack.c.h.b16 %v202
      %v386 = vunpack.c.l.b16 %v203
      %v387 = vunpack.c.h.b16 %v203
      %v388 = vunpack.c.l.b16 %v204
      %v389 = vunpack.c.h.b16 %v204
      %v390 = vunpack.c.l.b16 %v205
      %v391 = vunpack.c.h.b16 %v205
      %v392 = vunpack.c.l.b16 %v206
      %v393 = vunpack.c.h.b16 %v206
      %v394 = vunpack.c.l.b16 %v207
      %v395 = vunpack.c.h.b16 %v207
      %v396 = vunpack.c.l.b16 %v208
      %v397 = vunpack.c.h.b16 %v208
      %v398 = vunpack.c.l.b16 %v209
      %v399 = vunpack.c.h.b16 %v209
      %v400 = vunpack.c.l.b16 %v210
      %v401 = vunpack.c.h.b16 %v210
      %v402 = vunpack.c.l.b16 %v211
      %v403 = vunpack.c.h.b16 %v211
      %v404 = vunpack.c.l.b16 %v212
      %v405 = vunpack.c.h.b16 %v212
      %v406 = vunpack.c.l.b16 %v213
      %v407 = vunpack.c.h.b16 %v213
      %v408 = vunpack.c.l.b16 %v214
      %v409 = vunpack.c.h.b16 %v214
      %v410 = vunpack.c.l.b16 %v215
      %v411 = vunpack.c.h.b16 %v215
      %v412 = vunpack.c.l.b16 %v216
      %v413 = vunpack.c.h.b16 %v216
      %v414 = vunpack.c.l.b16 %v217
      %v415 = vunpack.c.h.b16 %v217
      %v416 = vunpack.c.l.b16 %v218
      %v417 = vunpack.c.h.b16 %v218
      %v418 = vunpack.c.l.b16 %v219
      %v419 = vunpack.c.h.b16 %v219
      %v420 = vunpack.c.l.b16 %v220
      %v421 = vunpack.c.h.b16 %v220
      %v422 = vunpack.c.l.b16 %v221
      %v423 = vunpack.c.h.b16 %v221
      %v424 = vunpack.c.l.b16 %v222
      %v425 = vunpack.c.h.b16 %v222
      %v426 = vunpack.c.l.b16 %v223
      %v427 = vunpack.c.h.b16 %v223
      %v428 = vunpack.c.l.b16 %v224
      %v429 = vunpack.c.h.b16 %v224
      %v430 = vunpack.c.l.b16 %v225
      %v431 = vunpack.c.h.b16 %v225
      %v432 = vunpack.c.l.b16 %v226
      %v433 = vunpack.c.h.b16 %v226
      %v434 = vunpack.c.l.b16 %v227
      %v435 = vunpack.c.h.b16 %v227
      %v436 = vunpack.c.l.b16 %v228
      %v437 = vunpack.c.h.b16 %v228
      %v438 = vunpack.c.l.b16 %v229
      %v439 = vunpack.c.h.b16 %v229
      %v440 = vunpack.c.l.b16 %v230
      %v441 = vunpack.c.h.b16 %v230
      %v442 = vunpack.c.l.b16 %v231
      %v443 = vunpack.c.h.b16 %v231
      %v444 = vunpack.c.l.b16 %v232
      %v445 = vunpack.c.h.b16 %v232
      %v446 = vpack.c.b16 %v338, %v332
      %v447 = vpack.c.b16 %v339, %v333
      %v448 = vpack.c.b16 %v340, %v334
      %v449 = vpack.c.b16 %v341, %v335
      %v450 = vpack.c.b16 %v342, %v336
      %v451 = vpack.c.b16 %v343, %v337
      %v452 = vpack.c.b16 %v350, %v344
      %v453 = vpack.c.b16 %v351, %v345
      %v454 = vpack.c.b16 %v352, %v346
      %v455 = vpack.c.b16 %v353, %v347
      %v456 = vpack.c.b16 %v354, %v348
      %v457 = vpack.c.b16 %v355, %v349
      %v458 = vpack.c.b16 %v362, %v356
      %v459 = vpack.c.b16 %v363, %v357
      %v460 = vpack.c.b16 %v364, %v358
      %v461 = vpack.c.b16 %v365, %v359
      %v462 = vpack.c.b16 %v366, %v360
      %v463 = vpack.c.b16 %v367, %v361
      %v464 = vpack.c.b16 %v374, %v368
      %v465 = vpack.c.b16 %v375, %v369
      %v466 = vpack.c.b16 %v376, %v370
      %v467 = vpack.c.b16 %v377, %v371
      %v468 = vpack.c.b16 %v378, %v372
      %v469 = vpack.c.b16 %v379, %v373
      %v470 = vpack.c.b16 %v386, %v380
      %v471 = vpack.c.b16 %v387, %v381
      %v472 = vpack.c.b16 %v388, %v382
      %v473 = vpack.c.b16 %v389, %v383
      %v474 = vpack.c.b16 %v390, %v384
      %v475 = vpack.c.b16 %v391, %v385
      %v476 = vpack.c.b16 %v398, %v392
      %v477 = vpack.c.b16 %v399, %v393
      %v478 = vpack.c.b16 %v400, %v394
      %v479 = vpack.c.b16 %v401, %v395
      %v480 = vpack.c.b16 %v402, %v396
      %v481 = vpack.c.b16 %v403, %v397
      %v482 = vpack.c.b16 %v410, %v404
      %v483 = vpack.c.b16 %v411, %v405
      %v484 = vpack.c.b16 %v412, %v406
      %v485 = vpack.c.b16 %v413, %v407
      %v486 = vpack.c.b16 %v414, %v408
      %v487 = vpack.c.b16 %v415, %v409
      %v488 = vpack.c.b16 %v422, %v416
      %v489 = vpack.c.b16 %v423, %v417
      %v490 = vpack.c.b16 %v424, %v418
      %v491 = vpack.c.b16 %v425, %v419
      %v492 = vpack.c.b16 %v426, %v420
      %v493 = vpack.c.b16 %v427, %v421
      %v494 = vpack.c.b16 %v434, %v428
      %v495 = vpack.c.b16 %v435, %v429
      %v496 = vpack.c.b16 %v436, %v430
      %v497 = vpack.c.b16 %v437, %v431
      %v498 = vpack.c.b16 %v438, %v432
      %v499 = vpack.c.b16 %v439, %v433
      %v500 = vpack.c.b16 %v440, %v440
      %v501 = vpack.c.b16 %v441, %v441
      %v502 = vpack.c.b16 %v442, %v442
      %v503 = vpack.c.b16 %v443, %v443
      %v504 = vpack.c.b16 %v444, %v444
      %v505 = vpack.c.b16 %v445, %v445
      %vm560 = vcmask 154624
      %v562 = vsel %vm560, %v270, 0
      %v565 = vsel %vm560, %v272, 0
      %vm567 = vcmask 1040384
      %vm568 = vcmask 1041408
      %v569 = vsel %vm567, 4294967295, 65535
      %v570 = vsel %vm568, %v569, 0
      %v572 = vand.u32 %v500, %v570
      %v575 = vand.u32 %v501, %v570
      %v578 = vand.u32 %v502, %v570
      %v581 = vand.u32 %v503, %v570
      %v584 = vand.u32 %v504, %v570
      %v587 = vand.u32 %v505, %v570
      %589 = vmatpush.bf16.msra.mxu0 %v488
      %590 = vmatpush.bf16.msra.mxu0 %v482
      %591 = vmatpush.bf16.msra.mxu0 %v476
      %592 = vmatpush.bf16.msra.mxu0 %v470
      %593 = vmatpush.bf16.msra.mxu0 %v464
      %594 = vmatpush.bf16.msra.mxu0 %v458
      %595 = vmatpush.bf16.msra.mxu0 %v452
      %596 = vmatpush.bf16.msra.mxu0 %v446
      %597 = vmatmul.bf16.gmra.mxu0 %v269
      %v598 = vpop.f32.mrf.mxu0
      %v599 = vadd.f32 %v240, %v598
      %v600 = vpop.f32.mrf.mxu0
      %v601 = vadd.f32 %v245, %v600
      %602 = vmatmul.bf16.gmra.mxu0 %v271
      %v603 = vpop.f32.mrf.mxu0
      %v604 = vadd.f32 %v250, %v603
      %v605 = vpop.f32.mrf.mxu0
      %v606 = vadd.f32 %v255, %v605
      %607 = vdwg.mxu0
      %608 = vmatpush.bf16.msra.mxu0 0
      %609 = vmatpush.bf16.msra.mxu0 0
      %610 = vmatpush.bf16.msra.mxu0 0
      %611 = vmatpush.bf16.msra.mxu0 0
      %612 = vmatpush.bf16.msra.mxu0 0
      %613 = vmatpush.bf16.msra.mxu0 0
      %614 = vmatpush.bf16.msra.mxu0 %v572
      %615 = vmatpush.bf16.msra.mxu0 %v494
      %616 = vmatmul.bf16.gmra.mxu0 %v562
      %v617 = vpop.f32.mrf.mxu0
      %v618 = vadd.f32 %v599, %v617
      %v619 = vpop.f32.mrf.mxu0
      %v620 = vadd.f32 %v601, %v619
      %621 = vmatmul.bf16.gmra.mxu0 %v565
      %v622 = vpop.f32.mrf.mxu0
      %v623 = vadd.f32 %v604, %v622
      %v624 = vpop.f32.mrf.mxu0
      %v625 = vadd.f32 %v606, %v624
      %626 = vdwg.mxu0
      %627 = vmatpush.bf16.msra.mxu0 %v489
      %628 = vmatpush.bf16.msra.mxu0 %v483
      %629 = vmatpush.bf16.msra.mxu0 %v477
      %630 = vmatpush.bf16.msra.mxu0 %v471
      %631 = vmatpush.bf16.msra.mxu0 %v465
      %632 = vmatpush.bf16.msra.mxu0 %v459
      %633 = vmatpush.bf16.msra.mxu0 %v453
      %634 = vmatpush.bf16.msra.mxu0 %v447
      %635 = vmatmul.bf16.gmra.mxu0 %v269
      %v636 = vpop.f32.mrf.mxu0
      %v637 = vadd.f32 %v240, %v636
      %v638 = vpop.f32.mrf.mxu0
      %v639 = vadd.f32 %v245, %v638
      %640 = vmatmul.bf16.gmra.mxu0 %v271
      %v641 = vpop.f32.mrf.mxu0
      %v642 = vadd.f32 %v250, %v641
      %v643 = vpop.f32.mrf.mxu0
      %v644 = vadd.f32 %v255, %v643
      %645 = vdwg.mxu0
      %646 = vmatpush.bf16.msra.mxu0 0
      %647 = vmatpush.bf16.msra.mxu0 0
      %648 = vmatpush.bf16.msra.mxu0 0
      %649 = vmatpush.bf16.msra.mxu0 0
      %650 = vmatpush.bf16.msra.mxu0 0
      %651 = vmatpush.bf16.msra.mxu0 0
      %652 = vmatpush.bf16.msra.mxu0 %v575
      %653 = vmatpush.bf16.msra.mxu0 %v495
      %654 = vmatmul.bf16.gmra.mxu0 %v562
      %v655 = vpop.f32.mrf.mxu0
      %v656 = vadd.f32 %v637, %v655
      %v657 = vpop.f32.mrf.mxu0
      %v658 = vadd.f32 %v639, %v657
      %659 = vmatmul.bf16.gmra.mxu0 %v565
      %v660 = vpop.f32.mrf.mxu0
      %v661 = vadd.f32 %v642, %v660
      %v662 = vpop.f32.mrf.mxu0
      %v663 = vadd.f32 %v644, %v662
      %664 = vdwg.mxu0
      %665 = vmatpush.bf16.msra.mxu0 %v490
      %666 = vmatpush.bf16.msra.mxu0 %v484
      %667 = vmatpush.bf16.msra.mxu0 %v478
      %668 = vmatpush.bf16.msra.mxu0 %v472
      %669 = vmatpush.bf16.msra.mxu0 %v466
      %670 = vmatpush.bf16.msra.mxu0 %v460
      %671 = vmatpush.bf16.msra.mxu0 %v454
      %672 = vmatpush.bf16.msra.mxu0 %v448
      %673 = vmatmul.bf16.gmra.mxu0 %v269
      %v674 = vpop.f32.mrf.mxu0
      %v675 = vadd.f32 %v240, %v674
      %v676 = vpop.f32.mrf.mxu0
      %v677 = vadd.f32 %v245, %v676
      %678 = vmatmul.bf16.gmra.mxu0 %v271
      %v679 = vpop.f32.mrf.mxu0
      %v680 = vadd.f32 %v250, %v679
      %v681 = vpop.f32.mrf.mxu0
      %v682 = vadd.f32 %v255, %v681
      %683 = vdwg.mxu0
      %684 = vmatpush.bf16.msra.mxu0 0
      %685 = vmatpush.bf16.msra.mxu0 0
      %686 = vmatpush.bf16.msra.mxu0 0
      %687 = vmatpush.bf16.msra.mxu0 0
      %688 = vmatpush.bf16.msra.mxu0 0
      %689 = vmatpush.bf16.msra.mxu0 0
      %690 = vmatpush.bf16.msra.mxu0 %v578
      %691 = vmatpush.bf16.msra.mxu0 %v496
      %692 = vmatmul.bf16.gmra.mxu0 %v562
      %v693 = vpop.f32.mrf.mxu0
      %v694 = vadd.f32 %v675, %v693
      %v695 = vpop.f32.mrf.mxu0
      %v696 = vadd.f32 %v677, %v695
      %697 = vmatmul.bf16.gmra.mxu0 %v565
      %v698 = vpop.f32.mrf.mxu0
      %v699 = vadd.f32 %v680, %v698
      %v700 = vpop.f32.mrf.mxu0
      %v701 = vadd.f32 %v682, %v700
      %702 = vdwg.mxu0
      %703 = vmatpush.bf16.msra.mxu0 %v491
      %704 = vmatpush.bf16.msra.mxu0 %v485
      %705 = vmatpush.bf16.msra.mxu0 %v479
      %706 = vmatpush.bf16.msra.mxu0 %v473
      %707 = vmatpush.bf16.msra.mxu0 %v467
      %708 = vmatpush.bf16.msra.mxu0 %v461
      %709 = vmatpush.bf16.msra.mxu0 %v455
      %710 = vmatpush.bf16.msra.mxu0 %v449
      %711 = vmatmul.bf16.gmra.mxu0 %v269
      %v712 = vpop.f32.mrf.mxu0
      %v713 = vadd.f32 %v240, %v712
      %v714 = vpop.f32.mrf.mxu0
      %v715 = vadd.f32 %v245, %v714
      %716 = vmatmul.bf16.gmra.mxu0 %v271
      %v717 = vpop.f32.mrf.mxu0
      %v718 = vadd.f32 %v250, %v717
      %v719 = vpop.f32.mrf.mxu0
      %v720 = vadd.f32 %v255, %v719
      %721 = vdwg.mxu0
      %722 = vmatpush.bf16.msra.mxu0 0
      %723 = vmatpush.bf16.msra.mxu0 0
      %724 = vmatpush.bf16.msra.mxu0 0
      %725 = vmatpush.bf16.msra.mxu0 0
      %726 = vmatpush.bf16.msra.mxu0 0
      %727 = vmatpush.bf16.msra.mxu0 0
      %728 = vmatpush.bf16.msra.mxu0 %v581
      %729 = vmatpush.bf16.msra.mxu0 %v497
      %730 = vmatmul.bf16.gmra.mxu0 %v562
      %v731 = vpop.f32.mrf.mxu0
      %v732 = vadd.f32 %v713, %v731
      %v733 = vpop.f32.mrf.mxu0
      %v734 = vadd.f32 %v715, %v733
      %735 = vmatmul.bf16.gmra.mxu0 %v565
      %v736 = vpop.f32.mrf.mxu0
      %v737 = vadd.f32 %v718, %v736
      %v738 = vpop.f32.mrf.mxu0
      %v739 = vadd.f32 %v720, %v738
      %740 = vdwg.mxu0
      %741 = vmatpush.bf16.msra.mxu0 %v492
      %742 = vmatpush.bf16.msra.mxu0 %v486
      %743 = vmatpush.bf16.msra.mxu0 %v480
      %744 = vmatpush.bf16.msra.mxu0 %v474
      %745 = vmatpush.bf16.msra.mxu0 %v468
      %746 = vmatpush.bf16.msra.mxu0 %v462
      %747 = vmatpush.bf16.msra.mxu0 %v456
      %748 = vmatpush.bf16.msra.mxu0 %v450
      %749 = vmatmul.bf16.gmra.mxu0 %v269
      %v750 = vpop.f32.mrf.mxu0
      %v751 = vadd.f32 %v240, %v750
      %v752 = vpop.f32.mrf.mxu0
      %v753 = vadd.f32 %v245, %v752
      %754 = vmatmul.bf16.gmra.mxu0 %v271
      %v755 = vpop.f32.mrf.mxu0
      %v756 = vadd.f32 %v250, %v755
      %v757 = vpop.f32.mrf.mxu0
      %v758 = vadd.f32 %v255, %v757
      %759 = vdwg.mxu0
      %760 = vmatpush.bf16.msra.mxu0 0
      %761 = vmatpush.bf16.msra.mxu0 0
      %762 = vmatpush.bf16.msra.mxu0 0
      %763 = vmatpush.bf16.msra.mxu0 0
      %764 = vmatpush.bf16.msra.mxu0 0
      %765 = vmatpush.bf16.msra.mxu0 0
      %766 = vmatpush.bf16.msra.mxu0 %v584
      %767 = vmatpush.bf16.msra.mxu0 %v498
      %768 = vmatmul.bf16.gmra.mxu0 %v562
      %v769 = vpop.f32.mrf.mxu0
      %v770 = vadd.f32 %v751, %v769
      %v771 = vpop.f32.mrf.mxu0
      %v772 = vadd.f32 %v753, %v771
      %773 = vmatmul.bf16.gmra.mxu0 %v565
      %v774 = vpop.f32.mrf.mxu0
      %v775 = vadd.f32 %v756, %v774
      %v776 = vpop.f32.mrf.mxu0
      %v777 = vadd.f32 %v758, %v776
      %778 = vdwg.mxu0
      %779 = vmatpush.bf16.msra.mxu0 %v493
      %780 = vmatpush.bf16.msra.mxu0 %v487
      %781 = vmatpush.bf16.msra.mxu0 %v481
      %782 = vmatpush.bf16.msra.mxu0 %v475
      %783 = vmatpush.bf16.msra.mxu0 %v469
      %784 = vmatpush.bf16.msra.mxu0 %v463
      %785 = vmatpush.bf16.msra.mxu0 %v457
      %786 = vmatpush.bf16.msra.mxu0 %v451
      %787 = vmatmul.bf16.gmra.mxu0 %v269
      %v788 = vpop.f32.mrf.mxu0
      %v789 = vadd.f32 %v240, %v788
      %v790 = vpop.f32.mrf.mxu0
      %v791 = vadd.f32 %v245, %v790
      %792 = vmatmul.bf16.gmra.mxu0 %v271
      %v793 = vpop.f32.mrf.mxu0
      %v794 = vadd.f32 %v250, %v793
      %v795 = vpop.f32.mrf.mxu0
      %v796 = vadd.f32 %v255, %v795
      %797 = vdwg.mxu0
      %798 = vmatpush.bf16.msra.mxu0 0
      %799 = vmatpush.bf16.msra.mxu0 0
      %800 = vmatpush.bf16.msra.mxu0 0
      %801 = vmatpush.bf16.msra.mxu0 0
      %802 = vmatpush.bf16.msra.mxu0 0
      %803 = vmatpush.bf16.msra.mxu0 0
      %804 = vmatpush.bf16.msra.mxu0 %v587
      %805 = vmatpush.bf16.msra.mxu0 %v499
      %806 = vmatmul.bf16.gmra.mxu0 %v562
      %v807 = vpop.f32.mrf.mxu0
      %v808 = vadd.f32 %v789, %v807
      %v809 = vpop.f32.mrf.mxu0
      %v810 = vadd.f32 %v791, %v809
      %811 = vmatmul.bf16.gmra.mxu0 %v565
      %v812 = vpop.f32.mrf.mxu0
      %v813 = vadd.f32 %v794, %v812
      %v814 = vpop.f32.mrf.mxu0
      %v815 = vadd.f32 %v796, %v814
      %816 = vdwg.mxu0
      %v817 = vmax.f32 %v618, 0.0
      %v818 = vmax.f32 %v656, 0.0
      %v819 = vmax.f32 %v694, 0.0
      %v820 = vmax.f32 %v732, 0.0
      %v821 = vmax.f32 %v770, 0.0
      %v822 = vmax.f32 %v808, 0.0
      %v823 = vmax.f32 %v620, 0.0
      %v824 = vmax.f32 %v658, 0.0
      %v825 = vmax.f32 %v696, 0.0
      %v826 = vmax.f32 %v734, 0.0
      %v827 = vmax.f32 %v772, 0.0
      %v828 = vmax.f32 %v810, 0.0
      %v829 = vmax.f32 %v623, 0.0
      %v830 = vmax.f32 %v661, 0.0
      %v831 = vmax.f32 %v699, 0.0
      %v832 = vmax.f32 %v737, 0.0
      %v833 = vmax.f32 %v775, 0.0
      %v834 = vmax.f32 %v813, 0.0
      %v835 = vmax.f32 %v625, 0.0
      %v836 = vmax.f32 %v663, 0.0
      %v837 = vmax.f32 %v701, 0.0
      %v838 = vmax.f32 %v739, 0.0
      %v839 = vmax.f32 %v777, 0.0
      %v840 = vmax.f32 %v815, 0.0
      %v841 = vpack.c.bf16 %v818, %v817
      %v842 = vpack.c.bf16 %v820, %v819
      %v843 = vpack.c.bf16 %v822, %v821
      %v844 = vpack.c.bf16 %v824, %v823
      %v845 = vpack.c.bf16 %v826, %v825
      %v846 = vpack.c.bf16 %v828, %v827
      %v847 = vpack.c.bf16 %v830, %v829
      %v848 = vpack.c.bf16 %v832, %v831
      %v849 = vpack.c.bf16 %v834, %v833
      %v850 = vpack.c.bf16 %v836, %v835
      %v851 = vpack.c.bf16 %v838, %v837
      %v852 = vpack.c.bf16 %v840, %v839
      %853 = vst [vmem:[%s170] sm:$0xff] %v841
      %854 = vst [vmem:[%s170 + $0x8] sm:$0xff] %v842
      %vm855 = vcmask 1043456
      %vm856 = vcmask 293892
      %vm857 = vmor %vm856, %vm855
      %858 = vst.msk [vmem:[%s170 + $0x10] sm:$0xff] %vm857, %v843
      %859 = vst [vmem:[%s170 + $0x18] sm:$0xff] %v844
      %860 = vst [vmem:[%s170 + $0x20] sm:$0xff] %v845
      %861 = vst.msk [vmem:[%s170 + $0x28] sm:$0xff] %vm857, %v846
      %862 = vst [vmem:[%s170 + $0x30] sm:$0xff] %v847
      %863 = vst [vmem:[%s170 + $0x38] sm:$0xff] %v848
      %864 = vst.msk [vmem:[%s170 + $0x40] sm:$0xff] %vm857, %v849
      %865 = vst [vmem:[%s170 + $0x48] sm:$0x33] %v850
      %866 = vst [vmem:[%s170 + $0x50] sm:$0x33] %v851
      %vm867 = vcmask 291844
      %vm868 = vmor %vm867, %vm568
      %869 = vst.msk [vmem:[%s170 + $0x58] sm:$0x33] %vm868, %v852
      %p870 = scmp.lt.s32.totalorder %s14, 1
      %s871 = scalar_select %p870, %s14, 1
      %s872 = smul.addr %s871, 24
      %s873 = smul.addr %s872, 4
      %s874 = scalar_lea.vmem %s3, %s873
      // Predicated region
      $region33: #{model_forward.2} parent=31 // pred_check
        %p875 = pneg %p100
      $region34: #{model_forward.2} parent=31 // pred_check_branch
        %877 = sbr.rel (%p875) target = $region36
      $region35: #{model_forward.2} parent=31 // pred_region
        _
      $region36: #{model_forward.2} parent=31 // pred_fallthru
        _
    $region32: #{model_forward.2} parent=5 // pred_fallthru
      _
    %p878 = scmp.le.s32.totalorder 2, %s9
    // Predicated region
    $region37: #{model_forward.2} parent=5 // pred_check
      %p879 = pneg %p878
    $region38: #{model_forward.2} parent=5 // pred_check_branch
      %881 = sbr.rel (%p879) target = $region40
    $region39: #{model_forward.2} parent=5 // pred_region
      %s882 = ssub.s32 %s9, 2
      // Predicated region
      $region41: #{model_forward.2} parent=39 // pred_check
        %p883 = pneg %p106
      $region42: #{model_forward.2} parent=39 // pred_check_branch
        %885 = sbr.rel (%p883) target = $region44
      $region43: #{model_forward.2} parent=39 // pred_region
        %p886 = scmp.lt.s32.totalorder %s15, 1
        %s887 = scalar_select %p886, %s15, 1
        %s888 = smul.addr %s887, 24
        %s889 = smul.addr %s888, 4
        %s890 = scalar_lea.vmem %s3, %s889
      $region44: #{model_forward.2} parent=39 // pred_fallthru
        _
    $region40: #{model_forward.2} parent=5 // pred_fallthru
      _
  $region6: #{model_forward.2} parent=0 // loop_footer
    %s13 = sadd.s32 1, %s9
  $region7: #{model_forward.2} parent=0 // loop_footer_branch
    %8 = sbr.rel target = $region3
  $region8: #{model_forward.2} parent=0 // loop_exit
    _

// kernel: model_forward.3
$region0: #{model_forward.3}
  #allocation0 [shape = 'u32[]', space=smem, size = 0x4, offset = 0x4, fixed_abs, tag = 'smem constant byte address 0x4 - core index']
  #allocation1 [shape = 'u32[72,128]{1,0:T(1,128)}', space=vmem, size = 0x9000, scoped, tag = 'internal scratch']
  %s0 = inlined_call_operand.vmem [shape: bf16[2,18928], index: 0, kind: input, shape index: {}]
  %s1 = inlined_call_operand.vmem [shape: bf16[18928,10], index: 1, kind: input, shape index: {}]
  %s2 = inlined_call_operand.vmem [shape: f32[1,10], index: 2, kind: input, shape index: {}]
  %s3 = inlined_call_operand.hbm [shape: f32[2,10], index: 3, kind: output, shape index: {}]
  %s4 = sld [smem:[#allocation0]]
  $region22: #{model_forward.3} parent=0
    _
  %s6 = ssub.s32 1, %s4
  %s7 = scalar_select 0, %s6, %s4
  $region1: #{model_forward.3} parent=0
    #allocation2 [shape = 'u8[1024]{0}', space=vmem, size = 0x400, scoped, tag = 'output window, operand 0, single buffered']
    #allocation3 [shape = 's32[1]{0}', space=sflag, size = 0x4, scoped, tag = 'scoped memory for model_forward.3']
    %8 = vsyncpa [#allocation3], 0
    // Predicated region
    $region2: #{model_forward.3} parent=1 // pred_check
      _
    $region3: #{model_forward.3} parent=1 // pred_check_branch
      %10 = sbr.rel (0) target = $region5
    $region4: #{model_forward.3} parent=1 // pred_region
      _
    $region5: #{model_forward.3} parent=1 // pred_fallthru
      _
    // Predicated region
    $region6: #{model_forward.3} parent=1 // pred_check
      _
    $region7: #{model_forward.3} parent=1 // pred_check_branch
      %12 = sbr.rel (0) target = $region9
    $region8: #{model_forward.3} parent=1 // pred_region
      _
    $region9: #{model_forward.3} parent=1 // pred_fallthru
      _
    // Predicated region
    $region10: #{model_forward.3} parent=1 // pred_check
      _
    $region11: #{model_forward.3} parent=1 // pred_check_branch
      %14 = sbr.rel (0) target = $region13
    $region12: #{model_forward.3} parent=1 // pred_region
      _
    $region13: #{model_forward.3} parent=1 // pred_fallthru
      _
    %v16 = vld [vmem:[%s0] sm:$0xff]
    %v17 = vld [vmem:[%s0 + $0x8] sm:$0xff]
    %v18 = vld [vmem:[%s0 + $0x10] sm:$0xff]
    %v19 = vld [vmem:[%s0 + $0x18] sm:$0xff]
    %v20 = vld [vmem:[%s0 + $0x20] sm:$0xff]
    %v21 = vld [vmem:[%s0 + $0x28] sm:$0xff]
    %v22 = vld [vmem:[%s0 + $0x30] sm:$0xff]
    %v23 = vld [vmem:[%s0 + $0x38] sm:$0xff]
    %v24 = vld [vmem:[%s0 + $0x40] sm:$0xff]
    %v25 = vld [vmem:[%s0 + $0x48] sm:$0xff]
    %v26 = vld [vmem:[%s0 + $0x50] sm:$0xff]
    %v27 = vld [vmem:[%s0 + $0x58] sm:$0xff]
    %v28 = vld [vmem:[%s0 + $0x60] sm:$0xff]
    %v29 = vld [vmem:[%s0 + $0x68] sm:$0xff]
    %v30 = vld [vmem:[%s0 + $0x70] sm:$0xff]
    %v31 = vld [vmem:[%s0 + $0x78] sm:$0xff]
    %v32 = vld [vmem:[%s0 + $0x80] sm:$0xff]
    %v33 = vld [vmem:[%s0 + $0x88] sm:$0xff]
    %v34 = vld [vmem:[%s0 + $0x90] sm:$0xf]
    %v35 = vld [vmem:[%s1] sm:$0xf]
    %v36 = vld [vmem:[%s1 + $0x4] sm:$0xf]
    %v37 = vld [vmem:[%s1 + $0x8] sm:$0xf]
    %v38 = vld [vmem:[%s1 + $0xc] sm:$0xf]
    %v39 = vld [vmem:[%s1 + $0x10] sm:$0xf]
    %v40 = vld [vmem:[%s1 + $0x14] sm:$0xf]
    %v41 = vld [vmem:[%s1 + $0x18] sm:$0xf]
    %v42 = vld [vmem:[%s1 + $0x1c] sm:$0xf]
    %v43 = vld [vmem:[%s1 + $0x20] sm:$0xf]
    %v44 = vld [vmem:[%s1 + $0x24] sm:$0xf]
    %v45 = vld [vmem:[%s1 + $0x28] sm:$0xf]
    %v46 = vld [vmem:[%s1 + $0x2c] sm:$0xf]
    %v47 = vld [vmem:[%s1 + $0x30] sm:$0xf]
    %v48 = vld [vmem:[%s1 + $0x34] sm:$0xf]
    %v49 = vld [vmem:[%s1 + $0x38] sm:$0xf]
    %v50 = vld [vmem:[%s1 + $0x3c] sm:$0xf]
    %v51 = vld [vmem:[%s1 + $0x40] sm:$0xf]
    %v52 = vld [vmem:[%s1 + $0x44] sm:$0xf]
    %v53 = vld [vmem:[%s1 + $0x48] sm:$0xf]
    %v54 = vld [vmem:[%s1 + $0x4c] sm:$0xf]
    %v55 = vld [vmem:[%s1 + $0x50] sm:$0xf]
    %v56 = vld [vmem:[%s1 + $0x54] sm:$0xf]
    %v57 = vld [vmem:[%s1 + $0x58] sm:$0xf]
    %v58 = vld [vmem:[%s1 + $0x5c] sm:$0xf]
    %v59 = vld [vmem:[%s1 + $0x60] sm:$0xf]
    %v60 = vld [vmem:[%s1 + $0x64] sm:$0xf]
    %v61 = vld [vmem:[%s1 + $0x68] sm:$0xf]
    %v62 = vld [vmem:[%s1 + $0x6c] sm:$0xf]
    %v63 = vld [vmem:[%s1 + $0x70] sm:$0xf]
    %v64 = vld [vmem:[%s1 + $0x74] sm:$0xf]
    %v65 = vld [vmem:[%s1 + $0x78] sm:$0xf]
    %v66 = vld [vmem:[%s1 + $0x7c] sm:$0xf]
    %v67 = vld [vmem:[%s1 + $0x80] sm:$0xf]
    %v68 = vld [vmem:[%s1 + $0x84] sm:$0xf]
    %v69 = vld [vmem:[%s1 + $0x88] sm:$0xf]
    %v70 = vld [vmem:[%s1 + $0x8c] sm:$0xf]
    %v71 = vld [vmem:[%s1 + $0x90] sm:$0xf]
    %v72 = vld [vmem:[%s1 + $0x94] sm:$0xf]
    %v73 = vld [vmem:[%s1 + $0x98] sm:$0xf]
    %v74 = vld [vmem:[%s1 + $0x9c] sm:$0xf]
    %v75 = vld [vmem:[%s1 + $0xa0] sm:$0xf]
    %v76 = vld [vmem:[%s1 + $0xa4] sm:$0xf]
    %v77 = vld [vmem:[%s1 + $0xa8] sm:$0xf]
    %v78 = vld [vmem:[%s1 + $0xac] sm:$0xf]
    %v79 = vld [vmem:[%s1 + $0xb0] sm:$0xf]
    %v80 = vld [vmem:[%s1 + $0xb4] sm:$0xf]
    %v81 = vld [vmem:[%s1 + $0xb8] sm:$0xf]
    %v82 = vld [vmem:[%s1 + $0xbc] sm:$0xf]
    %v83 = vld [vmem:[%s1 + $0xc0] sm:$0xf]
    %v84 = vld [vmem:[%s1 + $0xc4] sm:$0xf]
    %v85 = vld [vmem:[%s1 + $0xc8] sm:$0xf]
    %v86 = vld [vmem:[%s1 + $0xcc] sm:$0xf]
    %v87 = vld [vmem:[%s1 + $0xd0] sm:$0xf]
    %v88 = vld [vmem:[%s1 + $0xd4] sm:$0xf]
    %v89 = vld [vmem:[%s1 + $0xd8] sm:$0xf]
    %v90 = vld [vmem:[%s1 + $0xdc] sm:$0xf]
    %v91 = vld [vmem:[%s1 + $0xe0] sm:$0xf]
    %v92 = vld [vmem:[%s1 + $0xe4] sm:$0xf]
    %v93 = vld [vmem:[%s1 + $0xe8] sm:$0xf]
    %v94 = vld [vmem:[%s1 + $0xec] sm:$0xf]
    %v95 = vld [vmem:[%s1 + $0xf0] sm:$0xf]
    %v96 = vld [vmem:[%s1 + $0xf4] sm:$0xf]
    %v97 = vld [vmem:[%s1 + $0xf8] sm:$0xf]
    %v98 = vld [vmem:[%s1 + $0xfc] sm:$0xf]
    %v99 = vld [vmem:[%s1 + $0x100] sm:$0xf]
    %v100 = vld [vmem:[%s1 + $0x104] sm:$0xf]
    %v101 = vld [vmem:[%s1 + $0x108] sm:$0xf]
    %v102 = vld [vmem:[%s1 + $0x10c] sm:$0xf]
    %v103 = vld [vmem:[%s1 + $0x110] sm:$0xf]
    %v104 = vld [vmem:[%s1 + $0x114] sm:$0xf]
    %v105 = vld [vmem:[%s1 + $0x118] sm:$0xf]
    %v106 = vld [vmem:[%s1 + $0x11c] sm:$0xf]
    %v107 = vld [vmem:[%s1 + $0x120] sm:$0xf]
    %v108 = vld [vmem:[%s1 + $0x124] sm:$0xf]
    %v109 = vld [vmem:[%s1 + $0x128] sm:$0xf]
    %v110 = vld [vmem:[%s1 + $0x12c] sm:$0xf]
    %v111 = vld [vmem:[%s1 + $0x130] sm:$0xf]
    %v112 = vld [vmem:[%s1 + $0x134] sm:$0xf]
    %v113 = vld [vmem:[%s1 + $0x138] sm:$0xf]
    %v114 = vld [vmem:[%s1 + $0x13c] sm:$0xf]
    %v115 = vld [vmem:[%s1 + $0x140] sm:$0xf]
    %v116 = vld [vmem:[%s1 + $0x144] sm:$0xf]
    %v117 = vld [vmem:[%s1 + $0x148] sm:$0xf]
    %v118 = vld [vmem:[%s1 + $0x14c] sm:$0xf]
    %v119 = vld [vmem:[%s1 + $0x150] sm:$0xf]
    %v120 = vld [vmem:[%s1 + $0x154] sm:$0xf]
    %v121 = vld [vmem:[%s1 + $0x158] sm:$0xf]
    %v122 = vld [vmem:[%s1 + $0x15c] sm:$0xf]
    %v123 = vld [vmem:[%s1 + $0x160] sm:$0xf]
    %v124 = vld [vmem:[%s1 + $0x164] sm:$0xf]
    %v125 = vld [vmem:[%s1 + $0x168] sm:$0xf]
    %v126 = vld [vmem:[%s1 + $0x16c] sm:$0xf]
    %v127 = vld [vmem:[%s1 + $0x170] sm:$0xf]
    %v128 = vld [vmem:[%s1 + $0x174] sm:$0xf]
    %v129 = vld [vmem:[%s1 + $0x178] sm:$0xf]
    %v130 = vld [vmem:[%s1 + $0x17c] sm:$0xf]
    %v131 = vld [vmem:[%s1 + $0x180] sm:$0xf]
    %v132 = vld [vmem:[%s1 + $0x184] sm:$0xf]
    %v133 = vld [vmem:[%s1 + $0x188] sm:$0xf]
    %v134 = vld [vmem:[%s1 + $0x18c] sm:$0xf]
    %v135 = vld [vmem:[%s1 + $0x190] sm:$0xf]
    %v136 = vld [vmem:[%s1 + $0x194] sm:$0xf]
    %v137 = vld [vmem:[%s1 + $0x198] sm:$0xf]
    %v138 = vld [vmem:[%s1 + $0x19c] sm:$0xf]
    %v139 = vld [vmem:[%s1 + $0x1a0] sm:$0xf]
    %v140 = vld [vmem:[%s1 + $0x1a4] sm:$0xf]
    %v141 = vld [vmem:[%s1 + $0x1a8] sm:$0xf]
    %v142 = vld [vmem:[%s1 + $0x1ac] sm:$0xf]
    %v143 = vld [vmem:[%s1 + $0x1b0] sm:$0xf]
    %v144 = vld [vmem:[%s1 + $0x1b4] sm:$0xf]
    %v145 = vld [vmem:[%s1 + $0x1b8] sm:$0xf]
    %v146 = vld [vmem:[%s1 + $0x1bc] sm:$0xf]
    %v147 = vld [vmem:[%s1 + $0x1c0] sm:$0xf]
    %v148 = vld [vmem:[%s1 + $0x1c4] sm:$0xf]
    %v149 = vld [vmem:[%s1 + $0x1c8] sm:$0xf]
    %v150 = vld [vmem:[%s1 + $0x1cc] sm:$0xf]
    %v151 = vld [vmem:[%s1 + $0x1d0] sm:$0xf]
    %v152 = vld [vmem:[%s1 + $0x1d4] sm:$0xf]
    %v153 = vld [vmem:[%s1 + $0x1d8] sm:$0xf]
    %v154 = vld [vmem:[%s1 + $0x1dc] sm:$0xf]
    %v155 = vld [vmem:[%s1 + $0x1e0] sm:$0xf]
    %v156 = vld [vmem:[%s1 + $0x1e4] sm:$0xf]
    %v157 = vld [vmem:[%s1 + $0x1e8] sm:$0xf]
    %v158 = vld [vmem:[%s1 + $0x1ec] sm:$0xf]
    %v159 = vld [vmem:[%s1 + $0x1f0] sm:$0xf]
    %v160 = vld [vmem:[%s1 + $0x1f4] sm:$0xf]
    %v161 = vld [vmem:[%s1 + $0x1f8] sm:$0xf]
    %v162 = vld [vmem:[%s1 + $0x1fc] sm:$0xf]
    %v163 = vld [vmem:[%s1 + $0x200] sm:$0xf]
    %v164 = vld [vmem:[%s1 + $0x204] sm:$0xf]
    %v165 = vld [vmem:[%s1 + $0x208] sm:$0xf]
    %v166 = vld [vmem:[%s1 + $0x20c] sm:$0xf]
    %v167 = vld [vmem:[%s1 + $0x210] sm:$0xf]
    %v168 = vld [vmem:[%s1 + $0x214] sm:$0xf]
    %v169 = vld [vmem:[%s1 + $0x218] sm:$0xf]
    %v170 = vld [vmem:[%s1 + $0x21c] sm:$0xf]
    %v171 = vld [vmem:[%s1 + $0x220] sm:$0xf]
    %v172 = vld [vmem:[%s1 + $0x224] sm:$0xf]
    %v173 = vld [vmem:[%s1 + $0x228] sm:$0xf]
    %v174 = vld [vmem:[%s1 + $0x22c] sm:$0xf]
    %v175 = vld [vmem:[%s1 + $0x230] sm:$0xf]
    %v176 = vld [vmem:[%s1 + $0x234] sm:$0xf]
    %v177 = vld [vmem:[%s1 + $0x238] sm:$0xf]
    %v178 = vld [vmem:[%s1 + $0x23c] sm:$0xf]
    %v179 = vld [vmem:[%s1 + $0x240] sm:$0xf]
    %v180 = vld [vmem:[%s1 + $0x244] sm:$0xf]
    %v181 = vld [vmem:[%s1 + $0x248] sm:$0xf]
    %v182 = vld [vmem:[%s1 + $0x24c] sm:$0xf]
    %v183 = vld [vmem:[%s1 + $0x250] sm:$0xf]
    %v184 = vld [vmem:[%s1 + $0x254] sm:$0xf]
    %v185 = vld [vmem:[%s1 + $0x258] sm:$0xf]
    %v186 = vld [vmem:[%s1 + $0x25c] sm:$0xf]
    %v187 = vld [vmem:[%s1 + $0x260] sm:$0xf]
    %v188 = vld [vmem:[%s1 + $0x264] sm:$0xf]
    %v189 = vld [vmem:[%s1 + $0x268] sm:$0xf]
    %v190 = vld [vmem:[%s1 + $0x26c] sm:$0xf]
    %v191 = vld [vmem:[%s1 + $0x270] sm:$0xf]
    %v192 = vld [vmem:[%s1 + $0x274] sm:$0xf]
    %v193 = vld [vmem:[%s1 + $0x278] sm:$0xf]
    %v194 = vld [vmem:[%s1 + $0x27c] sm:$0xf]
    %v195 = vld [vmem:[%s1 + $0x280] sm:$0xf]
    %v196 = vld [vmem:[%s1 + $0x284] sm:$0xf]
    %v197 = vld [vmem:[%s1 + $0x288] sm:$0xf]
    %v198 = vld [vmem:[%s1 + $0x28c] sm:$0xf]
    %v199 = vld [vmem:[%s1 + $0x290] sm:$0xf]
    %v200 = vld [vmem:[%s1 + $0x294] sm:$0xf]
    %v201 = vld [vmem:[%s1 + $0x298] sm:$0xf]
    %v202 = vld [vmem:[%s1 + $0x29c] sm:$0xf]
    %v203 = vld [vmem:[%s1 + $0x2a0] sm:$0xf]
    %v204 = vld [vmem:[%s1 + $0x2a4] sm:$0xf]
    %v205 = vld [vmem:[%s1 + $0x2a8] sm:$0xf]
    %v206 = vld [vmem:[%s1 + $0x2ac] sm:$0xf]
    %v207 = vld [vmem:[%s1 + $0x2b0] sm:$0xf]
    %v208 = vld [vmem:[%s1 + $0x2b4] sm:$0xf]
    %v209 = vld [vmem:[%s1 + $0x2b8] sm:$0xf]
    %v210 = vld [vmem:[%s1 + $0x2bc] sm:$0xf]
    %v211 = vld [vmem:[%s1 + $0x2c0] sm:$0xf]
    %v212 = vld [vmem:[%s1 + $0x2c4] sm:$0xf]
    %v213 = vld [vmem:[%s1 + $0x2c8] sm:$0xf]
    %v214 = vld [vmem:[%s1 + $0x2cc] sm:$0xf]
    %v215 = vld [vmem:[%s1 + $0x2d0] sm:$0xf]
    %v216 = vld [vmem:[%s1 + $0x2d4] sm:$0xf]
    %v217 = vld [vmem:[%s1 + $0x2d8] sm:$0xf]
    %v218 = vld [vmem:[%s1 + $0x2dc] sm:$0xf]
    %v219 = vld [vmem:[%s1 + $0x2e0] sm:$0xf]
    %v220 = vld [vmem:[%s1 + $0x2e4] sm:$0xf]
    %v221 = vld [vmem:[%s1 + $0x2e8] sm:$0xf]
    %v222 = vld [vmem:[%s1 + $0x2ec] sm:$0xf]
    %v223 = vld [vmem:[%s1 + $0x2f0] sm:$0xf]
    %v224 = vld [vmem:[%s1 + $0x2f4] sm:$0xf]
    %v225 = vld [vmem:[%s1 + $0x2f8] sm:$0xf]
    %v226 = vld [vmem:[%s1 + $0x2fc] sm:$0xf]
    %v227 = vld [vmem:[%s1 + $0x300] sm:$0xf]
    %v228 = vld [vmem:[%s1 + $0x304] sm:$0xf]
    %v229 = vld [vmem:[%s1 + $0x308] sm:$0xf]
    %v230 = vld [vmem:[%s1 + $0x30c] sm:$0xf]
    %v231 = vld [vmem:[%s1 + $0x310] sm:$0xf]
    %v232 = vld [vmem:[%s1 + $0x314] sm:$0xf]
    %v233 = vld [vmem:[%s1 + $0x318] sm:$0xf]
    %v234 = vld [vmem:[%s1 + $0x31c] sm:$0xf]
    %v235 = vld [vmem:[%s1 + $0x320] sm:$0xf]
    %v236 = vld [vmem:[%s1 + $0x324] sm:$0xf]
    %v237 = vld [vmem:[%s1 + $0x328] sm:$0xf]
    %v238 = vld [vmem:[%s1 + $0x32c] sm:$0xf]
    %v239 = vld [vmem:[%s1 + $0x330] sm:$0xf]
    %v240 = vld [vmem:[%s1 + $0x334] sm:$0xf]
    %v241 = vld [vmem:[%s1 + $0x338] sm:$0xf]
    %v242 = vld [vmem:[%s1 + $0x33c] sm:$0xf]
    %v243 = vld [vmem:[%s1 + $0x340] sm:$0xf]
    %v244 = vld [vmem:[%s1 + $0x344] sm:$0xf]
    %v245 = vld [vmem:[%s1 + $0x348] sm:$0xf]
    %v246 = vld [vmem:[%s1 + $0x34c] sm:$0xf]
    %v247 = vld [vmem:[%s1 + $0x350] sm:$0xf]
    %v248 = vld [vmem:[%s1 + $0x354] sm:$0xf]
    %v249 = vld [vmem:[%s1 + $0x358] sm:$0xf]
    %v250 = vld [vmem:[%s1 + $0x35c] sm:$0xf]
    %v251 = vld [vmem:[%s1 + $0x360] sm:$0xf]
    %v252 = vld [vmem:[%s1 + $0x364] sm:$0xf]
    %v253 = vld [vmem:[%s1 + $0x368] sm:$0xf]
    %v254 = vld [vmem:[%s1 + $0x36c] sm:$0xf]
    %v255 = vld [vmem:[%s1 + $0x370] sm:$0xf]
    %v256 = vld [vmem:[%s1 + $0x374] sm:$0xf]
    %v257 = vld [vmem:[%s1 + $0x378] sm:$0xf]
    %v258 = vld [vmem:[%s1 + $0x37c] sm:$0xf]
    %v259 = vld [vmem:[%s1 + $0x380] sm:$0xf]
    %v260 = vld [vmem:[%s1 + $0x384] sm:$0xf]
    %v261 = vld [vmem:[%s1 + $0x388] sm:$0xf]
    %v262 = vld [vmem:[%s1 + $0x38c] sm:$0xf]
    %v263 = vld [vmem:[%s1 + $0x390] sm:$0xf]
    %v264 = vld [vmem:[%s1 + $0x394] sm:$0xf]
    %v265 = vld [vmem:[%s1 + $0x398] sm:$0xf]
    %v266 = vld [vmem:[%s1 + $0x39c] sm:$0xf]
    %v267 = vld [vmem:[%s1 + $0x3a0] sm:$0xf]
    %v268 = vld [vmem:[%s1 + $0x3a4] sm:$0xf]
    %v269 = vld [vmem:[%s1 + $0x3a8] sm:$0xf]
    %v270 = vld [vmem:[%s1 + $0x3ac] sm:$0xf]
    %v271 = vld [vmem:[%s1 + $0x3b0] sm:$0xf]
    %v272 = vld [vmem:[%s1 + $0x3b4] sm:$0xf]
    %v273 = vld [vmem:[%s1 + $0x3b8] sm:$0xf]
    %v274 = vld [vmem:[%s1 + $0x3bc] sm:$0xf]
    %v275 = vld [vmem:[%s1 + $0x3c0] sm:$0xf]
    %v276 = vld [vmem:[%s1 + $0x3c4] sm:$0xf]
    %v277 = vld [vmem:[%s1 + $0x3c8] sm:$0xf]
    %v278 = vld [vmem:[%s1 + $0x3cc] sm:$0xf]
    %v279 = vld [vmem:[%s1 + $0x3d0] sm:$0xf]
    %v280 = vld [vmem:[%s1 + $0x3d4] sm:$0xf]
    %v281 = vld [vmem:[%s1 + $0x3d8] sm:$0xf]
    %v282 = vld [vmem:[%s1 + $0x3dc] sm:$0xf]
    %v283 = vld [vmem:[%s1 + $0x3e0] sm:$0xf]
    %v284 = vld [vmem:[%s1 + $0x3e4] sm:$0xf]
    %v285 = vld [vmem:[%s1 + $0x3e8] sm:$0xf]
    %v286 = vld [vmem:[%s1 + $0x3ec] sm:$0xf]
    %v287 = vld [vmem:[%s1 + $0x3f0] sm:$0xf]
    %v288 = vld [vmem:[%s1 + $0x3f4] sm:$0xf]
    %v289 = vld [vmem:[%s1 + $0x3f8] sm:$0xf]
    %v290 = vld [vmem:[%s1 + $0x3fc] sm:$0xf]
    %v291 = vld [vmem:[%s1 + $0x400] sm:$0xf]
    %v292 = vld [vmem:[%s1 + $0x404] sm:$0xf]
    %v293 = vld [vmem:[%s1 + $0x408] sm:$0xf]
    %v294 = vld [vmem:[%s1 + $0x40c] sm:$0xf]
    %v295 = vld [vmem:[%s1 + $0x410] sm:$0xf]
    %v296 = vld [vmem:[%s1 + $0x414] sm:$0xf]
    %v297 = vld [vmem:[%s1 + $0x418] sm:$0xf]
    %v298 = vld [vmem:[%s1 + $0x41c] sm:$0xf]
    %v299 = vld [vmem:[%s1 + $0x420] sm:$0xf]
    %v300 = vld [vmem:[%s1 + $0x424] sm:$0xf]
    %v301 = vld [vmem:[%s1 + $0x428] sm:$0xf]
    %v302 = vld [vmem:[%s1 + $0x42c] sm:$0xf]
    %v303 = vld [vmem:[%s1 + $0x430] sm:$0xf]
    %v304 = vld [vmem:[%s1 + $0x434] sm:$0xf]
    %v305 = vld [vmem:[%s1 + $0x438] sm:$0xf]
    %v306 = vld [vmem:[%s1 + $0x43c] sm:$0xf]
    %v307 = vld [vmem:[%s1 + $0x440] sm:$0xf]
    %v308 = vld [vmem:[%s1 + $0x444] sm:$0xf]
    %v309 = vld [vmem:[%s1 + $0x448] sm:$0xf]
    %v310 = vld [vmem:[%s1 + $0x44c] sm:$0xf]
    %v311 = vld [vmem:[%s1 + $0x450] sm:$0xf]
    %v312 = vld [vmem:[%s1 + $0x454] sm:$0xf]
    %v313 = vld [vmem:[%s1 + $0x458] sm:$0xf]
    %v314 = vld [vmem:[%s1 + $0x45c] sm:$0xf]
    %v315 = vld [vmem:[%s1 + $0x460] sm:$0xf]
    %v316 = vld [vmem:[%s1 + $0x464] sm:$0xf]
    %v317 = vld [vmem:[%s1 + $0x468] sm:$0xf]
    %v318 = vld [vmem:[%s1 + $0x46c] sm:$0xf]
    %v319 = vld [vmem:[%s1 + $0x470] sm:$0xf]
    %v320 = vld [vmem:[%s1 + $0x474] sm:$0xf]
    %v321 = vld [vmem:[%s1 + $0x478] sm:$0xf]
    %v322 = vld [vmem:[%s1 + $0x47c] sm:$0xf]
    %v323 = vld [vmem:[%s1 + $0x480] sm:$0xf]
    %v324 = vld [vmem:[%s1 + $0x484] sm:$0xf]
    %v325 = vld [vmem:[%s1 + $0x488] sm:$0xf]
    %v326 = vld [vmem:[%s1 + $0x48c] sm:$0xf]
    %v327 = vld [vmem:[%s1 + $0x490] sm:$0xf]
    %v328 = vld [vmem:[%s1 + $0x494] sm:$0xf]
    %v329 = vld [vmem:[%s1 + $0x498] sm:$0xf]
    %v330 = vld [vmem:[%s1 + $0x49c] sm:$0xf]
    %v331 = vld [vmem:[%s1 + $0x4a0] sm:$0xf]
    %v332 = vld [vmem:[%s1 + $0x4a4] sm:$0xf]
    %v333 = vld [vmem:[%s1 + $0x4a8] sm:$0xf]
    %v334 = vld [vmem:[%s1 + $0x4ac] sm:$0xf]
    %v335 = vld [vmem:[%s1 + $0x4b0] sm:$0xf]
    %v336 = vld [vmem:[%s1 + $0x4b4] sm:$0xf]
    %v337 = vld [vmem:[%s1 + $0x4b8] sm:$0xf]
    %v338 = vld [vmem:[%s1 + $0x4bc] sm:$0xf]
    %v339 = vld [vmem:[%s1 + $0x4c0] sm:$0xf]
    %v340 = vld [vmem:[%s1 + $0x4c4] sm:$0xf]
    %v341 = vld [vmem:[%s1 + $0x4c8] sm:$0xf]
    %v342 = vld [vmem:[%s1 + $0x4cc] sm:$0xf]
    %v343 = vld [vmem:[%s1 + $0x4d0] sm:$0xf]
    %v344 = vld [vmem:[%s1 + $0x4d4] sm:$0xf]
    %v345 = vld [vmem:[%s1 + $0x4d8] sm:$0xf]
    %v346 = vld [vmem:[%s1 + $0x4dc] sm:$0xf]
    %v347 = vld [vmem:[%s1 + $0x4e0] sm:$0xf]
    %v348 = vld [vmem:[%s1 + $0x4e4] sm:$0xf]
    %v349 = vld [vmem:[%s1 + $0x4e8] sm:$0xf]
    %v350 = vld [vmem:[%s1 + $0x4ec] sm:$0xf]
    %v351 = vld [vmem:[%s1 + $0x4f0] sm:$0xf]
    %v352 = vld [vmem:[%s1 + $0x4f4] sm:$0xf]
    %v353 = vld [vmem:[%s1 + $0x4f8] sm:$0xf]
    %v354 = vld [vmem:[%s1 + $0x4fc] sm:$0xf]
    %v355 = vld [vmem:[%s1 + $0x500] sm:$0xf]
    %v356 = vld [vmem:[%s1 + $0x504] sm:$0xf]
    %v357 = vld [vmem:[%s1 + $0x508] sm:$0xf]
    %v358 = vld [vmem:[%s1 + $0x50c] sm:$0xf]
    %v359 = vld [vmem:[%s1 + $0x510] sm:$0xf]
    %v360 = vld [vmem:[%s1 + $0x514] sm:$0xf]
    %v361 = vld [vmem:[%s1 + $0x518] sm:$0xf]
    %v362 = vld [vmem:[%s1 + $0x51c] sm:$0xf]
    %v363 = vld [vmem:[%s1 + $0x520] sm:$0xf]
    %v364 = vld [vmem:[%s1 + $0x524] sm:$0xf]
    %v365 = vld [vmem:[%s1 + $0x528] sm:$0xf]
    %v366 = vld [vmem:[%s1 + $0x52c] sm:$0xf]
    %v367 = vld [vmem:[%s1 + $0x530] sm:$0xf]
    %v368 = vld [vmem:[%s1 + $0x534] sm:$0xf]
    %v369 = vld [vmem:[%s1 + $0x538] sm:$0xf]
    %v370 = vld [vmem:[%s1 + $0x53c] sm:$0xf]
    %v371 = vld [vmem:[%s1 + $0x540] sm:$0xf]
    %v372 = vld [vmem:[%s1 + $0x544] sm:$0xf]
    %v373 = vld [vmem:[%s1 + $0x548] sm:$0xf]
    %v374 = vld [vmem:[%s1 + $0x54c] sm:$0xf]
    %v375 = vld [vmem:[%s1 + $0x550] sm:$0xf]
    %v376 = vld [vmem:[%s1 + $0x554] sm:$0xf]
    %v377 = vld [vmem:[%s1 + $0x558] sm:$0xf]
    %v378 = vld [vmem:[%s1 + $0x55c] sm:$0xf]
    %v379 = vld [vmem:[%s1 + $0x560] sm:$0xf]
    %v380 = vld [vmem:[%s1 + $0x564] sm:$0xf]
    %v381 = vld [vmem:[%s1 + $0x568] sm:$0xf]
    %v382 = vld [vmem:[%s1 + $0x56c] sm:$0xf]
    %v383 = vld [vmem:[%s1 + $0x570] sm:$0xf]
    %v384 = vld [vmem:[%s1 + $0x574] sm:$0xf]
    %v385 = vld [vmem:[%s1 + $0x578] sm:$0xf]
    %v386 = vld [vmem:[%s1 + $0x57c] sm:$0xf]
    %v387 = vld [vmem:[%s1 + $0x580] sm:$0xf]
    %v388 = vld [vmem:[%s1 + $0x584] sm:$0xf]
    %v389 = vld [vmem:[%s1 + $0x588] sm:$0xf]
    %v390 = vld [vmem:[%s1 + $0x58c] sm:$0xf]
    %v391 = vld [vmem:[%s1 + $0x590] sm:$0xf]
    %v392 = vld [vmem:[%s1 + $0x594] sm:$0xf]
    %v393 = vld [vmem:[%s1 + $0x598] sm:$0xf]
    %v394 = vld [vmem:[%s1 + $0x59c] sm:$0xf]
    %v395 = vld [vmem:[%s1 + $0x5a0] sm:$0xf]
    %v396 = vld [vmem:[%s1 + $0x5a4] sm:$0xf]
    %v397 = vld [vmem:[%s1 + $0x5a8] sm:$0xf]
    %v398 = vld [vmem:[%s1 + $0x5ac] sm:$0xf]
    %v399 = vld [vmem:[%s1 + $0x5b0] sm:$0xf]
    %v400 = vld [vmem:[%s1 + $0x5b4] sm:$0xf]
    %v401 = vld [vmem:[%s1 + $0x5b8] sm:$0xf]
    %v402 = vld [vmem:[%s1 + $0x5bc] sm:$0xf]
    %v403 = vld [vmem:[%s1 + $0x5c0] sm:$0xf]
    %v404 = vld [vmem:[%s1 + $0x5c4] sm:$0xf]
    %v405 = vld [vmem:[%s1 + $0x5c8] sm:$0xf]
    %v406 = vld [vmem:[%s1 + $0x5cc] sm:$0xf]
    %v407 = vld [vmem:[%s1 + $0x5d0] sm:$0xf]
    %v408 = vld [vmem:[%s1 + $0x5d4] sm:$0xf]
    %v409 = vld [vmem:[%s1 + $0x5d8] sm:$0xf]
    %v410 = vld [vmem:[%s1 + $0x5dc] sm:$0xf]
    %v411 = vld [vmem:[%s1 + $0x5e0] sm:$0xf]
    %v412 = vld [vmem:[%s1 + $0x5e4] sm:$0xf]
    %v413 = vld [vmem:[%s1 + $0x5e8] sm:$0xf]
    %v414 = vld [vmem:[%s1 + $0x5ec] sm:$0xf]
    %v415 = vld [vmem:[%s1 + $0x5f0] sm:$0xf]
    %v416 = vld [vmem:[%s1 + $0x5f4] sm:$0xf]
    %v417 = vld [vmem:[%s1 + $0x5f8] sm:$0xf]
    %v418 = vld [vmem:[%s1 + $0x5fc] sm:$0xf]
    %v419 = vld [vmem:[%s1 + $0x600] sm:$0xf]
    %v420 = vld [vmem:[%s1 + $0x604] sm:$0xf]
    %v421 = vld [vmem:[%s1 + $0x608] sm:$0xf]
    %v422 = vld [vmem:[%s1 + $0x60c] sm:$0xf]
    %v423 = vld [vmem:[%s1 + $0x610] sm:$0xf]
    %v424 = vld [vmem:[%s1 + $0x614] sm:$0xf]
    %v425 = vld [vmem:[%s1 + $0x618] sm:$0xf]
    %v426 = vld [vmem:[%s1 + $0x61c] sm:$0xf]
    %v427 = vld [vmem:[%s1 + $0x620] sm:$0xf]
    %v428 = vld [vmem:[%s1 + $0x624] sm:$0xf]
    %v429 = vld [vmem:[%s1 + $0x628] sm:$0xf]
    %v430 = vld [vmem:[%s1 + $0x62c] sm:$0xf]
    %v431 = vld [vmem:[%s1 + $0x630] sm:$0xf]
    %v432 = vld [vmem:[%s1 + $0x634] sm:$0xf]
    %v433 = vld [vmem:[%s1 + $0x638] sm:$0xf]
    %v434 = vld [vmem:[%s1 + $0x63c] sm:$0xf]
    %v435 = vld [vmem:[%s1 + $0x640] sm:$0xf]
    %v436 = vld [vmem:[%s1 + $0x644] sm:$0xf]
    %v437 = vld [vmem:[%s1 + $0x648] sm:$0xf]
    %v438 = vld [vmem:[%s1 + $0x64c] sm:$0xf]
    %v439 = vld [vmem:[%s1 + $0x650] sm:$0xf]
    %v440 = vld [vmem:[%s1 + $0x654] sm:$0xf]
    %v441 = vld [vmem:[%s1 + $0x658] sm:$0xf]
    %v442 = vld [vmem:[%s1 + $0x65c] sm:$0xf]
    %v443 = vld [vmem:[%s1 + $0x660] sm:$0xf]
    %v444 = vld [vmem:[%s1 + $0x664] sm:$0xf]
    %v445 = vld [vmem:[%s1 + $0x668] sm:$0xf]
    %v446 = vld [vmem:[%s1 + $0x66c] sm:$0xf]
    %v447 = vld [vmem:[%s1 + $0x670] sm:$0xf]
    %v448 = vld [vmem:[%s1 + $0x674] sm:$0xf]
    %v449 = vld [vmem:[%s1 + $0x678] sm:$0xf]
    %v450 = vld [vmem:[%s1 + $0x67c] sm:$0xf]
    %v451 = vld [vmem:[%s1 + $0x680] sm:$0xf]
    %v452 = vld [vmem:[%s1 + $0x684] sm:$0xf]
    %v453 = vld [vmem:[%s1 + $0x688] sm:$0xf]
    %v454 = vld [vmem:[%s1 + $0x68c] sm:$0xf]
    %v455 = vld [vmem:[%s1 + $0x690] sm:$0xf]
    %v456 = vld [vmem:[%s1 + $0x694] sm:$0xf]
    %v457 = vld [vmem:[%s1 + $0x698] sm:$0xf]
    %v458 = vld [vmem:[%s1 + $0x69c] sm:$0xf]
    %v459 = vld [vmem:[%s1 + $0x6a0] sm:$0xf]
    %v460 = vld [vmem:[%s1 + $0x6a4] sm:$0xf]
    %v461 = vld [vmem:[%s1 + $0x6a8] sm:$0xf]
    %v462 = vld [vmem:[%s1 + $0x6ac] sm:$0xf]
    %v463 = vld [vmem:[%s1 + $0x6b0] sm:$0xf]
    %v464 = vld [vmem:[%s1 + $0x6b4] sm:$0xf]
    %v465 = vld [vmem:[%s1 + $0x6b8] sm:$0xf]
    %v466 = vld [vmem:[%s1 + $0x6bc] sm:$0xf]
    %v467 = vld [vmem:[%s1 + $0x6c0] sm:$0xf]
    %v468 = vld [vmem:[%s1 + $0x6c4] sm:$0xf]
    %v469 = vld [vmem:[%s1 + $0x6c8] sm:$0xf]
    %v470 = vld [vmem:[%s1 + $0x6cc] sm:$0xf]
    %v471 = vld [vmem:[%s1 + $0x6d0] sm:$0xf]
    %v472 = vld [vmem:[%s1 + $0x6d4] sm:$0xf]
    %v473 = vld [vmem:[%s1 + $0x6d8] sm:$0xf]
    %v474 = vld [vmem:[%s1 + $0x6dc] sm:$0xf]
    %v475 = vld [vmem:[%s1 + $0x6e0] sm:$0xf]
    %v476 = vld [vmem:[%s1 + $0x6e4] sm:$0xf]
    %v477 = vld [vmem:[%s1 + $0x6e8] sm:$0xf]
    %v478 = vld [vmem:[%s1 + $0x6ec] sm:$0xf]
    %v479 = vld [vmem:[%s1 + $0x6f0] sm:$0xf]
    %v480 = vld [vmem:[%s1 + $0x6f4] sm:$0xf]
    %v481 = vld [vmem:[%s1 + $0x6f8] sm:$0xf]
    %v482 = vld [vmem:[%s1 + $0x6fc] sm:$0xf]
    %v483 = vld [vmem:[%s1 + $0x700] sm:$0xf]
    %v484 = vld [vmem:[%s1 + $0x704] sm:$0xf]
    %v485 = vld [vmem:[%s1 + $0x708] sm:$0xf]
    %v486 = vld [vmem:[%s1 + $0x70c] sm:$0xf]
    %v487 = vld [vmem:[%s1 + $0x710] sm:$0xf]
    %v488 = vld [vmem:[%s1 + $0x714] sm:$0xf]
    %v489 = vld [vmem:[%s1 + $0x718] sm:$0xf]
    %v490 = vld [vmem:[%s1 + $0x71c] sm:$0xf]
    %v491 = vld [vmem:[%s1 + $0x720] sm:$0xf]
    %v492 = vld [vmem:[%s1 + $0x724] sm:$0xf]
    %v493 = vld [vmem:[%s1 + $0x728] sm:$0xf]
    %v494 = vld [vmem:[%s1 + $0x72c] sm:$0xf]
    %v495 = vld [vmem:[%s1 + $0x730] sm:$0xf]
    %v496 = vld [vmem:[%s1 + $0x734] sm:$0xf]
    %v497 = vld [vmem:[%s1 + $0x738] sm:$0xf]
    %v498 = vld [vmem:[%s1 + $0x73c] sm:$0xf]
    %v499 = vld [vmem:[%s1 + $0x740] sm:$0xf]
    %v500 = vld [vmem:[%s1 + $0x744] sm:$0xf]
    %v501 = vld [vmem:[%s1 + $0x748] sm:$0xf]
    %v502 = vld [vmem:[%s1 + $0x74c] sm:$0xf]
    %v503 = vld [vmem:[%s1 + $0x750] sm:$0xf]
    %v504 = vld [vmem:[%s1 + $0x754] sm:$0xf]
    %v505 = vld [vmem:[%s1 + $0x758] sm:$0xf]
    %v506 = vld [vmem:[%s1 + $0x75c] sm:$0xf]
    %v507 = vld [vmem:[%s1 + $0x760] sm:$0xf]
    %v508 = vld [vmem:[%s1 + $0x764] sm:$0xf]
    %v509 = vld [vmem:[%s1 + $0x768] sm:$0xf]
    %v510 = vld [vmem:[%s1 + $0x76c] sm:$0xf]
    %v511 = vld [vmem:[%s1 + $0x770] sm:$0xf]
    %v512 = vld [vmem:[%s1 + $0x774] sm:$0xf]
    %v513 = vld [vmem:[%s1 + $0x778] sm:$0xf]
    %v514 = vld [vmem:[%s1 + $0x77c] sm:$0xf]
    %v515 = vld [vmem:[%s1 + $0x780] sm:$0xf]
    %v516 = vld [vmem:[%s1 + $0x784] sm:$0xf]
    %v517 = vld [vmem:[%s1 + $0x788] sm:$0xf]
    %v518 = vld [vmem:[%s1 + $0x78c] sm:$0xf]
    %v519 = vld [vmem:[%s1 + $0x790] sm:$0xf]
    %v520 = vld [vmem:[%s1 + $0x794] sm:$0xf]
    %v521 = vld [vmem:[%s1 + $0x798] sm:$0xf]
    %v522 = vld [vmem:[%s1 + $0x79c] sm:$0xf]
    %v523 = vld [vmem:[%s1 + $0x7a0] sm:$0xf]
    %v524 = vld [vmem:[%s1 + $0x7a4] sm:$0xf]
    %v525 = vld [vmem:[%s1 + $0x7a8] sm:$0xf]
    %v526 = vld [vmem:[%s1 + $0x7ac] sm:$0xf]
    %v527 = vld [vmem:[%s1 + $0x7b0] sm:$0xf]
    %v528 = vld [vmem:[%s1 + $0x7b4] sm:$0xf]
    %v529 = vld [vmem:[%s1 + $0x7b8] sm:$0xf]
    %v530 = vld [vmem:[%s1 + $0x7bc] sm:$0xf]
    %v531 = vld [vmem:[%s1 + $0x7c0] sm:$0xf]
    %v532 = vld [vmem:[%s1 + $0x7c4] sm:$0xf]
    %v533 = vld [vmem:[%s1 + $0x7c8] sm:$0xf]
    %v534 = vld [vmem:[%s1 + $0x7cc] sm:$0xf]
    %v535 = vld [vmem:[%s1 + $0x7d0] sm:$0xf]
    %v536 = vld [vmem:[%s1 + $0x7d4] sm:$0xf]
    %v537 = vld [vmem:[%s1 + $0x7d8] sm:$0xf]
    %v538 = vld [vmem:[%s1 + $0x7dc] sm:$0xf]
    %v539 = vld [vmem:[%s1 + $0x7e0] sm:$0xf]
    %v540 = vld [vmem:[%s1 + $0x7e4] sm:$0xf]
    %v541 = vld [vmem:[%s1 + $0x7e8] sm:$0xf]
    %v542 = vld [vmem:[%s1 + $0x7ec] sm:$0xf]
    %v543 = vld [vmem:[%s1 + $0x7f0] sm:$0xf]
    %v544 = vld [vmem:[%s1 + $0x7f4] sm:$0xf]
    %v545 = vld [vmem:[%s1 + $0x7f8] sm:$0xf]
    %v546 = vld [vmem:[%s1 + $0x7fc] sm:$0xf]
    %v547 = vld [vmem:[%s1 + $0x800] sm:$0xf]
    %v548 = vld [vmem:[%s1 + $0x804] sm:$0xf]
    %v549 = vld [vmem:[%s1 + $0x808] sm:$0xf]
    %v550 = vld [vmem:[%s1 + $0x80c] sm:$0xf]
    %v551 = vld [vmem:[%s1 + $0x810] sm:$0xf]
    %v552 = vld [vmem:[%s1 + $0x814] sm:$0xf]
    %v553 = vld [vmem:[%s1 + $0x818] sm:$0xf]
    %v554 = vld [vmem:[%s1 + $0x81c] sm:$0xf]
    %v555 = vld [vmem:[%s1 + $0x820] sm:$0xf]
    %v556 = vld [vmem:[%s1 + $0x824] sm:$0xf]
    %v557 = vld [vmem:[%s1 + $0x828] sm:$0xf]
    %v558 = vld [vmem:[%s1 + $0x82c] sm:$0xf]
    %v559 = vld [vmem:[%s1 + $0x830] sm:$0xf]
    %v560 = vld [vmem:[%s1 + $0x834] sm:$0xf]
    %v561 = vld [vmem:[%s1 + $0x838] sm:$0xf]
    %v562 = vld [vmem:[%s1 + $0x83c] sm:$0xf]
    %v563 = vld [vmem:[%s1 + $0x840] sm:$0xf]
    %v564 = vld [vmem:[%s1 + $0x844] sm:$0xf]
    %v565 = vld [vmem:[%s1 + $0x848] sm:$0xf]
    %v566 = vld [vmem:[%s1 + $0x84c] sm:$0xf]
    %v567 = vld [vmem:[%s1 + $0x850] sm:$0xf]
    %v568 = vld [vmem:[%s1 + $0x854] sm:$0xf]
    %v569 = vld [vmem:[%s1 + $0x858] sm:$0xf]
    %v570 = vld [vmem:[%s1 + $0x85c] sm:$0xf]
    %v571 = vld [vmem:[%s1 + $0x860] sm:$0xf]
    %v572 = vld [vmem:[%s1 + $0x864] sm:$0xf]
    %v573 = vld [vmem:[%s1 + $0x868] sm:$0xf]
    %v574 = vld [vmem:[%s1 + $0x86c] sm:$0xf]
    %v575 = vld [vmem:[%s1 + $0x870] sm:$0xf]
    %v576 = vld [vmem:[%s1 + $0x874] sm:$0xf]
    %v577 = vld [vmem:[%s1 + $0x878] sm:$0xf]
    %v578 = vld [vmem:[%s1 + $0x87c] sm:$0xf]
    %v579 = vld [vmem:[%s1 + $0x880] sm:$0xf]
    %v580 = vld [vmem:[%s1 + $0x884] sm:$0xf]
    %v581 = vld [vmem:[%s1 + $0x888] sm:$0xf]
    %v582 = vld [vmem:[%s1 + $0x88c] sm:$0xf]
    %v583 = vld [vmem:[%s1 + $0x890] sm:$0xf]
    %v584 = vld [vmem:[%s1 + $0x894] sm:$0xf]
    %v585 = vld [vmem:[%s1 + $0x898] sm:$0xf]
    %v586 = vld [vmem:[%s1 + $0x89c] sm:$0xf]
    %v587 = vld [vmem:[%s1 + $0x8a0] sm:$0xf]
    %v588 = vld [vmem:[%s1 + $0x8a4] sm:$0xf]
    %v589 = vld [vmem:[%s1 + $0x8a8] sm:$0xf]
    %v590 = vld [vmem:[%s1 + $0x8ac] sm:$0xf]
    %v591 = vld [vmem:[%s1 + $0x8b0] sm:$0xf]
    %v592 = vld [vmem:[%s1 + $0x8b4] sm:$0xf]
    %v593 = vld [vmem:[%s1 + $0x8b8] sm:$0xf]
    %v594 = vld [vmem:[%s1 + $0x8bc] sm:$0xf]
    %v595 = vld [vmem:[%s1 + $0x8c0] sm:$0xf]
    %v596 = vld [vmem:[%s1 + $0x8c4] sm:$0xf]
    %v597 = vld [vmem:[%s1 + $0x8c8] sm:$0xf]
    %v598 = vld [vmem:[%s1 + $0x8cc] sm:$0xf]
    %v599 = vld [vmem:[%s1 + $0x8d0] sm:$0xf]
    %v600 = vld [vmem:[%s1 + $0x8d4] sm:$0xf]
    %v601 = vld [vmem:[%s1 + $0x8d8] sm:$0xf]
    %v602 = vld [vmem:[%s1 + $0x8dc] sm:$0xf]
    %v603 = vld [vmem:[%s1 + $0x8e0] sm:$0xf]
    %v604 = vld [vmem:[%s1 + $0x8e4] sm:$0xf]
    %v605 = vld [vmem:[%s1 + $0x8e8] sm:$0xf]
    %v606 = vld [vmem:[%s1 + $0x8ec] sm:$0xf]
    %v607 = vld [vmem:[%s1 + $0x8f0] sm:$0xf]
    %v608 = vld [vmem:[%s1 + $0x8f4] sm:$0xf]
    %v609 = vld [vmem:[%s1 + $0x8f8] sm:$0xf]
    %v610 = vld [vmem:[%s1 + $0x8fc] sm:$0xf]
    %v611 = vld [vmem:[%s1 + $0x900] sm:$0xf]
    %v612 = vld [vmem:[%s1 + $0x904] sm:$0xf]
    %v613 = vld [vmem:[%s1 + $0x908] sm:$0xf]
    %v614 = vld [vmem:[%s1 + $0x90c] sm:$0xf]
    %v615 = vld [vmem:[%s1 + $0x910] sm:$0xf]
    %v616 = vld [vmem:[%s1 + $0x914] sm:$0xf]
    %v617 = vld [vmem:[%s1 + $0x918] sm:$0xf]
    %v618 = vld [vmem:[%s1 + $0x91c] sm:$0xf]
    %v619 = vld [vmem:[%s1 + $0x920] sm:$0xf]
    %v620 = vld [vmem:[%s1 + $0x924] sm:$0xf]
    %v621 = vld [vmem:[%s1 + $0x928] sm:$0xf]
    %v622 = vld [vmem:[%s1 + $0x92c] sm:$0xf]
    %v623 = vld [vmem:[%s1 + $0x930] sm:$0xf]
    %v624 = vld [vmem:[%s1 + $0x934] sm:$0xf]
    %v625 = vld [vmem:[%s1 + $0x938] sm:$0xf]
    %v626 = vld [vmem:[%s1 + $0x93c] sm:$0xf]
    %v627 = vld [vmem:[%s1 + $0x940] sm:$0xf]
    %v628 = vld [vmem:[%s1 + $0x944] sm:$0xf]
    %v629 = vld [vmem:[%s1 + $0x948] sm:$0xf]
    %v630 = vld [vmem:[%s1 + $0x94c] sm:$0xf]
    %v631 = vld [vmem:[%s1 + $0x950] sm:$0xf]
    %v632 = vld [vmem:[%s1 + $0x954] sm:$0xf]
    %v633 = vld [vmem:[%s1 + $0x958] sm:$0xf]
    %v634 = vld [vmem:[%s1 + $0x95c] sm:$0xf]
    %v635 = vld [vmem:[%s1 + $0x960] sm:$0xf]
    %v636 = vld [vmem:[%s1 + $0x964] sm:$0xf]
    %v637 = vld [vmem:[%s1 + $0x968] sm:$0xf]
    %v638 = vld [vmem:[%s1 + $0x96c] sm:$0xf]
    %v639 = vld [vmem:[%s1 + $0x970] sm:$0xf]
    %v640 = vld [vmem:[%s1 + $0x974] sm:$0xf]
    %v641 = vld [vmem:[%s1 + $0x978] sm:$0xf]
    %v642 = vld [vmem:[%s1 + $0x97c] sm:$0xf]
    %v643 = vld [vmem:[%s1 + $0x980] sm:$0xf]
    %v644 = vld [vmem:[%s1 + $0x984] sm:$0xf]
    %v645 = vld [vmem:[%s1 + $0x988] sm:$0xf]
    %v646 = vld [vmem:[%s1 + $0x98c] sm:$0xf]
    %v647 = vld [vmem:[%s1 + $0x990] sm:$0xf]
    %v648 = vld [vmem:[%s1 + $0x994] sm:$0xf]
    %v649 = vld [vmem:[%s1 + $0x998] sm:$0xf]
    %v650 = vld [vmem:[%s1 + $0x99c] sm:$0xf]
    %v651 = vld [vmem:[%s1 + $0x9a0] sm:$0xf]
    %v652 = vld [vmem:[%s1 + $0x9a4] sm:$0xf]
    %v653 = vld [vmem:[%s1 + $0x9a8] sm:$0xf]
    %v654 = vld [vmem:[%s1 + $0x9ac] sm:$0xf]
    %v655 = vld [vmem:[%s1 + $0x9b0] sm:$0xf]
    %v656 = vld [vmem:[%s1 + $0x9b4] sm:$0xf]
    %v657 = vld [vmem:[%s1 + $0x9b8] sm:$0xf]
    %v658 = vld [vmem:[%s1 + $0x9bc] sm:$0xf]
    %v659 = vld [vmem:[%s1 + $0x9c0] sm:$0xf]
    %v660 = vld [vmem:[%s1 + $0x9c4] sm:$0xf]
    %v661 = vld [vmem:[%s1 + $0x9c8] sm:$0xf]
    %v662 = vld [vmem:[%s1 + $0x9cc] sm:$0xf]
    %v663 = vld [vmem:[%s1 + $0x9d0] sm:$0xf]
    %v664 = vld [vmem:[%s1 + $0x9d4] sm:$0xf]
    %v665 = vld [vmem:[%s1 + $0x9d8] sm:$0xf]
    %v666 = vld [vmem:[%s1 + $0x9dc] sm:$0xf]
    %v667 = vld [vmem:[%s1 + $0x9e0] sm:$0xf]
    %v668 = vld [vmem:[%s1 + $0x9e4] sm:$0xf]
    %v669 = vld [vmem:[%s1 + $0x9e8] sm:$0xf]
    %v670 = vld [vmem:[%s1 + $0x9ec] sm:$0xf]
    %v671 = vld [vmem:[%s1 + $0x9f0] sm:$0xf]
    %v672 = vld [vmem:[%s1 + $0x9f4] sm:$0xf]
    %v673 = vld [vmem:[%s1 + $0x9f8] sm:$0xf]
    %v674 = vld [vmem:[%s1 + $0x9fc] sm:$0xf]
    %v675 = vld [vmem:[%s1 + $0xa00] sm:$0xf]
    %v676 = vld [vmem:[%s1 + $0xa04] sm:$0xf]
    %v677 = vld [vmem:[%s1 + $0xa08] sm:$0xf]
    %v678 = vld [vmem:[%s1 + $0xa0c] sm:$0xf]
    %v679 = vld [vmem:[%s1 + $0xa10] sm:$0xf]
    %v680 = vld [vmem:[%s1 + $0xa14] sm:$0xf]
    %v681 = vld [vmem:[%s1 + $0xa18] sm:$0xf]
    %v682 = vld [vmem:[%s1 + $0xa1c] sm:$0xf]
    %v683 = vld [vmem:[%s1 + $0xa20] sm:$0xf]
    %v684 = vld [vmem:[%s1 + $0xa24] sm:$0xf]
    %v685 = vld [vmem:[%s1 + $0xa28] sm:$0xf]
    %v686 = vld [vmem:[%s1 + $0xa2c] sm:$0xf]
    %v687 = vld [vmem:[%s1 + $0xa30] sm:$0xf]
    %v688 = vld [vmem:[%s1 + $0xa34] sm:$0xf]
    %v689 = vld [vmem:[%s1 + $0xa38] sm:$0xf]
    %v690 = vld [vmem:[%s1 + $0xa3c] sm:$0xf]
    %v691 = vld [vmem:[%s1 + $0xa40] sm:$0xf]
    %v692 = vld [vmem:[%s1 + $0xa44] sm:$0xf]
    %v693 = vld [vmem:[%s1 + $0xa48] sm:$0xf]
    %v694 = vld [vmem:[%s1 + $0xa4c] sm:$0xf]
    %v695 = vld [vmem:[%s1 + $0xa50] sm:$0xf]
    %v696 = vld [vmem:[%s1 + $0xa54] sm:$0xf]
    %v697 = vld [vmem:[%s1 + $0xa58] sm:$0xf]
    %v698 = vld [vmem:[%s1 + $0xa5c] sm:$0xf]
    %v699 = vld [vmem:[%s1 + $0xa60] sm:$0xf]
    %v700 = vld [vmem:[%s1 + $0xa64] sm:$0xf]
    %v701 = vld [vmem:[%s1 + $0xa68] sm:$0xf]
    %v702 = vld [vmem:[%s1 + $0xa6c] sm:$0xf]
    %v703 = vld [vmem:[%s1 + $0xa70] sm:$0xf]
    %v704 = vld [vmem:[%s1 + $0xa74] sm:$0xf]
    %v705 = vld [vmem:[%s1 + $0xa78] sm:$0xf]
    %v706 = vld [vmem:[%s1 + $0xa7c] sm:$0xf]
    %v707 = vld [vmem:[%s1 + $0xa80] sm:$0xf]
    %v708 = vld [vmem:[%s1 + $0xa84] sm:$0xf]
    %v709 = vld [vmem:[%s1 + $0xa88] sm:$0xf]
    %v710 = vld [vmem:[%s1 + $0xa8c] sm:$0xf]
    %v711 = vld [vmem:[%s1 + $0xa90] sm:$0xf]
    %v712 = vld [vmem:[%s1 + $0xa94] sm:$0xf]
    %v713 = vld [vmem:[%s1 + $0xa98] sm:$0xf]
    %v714 = vld [vmem:[%s1 + $0xa9c] sm:$0xf]
    %v715 = vld [vmem:[%s1 + $0xaa0] sm:$0xf]
    %v716 = vld [vmem:[%s1 + $0xaa4] sm:$0xf]
    %v717 = vld [vmem:[%s1 + $0xaa8] sm:$0xf]
    %v718 = vld [vmem:[%s1 + $0xaac] sm:$0xf]
    %v719 = vld [vmem:[%s1 + $0xab0] sm:$0xf]
    %v720 = vld [vmem:[%s1 + $0xab4] sm:$0xf]
    %v721 = vld [vmem:[%s1 + $0xab8] sm:$0xf]
    %v722 = vld [vmem:[%s1 + $0xabc] sm:$0xf]
    %v723 = vld [vmem:[%s1 + $0xac0] sm:$0xf]
    %v724 = vld [vmem:[%s1 + $0xac4] sm:$0xf]
    %v725 = vld [vmem:[%s1 + $0xac8] sm:$0xf]
    %v726 = vld [vmem:[%s1 + $0xacc] sm:$0xf]
    %v727 = vld [vmem:[%s1 + $0xad0] sm:$0xf]
    %v728 = vld [vmem:[%s1 + $0xad4] sm:$0xf]
    %v729 = vld [vmem:[%s1 + $0xad8] sm:$0xf]
    %v730 = vld [vmem:[%s1 + $0xadc] sm:$0xf]
    %v731 = vld [vmem:[%s1 + $0xae0] sm:$0xf]
    %v732 = vld [vmem:[%s1 + $0xae4] sm:$0xf]
    %v733 = vld [vmem:[%s1 + $0xae8] sm:$0xf]
    %v734 = vld [vmem:[%s1 + $0xaec] sm:$0xf]
    %v735 = vld [vmem:[%s1 + $0xaf0] sm:$0xf]
    %v736 = vld [vmem:[%s1 + $0xaf4] sm:$0xf]
    %v737 = vld [vmem:[%s1 + $0xaf8] sm:$0xf]
    %v738 = vld [vmem:[%s1 + $0xafc] sm:$0xf]
    %v739 = vld [vmem:[%s1 + $0xb00] sm:$0xf]
    %v740 = vld [vmem:[%s1 + $0xb04] sm:$0xf]
    %v741 = vld [vmem:[%s1 + $0xb08] sm:$0xf]
    %v742 = vld [vmem:[%s1 + $0xb0c] sm:$0xf]
    %v743 = vld [vmem:[%s1 + $0xb10] sm:$0xf]
    %v744 = vld [vmem:[%s1 + $0xb14] sm:$0xf]
    %v745 = vld [vmem:[%s1 + $0xb18] sm:$0xf]
    %v746 = vld [vmem:[%s1 + $0xb1c] sm:$0xf]
    %v747 = vld [vmem:[%s1 + $0xb20] sm:$0xf]
    %v748 = vld [vmem:[%s1 + $0xb24] sm:$0xf]
    %v749 = vld [vmem:[%s1 + $0xb28] sm:$0xf]
    %v750 = vld [vmem:[%s1 + $0xb2c] sm:$0xf]
    %v751 = vld [vmem:[%s1 + $0xb30] sm:$0xf]
    %v752 = vld [vmem:[%s1 + $0xb34] sm:$0xf]
    %v753 = vld [vmem:[%s1 + $0xb38] sm:$0xf]
    %v754 = vld [vmem:[%s1 + $0xb3c] sm:$0xf]
    %v755 = vld [vmem:[%s1 + $0xb40] sm:$0xf]
    %v756 = vld [vmem:[%s1 + $0xb44] sm:$0xf]
    %v757 = vld [vmem:[%s1 + $0xb48] sm:$0xf]
    %v758 = vld [vmem:[%s1 + $0xb4c] sm:$0xf]
    %v759 = vld [vmem:[%s1 + $0xb50] sm:$0xf]
    %v760 = vld [vmem:[%s1 + $0xb54] sm:$0xf]
    %v761 = vld [vmem:[%s1 + $0xb58] sm:$0xf]
    %v762 = vld [vmem:[%s1 + $0xb5c] sm:$0xf]
    %v763 = vld [vmem:[%s1 + $0xb60] sm:$0xf]
    %v764 = vld [vmem:[%s1 + $0xb64] sm:$0xf]
    %v765 = vld [vmem:[%s1 + $0xb68] sm:$0xf]
    %v766 = vld [vmem:[%s1 + $0xb6c] sm:$0xf]
    %v767 = vld [vmem:[%s1 + $0xb70] sm:$0xf]
    %v768 = vld [vmem:[%s1 + $0xb74] sm:$0xf]
    %v769 = vld [vmem:[%s1 + $0xb78] sm:$0xf]
    %v770 = vld [vmem:[%s1 + $0xb7c] sm:$0xf]
    %v771 = vld [vmem:[%s1 + $0xb80] sm:$0xf]
    %v772 = vld [vmem:[%s1 + $0xb84] sm:$0xf]
    %v773 = vld [vmem:[%s1 + $0xb88] sm:$0xf]
    %v774 = vld [vmem:[%s1 + $0xb8c] sm:$0xf]
    %v775 = vld [vmem:[%s1 + $0xb90] sm:$0xf]
    %v776 = vld [vmem:[%s1 + $0xb94] sm:$0xf]
    %v777 = vld [vmem:[%s1 + $0xb98] sm:$0xf]
    %v778 = vld [vmem:[%s1 + $0xb9c] sm:$0xf]
    %v779 = vld [vmem:[%s1 + $0xba0] sm:$0xf]
    %v780 = vld [vmem:[%s1 + $0xba4] sm:$0xf]
    %v781 = vld [vmem:[%s1 + $0xba8] sm:$0xf]
    %v782 = vld [vmem:[%s1 + $0xbac] sm:$0xf]
    %v783 = vld [vmem:[%s1 + $0xbb0] sm:$0xf]
    %v784 = vld [vmem:[%s1 + $0xbb4] sm:$0xf]
    %v785 = vld [vmem:[%s1 + $0xbb8] sm:$0xf]
    %v786 = vld [vmem:[%s1 + $0xbbc] sm:$0xf]
    %v787 = vld [vmem:[%s1 + $0xbc0] sm:$0xf]
    %v788 = vld [vmem:[%s1 + $0xbc4] sm:$0xf]
    %v789 = vld [vmem:[%s1 + $0xbc8] sm:$0xf]
    %v790 = vld [vmem:[%s1 + $0xbcc] sm:$0xf]
    %v791 = vld [vmem:[%s1 + $0xbd0] sm:$0xf]
    %v792 = vld [vmem:[%s1 + $0xbd4] sm:$0xf]
    %v793 = vld [vmem:[%s1 + $0xbd8] sm:$0xf]
    %v794 = vld [vmem:[%s1 + $0xbdc] sm:$0xf]
    %v795 = vld [vmem:[%s1 + $0xbe0] sm:$0xf]
    %v796 = vld [vmem:[%s1 + $0xbe4] sm:$0xf]
    %v797 = vld [vmem:[%s1 + $0xbe8] sm:$0xf]
    %v798 = vld [vmem:[%s1 + $0xbec] sm:$0xf]
    %v799 = vld [vmem:[%s1 + $0xbf0] sm:$0xf]
    %v800 = vld [vmem:[%s1 + $0xbf4] sm:$0xf]
    %v801 = vld [vmem:[%s1 + $0xbf8] sm:$0xf]
    %v802 = vld [vmem:[%s1 + $0xbfc] sm:$0xf]
    %v803 = vld [vmem:[%s1 + $0xc00] sm:$0xf]
    %v804 = vld [vmem:[%s1 + $0xc04] sm:$0xf]
    %v805 = vld [vmem:[%s1 + $0xc08] sm:$0xf]
    %v806 = vld [vmem:[%s1 + $0xc0c] sm:$0xf]
    %v807 = vld [vmem:[%s1 + $0xc10] sm:$0xf]
    %v808 = vld [vmem:[%s1 + $0xc14] sm:$0xf]
    %v809 = vld [vmem:[%s1 + $0xc18] sm:$0xf]
    %v810 = vld [vmem:[%s1 + $0xc1c] sm:$0xf]
    %v811 = vld [vmem:[%s1 + $0xc20] sm:$0xf]
    %v812 = vld [vmem:[%s1 + $0xc24] sm:$0xf]
    %v813 = vld [vmem:[%s1 + $0xc28] sm:$0xf]
    %v814 = vld [vmem:[%s1 + $0xc2c] sm:$0xf]
    %v815 = vld [vmem:[%s1 + $0xc30] sm:$0xf]
    %v816 = vld [vmem:[%s1 + $0xc34] sm:$0xf]
    %v817 = vld [vmem:[%s1 + $0xc38] sm:$0xf]
    %v818 = vld [vmem:[%s1 + $0xc3c] sm:$0xf]
    %v819 = vld [vmem:[%s1 + $0xc40] sm:$0xf]
    %v820 = vld [vmem:[%s1 + $0xc44] sm:$0xf]
    %v821 = vld [vmem:[%s1 + $0xc48] sm:$0xf]
    %v822 = vld [vmem:[%s1 + $0xc4c] sm:$0xf]
    %v823 = vld [vmem:[%s1 + $0xc50] sm:$0xf]
    %v824 = vld [vmem:[%s1 + $0xc54] sm:$0xf]
    %v825 = vld [vmem:[%s1 + $0xc58] sm:$0xf]
    %v826 = vld [vmem:[%s1 + $0xc5c] sm:$0xf]
    %v827 = vld [vmem:[%s1 + $0xc60] sm:$0xf]
    %v828 = vld [vmem:[%s1 + $0xc64] sm:$0xf]
    %v829 = vld [vmem:[%s1 + $0xc68] sm:$0xf]
    %v830 = vld [vmem:[%s1 + $0xc6c] sm:$0xf]
    %v831 = vld [vmem:[%s1 + $0xc70] sm:$0xf]
    %v832 = vld [vmem:[%s1 + $0xc74] sm:$0xf]
    %v833 = vld [vmem:[%s1 + $0xc78] sm:$0xf]
    %v834 = vld [vmem:[%s1 + $0xc7c] sm:$0xf]
    %v835 = vld [vmem:[%s1 + $0xc80] sm:$0xf]
    %v836 = vld [vmem:[%s1 + $0xc84] sm:$0xf]
    %v837 = vld [vmem:[%s1 + $0xc88] sm:$0xf]
    %v838 = vld [vmem:[%s1 + $0xc8c] sm:$0xf]
    %v839 = vld [vmem:[%s1 + $0xc90] sm:$0xf]
    %v840 = vld [vmem:[%s1 + $0xc94] sm:$0xf]
    %v841 = vld [vmem:[%s1 + $0xc98] sm:$0xf]
    %v842 = vld [vmem:[%s1 + $0xc9c] sm:$0xf]
    %v843 = vld [vmem:[%s1 + $0xca0] sm:$0xf]
    %v844 = vld [vmem:[%s1 + $0xca4] sm:$0xf]
    %v845 = vld [vmem:[%s1 + $0xca8] sm:$0xf]
    %v846 = vld [vmem:[%s1 + $0xcac] sm:$0xf]
    %v847 = vld [vmem:[%s1 + $0xcb0] sm:$0xf]
    %v848 = vld [vmem:[%s1 + $0xcb4] sm:$0xf]
    %v849 = vld [vmem:[%s1 + $0xcb8] sm:$0xf]
    %v850 = vld [vmem:[%s1 + $0xcbc] sm:$0xf]
    %v851 = vld [vmem:[%s1 + $0xcc0] sm:$0xf]
    %v852 = vld [vmem:[%s1 + $0xcc4] sm:$0xf]
    %v853 = vld [vmem:[%s1 + $0xcc8] sm:$0xf]
    %v854 = vld [vmem:[%s1 + $0xccc] sm:$0xf]
    %v855 = vld [vmem:[%s1 + $0xcd0] sm:$0xf]
    %v856 = vld [vmem:[%s1 + $0xcd4] sm:$0xf]
    %v857 = vld [vmem:[%s1 + $0xcd8] sm:$0xf]
    %v858 = vld [vmem:[%s1 + $0xcdc] sm:$0xf]
    %v859 = vld [vmem:[%s1 + $0xce0] sm:$0xf]
    %v860 = vld [vmem:[%s1 + $0xce4] sm:$0xf]
    %v861 = vld [vmem:[%s1 + $0xce8] sm:$0xf]
    %v862 = vld [vmem:[%s1 + $0xcec] sm:$0xf]
    %v863 = vld [vmem:[%s1 + $0xcf0] sm:$0xf]
    %v864 = vld [vmem:[%s1 + $0xcf4] sm:$0xf]
    %v865 = vld [vmem:[%s1 + $0xcf8] sm:$0xf]
    %v866 = vld [vmem:[%s1 + $0xcfc] sm:$0xf]
    %v867 = vld [vmem:[%s1 + $0xd00] sm:$0xf]
    %v868 = vld [vmem:[%s1 + $0xd04] sm:$0xf]
    %v869 = vld [vmem:[%s1 + $0xd08] sm:$0xf]
    %v870 = vld [vmem:[%s1 + $0xd0c] sm:$0xf]
    %v871 = vld [vmem:[%s1 + $0xd10] sm:$0xf]
    %v872 = vld [vmem:[%s1 + $0xd14] sm:$0xf]
    %v873 = vld [vmem:[%s1 + $0xd18] sm:$0xf]
    %v874 = vld [vmem:[%s1 + $0xd1c] sm:$0xf]
    %v875 = vld [vmem:[%s1 + $0xd20] sm:$0xf]
    %v876 = vld [vmem:[%s1 + $0xd24] sm:$0xf]
    %v877 = vld [vmem:[%s1 + $0xd28] sm:$0xf]
    %v878 = vld [vmem:[%s1 + $0xd2c] sm:$0xf]
    %v879 = vld [vmem:[%s1 + $0xd30] sm:$0xf]
    %v880 = vld [vmem:[%s1 + $0xd34] sm:$0xf]
    %v881 = vld [vmem:[%s1 + $0xd38] sm:$0xf]
    %v882 = vld [vmem:[%s1 + $0xd3c] sm:$0xf]
    %v883 = vld [vmem:[%s1 + $0xd40] sm:$0xf]
    %v884 = vld [vmem:[%s1 + $0xd44] sm:$0xf]
    %v885 = vld [vmem:[%s1 + $0xd48] sm:$0xf]
    %v886 = vld [vmem:[%s1 + $0xd4c] sm:$0xf]
    %v887 = vld [vmem:[%s1 + $0xd50] sm:$0xf]
    %v888 = vld [vmem:[%s1 + $0xd54] sm:$0xf]
    %v889 = vld [vmem:[%s1 + $0xd58] sm:$0xf]
    %v890 = vld [vmem:[%s1 + $0xd5c] sm:$0xf]
    %v891 = vld [vmem:[%s1 + $0xd60] sm:$0xf]
    %v892 = vld [vmem:[%s1 + $0xd64] sm:$0xf]
    %v893 = vld [vmem:[%s1 + $0xd68] sm:$0xf]
    %v894 = vld [vmem:[%s1 + $0xd6c] sm:$0xf]
    %v895 = vld [vmem:[%s1 + $0xd70] sm:$0xf]
    %v896 = vld [vmem:[%s1 + $0xd74] sm:$0xf]
    %v897 = vld [vmem:[%s1 + $0xd78] sm:$0xf]
    %v898 = vld [vmem:[%s1 + $0xd7c] sm:$0xf]
    %v899 = vld [vmem:[%s1 + $0xd80] sm:$0xf]
    %v900 = vld [vmem:[%s1 + $0xd84] sm:$0xf]
    %v901 = vld [vmem:[%s1 + $0xd88] sm:$0xf]
    %v902 = vld [vmem:[%s1 + $0xd8c] sm:$0xf]
    %v903 = vld [vmem:[%s1 + $0xd90] sm:$0xf]
    %v904 = vld [vmem:[%s1 + $0xd94] sm:$0xf]
    %v905 = vld [vmem:[%s1 + $0xd98] sm:$0xf]
    %v906 = vld [vmem:[%s1 + $0xd9c] sm:$0xf]
    %v907 = vld [vmem:[%s1 + $0xda0] sm:$0xf]
    %v908 = vld [vmem:[%s1 + $0xda4] sm:$0xf]
    %v909 = vld [vmem:[%s1 + $0xda8] sm:$0xf]
    %v910 = vld [vmem:[%s1 + $0xdac] sm:$0xf]
    %v911 = vld [vmem:[%s1 + $0xdb0] sm:$0xf]
    %v912 = vld [vmem:[%s1 + $0xdb4] sm:$0xf]
    %v913 = vld [vmem:[%s1 + $0xdb8] sm:$0xf]
    %v914 = vld [vmem:[%s1 + $0xdbc] sm:$0xf]
    %v915 = vld [vmem:[%s1 + $0xdc0] sm:$0xf]
    %v916 = vld [vmem:[%s1 + $0xdc4] sm:$0xf]
    %v917 = vld [vmem:[%s1 + $0xdc8] sm:$0xf]
    %v918 = vld [vmem:[%s1 + $0xdcc] sm:$0xf]
    %v919 = vld [vmem:[%s1 + $0xdd0] sm:$0xf]
    %v920 = vld [vmem:[%s1 + $0xdd4] sm:$0xf]
    %v921 = vld [vmem:[%s1 + $0xdd8] sm:$0xf]
    %v922 = vld [vmem:[%s1 + $0xddc] sm:$0xf]
    %v923 = vld [vmem:[%s1 + $0xde0] sm:$0xf]
    %v924 = vld [vmem:[%s1 + $0xde4] sm:$0xf]
    %v925 = vld [vmem:[%s1 + $0xde8] sm:$0xf]
    %v926 = vld [vmem:[%s1 + $0xdec] sm:$0xf]
    %v927 = vld [vmem:[%s1 + $0xdf0] sm:$0xf]
    %v928 = vld [vmem:[%s1 + $0xdf4] sm:$0xf]
    %v929 = vld [vmem:[%s1 + $0xdf8] sm:$0xf]
    %v930 = vld [vmem:[%s1 + $0xdfc] sm:$0xf]
    %v931 = vld [vmem:[%s1 + $0xe00] sm:$0xf]
    %v932 = vld [vmem:[%s1 + $0xe04] sm:$0xf]
    %v933 = vld [vmem:[%s1 + $0xe08] sm:$0xf]
    %v934 = vld [vmem:[%s1 + $0xe0c] sm:$0xf]
    %v935 = vld [vmem:[%s1 + $0xe10] sm:$0xf]
    %v936 = vld [vmem:[%s1 + $0xe14] sm:$0xf]
    %v937 = vld [vmem:[%s1 + $0xe18] sm:$0xf]
    %v938 = vld [vmem:[%s1 + $0xe1c] sm:$0xf]
    %v939 = vld [vmem:[%s1 + $0xe20] sm:$0xf]
    %v940 = vld [vmem:[%s1 + $0xe24] sm:$0xf]
    %v941 = vld [vmem:[%s1 + $0xe28] sm:$0xf]
    %v942 = vld [vmem:[%s1 + $0xe2c] sm:$0xf]
    %v943 = vld [vmem:[%s1 + $0xe30] sm:$0xf]
    %v944 = vld [vmem:[%s1 + $0xe34] sm:$0xf]
    %v945 = vld [vmem:[%s1 + $0xe38] sm:$0xf]
    %v946 = vld [vmem:[%s1 + $0xe3c] sm:$0xf]
    %v947 = vld [vmem:[%s1 + $0xe40] sm:$0xf]
    %v948 = vld [vmem:[%s1 + $0xe44] sm:$0xf]
    %v949 = vld [vmem:[%s1 + $0xe48] sm:$0xf]
    %v950 = vld [vmem:[%s1 + $0xe4c] sm:$0xf]
    %v951 = vld [vmem:[%s1 + $0xe50] sm:$0xf]
    %v952 = vld [vmem:[%s1 + $0xe54] sm:$0xf]
    %v953 = vld [vmem:[%s1 + $0xe58] sm:$0xf]
    %v954 = vld [vmem:[%s1 + $0xe5c] sm:$0xf]
    %v955 = vld [vmem:[%s1 + $0xe60] sm:$0xf]
    %v956 = vld [vmem:[%s1 + $0xe64] sm:$0xf]
    %v957 = vld [vmem:[%s1 + $0xe68] sm:$0xf]
    %v958 = vld [vmem:[%s1 + $0xe6c] sm:$0xf]
    %v959 = vld [vmem:[%s1 + $0xe70] sm:$0xf]
    %v960 = vld [vmem:[%s1 + $0xe74] sm:$0xf]
    %v961 = vld [vmem:[%s1 + $0xe78] sm:$0xf]
    %v962 = vld [vmem:[%s1 + $0xe7c] sm:$0xf]
    %v963 = vld [vmem:[%s1 + $0xe80] sm:$0xf]
    %v964 = vld [vmem:[%s1 + $0xe84] sm:$0xf]
    %v965 = vld [vmem:[%s1 + $0xe88] sm:$0xf]
    %v966 = vld [vmem:[%s1 + $0xe8c] sm:$0xf]
    %v967 = vld [vmem:[%s1 + $0xe90] sm:$0xf]
    %v968 = vld [vmem:[%s1 + $0xe94] sm:$0xf]
    %v969 = vld [vmem:[%s1 + $0xe98] sm:$0xf]
    %v970 = vld [vmem:[%s1 + $0xe9c] sm:$0xf]
    %v971 = vld [vmem:[%s1 + $0xea0] sm:$0xf]
    %v972 = vld [vmem:[%s1 + $0xea4] sm:$0xf]
    %v973 = vld [vmem:[%s1 + $0xea8] sm:$0xf]
    %v974 = vld [vmem:[%s1 + $0xeac] sm:$0xf]
    %v975 = vld [vmem:[%s1 + $0xeb0] sm:$0xf]
    %v976 = vld [vmem:[%s1 + $0xeb4] sm:$0xf]
    %v977 = vld [vmem:[%s1 + $0xeb8] sm:$0xf]
    %v978 = vld [vmem:[%s1 + $0xebc] sm:$0xf]
    %v979 = vld [vmem:[%s1 + $0xec0] sm:$0xf]
    %v980 = vld [vmem:[%s1 + $0xec4] sm:$0xf]
    %v981 = vld [vmem:[%s1 + $0xec8] sm:$0xf]
    %v982 = vld [vmem:[%s1 + $0xecc] sm:$0xf]
    %v983 = vld [vmem:[%s1 + $0xed0] sm:$0xf]
    %v984 = vld [vmem:[%s1 + $0xed4] sm:$0xf]
    %v985 = vld [vmem:[%s1 + $0xed8] sm:$0xf]
    %v986 = vld [vmem:[%s1 + $0xedc] sm:$0xf]
    %v987 = vld [vmem:[%s1 + $0xee0] sm:$0xf]
    %v988 = vld [vmem:[%s1 + $0xee4] sm:$0xf]
    %v989 = vld [vmem:[%s1 + $0xee8] sm:$0xf]
    %v990 = vld [vmem:[%s1 + $0xeec] sm:$0xf]
    %v991 = vld [vmem:[%s1 + $0xef0] sm:$0xf]
    %v992 = vld [vmem:[%s1 + $0xef4] sm:$0xf]
    %v993 = vld [vmem:[%s1 + $0xef8] sm:$0xf]
    %v994 = vld [vmem:[%s1 + $0xefc] sm:$0xf]
    %v995 = vld [vmem:[%s1 + $0xf00] sm:$0xf]
    %v996 = vld [vmem:[%s1 + $0xf04] sm:$0xf]
    %v997 = vld [vmem:[%s1 + $0xf08] sm:$0xf]
    %v998 = vld [vmem:[%s1 + $0xf0c] sm:$0xf]
    %v999 = vld [vmem:[%s1 + $0xf10] sm:$0xf]
    %v1000 = vld [vmem:[%s1 + $0xf14] sm:$0xf]
    %v1001 = vld [vmem:[%s1 + $0xf18] sm:$0xf]
    %v1002 = vld [vmem:[%s1 + $0xf1c] sm:$0xf]
    %v1003 = vld [vmem:[%s1 + $0xf20] sm:$0xf]
    %v1004 = vld [vmem:[%s1 + $0xf24] sm:$0xf]
    %v1005 = vld [vmem:[%s1 + $0xf28] sm:$0xf]
    %v1006 = vld [vmem:[%s1 + $0xf2c] sm:$0xf]
    %v1007 = vld [vmem:[%s1 + $0xf30] sm:$0xf]
    %v1008 = vld [vmem:[%s1 + $0xf34] sm:$0xf]
    %v1009 = vld [vmem:[%s1 + $0xf38] sm:$0xf]
    %v1010 = vld [vmem:[%s1 + $0xf3c] sm:$0xf]
    %v1011 = vld [vmem:[%s1 + $0xf40] sm:$0xf]
    %v1012 = vld [vmem:[%s1 + $0xf44] sm:$0xf]
    %v1013 = vld [vmem:[%s1 + $0xf48] sm:$0xf]
    %v1014 = vld [vmem:[%s1 + $0xf4c] sm:$0xf]
    %v1015 = vld [vmem:[%s1 + $0xf50] sm:$0xf]
    %v1016 = vld [vmem:[%s1 + $0xf54] sm:$0xf]
    %v1017 = vld [vmem:[%s1 + $0xf58] sm:$0xf]
    %v1018 = vld [vmem:[%s1 + $0xf5c] sm:$0xf]
    %v1019 = vld [vmem:[%s1 + $0xf60] sm:$0xf]
    %v1020 = vld [vmem:[%s1 + $0xf64] sm:$0xf]
    %v1021 = vld [vmem:[%s1 + $0xf68] sm:$0xf]
    %v1022 = vld [vmem:[%s1 + $0xf6c] sm:$0xf]
    %v1023 = vld [vmem:[%s1 + $0xf70] sm:$0xf]
    %v1024 = vld [vmem:[%s1 + $0xf74] sm:$0xf]
    %v1025 = vld [vmem:[%s1 + $0xf78] sm:$0xf]
    %v1026 = vld [vmem:[%s1 + $0xf7c] sm:$0xf]
    %v1027 = vld [vmem:[%s1 + $0xf80] sm:$0xf]
    %v1028 = vld [vmem:[%s1 + $0xf84] sm:$0xf]
    %v1029 = vld [vmem:[%s1 + $0xf88] sm:$0xf]
    %v1030 = vld [vmem:[%s1 + $0xf8c] sm:$0xf]
    %v1031 = vld [vmem:[%s1 + $0xf90] sm:$0xf]
    %v1032 = vld [vmem:[%s1 + $0xf94] sm:$0xf]
    %v1033 = vld [vmem:[%s1 + $0xf98] sm:$0xf]
    %v1034 = vld [vmem:[%s1 + $0xf9c] sm:$0xf]
    %v1035 = vld [vmem:[%s1 + $0xfa0] sm:$0xf]
    %v1036 = vld [vmem:[%s1 + $0xfa4] sm:$0xf]
    %v1037 = vld [vmem:[%s1 + $0xfa8] sm:$0xf]
    %v1038 = vld [vmem:[%s1 + $0xfac] sm:$0xf]
    %v1039 = vld [vmem:[%s1 + $0xfb0] sm:$0xf]
    %v1040 = vld [vmem:[%s1 + $0xfb4] sm:$0xf]
    %v1041 = vld [vmem:[%s1 + $0xfb8] sm:$0xf]
    %v1042 = vld [vmem:[%s1 + $0xfbc] sm:$0xf]
    %v1043 = vld [vmem:[%s1 + $0xfc0] sm:$0xf]
    %v1044 = vld [vmem:[%s1 + $0xfc4] sm:$0xf]
    %v1045 = vld [vmem:[%s1 + $0xfc8] sm:$0xf]
    %v1046 = vld [vmem:[%s1 + $0xfcc] sm:$0xf]
    %v1047 = vld [vmem:[%s1 + $0xfd0] sm:$0xf]
    %v1048 = vld [vmem:[%s1 + $0xfd4] sm:$0xf]
    %v1049 = vld [vmem:[%s1 + $0xfd8] sm:$0xf]
    %v1050 = vld [vmem:[%s1 + $0xfdc] sm:$0xf]
    %v1051 = vld [vmem:[%s1 + $0xfe0] sm:$0xf]
    %v1052 = vld [vmem:[%s1 + $0xfe4] sm:$0xf]
    %v1053 = vld [vmem:[%s1 + $0xfe8] sm:$0xf]
    %v1054 = vld [vmem:[%s1 + $0xfec] sm:$0xf]
    %v1055 = vld [vmem:[%s1 + $0xff0] sm:$0xf]
    %v1056 = vld [vmem:[%s1 + $0xff4] sm:$0xf]
    %v1057 = vld [vmem:[%s1 + $0xff8] sm:$0xf]
    %v1058 = vld [vmem:[%s1 + $0xffc] sm:$0xf]
    %v1059 = vld [vmem:[%s1 + $0x1000] sm:$0xf]
    %v1060 = vld [vmem:[%s1 + $0x1004] sm:$0xf]
    %v1061 = vld [vmem:[%s1 + $0x1008] sm:$0xf]
    %v1062 = vld [vmem:[%s1 + $0x100c] sm:$0xf]
    %v1063 = vld [vmem:[%s1 + $0x1010] sm:$0xf]
    %v1064 = vld [vmem:[%s1 + $0x1014] sm:$0xf]
    %v1065 = vld [vmem:[%s1 + $0x1018] sm:$0xf]
    %v1066 = vld [vmem:[%s1 + $0x101c] sm:$0xf]
    %v1067 = vld [vmem:[%s1 + $0x1020] sm:$0xf]
    %v1068 = vld [vmem:[%s1 + $0x1024] sm:$0xf]
    %v1069 = vld [vmem:[%s1 + $0x1028] sm:$0xf]
    %v1070 = vld [vmem:[%s1 + $0x102c] sm:$0xf]
    %v1071 = vld [vmem:[%s1 + $0x1030] sm:$0xf]
    %v1072 = vld [vmem:[%s1 + $0x1034] sm:$0xf]
    %v1073 = vld [vmem:[%s1 + $0x1038] sm:$0xf]
    %v1074 = vld [vmem:[%s1 + $0x103c] sm:$0xf]
    %v1075 = vld [vmem:[%s1 + $0x1040] sm:$0xf]
    %v1076 = vld [vmem:[%s1 + $0x1044] sm:$0xf]
    %v1077 = vld [vmem:[%s1 + $0x1048] sm:$0xf]
    %v1078 = vld [vmem:[%s1 + $0x104c] sm:$0xf]
    %v1079 = vld [vmem:[%s1 + $0x1050] sm:$0xf]
    %v1080 = vld [vmem:[%s1 + $0x1054] sm:$0xf]
    %v1081 = vld [vmem:[%s1 + $0x1058] sm:$0xf]
    %v1082 = vld [vmem:[%s1 + $0x105c] sm:$0xf]
    %v1083 = vld [vmem:[%s1 + $0x1060] sm:$0xf]
    %v1084 = vld [vmem:[%s1 + $0x1064] sm:$0xf]
    %v1085 = vld [vmem:[%s1 + $0x1068] sm:$0xf]
    %v1086 = vld [vmem:[%s1 + $0x106c] sm:$0xf]
    %v1087 = vld [vmem:[%s1 + $0x1070] sm:$0xf]
    %v1088 = vld [vmem:[%s1 + $0x1074] sm:$0xf]
    %v1089 = vld [vmem:[%s1 + $0x1078] sm:$0xf]
    %v1090 = vld [vmem:[%s1 + $0x107c] sm:$0xf]
    %v1091 = vld [vmem:[%s1 + $0x1080] sm:$0xf]
    %v1092 = vld [vmem:[%s1 + $0x1084] sm:$0xf]
    %v1093 = vld [vmem:[%s1 + $0x1088] sm:$0xf]
    %v1094 = vld [vmem:[%s1 + $0x108c] sm:$0xf]
    %v1095 = vld [vmem:[%s1 + $0x1090] sm:$0xf]
    %v1096 = vld [vmem:[%s1 + $0x1094] sm:$0xf]
    %v1097 = vld [vmem:[%s1 + $0x1098] sm:$0xf]
    %v1098 = vld [vmem:[%s1 + $0x109c] sm:$0xf]
    %v1099 = vld [vmem:[%s1 + $0x10a0] sm:$0xf]
    %v1100 = vld [vmem:[%s1 + $0x10a4] sm:$0xf]
    %v1101 = vld [vmem:[%s1 + $0x10a8] sm:$0xf]
    %v1102 = vld [vmem:[%s1 + $0x10ac] sm:$0xf]
    %v1103 = vld [vmem:[%s1 + $0x10b0] sm:$0xf]
    %v1104 = vld [vmem:[%s1 + $0x10b4] sm:$0xf]
    %v1105 = vld [vmem:[%s1 + $0x10b8] sm:$0xf]
    %v1106 = vld [vmem:[%s1 + $0x10bc] sm:$0xf]
    %v1107 = vld [vmem:[%s1 + $0x10c0] sm:$0xf]
    %v1108 = vld [vmem:[%s1 + $0x10c4] sm:$0xf]
    %v1109 = vld [vmem:[%s1 + $0x10c8] sm:$0xf]
    %v1110 = vld [vmem:[%s1 + $0x10cc] sm:$0xf]
    %v1111 = vld [vmem:[%s1 + $0x10d0] sm:$0xf]
    %v1112 = vld [vmem:[%s1 + $0x10d4] sm:$0xf]
    %v1113 = vld [vmem:[%s1 + $0x10d8] sm:$0xf]
    %v1114 = vld [vmem:[%s1 + $0x10dc] sm:$0xf]
    %v1115 = vld [vmem:[%s1 + $0x10e0] sm:$0xf]
    %v1116 = vld [vmem:[%s1 + $0x10e4] sm:$0xf]
    %v1117 = vld [vmem:[%s1 + $0x10e8] sm:$0xf]
    %v1118 = vld [vmem:[%s1 + $0x10ec] sm:$0xf]
    %v1119 = vld [vmem:[%s1 + $0x10f0] sm:$0xf]
    %v1120 = vld [vmem:[%s1 + $0x10f4] sm:$0xf]
    %v1121 = vld [vmem:[%s1 + $0x10f8] sm:$0xf]
    %v1122 = vld [vmem:[%s1 + $0x10fc] sm:$0xf]
    %v1123 = vld [vmem:[%s1 + $0x1100] sm:$0xf]
    %v1124 = vld [vmem:[%s1 + $0x1104] sm:$0xf]
    %v1125 = vld [vmem:[%s1 + $0x1108] sm:$0xf]
    %v1126 = vld [vmem:[%s1 + $0x110c] sm:$0xf]
    %v1127 = vld [vmem:[%s1 + $0x1110] sm:$0xf]
    %v1128 = vld [vmem:[%s1 + $0x1114] sm:$0xf]
    %v1129 = vld [vmem:[%s1 + $0x1118] sm:$0xf]
    %v1130 = vld [vmem:[%s1 + $0x111c] sm:$0xf]
    %v1131 = vld [vmem:[%s1 + $0x1120] sm:$0xf]
    %v1132 = vld [vmem:[%s1 + $0x1124] sm:$0xf]
    %v1133 = vld [vmem:[%s1 + $0x1128] sm:$0xf]
    %v1134 = vld [vmem:[%s1 + $0x112c] sm:$0xf]
    %v1135 = vld [vmem:[%s1 + $0x1130] sm:$0xf]
    %v1136 = vld [vmem:[%s1 + $0x1134] sm:$0xf]
    %v1137 = vld [vmem:[%s1 + $0x1138] sm:$0xf]
    %v1138 = vld [vmem:[%s1 + $0x113c] sm:$0xf]
    %v1139 = vld [vmem:[%s1 + $0x1140] sm:$0xf]
    %v1140 = vld [vmem:[%s1 + $0x1144] sm:$0xf]
    %v1141 = vld [vmem:[%s1 + $0x1148] sm:$0xf]
    %v1142 = vld [vmem:[%s1 + $0x114c] sm:$0xf]
    %v1143 = vld [vmem:[%s1 + $0x1150] sm:$0xf]
    %v1144 = vld [vmem:[%s1 + $0x1154] sm:$0xf]
    %v1145 = vld [vmem:[%s1 + $0x1158] sm:$0xf]
    %v1146 = vld [vmem:[%s1 + $0x115c] sm:$0xf]
    %v1147 = vld [vmem:[%s1 + $0x1160] sm:$0xf]
    %v1148 = vld [vmem:[%s1 + $0x1164] sm:$0xf]
    %v1149 = vld [vmem:[%s1 + $0x1168] sm:$0xf]
    %v1150 = vld [vmem:[%s1 + $0x116c] sm:$0xf]
    %v1151 = vld [vmem:[%s1 + $0x1170] sm:$0xf]
    %v1152 = vld [vmem:[%s1 + $0x1174] sm:$0xf]
    %v1153 = vld [vmem:[%s1 + $0x1178] sm:$0xf]
    %v1154 = vld [vmem:[%s1 + $0x117c] sm:$0xf]
    %v1155 = vld [vmem:[%s1 + $0x1180] sm:$0xf]
    %v1156 = vld [vmem:[%s1 + $0x1184] sm:$0xf]
    %v1157 = vld [vmem:[%s1 + $0x1188] sm:$0xf]
    %v1158 = vld [vmem:[%s1 + $0x118c] sm:$0xf]
    %v1159 = vld [vmem:[%s1 + $0x1190] sm:$0xf]
    %v1160 = vld [vmem:[%s1 + $0x1194] sm:$0xf]
    %v1161 = vld [vmem:[%s1 + $0x1198] sm:$0xf]
    %v1162 = vld [vmem:[%s1 + $0x119c] sm:$0xf]
    %v1163 = vld [vmem:[%s1 + $0x11a0] sm:$0xf]
    %v1164 = vld [vmem:[%s1 + $0x11a4] sm:$0xf]
    %v1165 = vld [vmem:[%s1 + $0x11a8] sm:$0xf]
    %v1166 = vld [vmem:[%s1 + $0x11ac] sm:$0xf]
    %v1167 = vld [vmem:[%s1 + $0x11b0] sm:$0xf]
    %v1168 = vld [vmem:[%s1 + $0x11b4] sm:$0xf]
    %v1169 = vld [vmem:[%s1 + $0x11b8] sm:$0xf]
    %v1170 = vld [vmem:[%s1 + $0x11bc] sm:$0xf]
    %v1171 = vld [vmem:[%s1 + $0x11c0] sm:$0xf]
    %v1172 = vld [vmem:[%s1 + $0x11c4] sm:$0xf]
    %v1173 = vld [vmem:[%s1 + $0x11c8] sm:$0xf]
    %v1174 = vld [vmem:[%s1 + $0x11cc] sm:$0xf]
    %v1175 = vld [vmem:[%s1 + $0x11d0] sm:$0xf]
    %v1176 = vld [vmem:[%s1 + $0x11d4] sm:$0xf]
    %v1177 = vld [vmem:[%s1 + $0x11d8] sm:$0xf]
    %v1178 = vld [vmem:[%s1 + $0x11dc] sm:$0xf]
    %v1179 = vld [vmem:[%s1 + $0x11e0] sm:$0xf]
    %v1180 = vld [vmem:[%s1 + $0x11e4] sm:$0xf]
    %v1181 = vld [vmem:[%s1 + $0x11e8] sm:$0xf]
    %v1182 = vld [vmem:[%s1 + $0x11ec] sm:$0xf]
    %v1183 = vld [vmem:[%s1 + $0x11f0] sm:$0xf]
    %v1184 = vld [vmem:[%s1 + $0x11f4] sm:$0xf]
    %v1185 = vld [vmem:[%s1 + $0x11f8] sm:$0xf]
    %v1186 = vld [vmem:[%s1 + $0x11fc] sm:$0xf]
    %v1187 = vld [vmem:[%s1 + $0x1200] sm:$0xf]
    %v1188 = vld [vmem:[%s1 + $0x1204] sm:$0xf]
    %v1189 = vld [vmem:[%s1 + $0x1208] sm:$0xf]
    %v1190 = vld [vmem:[%s1 + $0x120c] sm:$0xf]
    %v1191 = vld [vmem:[%s1 + $0x1210] sm:$0xf]
    %v1192 = vld [vmem:[%s1 + $0x1214] sm:$0xf]
    %v1193 = vld [vmem:[%s1 + $0x1218] sm:$0xf]
    %v1194 = vld [vmem:[%s1 + $0x121c] sm:$0xf]
    %v1195 = vld [vmem:[%s1 + $0x1220] sm:$0xf]
    %v1196 = vld [vmem:[%s1 + $0x1224] sm:$0xf]
    %v1197 = vld [vmem:[%s1 + $0x1228] sm:$0xf]
    %v1198 = vld [vmem:[%s1 + $0x122c] sm:$0xf]
    %v1199 = vld [vmem:[%s1 + $0x1230] sm:$0xf]
    %v1200 = vld [vmem:[%s1 + $0x1234] sm:$0xf]
    %v1201 = vld [vmem:[%s1 + $0x1238] sm:$0xf]
    %v1202 = vld [vmem:[%s1 + $0x123c] sm:$0xf]
    %v1203 = vld [vmem:[%s1 + $0x1240] sm:$0xf]
    %v1204 = vld [vmem:[%s1 + $0x1244] sm:$0xf]
    %v1205 = vld [vmem:[%s1 + $0x1248] sm:$0xf]
    %v1206 = vld [vmem:[%s1 + $0x124c] sm:$0xf]
    %v1207 = vld [vmem:[%s1 + $0x1250] sm:$0xf]
    %v1208 = vld [vmem:[%s1 + $0x1254] sm:$0xf]
    %v1209 = vld [vmem:[%s1 + $0x1258] sm:$0xf]
    %v1210 = vld [vmem:[%s1 + $0x125c] sm:$0xf]
    %v1211 = vld [vmem:[%s1 + $0x1260] sm:$0xf]
    %v1212 = vld [vmem:[%s1 + $0x1264] sm:$0xf]
    %v1213 = vld [vmem:[%s1 + $0x1268] sm:$0xf]
    %v1214 = vld [vmem:[%s1 + $0x126c] sm:$0xf]
    %v1215 = vld [vmem:[%s1 + $0x1270] sm:$0xf]
    %v1216 = vld [vmem:[%s1 + $0x1274] sm:$0xf]
    %v1217 = vld [vmem:[%s1 + $0x1278] sm:$0xf]
    %v1218 = vld [vmem:[%s1 + $0x127c] sm:$0xf]
    %v1219 = vld [vmem:[%s1 + $0x1280] sm:$0xf]
    %v1220 = vld [vmem:[%s1 + $0x1284] sm:$0xf]
    %v1221 = vld [vmem:[%s1 + $0x1288] sm:$0xf]
    %v1222 = vld [vmem:[%s1 + $0x128c] sm:$0xf]
    %v1223 = vld [vmem:[%s1 + $0x1290] sm:$0xf]
    %v1224 = vld [vmem:[%s1 + $0x1294] sm:$0xf]
    %v1225 = vld [vmem:[%s1 + $0x1298] sm:$0xf]
    %v1226 = vld [vmem:[%s1 + $0x129c] sm:$0xf]
    %v1227 = vld [vmem:[%s1 + $0x12a0] sm:$0xf]
    %v1228 = vld [vmem:[%s1 + $0x12a4] sm:$0xf]
    %v1229 = vld [vmem:[%s1 + $0x12a8] sm:$0xf]
    %v1230 = vld [vmem:[%s1 + $0x12ac] sm:$0xf]
    %v1231 = vld [vmem:[%s1 + $0x12b0] sm:$0xf]
    %v1232 = vld [vmem:[%s1 + $0x12b4] sm:$0xf]
    %v1233 = vld [vmem:[%s1 + $0x12b8] sm:$0xf]
    %v1234 = vld [vmem:[%s1 + $0x12bc] sm:$0xf]
    %v1235 = vld [vmem:[%s1 + $0x12c0] sm:$0xf]
    %v1236 = vld [vmem:[%s1 + $0x12c4] sm:$0xf]
    %v1237 = vld [vmem:[%s1 + $0x12c8] sm:$0xf]
    %v1238 = vld [vmem:[%s1 + $0x12cc] sm:$0xf]
    %v1239 = vld [vmem:[%s1 + $0x12d0] sm:$0xf]
    %v1240 = vld [vmem:[%s1 + $0x12d4] sm:$0xf]
    %v1241 = vld [vmem:[%s1 + $0x12d8] sm:$0xf]
    %v1242 = vld [vmem:[%s1 + $0x12dc] sm:$0xf]
    %v1243 = vld [vmem:[%s1 + $0x12e0] sm:$0xf]
    %v1244 = vld [vmem:[%s1 + $0x12e4] sm:$0xf]
    %v1245 = vld [vmem:[%s1 + $0x12e8] sm:$0xf]
    %v1246 = vld [vmem:[%s1 + $0x12ec] sm:$0xf]
    %v1247 = vld [vmem:[%s1 + $0x12f0] sm:$0xf]
    %v1248 = vld [vmem:[%s1 + $0x12f4] sm:$0xf]
    %v1249 = vld [vmem:[%s1 + $0x12f8] sm:$0xf]
    %v1250 = vld [vmem:[%s1 + $0x12fc] sm:$0xf]
    %v1251 = vld [vmem:[%s1 + $0x1300] sm:$0xf]
    %v1252 = vld [vmem:[%s1 + $0x1304] sm:$0xf]
    %v1253 = vld [vmem:[%s1 + $0x1308] sm:$0xf]
    %v1254 = vld [vmem:[%s1 + $0x130c] sm:$0xf]
    %v1255 = vld [vmem:[%s1 + $0x1310] sm:$0xf]
    %v1256 = vld [vmem:[%s1 + $0x1314] sm:$0xf]
    %v1257 = vld [vmem:[%s1 + $0x1318] sm:$0xf]
    %v1258 = vld [vmem:[%s1 + $0x131c] sm:$0xf]
    %v1259 = vld [vmem:[%s1 + $0x1320] sm:$0xf]
    %v1260 = vld [vmem:[%s1 + $0x1324] sm:$0xf]
    %v1261 = vld [vmem:[%s1 + $0x1328] sm:$0xf]
    %v1262 = vld [vmem:[%s1 + $0x132c] sm:$0xf]
    %v1263 = vld [vmem:[%s1 + $0x1330] sm:$0xf]
    %v1264 = vld [vmem:[%s1 + $0x1334] sm:$0xf]
    %v1265 = vld [vmem:[%s1 + $0x1338] sm:$0xf]
    %v1266 = vld [vmem:[%s1 + $0x133c] sm:$0xf]
    %v1267 = vld [vmem:[%s1 + $0x1340] sm:$0xf]
    %v1268 = vld [vmem:[%s1 + $0x1344] sm:$0xf]
    %v1269 = vld [vmem:[%s1 + $0x1348] sm:$0xf]
    %v1270 = vld [vmem:[%s1 + $0x134c] sm:$0xf]
    %v1271 = vld [vmem:[%s1 + $0x1350] sm:$0xf]
    %v1272 = vld [vmem:[%s1 + $0x1354] sm:$0xf]
    %v1273 = vld [vmem:[%s1 + $0x1358] sm:$0xf]
    %v1274 = vld [vmem:[%s1 + $0x135c] sm:$0xf]
    %v1275 = vld [vmem:[%s1 + $0x1360] sm:$0xf]
    %v1276 = vld [vmem:[%s1 + $0x1364] sm:$0xf]
    %v1277 = vld [vmem:[%s1 + $0x1368] sm:$0xf]
    %v1278 = vld [vmem:[%s1 + $0x136c] sm:$0xf]
    %v1279 = vld [vmem:[%s1 + $0x1370] sm:$0xf]
    %v1280 = vld [vmem:[%s1 + $0x1374] sm:$0xf]
    %v1281 = vld [vmem:[%s1 + $0x1378] sm:$0xf]
    %v1282 = vld [vmem:[%s1 + $0x137c] sm:$0xf]
    %v1283 = vld [vmem:[%s1 + $0x1380] sm:$0xf]
    %v1284 = vld [vmem:[%s1 + $0x1384] sm:$0xf]
    %v1285 = vld [vmem:[%s1 + $0x1388] sm:$0xf]
    %v1286 = vld [vmem:[%s1 + $0x138c] sm:$0xf]
    %v1287 = vld [vmem:[%s1 + $0x1390] sm:$0xf]
    %v1288 = vld [vmem:[%s1 + $0x1394] sm:$0xf]
    %v1289 = vld [vmem:[%s1 + $0x1398] sm:$0xf]
    %v1290 = vld [vmem:[%s1 + $0x139c] sm:$0xf]
    %v1291 = vld [vmem:[%s1 + $0x13a0] sm:$0xf]
    %v1292 = vld [vmem:[%s1 + $0x13a4] sm:$0xf]
    %v1293 = vld [vmem:[%s1 + $0x13a8] sm:$0xf]
    %v1294 = vld [vmem:[%s1 + $0x13ac] sm:$0xf]
    %v1295 = vld [vmem:[%s1 + $0x13b0] sm:$0xf]
    %v1296 = vld [vmem:[%s1 + $0x13b4] sm:$0xf]
    %v1297 = vld [vmem:[%s1 + $0x13b8] sm:$0xf]
    %v1298 = vld [vmem:[%s1 + $0x13bc] sm:$0xf]
    %v1299 = vld [vmem:[%s1 + $0x13c0] sm:$0xf]
    %v1300 = vld [vmem:[%s1 + $0x13c4] sm:$0xf]
    %v1301 = vld [vmem:[%s1 + $0x13c8] sm:$0xf]
    %v1302 = vld [vmem:[%s1 + $0x13cc] sm:$0xf]
    %v1303 = vld [vmem:[%s1 + $0x13d0] sm:$0xf]
    %v1304 = vld [vmem:[%s1 + $0x13d4] sm:$0xf]
    %v1305 = vld [vmem:[%s1 + $0x13d8] sm:$0xf]
    %v1306 = vld [vmem:[%s1 + $0x13dc] sm:$0xf]
    %v1307 = vld [vmem:[%s1 + $0x13e0] sm:$0xf]
    %v1308 = vld [vmem:[%s1 + $0x13e4] sm:$0xf]
    %v1309 = vld [vmem:[%s1 + $0x13e8] sm:$0xf]
    %v1310 = vld [vmem:[%s1 + $0x13ec] sm:$0xf]
    %v1311 = vld [vmem:[%s1 + $0x13f0] sm:$0xf]
    %v1312 = vld [vmem:[%s1 + $0x13f4] sm:$0xf]
    %v1313 = vld [vmem:[%s1 + $0x13f8] sm:$0xf]
    %v1314 = vld [vmem:[%s1 + $0x13fc] sm:$0xf]
    %v1315 = vld [vmem:[%s1 + $0x1400] sm:$0xf]
    %v1316 = vld [vmem:[%s1 + $0x1404] sm:$0xf]
    %v1317 = vld [vmem:[%s1 + $0x1408] sm:$0xf]
    %v1318 = vld [vmem:[%s1 + $0x140c] sm:$0xf]
    %v1319 = vld [vmem:[%s1 + $0x1410] sm:$0xf]
    %v1320 = vld [vmem:[%s1 + $0x1414] sm:$0xf]
    %v1321 = vld [vmem:[%s1 + $0x1418] sm:$0xf]
    %v1322 = vld [vmem:[%s1 + $0x141c] sm:$0xf]
    %v1323 = vld [vmem:[%s1 + $0x1420] sm:$0xf]
    %v1324 = vld [vmem:[%s1 + $0x1424] sm:$0xf]
    %v1325 = vld [vmem:[%s1 + $0x1428] sm:$0xf]
    %v1326 = vld [vmem:[%s1 + $0x142c] sm:$0xf]
    %v1327 = vld [vmem:[%s1 + $0x1430] sm:$0xf]
    %v1328 = vld [vmem:[%s1 + $0x1434] sm:$0xf]
    %v1329 = vld [vmem:[%s1 + $0x1438] sm:$0xf]
    %v1330 = vld [vmem:[%s1 + $0x143c] sm:$0xf]
    %v1331 = vld [vmem:[%s1 + $0x1440] sm:$0xf]
    %v1332 = vld [vmem:[%s1 + $0x1444] sm:$0xf]
    %v1333 = vld [vmem:[%s1 + $0x1448] sm:$0xf]
    %v1334 = vld [vmem:[%s1 + $0x144c] sm:$0xf]
    %v1335 = vld [vmem:[%s1 + $0x1450] sm:$0xf]
    %v1336 = vld [vmem:[%s1 + $0x1454] sm:$0xf]
    %v1337 = vld [vmem:[%s1 + $0x1458] sm:$0xf]
    %v1338 = vld [vmem:[%s1 + $0x145c] sm:$0xf]
    %v1339 = vld [vmem:[%s1 + $0x1460] sm:$0xf]
    %v1340 = vld [vmem:[%s1 + $0x1464] sm:$0xf]
    %v1341 = vld [vmem:[%s1 + $0x1468] sm:$0xf]
    %v1342 = vld [vmem:[%s1 + $0x146c] sm:$0xf]
    %v1343 = vld [vmem:[%s1 + $0x1470] sm:$0xf]
    %v1344 = vld [vmem:[%s1 + $0x1474] sm:$0xf]
    %v1345 = vld [vmem:[%s1 + $0x1478] sm:$0xf]
    %v1346 = vld [vmem:[%s1 + $0x147c] sm:$0xf]
    %v1347 = vld [vmem:[%s1 + $0x1480] sm:$0xf]
    %v1348 = vld [vmem:[%s1 + $0x1484] sm:$0xf]
    %v1349 = vld [vmem:[%s1 + $0x1488] sm:$0xf]
    %v1350 = vld [vmem:[%s1 + $0x148c] sm:$0xf]
    %v1351 = vld [vmem:[%s1 + $0x1490] sm:$0xf]
    %v1352 = vld [vmem:[%s1 + $0x1494] sm:$0xf]
    %v1353 = vld [vmem:[%s1 + $0x1498] sm:$0xf]
    %v1354 = vld [vmem:[%s1 + $0x149c] sm:$0xf]
    %v1355 = vld [vmem:[%s1 + $0x14a0] sm:$0xf]
    %v1356 = vld [vmem:[%s1 + $0x14a4] sm:$0xf]
    %v1357 = vld [vmem:[%s1 + $0x14a8] sm:$0xf]
    %v1358 = vld [vmem:[%s1 + $0x14ac] sm:$0xf]
    %v1359 = vld [vmem:[%s1 + $0x14b0] sm:$0xf]
    %v1360 = vld [vmem:[%s1 + $0x14b4] sm:$0xf]
    %v1361 = vld [vmem:[%s1 + $0x14b8] sm:$0xf]
    %v1362 = vld [vmem:[%s1 + $0x14bc] sm:$0xf]
    %v1363 = vld [vmem:[%s1 + $0x14c0] sm:$0xf]
    %v1364 = vld [vmem:[%s1 + $0x14c4] sm:$0xf]
    %v1365 = vld [vmem:[%s1 + $0x14c8] sm:$0xf]
    %v1366 = vld [vmem:[%s1 + $0x14cc] sm:$0xf]
    %v1367 = vld [vmem:[%s1 + $0x14d0] sm:$0xf]
    %v1368 = vld [vmem:[%s1 + $0x14d4] sm:$0xf]
    %v1369 = vld [vmem:[%s1 + $0x14d8] sm:$0xf]
    %v1370 = vld [vmem:[%s1 + $0x14dc] sm:$0xf]
    %v1371 = vld [vmem:[%s1 + $0x14e0] sm:$0xf]
    %v1372 = vld [vmem:[%s1 + $0x14e4] sm:$0xf]
    %v1373 = vld [vmem:[%s1 + $0x14e8] sm:$0xf]
    %v1374 = vld [vmem:[%s1 + $0x14ec] sm:$0xf]
    %v1375 = vld [vmem:[%s1 + $0x14f0] sm:$0xf]
    %v1376 = vld [vmem:[%s1 + $0x14f4] sm:$0xf]
    %v1377 = vld [vmem:[%s1 + $0x14f8] sm:$0xf]
    %v1378 = vld [vmem:[%s1 + $0x14fc] sm:$0xf]
    %v1379 = vld [vmem:[%s1 + $0x1500] sm:$0xf]
    %v1380 = vld [vmem:[%s1 + $0x1504] sm:$0xf]
    %v1381 = vld [vmem:[%s1 + $0x1508] sm:$0xf]
    %v1382 = vld [vmem:[%s1 + $0x150c] sm:$0xf]
    %v1383 = vld [vmem:[%s1 + $0x1510] sm:$0xf]
    %v1384 = vld [vmem:[%s1 + $0x1514] sm:$0xf]
    %v1385 = vld [vmem:[%s1 + $0x1518] sm:$0xf]
    %v1386 = vld [vmem:[%s1 + $0x151c] sm:$0xf]
    %v1387 = vld [vmem:[%s1 + $0x1520] sm:$0xf]
    %v1388 = vld [vmem:[%s1 + $0x1524] sm:$0xf]
    %v1389 = vld [vmem:[%s1 + $0x1528] sm:$0xf]
    %v1390 = vld [vmem:[%s1 + $0x152c] sm:$0xf]
    %v1391 = vld [vmem:[%s1 + $0x1530] sm:$0xf]
    %v1392 = vld [vmem:[%s1 + $0x1534] sm:$0xf]
    %v1393 = vld [vmem:[%s1 + $0x1538] sm:$0xf]
    %v1394 = vld [vmem:[%s1 + $0x153c] sm:$0xf]
    %v1395 = vld [vmem:[%s1 + $0x1540] sm:$0xf]
    %v1396 = vld [vmem:[%s1 + $0x1544] sm:$0xf]
    %v1397 = vld [vmem:[%s1 + $0x1548] sm:$0xf]
    %v1398 = vld [vmem:[%s1 + $0x154c] sm:$0xf]
    %v1399 = vld [vmem:[%s1 + $0x1550] sm:$0xf]
    %v1400 = vld [vmem:[%s1 + $0x1554] sm:$0xf]
    %v1401 = vld [vmem:[%s1 + $0x1558] sm:$0xf]
    %v1402 = vld [vmem:[%s1 + $0x155c] sm:$0xf]
    %v1403 = vld [vmem:[%s1 + $0x1560] sm:$0xf]
    %v1404 = vld [vmem:[%s1 + $0x1564] sm:$0xf]
    %v1405 = vld [vmem:[%s1 + $0x1568] sm:$0xf]
    %v1406 = vld [vmem:[%s1 + $0x156c] sm:$0xf]
    %v1407 = vld [vmem:[%s1 + $0x1570] sm:$0xf]
    %v1408 = vld [vmem:[%s1 + $0x1574] sm:$0xf]
    %v1409 = vld [vmem:[%s1 + $0x1578] sm:$0xf]
    %v1410 = vld [vmem:[%s1 + $0x157c] sm:$0xf]
    %v1411 = vld [vmem:[%s1 + $0x1580] sm:$0xf]
    %v1412 = vld [vmem:[%s1 + $0x1584] sm:$0xf]
    %v1413 = vld [vmem:[%s1 + $0x1588] sm:$0xf]
    %v1414 = vld [vmem:[%s1 + $0x158c] sm:$0xf]
    %v1415 = vld [vmem:[%s1 + $0x1590] sm:$0xf]
    %v1416 = vld [vmem:[%s1 + $0x1594] sm:$0xf]
    %v1417 = vld [vmem:[%s1 + $0x1598] sm:$0xf]
    %v1418 = vld [vmem:[%s1 + $0x159c] sm:$0xf]
    %v1419 = vld [vmem:[%s1 + $0x15a0] sm:$0xf]
    %v1420 = vld [vmem:[%s1 + $0x15a4] sm:$0xf]
    %v1421 = vld [vmem:[%s1 + $0x15a8] sm:$0xf]
    %v1422 = vld [vmem:[%s1 + $0x15ac] sm:$0xf]
    %v1423 = vld [vmem:[%s1 + $0x15b0] sm:$0xf]
    %v1424 = vld [vmem:[%s1 + $0x15b4] sm:$0xf]
    %v1425 = vld [vmem:[%s1 + $0x15b8] sm:$0xf]
    %v1426 = vld [vmem:[%s1 + $0x15bc] sm:$0xf]
    %v1427 = vld [vmem:[%s1 + $0x15c0] sm:$0xf]
    %v1428 = vld [vmem:[%s1 + $0x15c4] sm:$0xf]
    %v1429 = vld [vmem:[%s1 + $0x15c8] sm:$0xf]
    %v1430 = vld [vmem:[%s1 + $0x15cc] sm:$0xf]
    %v1431 = vld [vmem:[%s1 + $0x15d0] sm:$0xf]
    %v1432 = vld [vmem:[%s1 + $0x15d4] sm:$0xf]
    %v1433 = vld [vmem:[%s1 + $0x15d8] sm:$0xf]
    %v1434 = vld [vmem:[%s1 + $0x15dc] sm:$0xf]
    %v1435 = vld [vmem:[%s1 + $0x15e0] sm:$0xf]
    %v1436 = vld [vmem:[%s1 + $0x15e4] sm:$0xf]
    %v1437 = vld [vmem:[%s1 + $0x15e8] sm:$0xf]
    %v1438 = vld [vmem:[%s1 + $0x15ec] sm:$0xf]
    %v1439 = vld [vmem:[%s1 + $0x15f0] sm:$0xf]
    %v1440 = vld [vmem:[%s1 + $0x15f4] sm:$0xf]
    %v1441 = vld [vmem:[%s1 + $0x15f8] sm:$0xf]
    %v1442 = vld [vmem:[%s1 + $0x15fc] sm:$0xf]
    %v1443 = vld [vmem:[%s1 + $0x1600] sm:$0xf]
    %v1444 = vld [vmem:[%s1 + $0x1604] sm:$0xf]
    %v1445 = vld [vmem:[%s1 + $0x1608] sm:$0xf]
    %v1446 = vld [vmem:[%s1 + $0x160c] sm:$0xf]
    %v1447 = vld [vmem:[%s1 + $0x1610] sm:$0xf]
    %v1448 = vld [vmem:[%s1 + $0x1614] sm:$0xf]
    %v1449 = vld [vmem:[%s1 + $0x1618] sm:$0xf]
    %v1450 = vld [vmem:[%s1 + $0x161c] sm:$0xf]
    %v1451 = vld [vmem:[%s1 + $0x1620] sm:$0xf]
    %v1452 = vld [vmem:[%s1 + $0x1624] sm:$0xf]
    %v1453 = vld [vmem:[%s1 + $0x1628] sm:$0xf]
    %v1454 = vld [vmem:[%s1 + $0x162c] sm:$0xf]
    %v1455 = vld [vmem:[%s1 + $0x1630] sm:$0xf]
    %v1456 = vld [vmem:[%s1 + $0x1634] sm:$0xf]
    %v1457 = vld [vmem:[%s1 + $0x1638] sm:$0xf]
    %v1458 = vld [vmem:[%s1 + $0x163c] sm:$0xf]
    %v1459 = vld [vmem:[%s1 + $0x1640] sm:$0xf]
    %v1460 = vld [vmem:[%s1 + $0x1644] sm:$0xf]
    %v1461 = vld [vmem:[%s1 + $0x1648] sm:$0xf]
    %v1462 = vld [vmem:[%s1 + $0x164c] sm:$0xf]
    %v1463 = vld [vmem:[%s1 + $0x1650] sm:$0xf]
    %v1464 = vld [vmem:[%s1 + $0x1654] sm:$0xf]
    %v1465 = vld [vmem:[%s1 + $0x1658] sm:$0xf]
    %v1466 = vld [vmem:[%s1 + $0x165c] sm:$0xf]
    %v1467 = vld [vmem:[%s1 + $0x1660] sm:$0xf]
    %v1468 = vld [vmem:[%s1 + $0x1664] sm:$0xf]
    %v1469 = vld [vmem:[%s1 + $0x1668] sm:$0xf]
    %v1470 = vld [vmem:[%s1 + $0x166c] sm:$0xf]
    %v1471 = vld [vmem:[%s1 + $0x1670] sm:$0xf]
    %v1472 = vld [vmem:[%s1 + $0x1674] sm:$0xf]
    %v1473 = vld [vmem:[%s1 + $0x1678] sm:$0xf]
    %v1474 = vld [vmem:[%s1 + $0x167c] sm:$0xf]
    %v1475 = vld [vmem:[%s1 + $0x1680] sm:$0xf]
    %v1476 = vld [vmem:[%s1 + $0x1684] sm:$0xf]
    %v1477 = vld [vmem:[%s1 + $0x1688] sm:$0xf]
    %v1478 = vld [vmem:[%s1 + $0x168c] sm:$0xf]
    %v1479 = vld [vmem:[%s1 + $0x1690] sm:$0xf]
    %v1480 = vld [vmem:[%s1 + $0x1694] sm:$0xf]
    %v1481 = vld [vmem:[%s1 + $0x1698] sm:$0xf]
    %v1482 = vld [vmem:[%s1 + $0x169c] sm:$0xf]
    %v1483 = vld [vmem:[%s1 + $0x16a0] sm:$0xf]
    %v1484 = vld [vmem:[%s1 + $0x16a4] sm:$0xf]
    %v1485 = vld [vmem:[%s1 + $0x16a8] sm:$0xf]
    %v1486 = vld [vmem:[%s1 + $0x16ac] sm:$0xf]
    %v1487 = vld [vmem:[%s1 + $0x16b0] sm:$0xf]
    %v1488 = vld [vmem:[%s1 + $0x16b4] sm:$0xf]
    %v1489 = vld [vmem:[%s1 + $0x16b8] sm:$0xf]
    %v1490 = vld [vmem:[%s1 + $0x16bc] sm:$0xf]
    %v1491 = vld [vmem:[%s1 + $0x16c0] sm:$0xf]
    %v1492 = vld [vmem:[%s1 + $0x16c4] sm:$0xf]
    %v1493 = vld [vmem:[%s1 + $0x16c8] sm:$0xf]
    %v1494 = vld [vmem:[%s1 + $0x16cc] sm:$0xf]
    %v1495 = vld [vmem:[%s1 + $0x16d0] sm:$0xf]
    %v1496 = vld [vmem:[%s1 + $0x16d4] sm:$0xf]
    %v1497 = vld [vmem:[%s1 + $0x16d8] sm:$0xf]
    %v1498 = vld [vmem:[%s1 + $0x16dc] sm:$0xf]
    %v1499 = vld [vmem:[%s1 + $0x16e0] sm:$0xf]
    %v1500 = vld [vmem:[%s1 + $0x16e4] sm:$0xf]
    %v1501 = vld [vmem:[%s1 + $0x16e8] sm:$0xf]
    %v1502 = vld [vmem:[%s1 + $0x16ec] sm:$0xf]
    %v1503 = vld [vmem:[%s1 + $0x16f0] sm:$0xf]
    %v1504 = vld [vmem:[%s1 + $0x16f4] sm:$0xf]
    %v1505 = vld [vmem:[%s1 + $0x16f8] sm:$0xf]
    %v1506 = vld [vmem:[%s1 + $0x16fc] sm:$0xf]
    %v1507 = vld [vmem:[%s1 + $0x1700] sm:$0xf]
    %v1508 = vld [vmem:[%s1 + $0x1704] sm:$0xf]
    %v1509 = vld [vmem:[%s1 + $0x1708] sm:$0xf]
    %v1510 = vld [vmem:[%s1 + $0x170c] sm:$0xf]
    %v1511 = vld [vmem:[%s1 + $0x1710] sm:$0xf]
    %v1512 = vld [vmem:[%s1 + $0x1714] sm:$0xf]
    %v1513 = vld [vmem:[%s1 + $0x1718] sm:$0xf]
    %v1514 = vld [vmem:[%s1 + $0x171c] sm:$0xf]
    %v1515 = vld [vmem:[%s1 + $0x1720] sm:$0xf]
    %v1516 = vld [vmem:[%s1 + $0x1724] sm:$0xf]
    %v1517 = vld [vmem:[%s1 + $0x1728] sm:$0xf]
    %v1518 = vld [vmem:[%s1 + $0x172c] sm:$0xf]
    %v1519 = vld [vmem:[%s1 + $0x1730] sm:$0xf]
    %v1520 = vld [vmem:[%s1 + $0x1734] sm:$0xf]
    %v1521 = vld [vmem:[%s1 + $0x1738] sm:$0xf]
    %v1522 = vld [vmem:[%s1 + $0x173c] sm:$0xf]
    %v1523 = vld [vmem:[%s1 + $0x1740] sm:$0xf]
    %v1524 = vld [vmem:[%s1 + $0x1744] sm:$0xf]
    %v1525 = vld [vmem:[%s1 + $0x1748] sm:$0xf]
    %v1526 = vld [vmem:[%s1 + $0x174c] sm:$0xf]
    %v1527 = vld [vmem:[%s1 + $0x1750] sm:$0xf]
    %v1528 = vld [vmem:[%s1 + $0x1754] sm:$0xf]
    %v1529 = vld [vmem:[%s1 + $0x1758] sm:$0xf]
    %v1530 = vld [vmem:[%s1 + $0x175c] sm:$0xf]
    %v1531 = vld [vmem:[%s1 + $0x1760] sm:$0xf]
    %v1532 = vld [vmem:[%s1 + $0x1764] sm:$0xf]
    %v1533 = vld [vmem:[%s1 + $0x1768] sm:$0xf]
    %v1534 = vld [vmem:[%s1 + $0x176c] sm:$0xf]
    %v1535 = vld [vmem:[%s1 + $0x1770] sm:$0xf]
    %v1536 = vld [vmem:[%s1 + $0x1774] sm:$0xf]
    %v1537 = vld [vmem:[%s1 + $0x1778] sm:$0xf]
    %v1538 = vld [vmem:[%s1 + $0x177c] sm:$0xf]
    %v1539 = vld [vmem:[%s1 + $0x1780] sm:$0xf]
    %v1540 = vld [vmem:[%s1 + $0x1784] sm:$0xf]
    %v1541 = vld [vmem:[%s1 + $0x1788] sm:$0xf]
    %v1542 = vld [vmem:[%s1 + $0x178c] sm:$0xf]
    %v1543 = vld [vmem:[%s1 + $0x1790] sm:$0xf]
    %v1544 = vld [vmem:[%s1 + $0x1794] sm:$0xf]
    %v1545 = vld [vmem:[%s1 + $0x1798] sm:$0xf]
    %v1546 = vld [vmem:[%s1 + $0x179c] sm:$0xf]
    %v1547 = vld [vmem:[%s1 + $0x17a0] sm:$0xf]
    %v1548 = vld [vmem:[%s1 + $0x17a4] sm:$0xf]
    %v1549 = vld [vmem:[%s1 + $0x17a8] sm:$0xf]
    %v1550 = vld [vmem:[%s1 + $0x17ac] sm:$0xf]
    %v1551 = vld [vmem:[%s1 + $0x17b0] sm:$0xf]
    %v1552 = vld [vmem:[%s1 + $0x17b4] sm:$0xf]
    %v1553 = vld [vmem:[%s1 + $0x17b8] sm:$0xf]
    %v1554 = vld [vmem:[%s1 + $0x17bc] sm:$0xf]
    %v1555 = vld [vmem:[%s1 + $0x17c0] sm:$0xf]
    %v1556 = vld [vmem:[%s1 + $0x17c4] sm:$0xf]
    %v1557 = vld [vmem:[%s1 + $0x17c8] sm:$0xf]
    %v1558 = vld [vmem:[%s1 + $0x17cc] sm:$0xf]
    %v1559 = vld [vmem:[%s1 + $0x17d0] sm:$0xf]
    %v1560 = vld [vmem:[%s1 + $0x17d4] sm:$0xf]
    %v1561 = vld [vmem:[%s1 + $0x17d8] sm:$0xf]
    %v1562 = vld [vmem:[%s1 + $0x17dc] sm:$0xf]
    %v1563 = vld [vmem:[%s1 + $0x17e0] sm:$0xf]
    %v1564 = vld [vmem:[%s1 + $0x17e4] sm:$0xf]
    %v1565 = vld [vmem:[%s1 + $0x17e8] sm:$0xf]
    %v1566 = vld [vmem:[%s1 + $0x17ec] sm:$0xf]
    %v1567 = vld [vmem:[%s1 + $0x17f0] sm:$0xf]
    %v1568 = vld [vmem:[%s1 + $0x17f4] sm:$0xf]
    %v1569 = vld [vmem:[%s1 + $0x17f8] sm:$0xf]
    %v1570 = vld [vmem:[%s1 + $0x17fc] sm:$0xf]
    %v1571 = vld [vmem:[%s1 + $0x1800] sm:$0xf]
    %v1572 = vld [vmem:[%s1 + $0x1804] sm:$0xf]
    %v1573 = vld [vmem:[%s1 + $0x1808] sm:$0xf]
    %v1574 = vld [vmem:[%s1 + $0x180c] sm:$0xf]
    %v1575 = vld [vmem:[%s1 + $0x1810] sm:$0xf]
    %v1576 = vld [vmem:[%s1 + $0x1814] sm:$0xf]
    %v1577 = vld [vmem:[%s1 + $0x1818] sm:$0xf]
    %v1578 = vld [vmem:[%s1 + $0x181c] sm:$0xf]
    %v1579 = vld [vmem:[%s1 + $0x1820] sm:$0xf]
    %v1580 = vld [vmem:[%s1 + $0x1824] sm:$0xf]
    %v1581 = vld [vmem:[%s1 + $0x1828] sm:$0xf]
    %v1582 = vld [vmem:[%s1 + $0x182c] sm:$0xf]
    %v1583 = vld [vmem:[%s1 + $0x1830] sm:$0xf]
    %v1584 = vld [vmem:[%s1 + $0x1834] sm:$0xf]
    %v1585 = vld [vmem:[%s1 + $0x1838] sm:$0xf]
    %v1586 = vld [vmem:[%s1 + $0x183c] sm:$0xf]
    %v1587 = vld [vmem:[%s1 + $0x1840] sm:$0xf]
    %v1588 = vld [vmem:[%s1 + $0x1844] sm:$0xf]
    %v1589 = vld [vmem:[%s1 + $0x1848] sm:$0xf]
    %v1590 = vld [vmem:[%s1 + $0x184c] sm:$0xf]
    %v1591 = vld [vmem:[%s1 + $0x1850] sm:$0xf]
    %v1592 = vld [vmem:[%s1 + $0x1854] sm:$0xf]
    %v1593 = vld [vmem:[%s1 + $0x1858] sm:$0xf]
    %v1594 = vld [vmem:[%s1 + $0x185c] sm:$0xf]
    %v1595 = vld [vmem:[%s1 + $0x1860] sm:$0xf]
    %v1596 = vld [vmem:[%s1 + $0x1864] sm:$0xf]
    %v1597 = vld [vmem:[%s1 + $0x1868] sm:$0xf]
    %v1598 = vld [vmem:[%s1 + $0x186c] sm:$0xf]
    %v1599 = vld [vmem:[%s1 + $0x1870] sm:$0xf]
    %v1600 = vld [vmem:[%s1 + $0x1874] sm:$0xf]
    %v1601 = vld [vmem:[%s1 + $0x1878] sm:$0xf]
    %v1602 = vld [vmem:[%s1 + $0x187c] sm:$0xf]
    %v1603 = vld [vmem:[%s1 + $0x1880] sm:$0xf]
    %v1604 = vld [vmem:[%s1 + $0x1884] sm:$0xf]
    %v1605 = vld [vmem:[%s1 + $0x1888] sm:$0xf]
    %v1606 = vld [vmem:[%s1 + $0x188c] sm:$0xf]
    %v1607 = vld [vmem:[%s1 + $0x1890] sm:$0xf]
    %v1608 = vld [vmem:[%s1 + $0x1894] sm:$0xf]
    %v1609 = vld [vmem:[%s1 + $0x1898] sm:$0xf]
    %v1610 = vld [vmem:[%s1 + $0x189c] sm:$0xf]
    %v1611 = vld [vmem:[%s1 + $0x18a0] sm:$0xf]
    %v1612 = vld [vmem:[%s1 + $0x18a4] sm:$0xf]
    %v1613 = vld [vmem:[%s1 + $0x18a8] sm:$0xf]
    %v1614 = vld [vmem:[%s1 + $0x18ac] sm:$0xf]
    %v1615 = vld [vmem:[%s1 + $0x18b0] sm:$0xf]
    %v1616 = vld [vmem:[%s1 + $0x18b4] sm:$0xf]
    %v1617 = vld [vmem:[%s1 + $0x18b8] sm:$0xf]
    %v1618 = vld [vmem:[%s1 + $0x18bc] sm:$0xf]
    %v1619 = vld [vmem:[%s1 + $0x18c0] sm:$0xf]
    %v1620 = vld [vmem:[%s1 + $0x18c4] sm:$0xf]
    %v1621 = vld [vmem:[%s1 + $0x18c8] sm:$0xf]
    %v1622 = vld [vmem:[%s1 + $0x18cc] sm:$0xf]
    %v1623 = vld [vmem:[%s1 + $0x18d0] sm:$0xf]
    %v1624 = vld [vmem:[%s1 + $0x18d4] sm:$0xf]
    %v1625 = vld [vmem:[%s1 + $0x18d8] sm:$0xf]
    %v1626 = vld [vmem:[%s1 + $0x18dc] sm:$0xf]
    %v1627 = vld [vmem:[%s1 + $0x18e0] sm:$0xf]
    %v1628 = vld [vmem:[%s1 + $0x18e4] sm:$0xf]
    %v1629 = vld [vmem:[%s1 + $0x18e8] sm:$0xf]
    %v1630 = vld [vmem:[%s1 + $0x18ec] sm:$0xf]
    %v1631 = vld [vmem:[%s1 + $0x18f0] sm:$0xf]
    %v1632 = vld [vmem:[%s1 + $0x18f4] sm:$0xf]
    %v1633 = vld [vmem:[%s1 + $0x18f8] sm:$0xf]
    %v1634 = vld [vmem:[%s1 + $0x18fc] sm:$0xf]
    %v1635 = vld [vmem:[%s1 + $0x1900] sm:$0xf]
    %v1636 = vld [vmem:[%s1 + $0x1904] sm:$0xf]
    %v1637 = vld [vmem:[%s1 + $0x1908] sm:$0xf]
    %v1638 = vld [vmem:[%s1 + $0x190c] sm:$0xf]
    %v1639 = vld [vmem:[%s1 + $0x1910] sm:$0xf]
    %v1640 = vld [vmem:[%s1 + $0x1914] sm:$0xf]
    %v1641 = vld [vmem:[%s1 + $0x1918] sm:$0xf]
    %v1642 = vld [vmem:[%s1 + $0x191c] sm:$0xf]
    %v1643 = vld [vmem:[%s1 + $0x1920] sm:$0xf]
    %v1644 = vld [vmem:[%s1 + $0x1924] sm:$0xf]
    %v1645 = vld [vmem:[%s1 + $0x1928] sm:$0xf]
    %v1646 = vld [vmem:[%s1 + $0x192c] sm:$0xf]
    %v1647 = vld [vmem:[%s1 + $0x1930] sm:$0xf]
    %v1648 = vld [vmem:[%s1 + $0x1934] sm:$0xf]
    %v1649 = vld [vmem:[%s1 + $0x1938] sm:$0xf]
    %v1650 = vld [vmem:[%s1 + $0x193c] sm:$0xf]
    %v1651 = vld [vmem:[%s1 + $0x1940] sm:$0xf]
    %v1652 = vld [vmem:[%s1 + $0x1944] sm:$0xf]
    %v1653 = vld [vmem:[%s1 + $0x1948] sm:$0xf]
    %v1654 = vld [vmem:[%s1 + $0x194c] sm:$0xf]
    %v1655 = vld [vmem:[%s1 + $0x1950] sm:$0xf]
    %v1656 = vld [vmem:[%s1 + $0x1954] sm:$0xf]
    %v1657 = vld [vmem:[%s1 + $0x1958] sm:$0xf]
    %v1658 = vld [vmem:[%s1 + $0x195c] sm:$0xf]
    %v1659 = vld [vmem:[%s1 + $0x1960] sm:$0xf]
    %v1660 = vld [vmem:[%s1 + $0x1964] sm:$0xf]
    %v1661 = vld [vmem:[%s1 + $0x1968] sm:$0xf]
    %v1662 = vld [vmem:[%s1 + $0x196c] sm:$0xf]
    %v1663 = vld [vmem:[%s1 + $0x1970] sm:$0xf]
    %v1664 = vld [vmem:[%s1 + $0x1974] sm:$0xf]
    %v1665 = vld [vmem:[%s1 + $0x1978] sm:$0xf]
    %v1666 = vld [vmem:[%s1 + $0x197c] sm:$0xf]
    %v1667 = vld [vmem:[%s1 + $0x1980] sm:$0xf]
    %v1668 = vld [vmem:[%s1 + $0x1984] sm:$0xf]
    %v1669 = vld [vmem:[%s1 + $0x1988] sm:$0xf]
    %v1670 = vld [vmem:[%s1 + $0x198c] sm:$0xf]
    %v1671 = vld [vmem:[%s1 + $0x1990] sm:$0xf]
    %v1672 = vld [vmem:[%s1 + $0x1994] sm:$0xf]
    %v1673 = vld [vmem:[%s1 + $0x1998] sm:$0xf]
    %v1674 = vld [vmem:[%s1 + $0x199c] sm:$0xf]
    %v1675 = vld [vmem:[%s1 + $0x19a0] sm:$0xf]
    %v1676 = vld [vmem:[%s1 + $0x19a4] sm:$0xf]
    %v1677 = vld [vmem:[%s1 + $0x19a8] sm:$0xf]
    %v1678 = vld [vmem:[%s1 + $0x19ac] sm:$0xf]
    %v1679 = vld [vmem:[%s1 + $0x19b0] sm:$0xf]
    %v1680 = vld [vmem:[%s1 + $0x19b4] sm:$0xf]
    %v1681 = vld [vmem:[%s1 + $0x19b8] sm:$0xf]
    %v1682 = vld [vmem:[%s1 + $0x19bc] sm:$0xf]
    %v1683 = vld [vmem:[%s1 + $0x19c0] sm:$0xf]
    %v1684 = vld [vmem:[%s1 + $0x19c4] sm:$0xf]
    %v1685 = vld [vmem:[%s1 + $0x19c8] sm:$0xf]
    %v1686 = vld [vmem:[%s1 + $0x19cc] sm:$0xf]
    %v1687 = vld [vmem:[%s1 + $0x19d0] sm:$0xf]
    %v1688 = vld [vmem:[%s1 + $0x19d4] sm:$0xf]
    %v1689 = vld [vmem:[%s1 + $0x19d8] sm:$0xf]
    %v1690 = vld [vmem:[%s1 + $0x19dc] sm:$0xf]
    %v1691 = vld [vmem:[%s1 + $0x19e0] sm:$0xf]
    %v1692 = vld [vmem:[%s1 + $0x19e4] sm:$0xf]
    %v1693 = vld [vmem:[%s1 + $0x19e8] sm:$0xf]
    %v1694 = vld [vmem:[%s1 + $0x19ec] sm:$0xf]
    %v1695 = vld [vmem:[%s1 + $0x19f0] sm:$0xf]
    %v1696 = vld [vmem:[%s1 + $0x19f4] sm:$0xf]
    %v1697 = vld [vmem:[%s1 + $0x19f8] sm:$0xf]
    %v1698 = vld [vmem:[%s1 + $0x19fc] sm:$0xf]
    %v1699 = vld [vmem:[%s1 + $0x1a00] sm:$0xf]
    %v1700 = vld [vmem:[%s1 + $0x1a04] sm:$0xf]
    %v1701 = vld [vmem:[%s1 + $0x1a08] sm:$0xf]
    %v1702 = vld [vmem:[%s1 + $0x1a0c] sm:$0xf]
    %v1703 = vld [vmem:[%s1 + $0x1a10] sm:$0xf]
    %v1704 = vld [vmem:[%s1 + $0x1a14] sm:$0xf]
    %v1705 = vld [vmem:[%s1 + $0x1a18] sm:$0xf]
    %v1706 = vld [vmem:[%s1 + $0x1a1c] sm:$0xf]
    %v1707 = vld [vmem:[%s1 + $0x1a20] sm:$0xf]
    %v1708 = vld [vmem:[%s1 + $0x1a24] sm:$0xf]
    %v1709 = vld [vmem:[%s1 + $0x1a28] sm:$0xf]
    %v1710 = vld [vmem:[%s1 + $0x1a2c] sm:$0xf]
    %v1711 = vld [vmem:[%s1 + $0x1a30] sm:$0xf]
    %v1712 = vld [vmem:[%s1 + $0x1a34] sm:$0xf]
    %v1713 = vld [vmem:[%s1 + $0x1a38] sm:$0xf]
    %v1714 = vld [vmem:[%s1 + $0x1a3c] sm:$0xf]
    %v1715 = vld [vmem:[%s1 + $0x1a40] sm:$0xf]
    %v1716 = vld [vmem:[%s1 + $0x1a44] sm:$0xf]
    %v1717 = vld [vmem:[%s1 + $0x1a48] sm:$0xf]
    %v1718 = vld [vmem:[%s1 + $0x1a4c] sm:$0xf]
    %v1719 = vld [vmem:[%s1 + $0x1a50] sm:$0xf]
    %v1720 = vld [vmem:[%s1 + $0x1a54] sm:$0xf]
    %v1721 = vld [vmem:[%s1 + $0x1a58] sm:$0xf]
    %v1722 = vld [vmem:[%s1 + $0x1a5c] sm:$0xf]
    %v1723 = vld [vmem:[%s1 + $0x1a60] sm:$0xf]
    %v1724 = vld [vmem:[%s1 + $0x1a64] sm:$0xf]
    %v1725 = vld [vmem:[%s1 + $0x1a68] sm:$0xf]
    %v1726 = vld [vmem:[%s1 + $0x1a6c] sm:$0xf]
    %v1727 = vld [vmem:[%s1 + $0x1a70] sm:$0xf]
    %v1728 = vld [vmem:[%s1 + $0x1a74] sm:$0xf]
    %v1729 = vld [vmem:[%s1 + $0x1a78] sm:$0xf]
    %v1730 = vld [vmem:[%s1 + $0x1a7c] sm:$0xf]
    %v1731 = vld [vmem:[%s1 + $0x1a80] sm:$0xf]
    %v1732 = vld [vmem:[%s1 + $0x1a84] sm:$0xf]
    %v1733 = vld [vmem:[%s1 + $0x1a88] sm:$0xf]
    %v1734 = vld [vmem:[%s1 + $0x1a8c] sm:$0xf]
    %v1735 = vld [vmem:[%s1 + $0x1a90] sm:$0xf]
    %v1736 = vld [vmem:[%s1 + $0x1a94] sm:$0xf]
    %v1737 = vld [vmem:[%s1 + $0x1a98] sm:$0xf]
    %v1738 = vld [vmem:[%s1 + $0x1a9c] sm:$0xf]
    %v1739 = vld [vmem:[%s1 + $0x1aa0] sm:$0xf]
    %v1740 = vld [vmem:[%s1 + $0x1aa4] sm:$0xf]
    %v1741 = vld [vmem:[%s1 + $0x1aa8] sm:$0xf]
    %v1742 = vld [vmem:[%s1 + $0x1aac] sm:$0xf]
    %v1743 = vld [vmem:[%s1 + $0x1ab0] sm:$0xf]
    %v1744 = vld [vmem:[%s1 + $0x1ab4] sm:$0xf]
    %v1745 = vld [vmem:[%s1 + $0x1ab8] sm:$0xf]
    %v1746 = vld [vmem:[%s1 + $0x1abc] sm:$0xf]
    %v1747 = vld [vmem:[%s1 + $0x1ac0] sm:$0xf]
    %v1748 = vld [vmem:[%s1 + $0x1ac4] sm:$0xf]
    %v1749 = vld [vmem:[%s1 + $0x1ac8] sm:$0xf]
    %v1750 = vld [vmem:[%s1 + $0x1acc] sm:$0xf]
    %v1751 = vld [vmem:[%s1 + $0x1ad0] sm:$0xf]
    %v1752 = vld [vmem:[%s1 + $0x1ad4] sm:$0xf]
    %v1753 = vld [vmem:[%s1 + $0x1ad8] sm:$0xf]
    %v1754 = vld [vmem:[%s1 + $0x1adc] sm:$0xf]
    %v1755 = vld [vmem:[%s1 + $0x1ae0] sm:$0xf]
    %v1756 = vld [vmem:[%s1 + $0x1ae4] sm:$0xf]
    %v1757 = vld [vmem:[%s1 + $0x1ae8] sm:$0xf]
    %v1758 = vld [vmem:[%s1 + $0x1aec] sm:$0xf]
    %v1759 = vld [vmem:[%s1 + $0x1af0] sm:$0xf]
    %v1760 = vld [vmem:[%s1 + $0x1af4] sm:$0xf]
    %v1761 = vld [vmem:[%s1 + $0x1af8] sm:$0xf]
    %v1762 = vld [vmem:[%s1 + $0x1afc] sm:$0xf]
    %v1763 = vld [vmem:[%s1 + $0x1b00] sm:$0xf]
    %v1764 = vld [vmem:[%s1 + $0x1b04] sm:$0xf]
    %v1765 = vld [vmem:[%s1 + $0x1b08] sm:$0xf]
    %v1766 = vld [vmem:[%s1 + $0x1b0c] sm:$0xf]
    %v1767 = vld [vmem:[%s1 + $0x1b10] sm:$0xf]
    %v1768 = vld [vmem:[%s1 + $0x1b14] sm:$0xf]
    %v1769 = vld [vmem:[%s1 + $0x1b18] sm:$0xf]
    %v1770 = vld [vmem:[%s1 + $0x1b1c] sm:$0xf]
    %v1771 = vld [vmem:[%s1 + $0x1b20] sm:$0xf]
    %v1772 = vld [vmem:[%s1 + $0x1b24] sm:$0xf]
    %v1773 = vld [vmem:[%s1 + $0x1b28] sm:$0xf]
    %v1774 = vld [vmem:[%s1 + $0x1b2c] sm:$0xf]
    %v1775 = vld [vmem:[%s1 + $0x1b30] sm:$0xf]
    %v1776 = vld [vmem:[%s1 + $0x1b34] sm:$0xf]
    %v1777 = vld [vmem:[%s1 + $0x1b38] sm:$0xf]
    %v1778 = vld [vmem:[%s1 + $0x1b3c] sm:$0xf]
    %v1779 = vld [vmem:[%s1 + $0x1b40] sm:$0xf]
    %v1780 = vld [vmem:[%s1 + $0x1b44] sm:$0xf]
    %v1781 = vld [vmem:[%s1 + $0x1b48] sm:$0xf]
    %v1782 = vld [vmem:[%s1 + $0x1b4c] sm:$0xf]
    %v1783 = vld [vmem:[%s1 + $0x1b50] sm:$0xf]
    %v1784 = vld [vmem:[%s1 + $0x1b54] sm:$0xf]
    %v1785 = vld [vmem:[%s1 + $0x1b58] sm:$0xf]
    %v1786 = vld [vmem:[%s1 + $0x1b5c] sm:$0xf]
    %v1787 = vld [vmem:[%s1 + $0x1b60] sm:$0xf]
    %v1788 = vld [vmem:[%s1 + $0x1b64] sm:$0xf]
    %v1789 = vld [vmem:[%s1 + $0x1b68] sm:$0xf]
    %v1790 = vld [vmem:[%s1 + $0x1b6c] sm:$0xf]
    %v1791 = vld [vmem:[%s1 + $0x1b70] sm:$0xf]
    %v1792 = vld [vmem:[%s1 + $0x1b74] sm:$0xf]
    %v1793 = vld [vmem:[%s1 + $0x1b78] sm:$0xf]
    %v1794 = vld [vmem:[%s1 + $0x1b7c] sm:$0xf]
    %v1795 = vld [vmem:[%s1 + $0x1b80] sm:$0xf]
    %v1796 = vld [vmem:[%s1 + $0x1b84] sm:$0xf]
    %v1797 = vld [vmem:[%s1 + $0x1b88] sm:$0xf]
    %v1798 = vld [vmem:[%s1 + $0x1b8c] sm:$0xf]
    %v1799 = vld [vmem:[%s1 + $0x1b90] sm:$0xf]
    %v1800 = vld [vmem:[%s1 + $0x1b94] sm:$0xf]
    %v1801 = vld [vmem:[%s1 + $0x1b98] sm:$0xf]
    %v1802 = vld [vmem:[%s1 + $0x1b9c] sm:$0xf]
    %v1803 = vld [vmem:[%s1 + $0x1ba0] sm:$0xf]
    %v1804 = vld [vmem:[%s1 + $0x1ba4] sm:$0xf]
    %v1805 = vld [vmem:[%s1 + $0x1ba8] sm:$0xf]
    %v1806 = vld [vmem:[%s1 + $0x1bac] sm:$0xf]
    %v1807 = vld [vmem:[%s1 + $0x1bb0] sm:$0xf]
    %v1808 = vld [vmem:[%s1 + $0x1bb4] sm:$0xf]
    %v1809 = vld [vmem:[%s1 + $0x1bb8] sm:$0xf]
    %v1810 = vld [vmem:[%s1 + $0x1bbc] sm:$0xf]
    %v1811 = vld [vmem:[%s1 + $0x1bc0] sm:$0xf]
    %v1812 = vld [vmem:[%s1 + $0x1bc4] sm:$0xf]
    %v1813 = vld [vmem:[%s1 + $0x1bc8] sm:$0xf]
    %v1814 = vld [vmem:[%s1 + $0x1bcc] sm:$0xf]
    %v1815 = vld [vmem:[%s1 + $0x1bd0] sm:$0xf]
    %v1816 = vld [vmem:[%s1 + $0x1bd4] sm:$0xf]
    %v1817 = vld [vmem:[%s1 + $0x1bd8] sm:$0xf]
    %v1818 = vld [vmem:[%s1 + $0x1bdc] sm:$0xf]
    %v1819 = vld [vmem:[%s1 + $0x1be0] sm:$0xf]
    %v1820 = vld [vmem:[%s1 + $0x1be4] sm:$0xf]
    %v1821 = vld [vmem:[%s1 + $0x1be8] sm:$0xf]
    %v1822 = vld [vmem:[%s1 + $0x1bec] sm:$0xf]
    %v1823 = vld [vmem:[%s1 + $0x1bf0] sm:$0xf]
    %v1824 = vld [vmem:[%s1 + $0x1bf4] sm:$0xf]
    %v1825 = vld [vmem:[%s1 + $0x1bf8] sm:$0xf]
    %v1826 = vld [vmem:[%s1 + $0x1bfc] sm:$0xf]
    %v1827 = vld [vmem:[%s1 + $0x1c00] sm:$0xf]
    %v1828 = vld [vmem:[%s1 + $0x1c04] sm:$0xf]
    %v1829 = vld [vmem:[%s1 + $0x1c08] sm:$0xf]
    %v1830 = vld [vmem:[%s1 + $0x1c0c] sm:$0xf]
    %v1831 = vld [vmem:[%s1 + $0x1c10] sm:$0xf]
    %v1832 = vld [vmem:[%s1 + $0x1c14] sm:$0xf]
    %v1833 = vld [vmem:[%s1 + $0x1c18] sm:$0xf]
    %v1834 = vld [vmem:[%s1 + $0x1c1c] sm:$0xf]
    %v1835 = vld [vmem:[%s1 + $0x1c20] sm:$0xf]
    %v1836 = vld [vmem:[%s1 + $0x1c24] sm:$0xf]
    %v1837 = vld [vmem:[%s1 + $0x1c28] sm:$0xf]
    %v1838 = vld [vmem:[%s1 + $0x1c2c] sm:$0xf]
    %v1839 = vld [vmem:[%s1 + $0x1c30] sm:$0xf]
    %v1840 = vld [vmem:[%s1 + $0x1c34] sm:$0xf]
    %v1841 = vld [vmem:[%s1 + $0x1c38] sm:$0xf]
    %v1842 = vld [vmem:[%s1 + $0x1c3c] sm:$0xf]
    %v1843 = vld [vmem:[%s1 + $0x1c40] sm:$0xf]
    %v1844 = vld [vmem:[%s1 + $0x1c44] sm:$0xf]
    %v1845 = vld [vmem:[%s1 + $0x1c48] sm:$0xf]
    %v1846 = vld [vmem:[%s1 + $0x1c4c] sm:$0xf]
    %v1847 = vld [vmem:[%s1 + $0x1c50] sm:$0xf]
    %v1848 = vld [vmem:[%s1 + $0x1c54] sm:$0xf]
    %v1849 = vld [vmem:[%s1 + $0x1c58] sm:$0xf]
    %v1850 = vld [vmem:[%s1 + $0x1c5c] sm:$0xf]
    %v1851 = vld [vmem:[%s1 + $0x1c60] sm:$0xf]
    %v1852 = vld [vmem:[%s1 + $0x1c64] sm:$0xf]
    %v1853 = vld [vmem:[%s1 + $0x1c68] sm:$0xf]
    %v1854 = vld [vmem:[%s1 + $0x1c6c] sm:$0xf]
    %v1855 = vld [vmem:[%s1 + $0x1c70] sm:$0xf]
    %v1856 = vld [vmem:[%s1 + $0x1c74] sm:$0xf]
    %v1857 = vld [vmem:[%s1 + $0x1c78] sm:$0xf]
    %v1858 = vld [vmem:[%s1 + $0x1c7c] sm:$0xf]
    %v1859 = vld [vmem:[%s1 + $0x1c80] sm:$0xf]
    %v1860 = vld [vmem:[%s1 + $0x1c84] sm:$0xf]
    %v1861 = vld [vmem:[%s1 + $0x1c88] sm:$0xf]
    %v1862 = vld [vmem:[%s1 + $0x1c8c] sm:$0xf]
    %v1863 = vld [vmem:[%s1 + $0x1c90] sm:$0xf]
    %v1864 = vld [vmem:[%s1 + $0x1c94] sm:$0xf]
    %v1865 = vld [vmem:[%s1 + $0x1c98] sm:$0xf]
    %v1866 = vld [vmem:[%s1 + $0x1c9c] sm:$0xf]
    %v1867 = vld [vmem:[%s1 + $0x1ca0] sm:$0xf]
    %v1868 = vld [vmem:[%s1 + $0x1ca4] sm:$0xf]
    %v1869 = vld [vmem:[%s1 + $0x1ca8] sm:$0xf]
    %v1870 = vld [vmem:[%s1 + $0x1cac] sm:$0xf]
    %v1871 = vld [vmem:[%s1 + $0x1cb0] sm:$0xf]
    %v1872 = vld [vmem:[%s1 + $0x1cb4] sm:$0xf]
    %v1873 = vld [vmem:[%s1 + $0x1cb8] sm:$0xf]
    %v1874 = vld [vmem:[%s1 + $0x1cbc] sm:$0xf]
    %v1875 = vld [vmem:[%s1 + $0x1cc0] sm:$0xf]
    %v1876 = vld [vmem:[%s1 + $0x1cc4] sm:$0xf]
    %v1877 = vld [vmem:[%s1 + $0x1cc8] sm:$0xf]
    %v1878 = vld [vmem:[%s1 + $0x1ccc] sm:$0xf]
    %v1879 = vld [vmem:[%s1 + $0x1cd0] sm:$0xf]
    %v1880 = vld [vmem:[%s1 + $0x1cd4] sm:$0xf]
    %v1881 = vld [vmem:[%s1 + $0x1cd8] sm:$0xf]
    %v1882 = vld [vmem:[%s1 + $0x1cdc] sm:$0xf]
    %v1883 = vld [vmem:[%s1 + $0x1ce0] sm:$0xf]
    %v1884 = vld [vmem:[%s1 + $0x1ce4] sm:$0xf]
    %v1885 = vld [vmem:[%s1 + $0x1ce8] sm:$0xf]
    %v1886 = vld [vmem:[%s1 + $0x1cec] sm:$0xf]
    %v1887 = vld [vmem:[%s1 + $0x1cf0] sm:$0xf]
    %v1888 = vld [vmem:[%s1 + $0x1cf4] sm:$0xf]
    %v1889 = vld [vmem:[%s1 + $0x1cf8] sm:$0xf]
    %v1890 = vld [vmem:[%s1 + $0x1cfc] sm:$0xf]
    %v1891 = vld [vmem:[%s1 + $0x1d00] sm:$0xf]
    %v1892 = vld [vmem:[%s1 + $0x1d04] sm:$0xf]
    %v1893 = vld [vmem:[%s1 + $0x1d08] sm:$0xf]
    %v1894 = vld [vmem:[%s1 + $0x1d0c] sm:$0xf]
    %v1895 = vld [vmem:[%s1 + $0x1d10] sm:$0xf]
    %v1896 = vld [vmem:[%s1 + $0x1d14] sm:$0xf]
    %v1897 = vld [vmem:[%s1 + $0x1d18] sm:$0xf]
    %v1898 = vld [vmem:[%s1 + $0x1d1c] sm:$0xf]
    %v1899 = vld [vmem:[%s1 + $0x1d20] sm:$0xf]
    %v1900 = vld [vmem:[%s1 + $0x1d24] sm:$0xf]
    %v1901 = vld [vmem:[%s1 + $0x1d28] sm:$0xf]
    %v1902 = vld [vmem:[%s1 + $0x1d2c] sm:$0xf]
    %v1903 = vld [vmem:[%s1 + $0x1d30] sm:$0xf]
    %v1904 = vld [vmem:[%s1 + $0x1d34] sm:$0xf]
    %v1905 = vld [vmem:[%s1 + $0x1d38] sm:$0xf]
    %v1906 = vld [vmem:[%s1 + $0x1d3c] sm:$0xf]
    %v1907 = vld [vmem:[%s1 + $0x1d40] sm:$0xf]
    %v1908 = vld [vmem:[%s1 + $0x1d44] sm:$0xf]
    %v1909 = vld [vmem:[%s1 + $0x1d48] sm:$0xf]
    %v1910 = vld [vmem:[%s1 + $0x1d4c] sm:$0xf]
    %v1911 = vld [vmem:[%s1 + $0x1d50] sm:$0xf]
    %v1912 = vld [vmem:[%s1 + $0x1d54] sm:$0xf]
    %v1913 = vld [vmem:[%s1 + $0x1d58] sm:$0xf]
    %v1914 = vld [vmem:[%s1 + $0x1d5c] sm:$0xf]
    %v1915 = vld [vmem:[%s1 + $0x1d60] sm:$0xf]
    %v1916 = vld [vmem:[%s1 + $0x1d64] sm:$0xf]
    %v1917 = vld [vmem:[%s1 + $0x1d68] sm:$0xf]
    %v1918 = vld [vmem:[%s1 + $0x1d6c] sm:$0xf]
    %v1919 = vld [vmem:[%s1 + $0x1d70] sm:$0xf]
    %v1920 = vld [vmem:[%s1 + $0x1d74] sm:$0xf]
    %v1921 = vld [vmem:[%s1 + $0x1d78] sm:$0xf]
    %v1922 = vld [vmem:[%s1 + $0x1d7c] sm:$0xf]
    %v1923 = vld [vmem:[%s1 + $0x1d80] sm:$0xf]
    %v1924 = vld [vmem:[%s1 + $0x1d84] sm:$0xf]
    %v1925 = vld [vmem:[%s1 + $0x1d88] sm:$0xf]
    %v1926 = vld [vmem:[%s1 + $0x1d8c] sm:$0xf]
    %v1927 = vld [vmem:[%s1 + $0x1d90] sm:$0xf]
    %v1928 = vld [vmem:[%s1 + $0x1d94] sm:$0xf]
    %v1929 = vld [vmem:[%s1 + $0x1d98] sm:$0xf]
    %v1930 = vld [vmem:[%s1 + $0x1d9c] sm:$0xf]
    %v1931 = vld [vmem:[%s1 + $0x1da0] sm:$0xf]
    %v1932 = vld [vmem:[%s1 + $0x1da4] sm:$0xf]
    %v1933 = vld [vmem:[%s1 + $0x1da8] sm:$0xf]
    %v1934 = vld [vmem:[%s1 + $0x1dac] sm:$0xf]
    %v1935 = vld [vmem:[%s1 + $0x1db0] sm:$0xf]
    %v1936 = vld [vmem:[%s1 + $0x1db4] sm:$0xf]
    %v1937 = vld [vmem:[%s1 + $0x1db8] sm:$0xf]
    %v1938 = vld [vmem:[%s1 + $0x1dbc] sm:$0xf]
    %v1939 = vld [vmem:[%s1 + $0x1dc0] sm:$0xf]
    %v1940 = vld [vmem:[%s1 + $0x1dc4] sm:$0xf]
    %v1941 = vld [vmem:[%s1 + $0x1dc8] sm:$0xf]
    %v1942 = vld [vmem:[%s1 + $0x1dcc] sm:$0xf]
    %v1943 = vld [vmem:[%s1 + $0x1dd0] sm:$0xf]
    %v1944 = vld [vmem:[%s1 + $0x1dd4] sm:$0xf]
    %v1945 = vld [vmem:[%s1 + $0x1dd8] sm:$0xf]
    %v1946 = vld [vmem:[%s1 + $0x1ddc] sm:$0xf]
    %v1947 = vld [vmem:[%s1 + $0x1de0] sm:$0xf]
    %v1948 = vld [vmem:[%s1 + $0x1de4] sm:$0xf]
    %v1949 = vld [vmem:[%s1 + $0x1de8] sm:$0xf]
    %v1950 = vld [vmem:[%s1 + $0x1dec] sm:$0xf]
    %v1951 = vld [vmem:[%s1 + $0x1df0] sm:$0xf]
    %v1952 = vld [vmem:[%s1 + $0x1df4] sm:$0xf]
    %v1953 = vld [vmem:[%s1 + $0x1df8] sm:$0xf]
    %v1954 = vld [vmem:[%s1 + $0x1dfc] sm:$0xf]
    %v1955 = vld [vmem:[%s1 + $0x1e00] sm:$0xf]
    %v1956 = vld [vmem:[%s1 + $0x1e04] sm:$0xf]
    %v1957 = vld [vmem:[%s1 + $0x1e08] sm:$0xf]
    %v1958 = vld [vmem:[%s1 + $0x1e0c] sm:$0xf]
    %v1959 = vld [vmem:[%s1 + $0x1e10] sm:$0xf]
    %v1960 = vld [vmem:[%s1 + $0x1e14] sm:$0xf]
    %v1961 = vld [vmem:[%s1 + $0x1e18] sm:$0xf]
    %v1962 = vld [vmem:[%s1 + $0x1e1c] sm:$0xf]
    %v1963 = vld [vmem:[%s1 + $0x1e20] sm:$0xf]
    %v1964 = vld [vmem:[%s1 + $0x1e24] sm:$0xf]
    %v1965 = vld [vmem:[%s1 + $0x1e28] sm:$0xf]
    %v1966 = vld [vmem:[%s1 + $0x1e2c] sm:$0xf]
    %v1967 = vld [vmem:[%s1 + $0x1e30] sm:$0xf]
    %v1968 = vld [vmem:[%s1 + $0x1e34] sm:$0xf]
    %v1969 = vld [vmem:[%s1 + $0x1e38] sm:$0xf]
    %v1970 = vld [vmem:[%s1 + $0x1e3c] sm:$0xf]
    %v1971 = vld [vmem:[%s1 + $0x1e40] sm:$0xf]
    %v1972 = vld [vmem:[%s1 + $0x1e44] sm:$0xf]
    %v1973 = vld [vmem:[%s1 + $0x1e48] sm:$0xf]
    %v1974 = vld [vmem:[%s1 + $0x1e4c] sm:$0xf]
    %v1975 = vld [vmem:[%s1 + $0x1e50] sm:$0xf]
    %v1976 = vld [vmem:[%s1 + $0x1e54] sm:$0xf]
    %v1977 = vld [vmem:[%s1 + $0x1e58] sm:$0xf]
    %v1978 = vld [vmem:[%s1 + $0x1e5c] sm:$0xf]
    %v1979 = vld [vmem:[%s1 + $0x1e60] sm:$0xf]
    %v1980 = vld [vmem:[%s1 + $0x1e64] sm:$0xf]
    %v1981 = vld [vmem:[%s1 + $0x1e68] sm:$0xf]
    %v1982 = vld [vmem:[%s1 + $0x1e6c] sm:$0xf]
    %v1983 = vld [vmem:[%s1 + $0x1e70] sm:$0xf]
    %v1984 = vld [vmem:[%s1 + $0x1e74] sm:$0xf]
    %v1985 = vld [vmem:[%s1 + $0x1e78] sm:$0xf]
    %v1986 = vld [vmem:[%s1 + $0x1e7c] sm:$0xf]
    %v1987 = vld [vmem:[%s1 + $0x1e80] sm:$0xf]
    %v1988 = vld [vmem:[%s1 + $0x1e84] sm:$0xf]
    %v1989 = vld [vmem:[%s1 + $0x1e88] sm:$0xf]
    %v1990 = vld [vmem:[%s1 + $0x1e8c] sm:$0xf]
    %v1991 = vld [vmem:[%s1 + $0x1e90] sm:$0xf]
    %v1992 = vld [vmem:[%s1 + $0x1e94] sm:$0xf]
    %v1993 = vld [vmem:[%s1 + $0x1e98] sm:$0xf]
    %v1994 = vld [vmem:[%s1 + $0x1e9c] sm:$0xf]
    %v1995 = vld [vmem:[%s1 + $0x1ea0] sm:$0xf]
    %v1996 = vld [vmem:[%s1 + $0x1ea4] sm:$0xf]
    %v1997 = vld [vmem:[%s1 + $0x1ea8] sm:$0xf]
    %v1998 = vld [vmem:[%s1 + $0x1eac] sm:$0xf]
    %v1999 = vld [vmem:[%s1 + $0x1eb0] sm:$0xf]
    %v2000 = vld [vmem:[%s1 + $0x1eb4] sm:$0xf]
    %v2001 = vld [vmem:[%s1 + $0x1eb8] sm:$0xf]
    %v2002 = vld [vmem:[%s1 + $0x1ebc] sm:$0xf]
    %v2003 = vld [vmem:[%s1 + $0x1ec0] sm:$0xf]
    %v2004 = vld [vmem:[%s1 + $0x1ec4] sm:$0xf]
    %v2005 = vld [vmem:[%s1 + $0x1ec8] sm:$0xf]
    %v2006 = vld [vmem:[%s1 + $0x1ecc] sm:$0xf]
    %v2007 = vld [vmem:[%s1 + $0x1ed0] sm:$0xf]
    %v2008 = vld [vmem:[%s1 + $0x1ed4] sm:$0xf]
    %v2009 = vld [vmem:[%s1 + $0x1ed8] sm:$0xf]
    %v2010 = vld [vmem:[%s1 + $0x1edc] sm:$0xf]
    %v2011 = vld [vmem:[%s1 + $0x1ee0] sm:$0xf]
    %v2012 = vld [vmem:[%s1 + $0x1ee4] sm:$0xf]
    %v2013 = vld [vmem:[%s1 + $0x1ee8] sm:$0xf]
    %v2014 = vld [vmem:[%s1 + $0x1eec] sm:$0xf]
    %v2015 = vld [vmem:[%s1 + $0x1ef0] sm:$0xf]
    %v2016 = vld [vmem:[%s1 + $0x1ef4] sm:$0xf]
    %v2017 = vld [vmem:[%s1 + $0x1ef8] sm:$0xf]
    %v2018 = vld [vmem:[%s1 + $0x1efc] sm:$0xf]
    %v2019 = vld [vmem:[%s1 + $0x1f00] sm:$0xf]
    %v2020 = vld [vmem:[%s1 + $0x1f04] sm:$0xf]
    %v2021 = vld [vmem:[%s1 + $0x1f08] sm:$0xf]
    %v2022 = vld [vmem:[%s1 + $0x1f0c] sm:$0xf]
    %v2023 = vld [vmem:[%s1 + $0x1f10] sm:$0xf]
    %v2024 = vld [vmem:[%s1 + $0x1f14] sm:$0xf]
    %v2025 = vld [vmem:[%s1 + $0x1f18] sm:$0xf]
    %v2026 = vld [vmem:[%s1 + $0x1f1c] sm:$0xf]
    %v2027 = vld [vmem:[%s1 + $0x1f20] sm:$0xf]
    %v2028 = vld [vmem:[%s1 + $0x1f24] sm:$0xf]
    %v2029 = vld [vmem:[%s1 + $0x1f28] sm:$0xf]
    %v2030 = vld [vmem:[%s1 + $0x1f2c] sm:$0xf]
    %v2031 = vld [vmem:[%s1 + $0x1f30] sm:$0xf]
    %v2032 = vld [vmem:[%s1 + $0x1f34] sm:$0xf]
    %v2033 = vld [vmem:[%s1 + $0x1f38] sm:$0xf]
    %v2034 = vld [vmem:[%s1 + $0x1f3c] sm:$0xf]
    %v2035 = vld [vmem:[%s1 + $0x1f40] sm:$0xf]
    %v2036 = vld [vmem:[%s1 + $0x1f44] sm:$0xf]
    %v2037 = vld [vmem:[%s1 + $0x1f48] sm:$0xf]
    %v2038 = vld [vmem:[%s1 + $0x1f4c] sm:$0xf]
    %v2039 = vld [vmem:[%s1 + $0x1f50] sm:$0xf]
    %v2040 = vld [vmem:[%s1 + $0x1f54] sm:$0xf]
    %v2041 = vld [vmem:[%s1 + $0x1f58] sm:$0xf]
    %v2042 = vld [vmem:[%s1 + $0x1f5c] sm:$0xf]
    %v2043 = vld [vmem:[%s1 + $0x1f60] sm:$0xf]
    %v2044 = vld [vmem:[%s1 + $0x1f64] sm:$0xf]
    %v2045 = vld [vmem:[%s1 + $0x1f68] sm:$0xf]
    %v2046 = vld [vmem:[%s1 + $0x1f6c] sm:$0xf]
    %v2047 = vld [vmem:[%s1 + $0x1f70] sm:$0xf]
    %v2048 = vld [vmem:[%s1 + $0x1f74] sm:$0xf]
    %v2049 = vld [vmem:[%s1 + $0x1f78] sm:$0xf]
    %v2050 = vld [vmem:[%s1 + $0x1f7c] sm:$0xf]
    %v2051 = vld [vmem:[%s1 + $0x1f80] sm:$0xf]
    %v2052 = vld [vmem:[%s1 + $0x1f84] sm:$0xf]
    %v2053 = vld [vmem:[%s1 + $0x1f88] sm:$0xf]
    %v2054 = vld [vmem:[%s1 + $0x1f8c] sm:$0xf]
    %v2055 = vld [vmem:[%s1 + $0x1f90] sm:$0xf]
    %v2056 = vld [vmem:[%s1 + $0x1f94] sm:$0xf]
    %v2057 = vld [vmem:[%s1 + $0x1f98] sm:$0xf]
    %v2058 = vld [vmem:[%s1 + $0x1f9c] sm:$0xf]
    %v2059 = vld [vmem:[%s1 + $0x1fa0] sm:$0xf]
    %v2060 = vld [vmem:[%s1 + $0x1fa4] sm:$0xf]
    %v2061 = vld [vmem:[%s1 + $0x1fa8] sm:$0xf]
    %v2062 = vld [vmem:[%s1 + $0x1fac] sm:$0xf]
    %v2063 = vld [vmem:[%s1 + $0x1fb0] sm:$0xf]
    %v2064 = vld [vmem:[%s1 + $0x1fb4] sm:$0xf]
    %v2065 = vld [vmem:[%s1 + $0x1fb8] sm:$0xf]
    %v2066 = vld [vmem:[%s1 + $0x1fbc] sm:$0xf]
    %v2067 = vld [vmem:[%s1 + $0x1fc0] sm:$0xf]
    %v2068 = vld [vmem:[%s1 + $0x1fc4] sm:$0xf]
    %v2069 = vld [vmem:[%s1 + $0x1fc8] sm:$0xf]
    %v2070 = vld [vmem:[%s1 + $0x1fcc] sm:$0xf]
    %v2071 = vld [vmem:[%s1 + $0x1fd0] sm:$0xf]
    %v2072 = vld [vmem:[%s1 + $0x1fd4] sm:$0xf]
    %v2073 = vld [vmem:[%s1 + $0x1fd8] sm:$0xf]
    %v2074 = vld [vmem:[%s1 + $0x1fdc] sm:$0xf]
    %v2075 = vld [vmem:[%s1 + $0x1fe0] sm:$0xf]
    %v2076 = vld [vmem:[%s1 + $0x1fe4] sm:$0xf]
    %v2077 = vld [vmem:[%s1 + $0x1fe8] sm:$0xf]
    %v2078 = vld [vmem:[%s1 + $0x1fec] sm:$0xf]
    %v2079 = vld [vmem:[%s1 + $0x1ff0] sm:$0xf]
    %v2080 = vld [vmem:[%s1 + $0x1ff4] sm:$0xf]
    %v2081 = vld [vmem:[%s1 + $0x1ff8] sm:$0xf]
    %v2082 = vld [vmem:[%s1 + $0x1ffc] sm:$0xf]
    %v2083 = vld [vmem:[%s1 + $0x2000] sm:$0xf]
    %v2084 = vld [vmem:[%s1 + $0x2004] sm:$0xf]
    %v2085 = vld [vmem:[%s1 + $0x2008] sm:$0xf]
    %v2086 = vld [vmem:[%s1 + $0x200c] sm:$0xf]
    %v2087 = vld [vmem:[%s1 + $0x2010] sm:$0xf]
    %v2088 = vld [vmem:[%s1 + $0x2014] sm:$0xf]
    %v2089 = vld [vmem:[%s1 + $0x2018] sm:$0xf]
    %v2090 = vld [vmem:[%s1 + $0x201c] sm:$0xf]
    %v2091 = vld [vmem:[%s1 + $0x2020] sm:$0xf]
    %v2092 = vld [vmem:[%s1 + $0x2024] sm:$0xf]
    %v2093 = vld [vmem:[%s1 + $0x2028] sm:$0xf]
    %v2094 = vld [vmem:[%s1 + $0x202c] sm:$0xf]
    %v2095 = vld [vmem:[%s1 + $0x2030] sm:$0xf]
    %v2096 = vld [vmem:[%s1 + $0x2034] sm:$0xf]
    %v2097 = vld [vmem:[%s1 + $0x2038] sm:$0xf]
    %v2098 = vld [vmem:[%s1 + $0x203c] sm:$0xf]
    %v2099 = vld [vmem:[%s1 + $0x2040] sm:$0xf]
    %v2100 = vld [vmem:[%s1 + $0x2044] sm:$0xf]
    %v2101 = vld [vmem:[%s1 + $0x2048] sm:$0xf]
    %v2102 = vld [vmem:[%s1 + $0x204c] sm:$0xf]
    %v2103 = vld [vmem:[%s1 + $0x2050] sm:$0xf]
    %v2104 = vld [vmem:[%s1 + $0x2054] sm:$0xf]
    %v2105 = vld [vmem:[%s1 + $0x2058] sm:$0xf]
    %v2106 = vld [vmem:[%s1 + $0x205c] sm:$0xf]
    %v2107 = vld [vmem:[%s1 + $0x2060] sm:$0xf]
    %v2108 = vld [vmem:[%s1 + $0x2064] sm:$0xf]
    %v2109 = vld [vmem:[%s1 + $0x2068] sm:$0xf]
    %v2110 = vld [vmem:[%s1 + $0x206c] sm:$0xf]
    %v2111 = vld [vmem:[%s1 + $0x2070] sm:$0xf]
    %v2112 = vld [vmem:[%s1 + $0x2074] sm:$0xf]
    %v2113 = vld [vmem:[%s1 + $0x2078] sm:$0xf]
    %v2114 = vld [vmem:[%s1 + $0x207c] sm:$0xf]
    %v2115 = vld [vmem:[%s1 + $0x2080] sm:$0xf]
    %v2116 = vld [vmem:[%s1 + $0x2084] sm:$0xf]
    %v2117 = vld [vmem:[%s1 + $0x2088] sm:$0xf]
    %v2118 = vld [vmem:[%s1 + $0x208c] sm:$0xf]
    %v2119 = vld [vmem:[%s1 + $0x2090] sm:$0xf]
    %v2120 = vld [vmem:[%s1 + $0x2094] sm:$0xf]
    %v2121 = vld [vmem:[%s1 + $0x2098] sm:$0xf]
    %v2122 = vld [vmem:[%s1 + $0x209c] sm:$0xf]
    %v2123 = vld [vmem:[%s1 + $0x20a0] sm:$0xf]
    %v2124 = vld [vmem:[%s1 + $0x20a4] sm:$0xf]
    %v2125 = vld [vmem:[%s1 + $0x20a8] sm:$0xf]
    %v2126 = vld [vmem:[%s1 + $0x20ac] sm:$0xf]
    %v2127 = vld [vmem:[%s1 + $0x20b0] sm:$0xf]
    %v2128 = vld [vmem:[%s1 + $0x20b4] sm:$0xf]
    %v2129 = vld [vmem:[%s1 + $0x20b8] sm:$0xf]
    %v2130 = vld [vmem:[%s1 + $0x20bc] sm:$0xf]
    %v2131 = vld [vmem:[%s1 + $0x20c0] sm:$0xf]
    %v2132 = vld [vmem:[%s1 + $0x20c4] sm:$0xf]
    %v2133 = vld [vmem:[%s1 + $0x20c8] sm:$0xf]
    %v2134 = vld [vmem:[%s1 + $0x20cc] sm:$0xf]
    %v2135 = vld [vmem:[%s1 + $0x20d0] sm:$0xf]
    %v2136 = vld [vmem:[%s1 + $0x20d4] sm:$0xf]
    %v2137 = vld [vmem:[%s1 + $0x20d8] sm:$0xf]
    %v2138 = vld [vmem:[%s1 + $0x20dc] sm:$0xf]
    %v2139 = vld [vmem:[%s1 + $0x20e0] sm:$0xf]
    %v2140 = vld [vmem:[%s1 + $0x20e4] sm:$0xf]
    %v2141 = vld [vmem:[%s1 + $0x20e8] sm:$0xf]
    %v2142 = vld [vmem:[%s1 + $0x20ec] sm:$0xf]
    %v2143 = vld [vmem:[%s1 + $0x20f0] sm:$0xf]
    %v2144 = vld [vmem:[%s1 + $0x20f4] sm:$0xf]
    %v2145 = vld [vmem:[%s1 + $0x20f8] sm:$0xf]
    %v2146 = vld [vmem:[%s1 + $0x20fc] sm:$0xf]
    %v2147 = vld [vmem:[%s1 + $0x2100] sm:$0xf]
    %v2148 = vld [vmem:[%s1 + $0x2104] sm:$0xf]
    %v2149 = vld [vmem:[%s1 + $0x2108] sm:$0xf]
    %v2150 = vld [vmem:[%s1 + $0x210c] sm:$0xf]
    %v2151 = vld [vmem:[%s1 + $0x2110] sm:$0xf]
    %v2152 = vld [vmem:[%s1 + $0x2114] sm:$0xf]
    %v2153 = vld [vmem:[%s1 + $0x2118] sm:$0xf]
    %v2154 = vld [vmem:[%s1 + $0x211c] sm:$0xf]
    %v2155 = vld [vmem:[%s1 + $0x2120] sm:$0xf]
    %v2156 = vld [vmem:[%s1 + $0x2124] sm:$0xf]
    %v2157 = vld [vmem:[%s1 + $0x2128] sm:$0xf]
    %v2158 = vld [vmem:[%s1 + $0x212c] sm:$0xf]
    %v2159 = vld [vmem:[%s1 + $0x2130] sm:$0xf]
    %v2160 = vld [vmem:[%s1 + $0x2134] sm:$0xf]
    %v2161 = vld [vmem:[%s1 + $0x2138] sm:$0xf]
    %v2162 = vld [vmem:[%s1 + $0x213c] sm:$0xf]
    %v2163 = vld [vmem:[%s1 + $0x2140] sm:$0xf]
    %v2164 = vld [vmem:[%s1 + $0x2144] sm:$0xf]
    %v2165 = vld [vmem:[%s1 + $0x2148] sm:$0xf]
    %v2166 = vld [vmem:[%s1 + $0x214c] sm:$0xf]
    %v2167 = vld [vmem:[%s1 + $0x2150] sm:$0xf]
    %v2168 = vld [vmem:[%s1 + $0x2154] sm:$0xf]
    %v2169 = vld [vmem:[%s1 + $0x2158] sm:$0xf]
    %v2170 = vld [vmem:[%s1 + $0x215c] sm:$0xf]
    %v2171 = vld [vmem:[%s1 + $0x2160] sm:$0xf]
    %v2172 = vld [vmem:[%s1 + $0x2164] sm:$0xf]
    %v2173 = vld [vmem:[%s1 + $0x2168] sm:$0xf]
    %v2174 = vld [vmem:[%s1 + $0x216c] sm:$0xf]
    %v2175 = vld [vmem:[%s1 + $0x2170] sm:$0xf]
    %v2176 = vld [vmem:[%s1 + $0x2174] sm:$0xf]
    %v2177 = vld [vmem:[%s1 + $0x2178] sm:$0xf]
    %v2178 = vld [vmem:[%s1 + $0x217c] sm:$0xf]
    %v2179 = vld [vmem:[%s1 + $0x2180] sm:$0xf]
    %v2180 = vld [vmem:[%s1 + $0x2184] sm:$0xf]
    %v2181 = vld [vmem:[%s1 + $0x2188] sm:$0xf]
    %v2182 = vld [vmem:[%s1 + $0x218c] sm:$0xf]
    %v2183 = vld [vmem:[%s1 + $0x2190] sm:$0xf]
    %v2184 = vld [vmem:[%s1 + $0x2194] sm:$0xf]
    %v2185 = vld [vmem:[%s1 + $0x2198] sm:$0xf]
    %v2186 = vld [vmem:[%s1 + $0x219c] sm:$0xf]
    %v2187 = vld [vmem:[%s1 + $0x21a0] sm:$0xf]
    %v2188 = vld [vmem:[%s1 + $0x21a4] sm:$0xf]
    %v2189 = vld [vmem:[%s1 + $0x21a8] sm:$0xf]
    %v2190 = vld [vmem:[%s1 + $0x21ac] sm:$0xf]
    %v2191 = vld [vmem:[%s1 + $0x21b0] sm:$0xf]
    %v2192 = vld [vmem:[%s1 + $0x21b4] sm:$0xf]
    %v2193 = vld [vmem:[%s1 + $0x21b8] sm:$0xf]
    %v2194 = vld [vmem:[%s1 + $0x21bc] sm:$0xf]
    %v2195 = vld [vmem:[%s1 + $0x21c0] sm:$0xf]
    %v2196 = vld [vmem:[%s1 + $0x21c4] sm:$0xf]
    %v2197 = vld [vmem:[%s1 + $0x21c8] sm:$0xf]
    %v2198 = vld [vmem:[%s1 + $0x21cc] sm:$0xf]
    %v2199 = vld [vmem:[%s1 + $0x21d0] sm:$0xf]
    %v2200 = vld [vmem:[%s1 + $0x21d4] sm:$0xf]
    %v2201 = vld [vmem:[%s1 + $0x21d8] sm:$0xf]
    %v2202 = vld [vmem:[%s1 + $0x21dc] sm:$0xf]
    %v2203 = vld [vmem:[%s1 + $0x21e0] sm:$0xf]
    %v2204 = vld [vmem:[%s1 + $0x21e4] sm:$0xf]
    %v2205 = vld [vmem:[%s1 + $0x21e8] sm:$0xf]
    %v2206 = vld [vmem:[%s1 + $0x21ec] sm:$0xf]
    %v2207 = vld [vmem:[%s1 + $0x21f0] sm:$0xf]
    %v2208 = vld [vmem:[%s1 + $0x21f4] sm:$0xf]
    %v2209 = vld [vmem:[%s1 + $0x21f8] sm:$0xf]
    %v2210 = vld [vmem:[%s1 + $0x21fc] sm:$0xf]
    %v2211 = vld [vmem:[%s1 + $0x2200] sm:$0xf]
    %v2212 = vld [vmem:[%s1 + $0x2204] sm:$0xf]
    %v2213 = vld [vmem:[%s1 + $0x2208] sm:$0xf]
    %v2214 = vld [vmem:[%s1 + $0x220c] sm:$0xf]
    %v2215 = vld [vmem:[%s1 + $0x2210] sm:$0xf]
    %v2216 = vld [vmem:[%s1 + $0x2214] sm:$0xf]
    %v2217 = vld [vmem:[%s1 + $0x2218] sm:$0xf]
    %v2218 = vld [vmem:[%s1 + $0x221c] sm:$0xf]
    %v2219 = vld [vmem:[%s1 + $0x2220] sm:$0xf]
    %v2220 = vld [vmem:[%s1 + $0x2224] sm:$0xf]
    %v2221 = vld [vmem:[%s1 + $0x2228] sm:$0xf]
    %v2222 = vld [vmem:[%s1 + $0x222c] sm:$0xf]
    %v2223 = vld [vmem:[%s1 + $0x2230] sm:$0xf]
    %v2224 = vld [vmem:[%s1 + $0x2234] sm:$0xf]
    %v2225 = vld [vmem:[%s1 + $0x2238] sm:$0xf]
    %v2226 = vld [vmem:[%s1 + $0x223c] sm:$0xf]
    %v2227 = vld [vmem:[%s1 + $0x2240] sm:$0xf]
    %v2228 = vld [vmem:[%s1 + $0x2244] sm:$0xf]
    %v2229 = vld [vmem:[%s1 + $0x2248] sm:$0xf]
    %v2230 = vld [vmem:[%s1 + $0x224c] sm:$0xf]
    %v2231 = vld [vmem:[%s1 + $0x2250] sm:$0xf]
    %v2232 = vld [vmem:[%s1 + $0x2254] sm:$0xf]
    %v2233 = vld [vmem:[%s1 + $0x2258] sm:$0xf]
    %v2234 = vld [vmem:[%s1 + $0x225c] sm:$0xf]
    %v2235 = vld [vmem:[%s1 + $0x2260] sm:$0xf]
    %v2236 = vld [vmem:[%s1 + $0x2264] sm:$0xf]
    %v2237 = vld [vmem:[%s1 + $0x2268] sm:$0xf]
    %v2238 = vld [vmem:[%s1 + $0x226c] sm:$0xf]
    %v2239 = vld [vmem:[%s1 + $0x2270] sm:$0xf]
    %v2240 = vld [vmem:[%s1 + $0x2274] sm:$0xf]
    %v2241 = vld [vmem:[%s1 + $0x2278] sm:$0xf]
    %v2242 = vld [vmem:[%s1 + $0x227c] sm:$0xf]
    %v2243 = vld [vmem:[%s1 + $0x2280] sm:$0xf]
    %v2244 = vld [vmem:[%s1 + $0x2284] sm:$0xf]
    %v2245 = vld [vmem:[%s1 + $0x2288] sm:$0xf]
    %v2246 = vld [vmem:[%s1 + $0x228c] sm:$0xf]
    %v2247 = vld [vmem:[%s1 + $0x2290] sm:$0xf]
    %v2248 = vld [vmem:[%s1 + $0x2294] sm:$0xf]
    %v2249 = vld [vmem:[%s1 + $0x2298] sm:$0xf]
    %v2250 = vld [vmem:[%s1 + $0x229c] sm:$0xf]
    %v2251 = vld [vmem:[%s1 + $0x22a0] sm:$0xf]
    %v2252 = vld [vmem:[%s1 + $0x22a4] sm:$0xf]
    %v2253 = vld [vmem:[%s1 + $0x22a8] sm:$0xf]
    %v2254 = vld [vmem:[%s1 + $0x22ac] sm:$0xf]
    %v2255 = vld [vmem:[%s1 + $0x22b0] sm:$0xf]
    %v2256 = vld [vmem:[%s1 + $0x22b4] sm:$0xf]
    %v2257 = vld [vmem:[%s1 + $0x22b8] sm:$0xf]
    %v2258 = vld [vmem:[%s1 + $0x22bc] sm:$0xf]
    %v2259 = vld [vmem:[%s1 + $0x22c0] sm:$0xf]
    %v2260 = vld [vmem:[%s1 + $0x22c4] sm:$0xf]
    %v2261 = vld [vmem:[%s1 + $0x22c8] sm:$0xf]
    %v2262 = vld [vmem:[%s1 + $0x22cc] sm:$0xf]
    %v2263 = vld [vmem:[%s1 + $0x22d0] sm:$0xf]
    %v2264 = vld [vmem:[%s1 + $0x22d4] sm:$0xf]
    %v2265 = vld [vmem:[%s1 + $0x22d8] sm:$0xf]
    %v2266 = vld [vmem:[%s1 + $0x22dc] sm:$0xf]
    %v2267 = vld [vmem:[%s1 + $0x22e0] sm:$0xf]
    %v2268 = vld [vmem:[%s1 + $0x22e4] sm:$0xf]
    %v2269 = vld [vmem:[%s1 + $0x22e8] sm:$0xf]
    %v2270 = vld [vmem:[%s1 + $0x22ec] sm:$0xf]
    %v2271 = vld [vmem:[%s1 + $0x22f0] sm:$0xf]
    %v2272 = vld [vmem:[%s1 + $0x22f4] sm:$0xf]
    %v2273 = vld [vmem:[%s1 + $0x22f8] sm:$0xf]
    %v2274 = vld [vmem:[%s1 + $0x22fc] sm:$0xf]
    %v2275 = vld [vmem:[%s1 + $0x2300] sm:$0xf]
    %v2276 = vld [vmem:[%s1 + $0x2304] sm:$0xf]
    %v2277 = vld [vmem:[%s1 + $0x2308] sm:$0xf]
    %v2278 = vld [vmem:[%s1 + $0x230c] sm:$0xf]
    %v2279 = vld [vmem:[%s1 + $0x2310] sm:$0xf]
    %v2280 = vld [vmem:[%s1 + $0x2314] sm:$0xf]
    %v2281 = vld [vmem:[%s1 + $0x2318] sm:$0xf]
    %v2282 = vld [vmem:[%s1 + $0x231c] sm:$0xf]
    %v2283 = vld [vmem:[%s1 + $0x2320] sm:$0xf]
    %v2284 = vld [vmem:[%s1 + $0x2324] sm:$0xf]
    %v2285 = vld [vmem:[%s1 + $0x2328] sm:$0xf]
    %v2286 = vld [vmem:[%s1 + $0x232c] sm:$0xf]
    %v2287 = vld [vmem:[%s1 + $0x2330] sm:$0xf]
    %v2288 = vld [vmem:[%s1 + $0x2334] sm:$0xf]
    %v2289 = vld [vmem:[%s1 + $0x2338] sm:$0xf]
    %v2290 = vld [vmem:[%s1 + $0x233c] sm:$0xf]
    %v2291 = vld [vmem:[%s1 + $0x2340] sm:$0xf]
    %v2292 = vld [vmem:[%s1 + $0x2344] sm:$0xf]
    %v2293 = vld [vmem:[%s1 + $0x2348] sm:$0xf]
    %v2294 = vld [vmem:[%s1 + $0x234c] sm:$0xf]
    %v2295 = vld [vmem:[%s1 + $0x2350] sm:$0xf]
    %v2296 = vld [vmem:[%s1 + $0x2354] sm:$0xf]
    %v2297 = vld [vmem:[%s1 + $0x2358] sm:$0xf]
    %v2298 = vld [vmem:[%s1 + $0x235c] sm:$0xf]
    %v2299 = vld [vmem:[%s1 + $0x2360] sm:$0xf]
    %v2300 = vld [vmem:[%s1 + $0x2364] sm:$0xf]
    %v2301 = vld [vmem:[%s1 + $0x2368] sm:$0xf]
    %v2302 = vld [vmem:[%s1 + $0x236c] sm:$0xf]
    %v2303 = vld [vmem:[%s1 + $0x2370] sm:$0xf]
    %v2304 = vld [vmem:[%s1 + $0x2374] sm:$0xf]
    %v2305 = vld [vmem:[%s1 + $0x2378] sm:$0xf]
    %v2306 = vld [vmem:[%s1 + $0x237c] sm:$0xf]
    %v2307 = vld [vmem:[%s1 + $0x2380] sm:$0xf]
    %v2308 = vld [vmem:[%s1 + $0x2384] sm:$0xf]
    %v2309 = vld [vmem:[%s1 + $0x2388] sm:$0xf]
    %v2310 = vld [vmem:[%s1 + $0x238c] sm:$0xf]
    %v2311 = vld [vmem:[%s1 + $0x2390] sm:$0xf]
    %v2312 = vld [vmem:[%s1 + $0x2394] sm:$0xf]
    %v2313 = vld [vmem:[%s1 + $0x2398] sm:$0xf]
    %v2314 = vld [vmem:[%s1 + $0x239c] sm:$0xf]
    %v2315 = vld [vmem:[%s1 + $0x23a0] sm:$0xf]
    %v2316 = vld [vmem:[%s1 + $0x23a4] sm:$0xf]
    %v2317 = vld [vmem:[%s1 + $0x23a8] sm:$0xf]
    %v2318 = vld [vmem:[%s1 + $0x23ac] sm:$0xf]
    %v2319 = vld [vmem:[%s1 + $0x23b0] sm:$0xf]
    %v2320 = vld [vmem:[%s1 + $0x23b4] sm:$0xf]
    %v2321 = vld [vmem:[%s1 + $0x23b8] sm:$0xf]
    %v2322 = vld [vmem:[%s1 + $0x23bc] sm:$0xf]
    %v2323 = vld [vmem:[%s1 + $0x23c0] sm:$0xf]
    %v2324 = vld [vmem:[%s1 + $0x23c4] sm:$0xf]
    %v2325 = vld [vmem:[%s1 + $0x23c8] sm:$0xf]
    %v2326 = vld [vmem:[%s1 + $0x23cc] sm:$0xf]
    %v2327 = vld [vmem:[%s1 + $0x23d0] sm:$0xf]
    %v2328 = vld [vmem:[%s1 + $0x23d4] sm:$0xf]
    %v2329 = vld [vmem:[%s1 + $0x23d8] sm:$0xf]
    %v2330 = vld [vmem:[%s1 + $0x23dc] sm:$0xf]
    %v2331 = vld [vmem:[%s1 + $0x23e0] sm:$0xf]
    %v2332 = vld [vmem:[%s1 + $0x23e4] sm:$0xf]
    %v2333 = vld [vmem:[%s1 + $0x23e8] sm:$0xf]
    %v2334 = vld [vmem:[%s1 + $0x23ec] sm:$0xf]
    %v2335 = vld [vmem:[%s1 + $0x23f0] sm:$0xf]
    %v2336 = vld [vmem:[%s1 + $0x23f4] sm:$0xf]
    %v2337 = vld [vmem:[%s1 + $0x23f8] sm:$0xf]
    %v2338 = vld [vmem:[%s1 + $0x23fc] sm:$0xf]
    %v2339 = vld [vmem:[%s1 + $0x2400] sm:$0xf]
    %v2340 = vld [vmem:[%s1 + $0x2404] sm:$0xf]
    %v2341 = vld [vmem:[%s1 + $0x2408] sm:$0xf]
    %v2342 = vld [vmem:[%s1 + $0x240c] sm:$0xf]
    %v2343 = vld [vmem:[%s1 + $0x2410] sm:$0xf]
    %v2344 = vld [vmem:[%s1 + $0x2414] sm:$0xf]
    %v2345 = vld [vmem:[%s1 + $0x2418] sm:$0xf]
    %v2346 = vld [vmem:[%s1 + $0x241c] sm:$0xf]
    %v2347 = vld [vmem:[%s1 + $0x2420] sm:$0xf]
    %v2348 = vld [vmem:[%s1 + $0x2424] sm:$0xf]
    %v2349 = vld [vmem:[%s1 + $0x2428] sm:$0xf]
    %v2350 = vld [vmem:[%s1 + $0x242c] sm:$0xf]
    %v2351 = vld [vmem:[%s1 + $0x2430] sm:$0xf]
    %v2352 = vld [vmem:[%s1 + $0x2434] sm:$0xf]
    %v2353 = vld [vmem:[%s1 + $0x2438] sm:$0xf]
    %v2354 = vld [vmem:[%s1 + $0x243c] sm:$0xf]
    %v2355 = vld [vmem:[%s1 + $0x2440] sm:$0xf]
    %v2356 = vld [vmem:[%s1 + $0x2444] sm:$0xf]
    %v2357 = vld [vmem:[%s1 + $0x2448] sm:$0xf]
    %v2358 = vld [vmem:[%s1 + $0x244c] sm:$0xf]
    %v2359 = vld [vmem:[%s1 + $0x2450] sm:$0xf]
    %v2360 = vld [vmem:[%s1 + $0x2454] sm:$0xf]
    %v2361 = vld [vmem:[%s1 + $0x2458] sm:$0xf]
    %v2362 = vld [vmem:[%s1 + $0x245c] sm:$0xf]
    %v2363 = vld [vmem:[%s1 + $0x2460] sm:$0xf]
    %v2364 = vld [vmem:[%s1 + $0x2464] sm:$0xf]
    %v2365 = vld [vmem:[%s1 + $0x2468] sm:$0xf]
    %v2366 = vld [vmem:[%s1 + $0x246c] sm:$0xf]
    %v2367 = vld [vmem:[%s1 + $0x2470] sm:$0xf]
    %v2368 = vld [vmem:[%s1 + $0x2474] sm:$0xf]
    %v2369 = vld [vmem:[%s1 + $0x2478] sm:$0xf]
    %v2370 = vld [vmem:[%s1 + $0x247c] sm:$0xf]
    %v2371 = vld [vmem:[%s1 + $0x2480] sm:$0xf]
    %v2372 = vld [vmem:[%s1 + $0x2484] sm:$0xf]
    %v2373 = vld [vmem:[%s1 + $0x2488] sm:$0xf]
    %v2374 = vld [vmem:[%s1 + $0x248c] sm:$0xf]
    %v2375 = vld [vmem:[%s1 + $0x2490] sm:$0xf]
    %v2376 = vld [vmem:[%s1 + $0x2494] sm:$0xf]
    %v2377 = vld [vmem:[%s1 + $0x2498] sm:$0xf]
    %v2378 = vld [vmem:[%s1 + $0x249c] sm:$0xf]
    %v2379 = vld [vmem:[%s1 + $0x24a0] sm:$0xf]
    %v2380 = vld [vmem:[%s1 + $0x24a4] sm:$0xf]
    %v2381 = vld [vmem:[%s1 + $0x24a8] sm:$0xf]
    %v2382 = vld [vmem:[%s1 + $0x24ac] sm:$0xf]
    %v2383 = vld [vmem:[%s1 + $0x24b0] sm:$0xf]
    %v2384 = vld [vmem:[%s1 + $0x24b4] sm:$0xf]
    %v2385 = vld [vmem:[%s1 + $0x24b8] sm:$0xf]
    %v2386 = vld [vmem:[%s1 + $0x24bc] sm:$0xf]
    %v2387 = vld [vmem:[%s1 + $0x24c0] sm:$0xf]
    %v2388 = vld [vmem:[%s1 + $0x24c4] sm:$0xf]
    %v2389 = vld [vmem:[%s1 + $0x24c8] sm:$0xf]
    %v2390 = vld [vmem:[%s1 + $0x24cc] sm:$0xf]
    %v2391 = vld [vmem:[%s1 + $0x24d0] sm:$0xf]
    %v2392 = vld [vmem:[%s1 + $0x24d4] sm:$0xf]
    %v2393 = vld [vmem:[%s1 + $0x24d8] sm:$0xf]
    %v2394 = vld [vmem:[%s1 + $0x24dc] sm:$0xf]
    %v2395 = vld [vmem:[%s1 + $0x24e0] sm:$0xf]
    %v2396 = vld [vmem:[%s1 + $0x24e4] sm:$0xf]
    %v2397 = vld [vmem:[%s1 + $0x24e8] sm:$0xf]
    %v2398 = vld [vmem:[%s1 + $0x24ec] sm:$0xf]
    %v2399 = vld [vmem:[%s1 + $0x24f0] sm:$0xf]
    %v2400 = vld [vmem:[%s1 + $0x24f4] sm:$0xf]
    %v2401 = vld [vmem:[%s2] sm:$0x1]
    %v2403 = vperm.slane %v2401, 0
    %2406 = vst [vmem:[#allocation1] ss:$9 sm:$0xff] %v16
    %v2407 = vld [vmem:[#allocation1] sm:$0xff]
    %v2408 = vld [vmem:[#allocation1 + $0x9] sm:$0xff]
    %v2409 = vld [vmem:[#allocation1 + $0x12] sm:$0xff]
    %v2410 = vld [vmem:[#allocation1 + $0x1b] sm:$0xff]
    %v2411 = vld [vmem:[#allocation1 + $0x24] sm:$0xff]
    %v2412 = vld [vmem:[#allocation1 + $0x2d] sm:$0xff]
    %v2413 = vld [vmem:[#allocation1 + $0x36] sm:$0xff]
    %v2414 = vld [vmem:[#allocation1 + $0x3f] sm:$0xff]
    %2416 = vst [vmem:[#allocation1] ss:$9 sm:$0xff] %v17
    %v2417 = vld [vmem:[#allocation1] sm:$0xff]
    %v2418 = vld [vmem:[#allocation1 + $0x9] sm:$0xff]
    %v2419 = vld [vmem:[#allocation1 + $0x12] sm:$0xff]
    %v2420 = vld [vmem:[#allocation1 + $0x1b] sm:$0xff]
    %v2421 = vld [vmem:[#allocation1 + $0x24] sm:$0xff]
    %v2422 = vld [vmem:[#allocation1 + $0x2d] sm:$0xff]
    %v2423 = vld [vmem:[#allocation1 + $0x36] sm:$0xff]
    %v2424 = vld [vmem:[#allocation1 + $0x3f] sm:$0xff]
    %2426 = vst [vmem:[#allocation1] ss:$9 sm:$0xff] %v18
    %v2427 = vld [vmem:[#allocation1] sm:$0xff]
    %v2428 = vld [vmem:[#allocation1 + $0x9] sm:$0xff]
    %v2429 = vld [vmem:[#allocation1 + $0x12] sm:$0xff]
    %v2430 = vld [vmem:[#allocation1 + $0x1b] sm:$0xff]
    %v2431 = vld [vmem:[#allocation1 + $0x24] sm:$0xff]
    %v2432 = vld [vmem:[#allocation1 + $0x2d] sm:$0xff]
    %v2433 = vld [vmem:[#allocation1 + $0x36] sm:$0xff]
    %v2434 = vld [vmem:[#allocation1 + $0x3f] sm:$0xff]
    %2436 = vst [vmem:[#allocation1] ss:$9 sm:$0xff] %v19
    %v2437 = vld [vmem:[#allocation1] sm:$0xff]
    %v2438 = vld [vmem:[#allocation1 + $0x9] sm:$0xff]
    %v2439 = vld [vmem:[#allocation1 + $0x12] sm:$0xff]
    %v2440 = vld [vmem:[#allocation1 + $0x1b] sm:$0xff]
    %v2441 = vld [vmem:[#allocation1 + $0x24] sm:$0xff]
    %v2442 = vld [vmem:[#allocation1 + $0x2d] sm:$0xff]
    %v2443 = vld [vmem:[#allocation1 + $0x36] sm:$0xff]
    %v2444 = vld [vmem:[#allocation1 + $0x3f] sm:$0xff]
    %2446 = vst [vmem:[#allocation1] ss:$9 sm:$0xff] %v20
    %v2447 = vld [vmem:[#allocation1] sm:$0xff]
    %v2448 = vld [vmem:[#allocation1 + $0x9] sm:$0xff]
    %v2449 = vld [vmem:[#allocation1 + $0x12] sm:$0xff]
    %v2450 = vld [vmem:[#allocation1 + $0x1b] sm:$0xff]
    %v2451 = vld [vmem:[#allocation1 + $0x24] sm:$0xff]
    %v2452 = vld [vmem:[#allocation1 + $0x2d] sm:$0xff]
    %v2453 = vld [vmem:[#allocation1 + $0x36] sm:$0xff]
    %v2454 = vld [vmem:[#allocation1 + $0x3f] sm:$0xff]
    %2456 = vst [vmem:[#allocation1] ss:$9 sm:$0xff] %v21
    %v2457 = vld [vmem:[#allocation1] sm:$0xff]
    %v2458 = vld [vmem:[#allocation1 + $0x9] sm:$0xff]
    %v2459 = vld [vmem:[#allocation1 + $0x12] sm:$0xff]
    %v2460 = vld [vmem:[#allocation1 + $0x1b] sm:$0xff]
    %v2461 = vld [vmem:[#allocation1 + $0x24] sm:$0xff]
    %v2462 = vld [vmem:[#allocation1 + $0x2d] sm:$0xff]
    %v2463 = vld [vmem:[#allocation1 + $0x36] sm:$0xff]
    %v2464 = vld [vmem:[#allocation1 + $0x3f] sm:$0xff]
    %2466 = vst [vmem:[#allocation1] ss:$9 sm:$0xff] %v22
    %v2467 = vld [vmem:[#allocation1] sm:$0xff]
    %v2468 = vld [vmem:[#allocation1 + $0x9] sm:$0xff]
    %v2469 = vld [vmem:[#allocation1 + $0x12] sm:$0xff]
    %v2470 = vld [vmem:[#allocation1 + $0x1b] sm:$0xff]
    %v2471 = vld [vmem:[#allocation1 + $0x24] sm:$0xff]
    %v2472 = vld [vmem:[#allocation1 + $0x2d] sm:$0xff]
    %v2473 = vld [vmem:[#allocation1 + $0x36] sm:$0xff]
    %v2474 = vld [vmem:[#allocation1 + $0x3f] sm:$0xff]
    %2476 = vst [vmem:[#allocation1] ss:$9 sm:$0xff] %v23
    %v2477 = vld [vmem:[#allocation1] sm:$0xff]
    %v2478 = vld [vmem:[#allocation1 + $0x9] sm:$0xff]
    %v2479 = vld [vmem:[#allocation1 + $0x12] sm:$0xff]
    %v2480 = vld [vmem:[#allocation1 + $0x1b] sm:$0xff]
    %v2481 = vld [vmem:[#allocation1 + $0x24] sm:$0xff]
    %v2482 = vld [vmem:[#allocation1 + $0x2d] sm:$0xff]
    %v2483 = vld [vmem:[#allocation1 + $0x36] sm:$0xff]
    %v2484 = vld [vmem:[#allocation1 + $0x3f] sm:$0xff]
    %2486 = vst [vmem:[#allocation1] ss:$9 sm:$0xff] %v24
    %v2487 = vld [vmem:[#allocation1] sm:$0xff]
    %v2488 = vld [vmem:[#allocation1 + $0x9] sm:$0xff]
    %v2489 = vld [vmem:[#allocation1 + $0x12] sm:$0xff]
    %v2490 = vld [vmem:[#allocation1 + $0x1b] sm:$0xff]
    %v2491 = vld [vmem:[#allocation1 + $0x24] sm:$0xff]
    %v2492 = vld [vmem:[#allocation1 + $0x2d] sm:$0xff]
    %v2493 = vld [vmem:[#allocation1 + $0x36] sm:$0xff]
    %v2494 = vld [vmem:[#allocation1 + $0x3f] sm:$0xff]
    %2496 = vst [vmem:[#allocation1] ss:$9 sm:$0xff] %v25
    %v2497 = vld [vmem:[#allocation1] sm:$0xff]
    %v2498 = vld [vmem:[#allocation1 + $0x9] sm:$0xff]
    %v2499 = vld [vmem:[#allocation1 + $0x12] sm:$0xff]
    %v2500 = vld [vmem:[#allocation1 + $0x1b] sm:$0xff]
    %v2501 = vld [vmem:[#allocation1 + $0x24] sm:$0xff]
    %v2502 = vld [vmem:[#allocation1 + $0x2d] sm:$0xff]
    %v2503 = vld [vmem:[#allocation1 + $0x36] sm:$0xff]
    %v2504 = vld [vmem:[#allocation1 + $0x3f] sm:$0xff]
    %2506 = vst [vmem:[#allocation1] ss:$9 sm:$0xff] %v26
    %v2507 = vld [vmem:[#allocation1] sm:$0xff]
    %v2508 = vld [vmem:[#allocation1 + $0x9] sm:$0xff]
    %v2509 = vld [vmem:[#allocation1 + $0x12] sm:$0xff]
    %v2510 = vld [vmem:[#allocation1 + $0x1b] sm:$0xff]
    %v2511 = vld [vmem:[#allocation1 + $0x24] sm:$0xff]
    %v2512 = vld [vmem:[#allocation1 + $0x2d] sm:$0xff]
    %v2513 = vld [vmem:[#allocation1 + $0x36] sm:$0xff]
    %v2514 = vld [vmem:[#allocation1 + $0x3f] sm:$0xff]
    %2516 = vst [vmem:[#allocation1] ss:$9 sm:$0xff] %v27
    %v2517 = vld [vmem:[#allocation1] sm:$0xff]
    %v2518 = vld [vmem:[#allocation1 + $0x9] sm:$0xff]
    %v2519 = vld [vmem:[#allocation1 + $0x12] sm:$0xff]
    %v2520 = vld [vmem:[#allocation1 + $0x1b] sm:$0xff]
    %v2521 = vld [vmem:[#allocation1 + $0x24] sm:$0xff]
    %v2522 = vld [vmem:[#allocation1 + $0x2d] sm:$0xff]
    %v2523 = vld [vmem:[#allocation1 + $0x36] sm:$0xff]
    %v2524 = vld [vmem:[#allocation1 + $0x3f] sm:$0xff]
    %2526 = vst [vmem:[#allocation1] ss:$9 sm:$0xff] %v28
    %v2527 = vld [vmem:[#allocation1] sm:$0xff]
    %v2528 = vld [vmem:[#allocation1 + $0x9] sm:$0xff]
    %v2529 = vld [vmem:[#allocation1 + $0x12] sm:$0xff]
    %v2530 = vld [vmem:[#allocation1 + $0x1b] sm:$0xff]
    %v2531 = vld [vmem:[#allocation1 + $0x24] sm:$0xff]
    %v2532 = vld [vmem:[#allocation1 + $0x2d] sm:$0xff]
    %v2533 = vld [vmem:[#allocation1 + $0x36] sm:$0xff]
    %v2534 = vld [vmem:[#allocation1 + $0x3f] sm:$0xff]
    %2536 = vst [vmem:[#allocation1] ss:$9 sm:$0xff] %v29
    %v2537 = vld [vmem:[#allocation1] sm:$0xff]
    %v2538 = vld [vmem:[#allocation1 + $0x9] sm:$0xff]
    %v2539 = vld [vmem:[#allocation1 + $0x12] sm:$0xff]
    %v2540 = vld [vmem:[#allocation1 + $0x1b] sm:$0xff]
    %v2541 = vld [vmem:[#allocation1 + $0x24] sm:$0xff]
    %v2542 = vld [vmem:[#allocation1 + $0x2d] sm:$0xff]
    %v2543 = vld [vmem:[#allocation1 + $0x36] sm:$0xff]
    %v2544 = vld [vmem:[#allocation1 + $0x3f] sm:$0xff]
    %2546 = vst [vmem:[#allocation1] ss:$9 sm:$0xff] %v30
    %v2547 = vld [vmem:[#allocation1] sm:$0xff]
    %v2548 = vld [vmem:[#allocation1 + $0x9] sm:$0xff]
    %v2549 = vld [vmem:[#allocation1 + $0x12] sm:$0xff]
    %v2550 = vld [vmem:[#allocation1 + $0x1b] sm:$0xff]
    %v2551 = vld [vmem:[#allocation1 + $0x24] sm:$0xff]
    %v2552 = vld [vmem:[#allocation1 + $0x2d] sm:$0xff]
    %v2553 = vld [vmem:[#allocation1 + $0x36] sm:$0xff]
    %v2554 = vld [vmem:[#allocation1 + $0x3f] sm:$0xff]
    %2556 = vst [vmem:[#allocation1] ss:$9 sm:$0xff] %v31
    %v2557 = vld [vmem:[#allocation1] sm:$0xff]
    %v2558 = vld [vmem:[#allocation1 + $0x9] sm:$0xff]
    %v2559 = vld [vmem:[#allocation1 + $0x12] sm:$0xff]
    %v2560 = vld [vmem:[#allocation1 + $0x1b] sm:$0xff]
    %v2561 = vld [vmem:[#allocation1 + $0x24] sm:$0xff]
    %v2562 = vld [vmem:[#allocation1 + $0x2d] sm:$0xff]
    %v2563 = vld [vmem:[#allocation1 + $0x36] sm:$0xff]
    %v2564 = vld [vmem:[#allocation1 + $0x3f] sm:$0xff]
    %2566 = vst [vmem:[#allocation1] ss:$9 sm:$0xff] %v32
    %v2567 = vld [vmem:[#allocation1] sm:$0xff]
    %v2568 = vld [vmem:[#allocation1 + $0x9] sm:$0xff]
    %v2569 = vld [vmem:[#allocation1 + $0x12] sm:$0xff]
    %v2570 = vld [vmem:[#allocation1 + $0x1b] sm:$0xff]
    %v2571 = vld [vmem:[#allocation1 + $0x24] sm:$0xff]
    %v2572 = vld [vmem:[#allocation1 + $0x2d] sm:$0xff]
    %v2573 = vld [vmem:[#allocation1 + $0x36] sm:$0xff]
    %v2574 = vld [vmem:[#allocation1 + $0x3f] sm:$0xff]
    %2576 = vst [vmem:[#allocation1] ss:$9 sm:$0xff] %v33
    %v2577 = vld [vmem:[#allocation1] sm:$0xff]
    %v2578 = vld [vmem:[#allocation1 + $0x9] sm:$0xff]
    %v2579 = vld [vmem:[#allocation1 + $0x12] sm:$0xff]
    %v2580 = vld [vmem:[#allocation1 + $0x1b] sm:$0xff]
    %v2581 = vld [vmem:[#allocation1 + $0x24] sm:$0xff]
    %v2582 = vld [vmem:[#allocation1 + $0x2d] sm:$0xff]
    %v2583 = vld [vmem:[#allocation1 + $0x36] sm:$0xff]
    %v2584 = vld [vmem:[#allocation1 + $0x3f] sm:$0xff]
    %2586 = vst [vmem:[#allocation1] ss:$9 sm:$0xff] %v34
    %v2587 = vld [vmem:[#allocation1] sm:$0xff]
    %v2588 = vld [vmem:[#allocation1 + $0x9] sm:$0xff]
    %v2589 = vld [vmem:[#allocation1 + $0x12] sm:$0xff]
    %v2590 = vld [vmem:[#allocation1 + $0x1b] sm:$0xff]
    %v5104 = vunpack.c.l.b16 %v35
    %v5105 = vunpack.c.l.b16 %v36
    %v5106 = vunpack.c.l.b16 %v37
    %v5107 = vunpack.c.l.b16 %v38
    %v5108 = vunpack.c.l.b16 %v39
    %v5109 = vunpack.c.l.b16 %v40
    %v5110 = vunpack.c.l.b16 %v41
    %v5111 = vunpack.c.l.b16 %v42
    %v5112 = vunpack.c.l.b16 %v43
    %v5113 = vunpack.c.l.b16 %v44
    %v5114 = vunpack.c.l.b16 %v45
    %v5115 = vunpack.c.l.b16 %v46
    %v5116 = vunpack.c.l.b16 %v47
    %v5117 = vunpack.c.l.b16 %v48
    %v5118 = vunpack.c.l.b16 %v49
    %v5119 = vunpack.c.l.b16 %v50
    %v5120 = vunpack.c.l.b16 %v51
    %v5121 = vunpack.c.l.b16 %v52
    %v5122 = vunpack.c.l.b16 %v53
    %v5123 = vunpack.c.l.b16 %v54
    %v5124 = vunpack.c.l.b16 %v55
    %v5125 = vunpack.c.l.b16 %v56
    %v5126 = vunpack.c.l.b16 %v57
    %v5127 = vunpack.c.l.b16 %v58
    %v5128 = vunpack.c.l.b16 %v59
    %v5129 = vunpack.c.l.b16 %v60
    %v5130 = vunpack.c.l.b16 %v61
    %v5131 = vunpack.c.l.b16 %v62
    %v5132 = vunpack.c.l.b16 %v63
    %v5133 = vunpack.c.l.b16 %v64
    %v5134 = vunpack.c.l.b16 %v65
    %v5135 = vunpack.c.l.b16 %v66
    %v5136 = vunpack.c.l.b16 %v67
    %v5137 = vunpack.c.l.b16 %v68
    %v5138 = vunpack.c.l.b16 %v69
    %v5139 = vunpack.c.l.b16 %v70
    %v5140 = vunpack.c.l.b16 %v71
    %v5141 = vunpack.c.l.b16 %v72
    %v5142 = vunpack.c.l.b16 %v73
    %v5143 = vunpack.c.l.b16 %v74
    %v5144 = vunpack.c.l.b16 %v75
    %v5145 = vunpack.c.l.b16 %v76
    %v5146 = vunpack.c.l.b16 %v77
    %v5147 = vunpack.c.l.b16 %v78
    %v5148 = vunpack.c.l.b16 %v79
    %v5149 = vunpack.c.l.b16 %v80
    %v5150 = vunpack.c.l.b16 %v81
    %v5151 = vunpack.c.l.b16 %v82
    %v5152 = vunpack.c.l.b16 %v83
    %v5153 = vunpack.c.l.b16 %v84
    %v5154 = vunpack.c.l.b16 %v85
    %v5155 = vunpack.c.l.b16 %v86
    %v5156 = vunpack.c.l.b16 %v87
    %v5157 = vunpack.c.l.b16 %v88
    %v5158 = vunpack.c.l.b16 %v89
    %v5159 = vunpack.c.l.b16 %v90
    %v5160 = vunpack.c.l.b16 %v91
    %v5161 = vunpack.c.l.b16 %v92
    %v5162 = vunpack.c.l.b16 %v93
    %v5163 = vunpack.c.l.b16 %v94
    %v5164 = vunpack.c.l.b16 %v95
    %v5165 = vunpack.c.l.b16 %v96
    %v5166 = vunpack.c.l.b16 %v97
    %v5167 = vunpack.c.l.b16 %v98
    %v5168 = vunpack.c.l.b16 %v99
    %v5169 = vunpack.c.l.b16 %v100
    %v5170 = vunpack.c.l.b16 %v101
    %v5171 = vunpack.c.l.b16 %v102
    %v5172 = vunpack.c.l.b16 %v103
    %v5173 = vunpack.c.l.b16 %v104
    %v5174 = vunpack.c.l.b16 %v105
    %v5175 = vunpack.c.l.b16 %v106
    %v5176 = vunpack.c.l.b16 %v107
    %v5177 = vunpack.c.l.b16 %v108
    %v5178 = vunpack.c.l.b16 %v109
    %v5179 = vunpack.c.l.b16 %v110
    %v5180 = vunpack.c.l.b16 %v111
    %v5181 = vunpack.c.l.b16 %v112
    %v5182 = vunpack.c.l.b16 %v113
    %v5183 = vunpack.c.l.b16 %v114
    %v5184 = vunpack.c.l.b16 %v115
    %v5185 = vunpack.c.l.b16 %v116
    %v5186 = vunpack.c.l.b16 %v117
    %v5187 = vunpack.c.l.b16 %v118
    %v5188 = vunpack.c.l.b16 %v119
    %v5189 = vunpack.c.l.b16 %v120
    %v5190 = vunpack.c.l.b16 %v121
    %v5191 = vunpack.c.l.b16 %v122
    %v5192 = vunpack.c.l.b16 %v123
    %v5193 = vunpack.c.l.b16 %v124
    %v5194 = vunpack.c.l.b16 %v125
    %v5195 = vunpack.c.l.b16 %v126
    %v5196 = vunpack.c.l.b16 %v127
    %v5197 = vunpack.c.l.b16 %v128
    %v5198 = vunpack.c.l.b16 %v129
    %v5199 = vunpack.c.l.b16 %v130
    %v5200 = vunpack.c.l.b16 %v131
    %v5201 = vunpack.c.l.b16 %v132
    %v5202 = vunpack.c.l.b16 %v133
    %v5203 = vunpack.c.l.b16 %v134
    %v5204 = vunpack.c.l.b16 %v135
    %v5205 = vunpack.c.l.b16 %v136
    %v5206 = vunpack.c.l.b16 %v137
    %v5207 = vunpack.c.l.b16 %v138
    %v5208 = vunpack.c.l.b16 %v139
    %v5209 = vunpack.c.l.b16 %v140
    %v5210 = vunpack.c.l.b16 %v141
    %v5211 = vunpack.c.l.b16 %v142
    %v5212 = vunpack.c.l.b16 %v143
    %v5213 = vunpack.c.l.b16 %v144
    %v5214 = vunpack.c.l.b16 %v145
    %v5215 = vunpack.c.l.b16 %v146
    %v5216 = vunpack.c.l.b16 %v147
    %v5217 = vunpack.c.l.b16 %v148
    %v5218 = vunpack.c.l.b16 %v149
    %v5219 = vunpack.c.l.b16 %v150
    %v5220 = vunpack.c.l.b16 %v151
    %v5221 = vunpack.c.l.b16 %v152
    %v5222 = vunpack.c.l.b16 %v153
    %v5223 = vunpack.c.l.b16 %v154
    %v5224 = vunpack.c.l.b16 %v155
    %v5225 = vunpack.c.l.b16 %v156
    %v5226 = vunpack.c.l.b16 %v157
    %v5227 = vunpack.c.l.b16 %v158
    %v5228 = vunpack.c.l.b16 %v159
    %v5229 = vunpack.c.l.b16 %v160
    %v5230 = vunpack.c.l.b16 %v161
    %v5231 = vunpack.c.l.b16 %v162
    %v5232 = vunpack.c.l.b16 %v163
    %v5233 = vunpack.c.l.b16 %v164
    %v5234 = vunpack.c.l.b16 %v165
    %v5235 = vunpack.c.l.b16 %v166
    %v5236 = vunpack.c.l.b16 %v167
    %v5237 = vunpack.c.l.b16 %v168
    %v5238 = vunpack.c.l.b16 %v169
    %v5239 = vunpack.c.l.b16 %v170
    %v5240 = vunpack.c.l.b16 %v171
    %v5241 = vunpack.c.l.b16 %v172
    %v5242 = vunpack.c.l.b16 %v173
    %v5243 = vunpack.c.l.b16 %v174
    %v5244 = vunpack.c.l.b16 %v175
    %v5245 = vunpack.c.l.b16 %v176
    %v5246 = vunpack.c.l.b16 %v177
    %v5247 = vunpack.c.l.b16 %v178
    %v5248 = vunpack.c.l.b16 %v179
    %v5249 = vunpack.c.l.b16 %v180
    %v5250 = vunpack.c.l.b16 %v181
    %v5251 = vunpack.c.l.b16 %v182
    %v5252 = vunpack.c.l.b16 %v183
    %v5253 = vunpack.c.l.b16 %v184
    %v5254 = vunpack.c.l.b16 %v185
    %v5255 = vunpack.c.l.b16 %v186
    %v5256 = vunpack.c.l.b16 %v187
    %v5257 = vunpack.c.l.b16 %v188
    %v5258 = vunpack.c.l.b16 %v189
    %v5259 = vunpack.c.l.b16 %v190
    %v5260 = vunpack.c.l.b16 %v191
    %v5261 = vunpack.c.l.b16 %v192
    %v5262 = vunpack.c.l.b16 %v193
    %v5263 = vunpack.c.l.b16 %v194
    %v5264 = vunpack.c.l.b16 %v195
    %v5265 = vunpack.c.l.b16 %v196
    %v5266 = vunpack.c.l.b16 %v197
    %v5267 = vunpack.c.l.b16 %v198
    %v5268 = vunpack.c.l.b16 %v199
    %v5269 = vunpack.c.l.b16 %v200
    %v5270 = vunpack.c.l.b16 %v201
    %v5271 = vunpack.c.l.b16 %v202
    %v5272 = vunpack.c.l.b16 %v203
    %v5273 = vunpack.c.l.b16 %v204
    %v5274 = vunpack.c.l.b16 %v205
    %v5275 = vunpack.c.l.b16 %v206
    %v5276 = vunpack.c.l.b16 %v207
    %v5277 = vunpack.c.l.b16 %v208
    %v5278 = vunpack.c.l.b16 %v209
    %v5279 = vunpack.c.l.b16 %v210
    %v5280 = vunpack.c.l.b16 %v211
    %v5281 = vunpack.c.l.b16 %v212
    %v5282 = vunpack.c.l.b16 %v213
    %v5283 = vunpack.c.l.b16 %v214
    %v5284 = vunpack.c.l.b16 %v215
    %v5285 = vunpack.c.l.b16 %v216
    %v5286 = vunpack.c.l.b16 %v217
    %v5287 = vunpack.c.l.b16 %v218
    %v5288 = vunpack.c.l.b16 %v219
    %v5289 = vunpack.c.l.b16 %v220
    %v5290 = vunpack.c.l.b16 %v221
    %v5291 = vunpack.c.l.b16 %v222
    %v5292 = vunpack.c.l.b16 %v223
    %v5293 = vunpack.c.l.b16 %v224
    %v5294 = vunpack.c.l.b16 %v225
    %v5295 = vunpack.c.l.b16 %v226
    %v5296 = vunpack.c.l.b16 %v227
    %v5297 = vunpack.c.l.b16 %v228
    %v5298 = vunpack.c.l.b16 %v229
    %v5299 = vunpack.c.l.b16 %v230
    %v5300 = vunpack.c.l.b16 %v231
    %v5301 = vunpack.c.l.b16 %v232
    %v5302 = vunpack.c.l.b16 %v233
    %v5303 = vunpack.c.l.b16 %v234
    %v5304 = vunpack.c.l.b16 %v235
    %v5305 = vunpack.c.l.b16 %v236
    %v5306 = vunpack.c.l.b16 %v237
    %v5307 = vunpack.c.l.b16 %v238
    %v5308 = vunpack.c.l.b16 %v239
    %v5309 = vunpack.c.l.b16 %v240
    %v5310 = vunpack.c.l.b16 %v241
    %v5311 = vunpack.c.l.b16 %v242
    %v5312 = vunpack.c.l.b16 %v243
    %v5313 = vunpack.c.l.b16 %v244
    %v5314 = vunpack.c.l.b16 %v245
    %v5315 = vunpack.c.l.b16 %v246
    %v5316 = vunpack.c.l.b16 %v247
    %v5317 = vunpack.c.l.b16 %v248
    %v5318 = vunpack.c.l.b16 %v249
    %v5319 = vunpack.c.l.b16 %v250
    %v5320 = vunpack.c.l.b16 %v251
    %v5321 = vunpack.c.l.b16 %v252
    %v5322 = vunpack.c.l.b16 %v253
    %v5323 = vunpack.c.l.b16 %v254
    %v5324 = vunpack.c.l.b16 %v255
    %v5325 = vunpack.c.l.b16 %v256
    %v5326 = vunpack.c.l.b16 %v257
    %v5327 = vunpack.c.l.b16 %v258
    %v5328 = vunpack.c.l.b16 %v259
    %v5329 = vunpack.c.l.b16 %v260
    %v5330 = vunpack.c.l.b16 %v261
    %v5331 = vunpack.c.l.b16 %v262
    %v5332 = vunpack.c.l.b16 %v263
    %v5333 = vunpack.c.l.b16 %v264
    %v5334 = vunpack.c.l.b16 %v265
    %v5335 = vunpack.c.l.b16 %v266
    %v5336 = vunpack.c.l.b16 %v267
    %v5337 = vunpack.c.l.b16 %v268
    %v5338 = vunpack.c.l.b16 %v269
    %v5339 = vunpack.c.l.b16 %v270
    %v5340 = vunpack.c.l.b16 %v271
    %v5341 = vunpack.c.l.b16 %v272
    %v5342 = vunpack.c.l.b16 %v273
    %v5343 = vunpack.c.l.b16 %v274
    %v5344 = vunpack.c.l.b16 %v275
    %v5345 = vunpack.c.l.b16 %v276
    %v5346 = vunpack.c.l.b16 %v277
    %v5347 = vunpack.c.l.b16 %v278
    %v5348 = vunpack.c.l.b16 %v279
    %v5349 = vunpack.c.l.b16 %v280
    %v5350 = vunpack.c.l.b16 %v281
    %v5351 = vunpack.c.l.b16 %v282
    %v5352 = vunpack.c.l.b16 %v283
    %v5353 = vunpack.c.l.b16 %v284
    %v5354 = vunpack.c.l.b16 %v285
    %v5355 = vunpack.c.l.b16 %v286
    %v5356 = vunpack.c.l.b16 %v287
    %v5357 = vunpack.c.l.b16 %v288
    %v5358 = vunpack.c.l.b16 %v289
    %v5359 = vunpack.c.l.b16 %v290
    %v5360 = vunpack.c.l.b16 %v291
    %v5361 = vunpack.c.l.b16 %v292
    %v5362 = vunpack.c.l.b16 %v293
    %v5363 = vunpack.c.l.b16 %v294
    %v5364 = vunpack.c.l.b16 %v295
    %v5365 = vunpack.c.l.b16 %v296
    %v5366 = vunpack.c.l.b16 %v297
    %v5367 = vunpack.c.l.b16 %v298
    %v5368 = vunpack.c.l.b16 %v299
    %v5369 = vunpack.c.l.b16 %v300
    %v5370 = vunpack.c.l.b16 %v301
    %v5371 = vunpack.c.l.b16 %v302
    %v5372 = vunpack.c.l.b16 %v303
    %v5373 = vunpack.c.l.b16 %v304
    %v5374 = vunpack.c.l.b16 %v305
    %v5375 = vunpack.c.l.b16 %v306
    %v5376 = vunpack.c.l.b16 %v307
    %v5377 = vunpack.c.l.b16 %v308
    %v5378 = vunpack.c.l.b16 %v309
    %v5379 = vunpack.c.l.b16 %v310
    %v5380 = vunpack.c.l.b16 %v311
    %v5381 = vunpack.c.l.b16 %v312
    %v5382 = vunpack.c.l.b16 %v313
    %v5383 = vunpack.c.l.b16 %v314
    %v5384 = vunpack.c.l.b16 %v315
    %v5385 = vunpack.c.l.b16 %v316
    %v5386 = vunpack.c.l.b16 %v317
    %v5387 = vunpack.c.l.b16 %v318
    %v5388 = vunpack.c.l.b16 %v319
    %v5389 = vunpack.c.l.b16 %v320
    %v5390 = vunpack.c.l.b16 %v321
    %v5391 = vunpack.c.l.b16 %v322
    %v5392 = vunpack.c.l.b16 %v323
    %v5393 = vunpack.c.l.b16 %v324
    %v5394 = vunpack.c.l.b16 %v325
    %v5395 = vunpack.c.l.b16 %v326
    %v5396 = vunpack.c.l.b16 %v327
    %v5397 = vunpack.c.l.b16 %v328
    %v5398 = vunpack.c.l.b16 %v329
    %v5399 = vunpack.c.l.b16 %v330
    %v5400 = vunpack.c.l.b16 %v331
    %v5401 = vunpack.c.l.b16 %v332
    %v5402 = vunpack.c.l.b16 %v333
    %v5403 = vunpack.c.l.b16 %v334
    %v5404 = vunpack.c.l.b16 %v335
    %v5405 = vunpack.c.l.b16 %v336
    %v5406 = vunpack.c.l.b16 %v337
    %v5407 = vunpack.c.l.b16 %v338
    %v5408 = vunpack.c.l.b16 %v339
    %v5409 = vunpack.c.l.b16 %v340
    %v5410 = vunpack.c.l.b16 %v341
    %v5411 = vunpack.c.l.b16 %v342
    %v5412 = vunpack.c.l.b16 %v343
    %v5413 = vunpack.c.l.b16 %v344
    %v5414 = vunpack.c.l.b16 %v345
    %v5415 = vunpack.c.l.b16 %v346
    %v5416 = vunpack.c.l.b16 %v347
    %v5417 = vunpack.c.l.b16 %v348
    %v5418 = vunpack.c.l.b16 %v349
    %v5419 = vunpack.c.l.b16 %v350
    %v5420 = vunpack.c.l.b16 %v351
    %v5421 = vunpack.c.l.b16 %v352
    %v5422 = vunpack.c.l.b16 %v353
    %v5423 = vunpack.c.l.b16 %v354
    %v5424 = vunpack.c.l.b16 %v355
    %v5425 = vunpack.c.l.b16 %v356
    %v5426 = vunpack.c.l.b16 %v357
    %v5427 = vunpack.c.l.b16 %v358
    %v5428 = vunpack.c.l.b16 %v359
    %v5429 = vunpack.c.l.b16 %v360
    %v5430 = vunpack.c.l.b16 %v361
    %v5431 = vunpack.c.l.b16 %v362
    %v5432 = vunpack.c.l.b16 %v363
    %v5433 = vunpack.c.l.b16 %v364
    %v5434 = vunpack.c.l.b16 %v365
    %v5435 = vunpack.c.l.b16 %v366
    %v5436 = vunpack.c.l.b16 %v367
    %v5437 = vunpack.c.l.b16 %v368
    %v5438 = vunpack.c.l.b16 %v369
    %v5439 = vunpack.c.l.b16 %v370
    %v5440 = vunpack.c.l.b16 %v371
    %v5441 = vunpack.c.l.b16 %v372
    %v5442 = vunpack.c.l.b16 %v373
    %v5443 = vunpack.c.l.b16 %v374
    %v5444 = vunpack.c.l.b16 %v375
    %v5445 = vunpack.c.l.b16 %v376
    %v5446 = vunpack.c.l.b16 %v377
    %v5447 = vunpack.c.l.b16 %v378
    %v5448 = vunpack.c.l.b16 %v379
    %v5449 = vunpack.c.l.b16 %v380
    %v5450 = vunpack.c.l.b16 %v381
    %v5451 = vunpack.c.l.b16 %v382
    %v5452 = vunpack.c.l.b16 %v383
    %v5453 = vunpack.c.l.b16 %v384
    %v5454 = vunpack.c.l.b16 %v385
    %v5455 = vunpack.c.l.b16 %v386
    %v5456 = vunpack.c.l.b16 %v387
    %v5457 = vunpack.c.l.b16 %v388
    %v5458 = vunpack.c.l.b16 %v389
    %v5459 = vunpack.c.l.b16 %v390
    %v5460 = vunpack.c.l.b16 %v391
    %v5461 = vunpack.c.l.b16 %v392
    %v5462 = vunpack.c.l.b16 %v393
    %v5463 = vunpack.c.l.b16 %v394
    %v5464 = vunpack.c.l.b16 %v395
    %v5465 = vunpack.c.l.b16 %v396
    %v5466 = vunpack.c.l.b16 %v397
    %v5467 = vunpack.c.l.b16 %v398
    %v5468 = vunpack.c.l.b16 %v399
    %v5469 = vunpack.c.l.b16 %v400
    %v5470 = vunpack.c.l.b16 %v401
    %v5471 = vunpack.c.l.b16 %v402
    %v5472 = vunpack.c.l.b16 %v403
    %v5473 = vunpack.c.l.b16 %v404
    %v5474 = vunpack.c.l.b16 %v405
    %v5475 = vunpack.c.l.b16 %v406
    %v5476 = vunpack.c.l.b16 %v407
    %v5477 = vunpack.c.l.b16 %v408
    %v5478 = vunpack.c.l.b16 %v409
    %v5479 = vunpack.c.l.b16 %v410
    %v5480 = vunpack.c.l.b16 %v411
    %v5481 = vunpack.c.l.b16 %v412
    %v5482 = vunpack.c.l.b16 %v413
    %v5483 = vunpack.c.l.b16 %v414
    %v5484 = vunpack.c.l.b16 %v415
    %v5485 = vunpack.c.l.b16 %v416
    %v5486 = vunpack.c.l.b16 %v417
    %v5487 = vunpack.c.l.b16 %v418
    %v5488 = vunpack.c.l.b16 %v419
    %v5489 = vunpack.c.l.b16 %v420
    %v5490 = vunpack.c.l.b16 %v421
    %v5491 = vunpack.c.l.b16 %v422
    %v5492 = vunpack.c.l.b16 %v423
    %v5493 = vunpack.c.l.b16 %v424
    %v5494 = vunpack.c.l.b16 %v425
    %v5495 = vunpack.c.l.b16 %v426
    %v5496 = vunpack.c.l.b16 %v427
    %v5497 = vunpack.c.l.b16 %v428
    %v5498 = vunpack.c.l.b16 %v429
    %v5499 = vunpack.c.l.b16 %v430
    %v5500 = vunpack.c.l.b16 %v431
    %v5501 = vunpack.c.l.b16 %v432
    %v5502 = vunpack.c.l.b16 %v433
    %v5503 = vunpack.c.l.b16 %v434
    %v5504 = vunpack.c.l.b16 %v435
    %v5505 = vunpack.c.l.b16 %v436
    %v5506 = vunpack.c.l.b16 %v437
    %v5507 = vunpack.c.l.b16 %v438
    %v5508 = vunpack.c.l.b16 %v439
    %v5509 = vunpack.c.l.b16 %v440
    %v5510 = vunpack.c.l.b16 %v441
    %v5511 = vunpack.c.l.b16 %v442
    %v5512 = vunpack.c.l.b16 %v443
    %v5513 = vunpack.c.l.b16 %v444
    %v5514 = vunpack.c.l.b16 %v445
    %v5515 = vunpack.c.l.b16 %v446
    %v5516 = vunpack.c.l.b16 %v447
    %v5517 = vunpack.c.l.b16 %v448
    %v5518 = vunpack.c.l.b16 %v449
    %v5519 = vunpack.c.l.b16 %v450
    %v5520 = vunpack.c.l.b16 %v451
    %v5521 = vunpack.c.l.b16 %v452
    %v5522 = vunpack.c.l.b16 %v453
    %v5523 = vunpack.c.l.b16 %v454
    %v5524 = vunpack.c.l.b16 %v455
    %v5525 = vunpack.c.l.b16 %v456
    %v5526 = vunpack.c.l.b16 %v457
    %v5527 = vunpack.c.l.b16 %v458
    %v5528 = vunpack.c.l.b16 %v459
    %v5529 = vunpack.c.l.b16 %v460
    %v5530 = vunpack.c.l.b16 %v461
    %v5531 = vunpack.c.l.b16 %v462
    %v5532 = vunpack.c.l.b16 %v463
    %v5533 = vunpack.c.l.b16 %v464
    %v5534 = vunpack.c.l.b16 %v465
    %v5535 = vunpack.c.l.b16 %v466
    %v5536 = vunpack.c.l.b16 %v467
    %v5537 = vunpack.c.l.b16 %v468
    %v5538 = vunpack.c.l.b16 %v469
    %v5539 = vunpack.c.l.b16 %v470
    %v5540 = vunpack.c.l.b16 %v471
    %v5541 = vunpack.c.l.b16 %v472
    %v5542 = vunpack.c.l.b16 %v473
    %v5543 = vunpack.c.l.b16 %v474
    %v5544 = vunpack.c.l.b16 %v475
    %v5545 = vunpack.c.l.b16 %v476
    %v5546 = vunpack.c.l.b16 %v477
    %v5547 = vunpack.c.l.b16 %v478
    %v5548 = vunpack.c.l.b16 %v479
    %v5549 = vunpack.c.l.b16 %v480
    %v5550 = vunpack.c.l.b16 %v481
    %v5551 = vunpack.c.l.b16 %v482
    %v5552 = vunpack.c.l.b16 %v483
    %v5553 = vunpack.c.l.b16 %v484
    %v5554 = vunpack.c.l.b16 %v485
    %v5555 = vunpack.c.l.b16 %v486
    %v5556 = vunpack.c.l.b16 %v487
    %v5557 = vunpack.c.l.b16 %v488
    %v5558 = vunpack.c.l.b16 %v489
    %v5559 = vunpack.c.l.b16 %v490
    %v5560 = vunpack.c.l.b16 %v491
    %v5561 = vunpack.c.l.b16 %v492
    %v5562 = vunpack.c.l.b16 %v493
    %v5563 = vunpack.c.l.b16 %v494
    %v5564 = vunpack.c.l.b16 %v495
    %v5565 = vunpack.c.l.b16 %v496
    %v5566 = vunpack.c.l.b16 %v497
    %v5567 = vunpack.c.l.b16 %v498
    %v5568 = vunpack.c.l.b16 %v499
    %v5569 = vunpack.c.l.b16 %v500
    %v5570 = vunpack.c.l.b16 %v501
    %v5571 = vunpack.c.l.b16 %v502
    %v5572 = vunpack.c.l.b16 %v503
    %v5573 = vunpack.c.l.b16 %v504
    %v5574 = vunpack.c.l.b16 %v505
    %v5575 = vunpack.c.l.b16 %v506
    %v5576 = vunpack.c.l.b16 %v507
    %v5577 = vunpack.c.l.b16 %v508
    %v5578 = vunpack.c.l.b16 %v509
    %v5579 = vunpack.c.l.b16 %v510
    %v5580 = vunpack.c.l.b16 %v511
    %v5581 = vunpack.c.l.b16 %v512
    %v5582 = vunpack.c.l.b16 %v513
    %v5583 = vunpack.c.l.b16 %v514
    %v5584 = vunpack.c.l.b16 %v515
    %v5585 = vunpack.c.l.b16 %v516
    %v5586 = vunpack.c.l.b16 %v517
    %v5587 = vunpack.c.l.b16 %v518
    %v5588 = vunpack.c.l.b16 %v519
    %v5589 = vunpack.c.l.b16 %v520
    %v5590 = vunpack.c.l.b16 %v521
    %v5591 = vunpack.c.l.b16 %v522
    %v5592 = vunpack.c.l.b16 %v523
    %v5593 = vunpack.c.l.b16 %v524
    %v5594 = vunpack.c.l.b16 %v525
    %v5595 = vunpack.c.l.b16 %v526
    %v5596 = vunpack.c.l.b16 %v527
    %v5597 = vunpack.c.l.b16 %v528
    %v5598 = vunpack.c.l.b16 %v529
    %v5599 = vunpack.c.l.b16 %v530
    %v5600 = vunpack.c.l.b16 %v531
    %v5601 = vunpack.c.l.b16 %v532
    %v5602 = vunpack.c.l.b16 %v533
    %v5603 = vunpack.c.l.b16 %v534
    %v5604 = vunpack.c.l.b16 %v535
    %v5605 = vunpack.c.l.b16 %v536
    %v5606 = vunpack.c.l.b16 %v537
    %v5607 = vunpack.c.l.b16 %v538
    %v5608 = vunpack.c.l.b16 %v539
    %v5609 = vunpack.c.l.b16 %v540
    %v5610 = vunpack.c.l.b16 %v541
    %v5611 = vunpack.c.l.b16 %v542
    %v5612 = vunpack.c.l.b16 %v543
    %v5613 = vunpack.c.l.b16 %v544
    %v5614 = vunpack.c.l.b16 %v545
    %v5615 = vunpack.c.l.b16 %v546
    %v5616 = vunpack.c.l.b16 %v547
    %v5617 = vunpack.c.l.b16 %v548
    %v5618 = vunpack.c.l.b16 %v549
    %v5619 = vunpack.c.l.b16 %v550
    %v5620 = vunpack.c.l.b16 %v551
    %v5621 = vunpack.c.l.b16 %v552
    %v5622 = vunpack.c.l.b16 %v553
    %v5623 = vunpack.c.l.b16 %v554
    %v5624 = vunpack.c.l.b16 %v555
    %v5625 = vunpack.c.l.b16 %v556
    %v5626 = vunpack.c.l.b16 %v557
    %v5627 = vunpack.c.l.b16 %v558
    %v5628 = vunpack.c.l.b16 %v559
    %v5629 = vunpack.c.l.b16 %v560
    %v5630 = vunpack.c.l.b16 %v561
    %v5631 = vunpack.c.l.b16 %v562
    %v5632 = vunpack.c.l.b16 %v563
    %v5633 = vunpack.c.l.b16 %v564
    %v5634 = vunpack.c.l.b16 %v565
    %v5635 = vunpack.c.l.b16 %v566
    %v5636 = vunpack.c.l.b16 %v567
    %v5637 = vunpack.c.l.b16 %v568
    %v5638 = vunpack.c.l.b16 %v569
    %v5639 = vunpack.c.l.b16 %v570
    %v5640 = vunpack.c.l.b16 %v571
    %v5641 = vunpack.c.l.b16 %v572
    %v5642 = vunpack.c.l.b16 %v573
    %v5643 = vunpack.c.l.b16 %v574
    %v5644 = vunpack.c.l.b16 %v575
    %v5645 = vunpack.c.l.b16 %v576
    %v5646 = vunpack.c.l.b16 %v577
    %v5647 = vunpack.c.l.b16 %v578
    %v5648 = vunpack.c.l.b16 %v579
    %v5649 = vunpack.c.l.b16 %v580
    %v5650 = vunpack.c.l.b16 %v581
    %v5651 = vunpack.c.l.b16 %v582
    %v5652 = vunpack.c.l.b16 %v583
    %v5653 = vunpack.c.l.b16 %v584
    %v5654 = vunpack.c.l.b16 %v585
    %v5655 = vunpack.c.l.b16 %v586
    %v5656 = vunpack.c.l.b16 %v587
    %v5657 = vunpack.c.l.b16 %v588
    %v5658 = vunpack.c.l.b16 %v589
    %v5659 = vunpack.c.l.b16 %v590
    %v5660 = vunpack.c.l.b16 %v591
    %v5661 = vunpack.c.l.b16 %v592
    %v5662 = vunpack.c.l.b16 %v593
    %v5663 = vunpack.c.l.b16 %v594
    %v5664 = vunpack.c.l.b16 %v595
    %v5665 = vunpack.c.l.b16 %v596
    %v5666 = vunpack.c.l.b16 %v597
    %v5667 = vunpack.c.l.b16 %v598
    %v5668 = vunpack.c.l.b16 %v599
    %v5669 = vunpack.c.l.b16 %v600
    %v5670 = vunpack.c.l.b16 %v601
    %v5671 = vunpack.c.l.b16 %v602
    %v5672 = vunpack.c.l.b16 %v603
    %v5673 = vunpack.c.l.b16 %v604
    %v5674 = vunpack.c.l.b16 %v605
    %v5675 = vunpack.c.l.b16 %v606
    %v5676 = vunpack.c.l.b16 %v607
    %v5677 = vunpack.c.l.b16 %v608
    %v5678 = vunpack.c.l.b16 %v609
    %v5679 = vunpack.c.l.b16 %v610
    %v5680 = vunpack.c.l.b16 %v611
    %v5681 = vunpack.c.l.b16 %v612
    %v5682 = vunpack.c.l.b16 %v613
    %v5683 = vunpack.c.l.b16 %v614
    %v5684 = vunpack.c.l.b16 %v615
    %v5685 = vunpack.c.l.b16 %v616
    %v5686 = vunpack.c.l.b16 %v617
    %v5687 = vunpack.c.l.b16 %v618
    %v5688 = vunpack.c.l.b16 %v619
    %v5689 = vunpack.c.l.b16 %v620
    %v5690 = vunpack.c.l.b16 %v621
    %v5691 = vunpack.c.l.b16 %v622
    %v5692 = vunpack.c.l.b16 %v623
    %v5693 = vunpack.c.l.b16 %v624
    %v5694 = vunpack.c.l.b16 %v625
    %v5695 = vunpack.c.l.b16 %v626
    %v5696 = vunpack.c.l.b16 %v627
    %v5697 = vunpack.c.l.b16 %v628
    %v5698 = vunpack.c.l.b16 %v629
    %v5699 = vunpack.c.l.b16 %v630
    %v5700 = vunpack.c.l.b16 %v631
    %v5701 = vunpack.c.l.b16 %v632
    %v5702 = vunpack.c.l.b16 %v633
    %v5703 = vunpack.c.l.b16 %v634
    %v5704 = vunpack.c.l.b16 %v635
    %v5705 = vunpack.c.l.b16 %v636
    %v5706 = vunpack.c.l.b16 %v637
    %v5707 = vunpack.c.l.b16 %v638
    %v5708 = vunpack.c.l.b16 %v639
    %v5709 = vunpack.c.l.b16 %v640
    %v5710 = vunpack.c.l.b16 %v641
    %v5711 = vunpack.c.l.b16 %v642
    %v5712 = vunpack.c.l.b16 %v643
    %v5713 = vunpack.c.l.b16 %v644
    %v5714 = vunpack.c.l.b16 %v645
    %v5715 = vunpack.c.l.b16 %v646
    %v5716 = vunpack.c.l.b16 %v647
    %v5717 = vunpack.c.l.b16 %v648
    %v5718 = vunpack.c.l.b16 %v649
    %v5719 = vunpack.c.l.b16 %v650
    %v5720 = vunpack.c.l.b16 %v651
    %v5721 = vunpack.c.l.b16 %v652
    %v5722 = vunpack.c.l.b16 %v653
    %v5723 = vunpack.c.l.b16 %v654
    %v5724 = vunpack.c.l.b16 %v655
    %v5725 = vunpack.c.l.b16 %v656
    %v5726 = vunpack.c.l.b16 %v657
    %v5727 = vunpack.c.l.b16 %v658
    %v5728 = vunpack.c.l.b16 %v659
    %v5729 = vunpack.c.l.b16 %v660
    %v5730 = vunpack.c.l.b16 %v661
    %v5731 = vunpack.c.l.b16 %v662
    %v5732 = vunpack.c.l.b16 %v663
    %v5733 = vunpack.c.l.b16 %v664
    %v5734 = vunpack.c.l.b16 %v665
    %v5735 = vunpack.c.l.b16 %v666
    %v5736 = vunpack.c.l.b16 %v667
    %v5737 = vunpack.c.l.b16 %v668
    %v5738 = vunpack.c.l.b16 %v669
    %v5739 = vunpack.c.l.b16 %v670
    %v5740 = vunpack.c.l.b16 %v671
    %v5741 = vunpack.c.l.b16 %v672
    %v5742 = vunpack.c.l.b16 %v673
    %v5743 = vunpack.c.l.b16 %v674
    %v5744 = vunpack.c.l.b16 %v675
    %v5745 = vunpack.c.l.b16 %v676
    %v5746 = vunpack.c.l.b16 %v677
    %v5747 = vunpack.c.l.b16 %v678
    %v5748 = vunpack.c.l.b16 %v679
    %v5749 = vunpack.c.l.b16 %v680
    %v5750 = vunpack.c.l.b16 %v681
    %v5751 = vunpack.c.l.b16 %v682
    %v5752 = vunpack.c.l.b16 %v683
    %v5753 = vunpack.c.l.b16 %v684
    %v5754 = vunpack.c.l.b16 %v685
    %v5755 = vunpack.c.l.b16 %v686
    %v5756 = vunpack.c.l.b16 %v687
    %v5757 = vunpack.c.l.b16 %v688
    %v5758 = vunpack.c.l.b16 %v689
    %v5759 = vunpack.c.l.b16 %v690
    %v5760 = vunpack.c.l.b16 %v691
    %v5761 = vunpack.c.l.b16 %v692
    %v5762 = vunpack.c.l.b16 %v693
    %v5763 = vunpack.c.l.b16 %v694
    %v5764 = vunpack.c.l.b16 %v695
    %v5765 = vunpack.c.l.b16 %v696
    %v5766 = vunpack.c.l.b16 %v697
    %v5767 = vunpack.c.l.b16 %v698
    %v5768 = vunpack.c.l.b16 %v699
    %v5769 = vunpack.c.l.b16 %v700
    %v5770 = vunpack.c.l.b16 %v701
    %v5771 = vunpack.c.l.b16 %v702
    %v5772 = vunpack.c.l.b16 %v703
    %v5773 = vunpack.c.l.b16 %v704
    %v5774 = vunpack.c.l.b16 %v705
    %v5775 = vunpack.c.l.b16 %v706
    %v5776 = vunpack.c.l.b16 %v707
    %v5777 = vunpack.c.l.b16 %v708
    %v5778 = vunpack.c.l.b16 %v709
    %v5779 = vunpack.c.l.b16 %v710
    %v5780 = vunpack.c.l.b16 %v711
    %v5781 = vunpack.c.l.b16 %v712
    %v5782 = vunpack.c.l.b16 %v713
    %v5783 = vunpack.c.l.b16 %v714
    %v5784 = vunpack.c.l.b16 %v715
    %v5785 = vunpack.c.l.b16 %v716
    %v5786 = vunpack.c.l.b16 %v717
    %v5787 = vunpack.c.l.b16 %v718
    %v5788 = vunpack.c.l.b16 %v719
    %v5789 = vunpack.c.l.b16 %v720
    %v5790 = vunpack.c.l.b16 %v721
    %v5791 = vunpack.c.l.b16 %v722
    %v5792 = vunpack.c.l.b16 %v723
    %v5793 = vunpack.c.l.b16 %v724
    %v5794 = vunpack.c.l.b16 %v725
    %v5795 = vunpack.c.l.b16 %v726
    %v5796 = vunpack.c.l.b16 %v727
    %v5797 = vunpack.c.l.b16 %v728
    %v5798 = vunpack.c.l.b16 %v729
    %v5799 = vunpack.c.l.b16 %v730
    %v5800 = vunpack.c.l.b16 %v731
    %v5801 = vunpack.c.l.b16 %v732
    %v5802 = vunpack.c.l.b16 %v733
    %v5803 = vunpack.c.l.b16 %v734
    %v5804 = vunpack.c.l.b16 %v735
    %v5805 = vunpack.c.l.b16 %v736
    %v5806 = vunpack.c.l.b16 %v737
    %v5807 = vunpack.c.l.b16 %v738
    %v5808 = vunpack.c.l.b16 %v739
    %v5809 = vunpack.c.l.b16 %v740
    %v5810 = vunpack.c.l.b16 %v741
    %v5811 = vunpack.c.l.b16 %v742
    %v5812 = vunpack.c.l.b16 %v743
    %v5813 = vunpack.c.l.b16 %v744
    %v5814 = vunpack.c.l.b16 %v745
    %v5815 = vunpack.c.l.b16 %v746
    %v5816 = vunpack.c.l.b16 %v747
    %v5817 = vunpack.c.l.b16 %v748
    %v5818 = vunpack.c.l.b16 %v749
    %v5819 = vunpack.c.l.b16 %v750
    %v5820 = vunpack.c.l.b16 %v751
    %v5821 = vunpack.c.l.b16 %v752
    %v5822 = vunpack.c.l.b16 %v753
    %v5823 = vunpack.c.l.b16 %v754
    %v5824 = vunpack.c.l.b16 %v755
    %v5825 = vunpack.c.l.b16 %v756
    %v5826 = vunpack.c.l.b16 %v757
    %v5827 = vunpack.c.l.b16 %v758
    %v5828 = vunpack.c.l.b16 %v759
    %v5829 = vunpack.c.l.b16 %v760
    %v5830 = vunpack.c.l.b16 %v761
    %v5831 = vunpack.c.l.b16 %v762
    %v5832 = vunpack.c.l.b16 %v763
    %v5833 = vunpack.c.l.b16 %v764
    %v5834 = vunpack.c.l.b16 %v765
    %v5835 = vunpack.c.l.b16 %v766
    %v5836 = vunpack.c.l.b16 %v767
    %v5837 = vunpack.c.l.b16 %v768
    %v5838 = vunpack.c.l.b16 %v769
    %v5839 = vunpack.c.l.b16 %v770
    %v5840 = vunpack.c.l.b16 %v771
    %v5841 = vunpack.c.l.b16 %v772
    %v5842 = vunpack.c.l.b16 %v773
    %v5843 = vunpack.c.l.b16 %v774
    %v5844 = vunpack.c.l.b16 %v775
    %v5845 = vunpack.c.l.b16 %v776
    %v5846 = vunpack.c.l.b16 %v777
    %v5847 = vunpack.c.l.b16 %v778
    %v5848 = vunpack.c.l.b16 %v779
    %v5849 = vunpack.c.l.b16 %v780
    %v5850 = vunpack.c.l.b16 %v781
    %v5851 = vunpack.c.l.b16 %v782
    %v5852 = vunpack.c.l.b16 %v783
    %v5853 = vunpack.c.l.b16 %v784
    %v5854 = vunpack.c.l.b16 %v785
    %v5855 = vunpack.c.l.b16 %v786
    %v5856 = vunpack.c.l.b16 %v787
    %v5857 = vunpack.c.l.b16 %v788
    %v5858 = vunpack.c.l.b16 %v789
    %v5859 = vunpack.c.l.b16 %v790
    %v5860 = vunpack.c.l.b16 %v791
    %v5861 = vunpack.c.l.b16 %v792
    %v5862 = vunpack.c.l.b16 %v793
    %v5863 = vunpack.c.l.b16 %v794
    %v5864 = vunpack.c.l.b16 %v795
    %v5865 = vunpack.c.l.b16 %v796
    %v5866 = vunpack.c.l.b16 %v797
    %v5867 = vunpack.c.l.b16 %v798
    %v5868 = vunpack.c.l.b16 %v799
    %v5869 = vunpack.c.l.b16 %v800
    %v5870 = vunpack.c.l.b16 %v801
    %v5871 = vunpack.c.l.b16 %v802
    %v5872 = vunpack.c.l.b16 %v803
    %v5873 = vunpack.c.l.b16 %v804
    %v5874 = vunpack.c.l.b16 %v805
    %v5875 = vunpack.c.l.b16 %v806
    %v5876 = vunpack.c.l.b16 %v807
    %v5877 = vunpack.c.l.b16 %v808
    %v5878 = vunpack.c.l.b16 %v809
    %v5879 = vunpack.c.l.b16 %v810
    %v5880 = vunpack.c.l.b16 %v811
    %v5881 = vunpack.c.l.b16 %v812
    %v5882 = vunpack.c.l.b16 %v813
    %v5883 = vunpack.c.l.b16 %v814
    %v5884 = vunpack.c.l.b16 %v815
    %v5885 = vunpack.c.l.b16 %v816
    %v5886 = vunpack.c.l.b16 %v817
    %v5887 = vunpack.c.l.b16 %v818
    %v5888 = vunpack.c.l.b16 %v819
    %v5889 = vunpack.c.l.b16 %v820
    %v5890 = vunpack.c.l.b16 %v821
    %v5891 = vunpack.c.l.b16 %v822
    %v5892 = vunpack.c.l.b16 %v823
    %v5893 = vunpack.c.l.b16 %v824
    %v5894 = vunpack.c.l.b16 %v825
    %v5895 = vunpack.c.l.b16 %v826
    %v5896 = vunpack.c.l.b16 %v827
    %v5897 = vunpack.c.l.b16 %v828
    %v5898 = vunpack.c.l.b16 %v829
    %v5899 = vunpack.c.l.b16 %v830
    %v5900 = vunpack.c.l.b16 %v831
    %v5901 = vunpack.c.l.b16 %v832
    %v5902 = vunpack.c.l.b16 %v833
    %v5903 = vunpack.c.l.b16 %v834
    %v5904 = vunpack.c.l.b16 %v835
    %v5905 = vunpack.c.l.b16 %v836
    %v5906 = vunpack.c.l.b16 %v837
    %v5907 = vunpack.c.l.b16 %v838
    %v5908 = vunpack.c.l.b16 %v839
    %v5909 = vunpack.c.l.b16 %v840
    %v5910 = vunpack.c.l.b16 %v841
    %v5911 = vunpack.c.l.b16 %v842
    %v5912 = vunpack.c.l.b16 %v843
    %v5913 = vunpack.c.l.b16 %v844
    %v5914 = vunpack.c.l.b16 %v845
    %v5915 = vunpack.c.l.b16 %v846
    %v5916 = vunpack.c.l.b16 %v847
    %v5917 = vunpack.c.l.b16 %v848
    %v5918 = vunpack.c.l.b16 %v849
    %v5919 = vunpack.c.l.b16 %v850
    %v5920 = vunpack.c.l.b16 %v851
    %v5921 = vunpack.c.l.b16 %v852
    %v5922 = vunpack.c.l.b16 %v853
    %v5923 = vunpack.c.l.b16 %v854
    %v5924 = vunpack.c.l.b16 %v855
    %v5925 = vunpack.c.l.b16 %v856
    %v5926 = vunpack.c.l.b16 %v857
    %v5927 = vunpack.c.l.b16 %v858
    %v5928 = vunpack.c.l.b16 %v859
    %v5929 = vunpack.c.l.b16 %v860
    %v5930 = vunpack.c.l.b16 %v861
    %v5931 = vunpack.c.l.b16 %v862
    %v5932 = vunpack.c.l.b16 %v863
    %v5933 = vunpack.c.l.b16 %v864
    %v5934 = vunpack.c.l.b16 %v865
    %v5935 = vunpack.c.l.b16 %v866
    %v5936 = vunpack.c.l.b16 %v867
    %v5937 = vunpack.c.l.b16 %v868
    %v5938 = vunpack.c.l.b16 %v869
    %v5939 = vunpack.c.l.b16 %v870
    %v5940 = vunpack.c.l.b16 %v871
    %v5941 = vunpack.c.l.b16 %v872
    %v5942 = vunpack.c.l.b16 %v873
    %v5943 = vunpack.c.l.b16 %v874
    %v5944 = vunpack.c.l.b16 %v875
    %v5945 = vunpack.c.l.b16 %v876
    %v5946 = vunpack.c.l.b16 %v877
    %v5947 = vunpack.c.l.b16 %v878
    %v5948 = vunpack.c.l.b16 %v879
    %v5949 = vunpack.c.l.b16 %v880
    %v5950 = vunpack.c.l.b16 %v881
    %v5951 = vunpack.c.l.b16 %v882
    %v5952 = vunpack.c.l.b16 %v883
    %v5953 = vunpack.c.l.b16 %v884
    %v5954 = vunpack.c.l.b16 %v885
    %v5955 = vunpack.c.l.b16 %v886
    %v5956 = vunpack.c.l.b16 %v887
    %v5957 = vunpack.c.l.b16 %v888
    %v5958 = vunpack.c.l.b16 %v889
    %v5959 = vunpack.c.l.b16 %v890
    %v5960 = vunpack.c.l.b16 %v891
    %v5961 = vunpack.c.l.b16 %v892
    %v5962 = vunpack.c.l.b16 %v893
    %v5963 = vunpack.c.l.b16 %v894
    %v5964 = vunpack.c.l.b16 %v895
    %v5965 = vunpack.c.l.b16 %v896
    %v5966 = vunpack.c.l.b16 %v897
    %v5967 = vunpack.c.l.b16 %v898
    %v5968 = vunpack.c.l.b16 %v899
    %v5969 = vunpack.c.l.b16 %v900
    %v5970 = vunpack.c.l.b16 %v901
    %v5971 = vunpack.c.l.b16 %v902
    %v5972 = vunpack.c.l.b16 %v903
    %v5973 = vunpack.c.l.b16 %v904
    %v5974 = vunpack.c.l.b16 %v905
    %v5975 = vunpack.c.l.b16 %v906
    %v5976 = vunpack.c.l.b16 %v907
    %v5977 = vunpack.c.l.b16 %v908
    %v5978 = vunpack.c.l.b16 %v909
    %v5979 = vunpack.c.l.b16 %v910
    %v5980 = vunpack.c.l.b16 %v911
    %v5981 = vunpack.c.l.b16 %v912
    %v5982 = vunpack.c.l.b16 %v913
    %v5983 = vunpack.c.l.b16 %v914
    %v5984 = vunpack.c.l.b16 %v915
    %v5985 = vunpack.c.l.b16 %v916
    %v5986 = vunpack.c.l.b16 %v917
    %v5987 = vunpack.c.l.b16 %v918
    %v5988 = vunpack.c.l.b16 %v919
    %v5989 = vunpack.c.l.b16 %v920
    %v5990 = vunpack.c.l.b16 %v921
    %v5991 = vunpack.c.l.b16 %v922
    %v5992 = vunpack.c.l.b16 %v923
    %v5993 = vunpack.c.l.b16 %v924
    %v5994 = vunpack.c.l.b16 %v925
    %v5995 = vunpack.c.l.b16 %v926
    %v5996 = vunpack.c.l.b16 %v927
    %v5997 = vunpack.c.l.b16 %v928
    %v5998 = vunpack.c.l.b16 %v929
    %v5999 = vunpack.c.l.b16 %v930
    %v6000 = vunpack.c.l.b16 %v931
    %v6001 = vunpack.c.l.b16 %v932
    %v6002 = vunpack.c.l.b16 %v933
    %v6003 = vunpack.c.l.b16 %v934
    %v6004 = vunpack.c.l.b16 %v935
    %v6005 = vunpack.c.l.b16 %v936
    %v6006 = vunpack.c.l.b16 %v937
    %v6007 = vunpack.c.l.b16 %v938
    %v6008 = vunpack.c.l.b16 %v939
    %v6009 = vunpack.c.l.b16 %v940
    %v6010 = vunpack.c.l.b16 %v941
    %v6011 = vunpack.c.l.b16 %v942
    %v6012 = vunpack.c.l.b16 %v943
    %v6013 = vunpack.c.l.b16 %v944
    %v6014 = vunpack.c.l.b16 %v945
    %v6015 = vunpack.c.l.b16 %v946
    %v6016 = vunpack.c.l.b16 %v947
    %v6017 = vunpack.c.l.b16 %v948
    %v6018 = vunpack.c.l.b16 %v949
    %v6019 = vunpack.c.l.b16 %v950
    %v6020 = vunpack.c.l.b16 %v951
    %v6021 = vunpack.c.l.b16 %v952
    %v6022 = vunpack.c.l.b16 %v953
    %v6023 = vunpack.c.l.b16 %v954
    %v6024 = vunpack.c.l.b16 %v955
    %v6025 = vunpack.c.l.b16 %v956
    %v6026 = vunpack.c.l.b16 %v957
    %v6027 = vunpack.c.l.b16 %v958
    %v6028 = vunpack.c.l.b16 %v959
    %v6029 = vunpack.c.l.b16 %v960
    %v6030 = vunpack.c.l.b16 %v961
    %v6031 = vunpack.c.l.b16 %v962
    %v6032 = vunpack.c.l.b16 %v963
    %v6033 = vunpack.c.l.b16 %v964
    %v6034 = vunpack.c.l.b16 %v965
    %v6035 = vunpack.c.l.b16 %v966
    %v6036 = vunpack.c.l.b16 %v967
    %v6037 = vunpack.c.l.b16 %v968
    %v6038 = vunpack.c.l.b16 %v969
    %v6039 = vunpack.c.l.b16 %v970
    %v6040 = vunpack.c.l.b16 %v971
    %v6041 = vunpack.c.l.b16 %v972
    %v6042 = vunpack.c.l.b16 %v973
    %v6043 = vunpack.c.l.b16 %v974
    %v6044 = vunpack.c.l.b16 %v975
    %v6045 = vunpack.c.l.b16 %v976
    %v6046 = vunpack.c.l.b16 %v977
    %v6047 = vunpack.c.l.b16 %v978
    %v6048 = vunpack.c.l.b16 %v979
    %v6049 = vunpack.c.l.b16 %v980
    %v6050 = vunpack.c.l.b16 %v981
    %v6051 = vunpack.c.l.b16 %v982
    %v6052 = vunpack.c.l.b16 %v983
    %v6053 = vunpack.c.l.b16 %v984
    %v6054 = vunpack.c.l.b16 %v985
    %v6055 = vunpack.c.l.b16 %v986
    %v6056 = vunpack.c.l.b16 %v987
    %v6057 = vunpack.c.l.b16 %v988
    %v6058 = vunpack.c.l.b16 %v989
    %v6059 = vunpack.c.l.b16 %v990
    %v6060 = vunpack.c.l.b16 %v991
    %v6061 = vunpack.c.l.b16 %v992
    %v6062 = vunpack.c.l.b16 %v993
    %v6063 = vunpack.c.l.b16 %v994
    %v6064 = vunpack.c.l.b16 %v995
    %v6065 = vunpack.c.l.b16 %v996
    %v6066 = vunpack.c.l.b16 %v997
    %v6067 = vunpack.c.l.b16 %v998
    %v6068 = vunpack.c.l.b16 %v999
    %v6069 = vunpack.c.l.b16 %v1000
    %v6070 = vunpack.c.l.b16 %v1001
    %v6071 = vunpack.c.l.b16 %v1002
    %v6072 = vunpack.c.l.b16 %v1003
    %v6073 = vunpack.c.l.b16 %v1004
    %v6074 = vunpack.c.l.b16 %v1005
    %v6075 = vunpack.c.l.b16 %v1006
    %v6076 = vunpack.c.l.b16 %v1007
    %v6077 = vunpack.c.l.b16 %v1008
    %v6078 = vunpack.c.l.b16 %v1009
    %v6079 = vunpack.c.l.b16 %v1010
    %v6080 = vunpack.c.l.b16 %v1011
    %v6081 = vunpack.c.l.b16 %v1012
    %v6082 = vunpack.c.l.b16 %v1013
    %v6083 = vunpack.c.l.b16 %v1014
    %v6084 = vunpack.c.l.b16 %v1015
    %v6085 = vunpack.c.l.b16 %v1016
    %v6086 = vunpack.c.l.b16 %v1017
    %v6087 = vunpack.c.l.b16 %v1018
    %v6088 = vunpack.c.l.b16 %v1019
    %v6089 = vunpack.c.l.b16 %v1020
    %v6090 = vunpack.c.l.b16 %v1021
    %v6091 = vunpack.c.l.b16 %v1022
    %v6092 = vunpack.c.l.b16 %v1023
    %v6093 = vunpack.c.l.b16 %v1024
    %v6094 = vunpack.c.l.b16 %v1025
    %v6095 = vunpack.c.l.b16 %v1026
    %v6096 = vunpack.c.l.b16 %v1027
    %v6097 = vunpack.c.l.b16 %v1028
    %v6098 = vunpack.c.l.b16 %v1029
    %v6099 = vunpack.c.l.b16 %v1030
    %v6100 = vunpack.c.l.b16 %v1031
    %v6101 = vunpack.c.l.b16 %v1032
    %v6102 = vunpack.c.l.b16 %v1033
    %v6103 = vunpack.c.l.b16 %v1034
    %v6104 = vunpack.c.l.b16 %v1035
    %v6105 = vunpack.c.l.b16 %v1036
    %v6106 = vunpack.c.l.b16 %v1037
    %v6107 = vunpack.c.l.b16 %v1038
    %v6108 = vunpack.c.l.b16 %v1039
    %v6109 = vunpack.c.l.b16 %v1040
    %v6110 = vunpack.c.l.b16 %v1041
    %v6111 = vunpack.c.l.b16 %v1042
    %v6112 = vunpack.c.l.b16 %v1043
    %v6113 = vunpack.c.l.b16 %v1044
    %v6114 = vunpack.c.l.b16 %v1045
    %v6115 = vunpack.c.l.b16 %v1046
    %v6116 = vunpack.c.l.b16 %v1047
    %v6117 = vunpack.c.l.b16 %v1048
    %v6118 = vunpack.c.l.b16 %v1049
    %v6119 = vunpack.c.l.b16 %v1050
    %v6120 = vunpack.c.l.b16 %v1051
    %v6121 = vunpack.c.l.b16 %v1052
    %v6122 = vunpack.c.l.b16 %v1053
    %v6123 = vunpack.c.l.b16 %v1054
    %v6124 = vunpack.c.l.b16 %v1055
    %v6125 = vunpack.c.l.b16 %v1056
    %v6126 = vunpack.c.l.b16 %v1057
    %v6127 = vunpack.c.l.b16 %v1058
    %v6128 = vunpack.c.l.b16 %v1059
    %v6129 = vunpack.c.l.b16 %v1060
    %v6130 = vunpack.c.l.b16 %v1061
    %v6131 = vunpack.c.l.b16 %v1062
    %v6132 = vunpack.c.l.b16 %v1063
    %v6133 = vunpack.c.l.b16 %v1064
    %v6134 = vunpack.c.l.b16 %v1065
    %v6135 = vunpack.c.l.b16 %v1066
    %v6136 = vunpack.c.l.b16 %v1067
    %v6137 = vunpack.c.l.b16 %v1068
    %v6138 = vunpack.c.l.b16 %v1069
    %v6139 = vunpack.c.l.b16 %v1070
    %v6140 = vunpack.c.l.b16 %v1071
    %v6141 = vunpack.c.l.b16 %v1072
    %v6142 = vunpack.c.l.b16 %v1073
    %v6143 = vunpack.c.l.b16 %v1074
    %v6144 = vunpack.c.l.b16 %v1075
    %v6145 = vunpack.c.l.b16 %v1076
    %v6146 = vunpack.c.l.b16 %v1077
    %v6147 = vunpack.c.l.b16 %v1078
    %v6148 = vunpack.c.l.b16 %v1079
    %v6149 = vunpack.c.l.b16 %v1080
    %v6150 = vunpack.c.l.b16 %v1081
    %v6151 = vunpack.c.l.b16 %v1082
    %v6152 = vunpack.c.l.b16 %v1083
    %v6153 = vunpack.c.l.b16 %v1084
    %v6154 = vunpack.c.l.b16 %v1085
    %v6155 = vunpack.c.l.b16 %v1086
    %v6156 = vunpack.c.l.b16 %v1087
    %v6157 = vunpack.c.l.b16 %v1088
    %v6158 = vunpack.c.l.b16 %v1089
    %v6159 = vunpack.c.l.b16 %v1090
    %v6160 = vunpack.c.l.b16 %v1091
    %v6161 = vunpack.c.l.b16 %v1092
    %v6162 = vunpack.c.l.b16 %v1093
    %v6163 = vunpack.c.l.b16 %v1094
    %v6164 = vunpack.c.l.b16 %v1095
    %v6165 = vunpack.c.l.b16 %v1096
    %v6166 = vunpack.c.l.b16 %v1097
    %v6167 = vunpack.c.l.b16 %v1098
    %v6168 = vunpack.c.l.b16 %v1099
    %v6169 = vunpack.c.l.b16 %v1100
    %v6170 = vunpack.c.l.b16 %v1101
    %v6171 = vunpack.c.l.b16 %v1102
    %v6172 = vunpack.c.l.b16 %v1103
    %v6173 = vunpack.c.l.b16 %v1104
    %v6174 = vunpack.c.l.b16 %v1105
    %v6175 = vunpack.c.l.b16 %v1106
    %v6176 = vunpack.c.l.b16 %v1107
    %v6177 = vunpack.c.l.b16 %v1108
    %v6178 = vunpack.c.l.b16 %v1109
    %v6179 = vunpack.c.l.b16 %v1110
    %v6180 = vunpack.c.l.b16 %v1111
    %v6181 = vunpack.c.l.b16 %v1112
    %v6182 = vunpack.c.l.b16 %v1113
    %v6183 = vunpack.c.l.b16 %v1114
    %v6184 = vunpack.c.l.b16 %v1115
    %v6185 = vunpack.c.l.b16 %v1116
    %v6186 = vunpack.c.l.b16 %v1117
    %v6187 = vunpack.c.l.b16 %v1118
    %v6188 = vunpack.c.l.b16 %v1119
    %v6189 = vunpack.c.l.b16 %v1120
    %v6190 = vunpack.c.l.b16 %v1121
    %v6191 = vunpack.c.l.b16 %v1122
    %v6192 = vunpack.c.l.b16 %v1123
    %v6193 = vunpack.c.l.b16 %v1124
    %v6194 = vunpack.c.l.b16 %v1125
    %v6195 = vunpack.c.l.b16 %v1126
    %v6196 = vunpack.c.l.b16 %v1127
    %v6197 = vunpack.c.l.b16 %v1128
    %v6198 = vunpack.c.l.b16 %v1129
    %v6199 = vunpack.c.l.b16 %v1130
    %v6200 = vunpack.c.l.b16 %v1131
    %v6201 = vunpack.c.l.b16 %v1132
    %v6202 = vunpack.c.l.b16 %v1133
    %v6203 = vunpack.c.l.b16 %v1134
    %v6204 = vunpack.c.l.b16 %v1135
    %v6205 = vunpack.c.l.b16 %v1136
    %v6206 = vunpack.c.l.b16 %v1137
    %v6207 = vunpack.c.l.b16 %v1138
    %v6208 = vunpack.c.l.b16 %v1139
    %v6209 = vunpack.c.l.b16 %v1140
    %v6210 = vunpack.c.l.b16 %v1141
    %v6211 = vunpack.c.l.b16 %v1142
    %v6212 = vunpack.c.l.b16 %v1143
    %v6213 = vunpack.c.l.b16 %v1144
    %v6214 = vunpack.c.l.b16 %v1145
    %v6215 = vunpack.c.l.b16 %v1146
    %v6216 = vunpack.c.l.b16 %v1147
    %v6217 = vunpack.c.l.b16 %v1148
    %v6218 = vunpack.c.l.b16 %v1149
    %v6219 = vunpack.c.l.b16 %v1150
    %v6220 = vunpack.c.l.b16 %v1151
    %v6221 = vunpack.c.l.b16 %v1152
    %v6222 = vunpack.c.l.b16 %v1153
    %v6223 = vunpack.c.l.b16 %v1154
    %v6224 = vunpack.c.l.b16 %v1155
    %v6225 = vunpack.c.l.b16 %v1156
    %v6226 = vunpack.c.l.b16 %v1157
    %v6227 = vunpack.c.l.b16 %v1158
    %v6228 = vunpack.c.l.b16 %v1159
    %v6229 = vunpack.c.l.b16 %v1160
    %v6230 = vunpack.c.l.b16 %v1161
    %v6231 = vunpack.c.l.b16 %v1162
    %v6232 = vunpack.c.l.b16 %v1163
    %v6233 = vunpack.c.l.b16 %v1164
    %v6234 = vunpack.c.l.b16 %v1165
    %v6235 = vunpack.c.l.b16 %v1166
    %v6236 = vunpack.c.l.b16 %v1167
    %v6237 = vunpack.c.l.b16 %v1168
    %v6238 = vunpack.c.l.b16 %v1169
    %v6239 = vunpack.c.l.b16 %v1170
    %v6240 = vunpack.c.l.b16 %v1171
    %v6241 = vunpack.c.l.b16 %v1172
    %v6242 = vunpack.c.l.b16 %v1173
    %v6243 = vunpack.c.l.b16 %v1174
    %v6244 = vunpack.c.l.b16 %v1175
    %v6245 = vunpack.c.l.b16 %v1176
    %v6246 = vunpack.c.l.b16 %v1177
    %v6247 = vunpack.c.l.b16 %v1178
    %v6248 = vunpack.c.l.b16 %v1179
    %v6249 = vunpack.c.l.b16 %v1180
    %v6250 = vunpack.c.l.b16 %v1181
    %v6251 = vunpack.c.l.b16 %v1182
    %v6252 = vunpack.c.l.b16 %v1183
    %v6253 = vunpack.c.l.b16 %v1184
    %v6254 = vunpack.c.l.b16 %v1185
    %v6255 = vunpack.c.l.b16 %v1186
    %v6256 = vunpack.c.l.b16 %v1187
    %v6257 = vunpack.c.l.b16 %v1188
    %v6258 = vunpack.c.l.b16 %v1189
    %v6259 = vunpack.c.l.b16 %v1190
    %v6260 = vunpack.c.l.b16 %v1191
    %v6261 = vunpack.c.l.b16 %v1192
    %v6262 = vunpack.c.l.b16 %v1193
    %v6263 = vunpack.c.l.b16 %v1194
    %v6264 = vunpack.c.l.b16 %v1195
    %v6265 = vunpack.c.l.b16 %v1196
    %v6266 = vunpack.c.l.b16 %v1197
    %v6267 = vunpack.c.l.b16 %v1198
    %v6268 = vunpack.c.l.b16 %v1199
    %v6269 = vunpack.c.l.b16 %v1200
    %v6270 = vunpack.c.l.b16 %v1201
    %v6271 = vunpack.c.l.b16 %v1202
    %v6272 = vunpack.c.l.b16 %v1203
    %v6273 = vunpack.c.l.b16 %v1204
    %v6274 = vunpack.c.l.b16 %v1205
    %v6275 = vunpack.c.l.b16 %v1206
    %v6276 = vunpack.c.l.b16 %v1207
    %v6277 = vunpack.c.l.b16 %v1208
    %v6278 = vunpack.c.l.b16 %v1209
    %v6279 = vunpack.c.l.b16 %v1210
    %v6280 = vunpack.c.l.b16 %v1211
    %v6281 = vunpack.c.l.b16 %v1212
    %v6282 = vunpack.c.l.b16 %v1213
    %v6283 = vunpack.c.l.b16 %v1214
    %v6284 = vunpack.c.l.b16 %v1215
    %v6285 = vunpack.c.l.b16 %v1216
    %v6286 = vunpack.c.l.b16 %v1217
    %v6287 = vunpack.c.l.b16 %v1218
    %v6288 = vunpack.c.l.b16 %v1219
    %v6289 = vunpack.c.l.b16 %v1220
    %v6290 = vunpack.c.l.b16 %v1221
    %v6291 = vunpack.c.l.b16 %v1222
    %v6292 = vunpack.c.l.b16 %v1223
    %v6293 = vunpack.c.l.b16 %v1224
    %v6294 = vunpack.c.l.b16 %v1225
    %v6295 = vunpack.c.l.b16 %v1226
    %v6296 = vunpack.c.l.b16 %v1227
    %v6297 = vunpack.c.l.b16 %v1228
    %v6298 = vunpack.c.l.b16 %v1229
    %v6299 = vunpack.c.l.b16 %v1230
    %v6300 = vunpack.c.l.b16 %v1231
    %v6301 = vunpack.c.l.b16 %v1232
    %v6302 = vunpack.c.l.b16 %v1233
    %v6303 = vunpack.c.l.b16 %v1234
    %v6304 = vunpack.c.l.b16 %v1235
    %v6305 = vunpack.c.l.b16 %v1236
    %v6306 = vunpack.c.l.b16 %v1237
    %v6307 = vunpack.c.l.b16 %v1238
    %v6308 = vunpack.c.l.b16 %v1239
    %v6309 = vunpack.c.l.b16 %v1240
    %v6310 = vunpack.c.l.b16 %v1241
    %v6311 = vunpack.c.l.b16 %v1242
    %v6312 = vunpack.c.l.b16 %v1243
    %v6313 = vunpack.c.l.b16 %v1244
    %v6314 = vunpack.c.l.b16 %v1245
    %v6315 = vunpack.c.l.b16 %v1246
    %v6316 = vunpack.c.l.b16 %v1247
    %v6317 = vunpack.c.l.b16 %v1248
    %v6318 = vunpack.c.l.b16 %v1249
    %v6319 = vunpack.c.l.b16 %v1250
    %v6320 = vunpack.c.l.b16 %v1251
    %v6321 = vunpack.c.l.b16 %v1252
    %v6322 = vunpack.c.l.b16 %v1253
    %v6323 = vunpack.c.l.b16 %v1254
    %v6324 = vunpack.c.l.b16 %v1255
    %v6325 = vunpack.c.l.b16 %v1256
    %v6326 = vunpack.c.l.b16 %v1257
    %v6327 = vunpack.c.l.b16 %v1258
    %v6328 = vunpack.c.l.b16 %v1259
    %v6329 = vunpack.c.l.b16 %v1260
    %v6330 = vunpack.c.l.b16 %v1261
    %v6331 = vunpack.c.l.b16 %v1262
    %v6332 = vunpack.c.l.b16 %v1263
    %v6333 = vunpack.c.l.b16 %v1264
    %v6334 = vunpack.c.l.b16 %v1265
    %v6335 = vunpack.c.l.b16 %v1266
    %v6336 = vunpack.c.l.b16 %v1267
    %v6337 = vunpack.c.l.b16 %v1268
    %v6338 = vunpack.c.l.b16 %v1269
    %v6339 = vunpack.c.l.b16 %v1270
    %v6340 = vunpack.c.l.b16 %v1271
    %v6341 = vunpack.c.l.b16 %v1272
    %v6342 = vunpack.c.l.b16 %v1273
    %v6343 = vunpack.c.l.b16 %v1274
    %v6344 = vunpack.c.l.b16 %v1275
    %v6345 = vunpack.c.l.b16 %v1276
    %v6346 = vunpack.c.l.b16 %v1277
    %v6347 = vunpack.c.l.b16 %v1278
    %v6348 = vunpack.c.l.b16 %v1279
    %v6349 = vunpack.c.l.b16 %v1280
    %v6350 = vunpack.c.l.b16 %v1281
    %v6351 = vunpack.c.l.b16 %v1282
    %v6352 = vunpack.c.l.b16 %v1283
    %v6353 = vunpack.c.l.b16 %v1284
    %v6354 = vunpack.c.l.b16 %v1285
    %v6355 = vunpack.c.l.b16 %v1286
    %v6356 = vunpack.c.l.b16 %v1287
    %v6357 = vunpack.c.l.b16 %v1288
    %v6358 = vunpack.c.l.b16 %v1289
    %v6359 = vunpack.c.l.b16 %v1290
    %v6360 = vunpack.c.l.b16 %v1291
    %v6361 = vunpack.c.l.b16 %v1292
    %v6362 = vunpack.c.l.b16 %v1293
    %v6363 = vunpack.c.l.b16 %v1294
    %v6364 = vunpack.c.l.b16 %v1295
    %v6365 = vunpack.c.l.b16 %v1296
    %v6366 = vunpack.c.l.b16 %v1297
    %v6367 = vunpack.c.l.b16 %v1298
    %v6368 = vunpack.c.l.b16 %v1299
    %v6369 = vunpack.c.l.b16 %v1300
    %v6370 = vunpack.c.l.b16 %v1301
    %v6371 = vunpack.c.l.b16 %v1302
    %v6372 = vunpack.c.l.b16 %v1303
    %v6373 = vunpack.c.l.b16 %v1304
    %v6374 = vunpack.c.l.b16 %v1305
    %v6375 = vunpack.c.l.b16 %v1306
    %v6376 = vunpack.c.l.b16 %v1307
    %v6377 = vunpack.c.l.b16 %v1308
    %v6378 = vunpack.c.l.b16 %v1309
    %v6379 = vunpack.c.l.b16 %v1310
    %v6380 = vunpack.c.l.b16 %v1311
    %v6381 = vunpack.c.l.b16 %v1312
    %v6382 = vunpack.c.l.b16 %v1313
    %v6383 = vunpack.c.l.b16 %v1314
    %v6384 = vunpack.c.l.b16 %v1315
    %v6385 = vunpack.c.l.b16 %v1316
    %v6386 = vunpack.c.l.b16 %v1317
    %v6387 = vunpack.c.l.b16 %v1318
    %v6388 = vunpack.c.l.b16 %v1319
    %v6389 = vunpack.c.l.b16 %v1320
    %v6390 = vunpack.c.l.b16 %v1321
    %v6391 = vunpack.c.l.b16 %v1322
    %v6392 = vunpack.c.l.b16 %v1323
    %v6393 = vunpack.c.l.b16 %v1324
    %v6394 = vunpack.c.l.b16 %v1325
    %v6395 = vunpack.c.l.b16 %v1326
    %v6396 = vunpack.c.l.b16 %v1327
    %v6397 = vunpack.c.l.b16 %v1328
    %v6398 = vunpack.c.l.b16 %v1329
    %v6399 = vunpack.c.l.b16 %v1330
    %v6400 = vunpack.c.l.b16 %v1331
    %v6401 = vunpack.c.l.b16 %v1332
    %v6402 = vunpack.c.l.b16 %v1333
    %v6403 = vunpack.c.l.b16 %v1334
    %v6404 = vunpack.c.l.b16 %v1335
    %v6405 = vunpack.c.l.b16 %v1336
    %v6406 = vunpack.c.l.b16 %v1337
    %v6407 = vunpack.c.l.b16 %v1338
    %v6408 = vunpack.c.l.b16 %v1339
    %v6409 = vunpack.c.l.b16 %v1340
    %v6410 = vunpack.c.l.b16 %v1341
    %v6411 = vunpack.c.l.b16 %v1342
    %v6412 = vunpack.c.l.b16 %v1343
    %v6413 = vunpack.c.l.b16 %v1344
    %v6414 = vunpack.c.l.b16 %v1345
    %v6415 = vunpack.c.l.b16 %v1346
    %v6416 = vunpack.c.l.b16 %v1347
    %v6417 = vunpack.c.l.b16 %v1348
    %v6418 = vunpack.c.l.b16 %v1349
    %v6419 = vunpack.c.l.b16 %v1350
    %v6420 = vunpack.c.l.b16 %v1351
    %v6421 = vunpack.c.l.b16 %v1352
    %v6422 = vunpack.c.l.b16 %v1353
    %v6423 = vunpack.c.l.b16 %v1354
    %v6424 = vunpack.c.l.b16 %v1355
    %v6425 = vunpack.c.l.b16 %v1356
    %v6426 = vunpack.c.l.b16 %v1357
    %v6427 = vunpack.c.l.b16 %v1358
    %v6428 = vunpack.c.l.b16 %v1359
    %v6429 = vunpack.c.l.b16 %v1360
    %v6430 = vunpack.c.l.b16 %v1361
    %v6431 = vunpack.c.l.b16 %v1362
    %v6432 = vunpack.c.l.b16 %v1363
    %v6433 = vunpack.c.l.b16 %v1364
    %v6434 = vunpack.c.l.b16 %v1365
    %v6435 = vunpack.c.l.b16 %v1366
    %v6436 = vunpack.c.l.b16 %v1367
    %v6437 = vunpack.c.l.b16 %v1368
    %v6438 = vunpack.c.l.b16 %v1369
    %v6439 = vunpack.c.l.b16 %v1370
    %v6440 = vunpack.c.l.b16 %v1371
    %v6441 = vunpack.c.l.b16 %v1372
    %v6442 = vunpack.c.l.b16 %v1373
    %v6443 = vunpack.c.l.b16 %v1374
    %v6444 = vunpack.c.l.b16 %v1375
    %v6445 = vunpack.c.l.b16 %v1376
    %v6446 = vunpack.c.l.b16 %v1377
    %v6447 = vunpack.c.l.b16 %v1378
    %v6448 = vunpack.c.l.b16 %v1379
    %v6449 = vunpack.c.l.b16 %v1380
    %v6450 = vunpack.c.l.b16 %v1381
    %v6451 = vunpack.c.l.b16 %v1382
    %v6452 = vunpack.c.l.b16 %v1383
    %v6453 = vunpack.c.l.b16 %v1384
    %v6454 = vunpack.c.l.b16 %v1385
    %v6455 = vunpack.c.l.b16 %v1386
    %v6456 = vunpack.c.l.b16 %v1387
    %v6457 = vunpack.c.l.b16 %v1388
    %v6458 = vunpack.c.l.b16 %v1389
    %v6459 = vunpack.c.l.b16 %v1390
    %v6460 = vunpack.c.l.b16 %v1391
    %v6461 = vunpack.c.l.b16 %v1392
    %v6462 = vunpack.c.l.b16 %v1393
    %v6463 = vunpack.c.l.b16 %v1394
    %v6464 = vunpack.c.l.b16 %v1395
    %v6465 = vunpack.c.l.b16 %v1396
    %v6466 = vunpack.c.l.b16 %v1397
    %v6467 = vunpack.c.l.b16 %v1398
    %v6468 = vunpack.c.l.b16 %v1399
    %v6469 = vunpack.c.l.b16 %v1400
    %v6470 = vunpack.c.l.b16 %v1401
    %v6471 = vunpack.c.l.b16 %v1402
    %v6472 = vunpack.c.l.b16 %v1403
    %v6473 = vunpack.c.l.b16 %v1404
    %v6474 = vunpack.c.l.b16 %v1405
    %v6475 = vunpack.c.l.b16 %v1406
    %v6476 = vunpack.c.l.b16 %v1407
    %v6477 = vunpack.c.l.b16 %v1408
    %v6478 = vunpack.c.l.b16 %v1409
    %v6479 = vunpack.c.l.b16 %v1410
    %v6480 = vunpack.c.l.b16 %v1411
    %v6481 = vunpack.c.l.b16 %v1412
    %v6482 = vunpack.c.l.b16 %v1413
    %v6483 = vunpack.c.l.b16 %v1414
    %v6484 = vunpack.c.l.b16 %v1415
    %v6485 = vunpack.c.l.b16 %v1416
    %v6486 = vunpack.c.l.b16 %v1417
    %v6487 = vunpack.c.l.b16 %v1418
    %v6488 = vunpack.c.l.b16 %v1419
    %v6489 = vunpack.c.l.b16 %v1420
    %v6490 = vunpack.c.l.b16 %v1421
    %v6491 = vunpack.c.l.b16 %v1422
    %v6492 = vunpack.c.l.b16 %v1423
    %v6493 = vunpack.c.l.b16 %v1424
    %v6494 = vunpack.c.l.b16 %v1425
    %v6495 = vunpack.c.l.b16 %v1426
    %v6496 = vunpack.c.l.b16 %v1427
    %v6497 = vunpack.c.l.b16 %v1428
    %v6498 = vunpack.c.l.b16 %v1429
    %v6499 = vunpack.c.l.b16 %v1430
    %v6500 = vunpack.c.l.b16 %v1431
    %v6501 = vunpack.c.l.b16 %v1432
    %v6502 = vunpack.c.l.b16 %v1433
    %v6503 = vunpack.c.l.b16 %v1434
    %v6504 = vunpack.c.l.b16 %v1435
    %v6505 = vunpack.c.l.b16 %v1436
    %v6506 = vunpack.c.l.b16 %v1437
    %v6507 = vunpack.c.l.b16 %v1438
    %v6508 = vunpack.c.l.b16 %v1439
    %v6509 = vunpack.c.l.b16 %v1440
    %v6510 = vunpack.c.l.b16 %v1441
    %v6511 = vunpack.c.l.b16 %v1442
    %v6512 = vunpack.c.l.b16 %v1443
    %v6513 = vunpack.c.l.b16 %v1444
    %v6514 = vunpack.c.l.b16 %v1445
    %v6515 = vunpack.c.l.b16 %v1446
    %v6516 = vunpack.c.l.b16 %v1447
    %v6517 = vunpack.c.l.b16 %v1448
    %v6518 = vunpack.c.l.b16 %v1449
    %v6519 = vunpack.c.l.b16 %v1450
    %v6520 = vunpack.c.l.b16 %v1451
    %v6521 = vunpack.c.l.b16 %v1452
    %v6522 = vunpack.c.l.b16 %v1453
    %v6523 = vunpack.c.l.b16 %v1454
    %v6524 = vunpack.c.l.b16 %v1455
    %v6525 = vunpack.c.l.b16 %v1456
    %v6526 = vunpack.c.l.b16 %v1457
    %v6527 = vunpack.c.l.b16 %v1458
    %v6528 = vunpack.c.l.b16 %v1459
    %v6529 = vunpack.c.l.b16 %v1460
    %v6530 = vunpack.c.l.b16 %v1461
    %v6531 = vunpack.c.l.b16 %v1462
    %v6532 = vunpack.c.l.b16 %v1463
    %v6533 = vunpack.c.l.b16 %v1464
    %v6534 = vunpack.c.l.b16 %v1465
    %v6535 = vunpack.c.l.b16 %v1466
    %v6536 = vunpack.c.l.b16 %v1467
    %v6537 = vunpack.c.l.b16 %v1468
    %v6538 = vunpack.c.l.b16 %v1469
    %v6539 = vunpack.c.l.b16 %v1470
    %v6540 = vunpack.c.l.b16 %v1471
    %v6541 = vunpack.c.l.b16 %v1472
    %v6542 = vunpack.c.l.b16 %v1473
    %v6543 = vunpack.c.l.b16 %v1474
    %v6544 = vunpack.c.l.b16 %v1475
    %v6545 = vunpack.c.l.b16 %v1476
    %v6546 = vunpack.c.l.b16 %v1477
    %v6547 = vunpack.c.l.b16 %v1478
    %v6548 = vunpack.c.l.b16 %v1479
    %v6549 = vunpack.c.l.b16 %v1480
    %v6550 = vunpack.c.l.b16 %v1481
    %v6551 = vunpack.c.l.b16 %v1482
    %v6552 = vunpack.c.l.b16 %v1483
    %v6553 = vunpack.c.l.b16 %v1484
    %v6554 = vunpack.c.l.b16 %v1485
    %v6555 = vunpack.c.l.b16 %v1486
    %v6556 = vunpack.c.l.b16 %v1487
    %v6557 = vunpack.c.l.b16 %v1488
    %v6558 = vunpack.c.l.b16 %v1489
    %v6559 = vunpack.c.l.b16 %v1490
    %v6560 = vunpack.c.l.b16 %v1491
    %v6561 = vunpack.c.l.b16 %v1492
    %v6562 = vunpack.c.l.b16 %v1493
    %v6563 = vunpack.c.l.b16 %v1494
    %v6564 = vunpack.c.l.b16 %v1495
    %v6565 = vunpack.c.l.b16 %v1496
    %v6566 = vunpack.c.l.b16 %v1497
    %v6567 = vunpack.c.l.b16 %v1498
    %v6568 = vunpack.c.l.b16 %v1499
    %v6569 = vunpack.c.l.b16 %v1500
    %v6570 = vunpack.c.l.b16 %v1501
    %v6571 = vunpack.c.l.b16 %v1502
    %v6572 = vunpack.c.l.b16 %v1503
    %v6573 = vunpack.c.l.b16 %v1504
    %v6574 = vunpack.c.l.b16 %v1505
    %v6575 = vunpack.c.l.b16 %v1506
    %v6576 = vunpack.c.l.b16 %v1507
    %v6577 = vunpack.c.l.b16 %v1508
    %v6578 = vunpack.c.l.b16 %v1509
    %v6579 = vunpack.c.l.b16 %v1510
    %v6580 = vunpack.c.l.b16 %v1511
    %v6581 = vunpack.c.l.b16 %v1512
    %v6582 = vunpack.c.l.b16 %v1513
    %v6583 = vunpack.c.l.b16 %v1514
    %v6584 = vunpack.c.l.b16 %v1515
    %v6585 = vunpack.c.l.b16 %v1516
    %v6586 = vunpack.c.l.b16 %v1517
    %v6587 = vunpack.c.l.b16 %v1518
    %v6588 = vunpack.c.l.b16 %v1519
    %v6589 = vunpack.c.l.b16 %v1520
    %v6590 = vunpack.c.l.b16 %v1521
    %v6591 = vunpack.c.l.b16 %v1522
    %v6592 = vunpack.c.l.b16 %v1523
    %v6593 = vunpack.c.l.b16 %v1524
    %v6594 = vunpack.c.l.b16 %v1525
    %v6595 = vunpack.c.l.b16 %v1526
    %v6596 = vunpack.c.l.b16 %v1527
    %v6597 = vunpack.c.l.b16 %v1528
    %v6598 = vunpack.c.l.b16 %v1529
    %v6599 = vunpack.c.l.b16 %v1530
    %v6600 = vunpack.c.l.b16 %v1531
    %v6601 = vunpack.c.l.b16 %v1532
    %v6602 = vunpack.c.l.b16 %v1533
    %v6603 = vunpack.c.l.b16 %v1534
    %v6604 = vunpack.c.l.b16 %v1535
    %v6605 = vunpack.c.l.b16 %v1536
    %v6606 = vunpack.c.l.b16 %v1537
    %v6607 = vunpack.c.l.b16 %v1538
    %v6608 = vunpack.c.l.b16 %v1539
    %v6609 = vunpack.c.l.b16 %v1540
    %v6610 = vunpack.c.l.b16 %v1541
    %v6611 = vunpack.c.l.b16 %v1542
    %v6612 = vunpack.c.l.b16 %v1543
    %v6613 = vunpack.c.l.b16 %v1544
    %v6614 = vunpack.c.l.b16 %v1545
    %v6615 = vunpack.c.l.b16 %v1546
    %v6616 = vunpack.c.l.b16 %v1547
    %v6617 = vunpack.c.l.b16 %v1548
    %v6618 = vunpack.c.l.b16 %v1549
    %v6619 = vunpack.c.l.b16 %v1550
    %v6620 = vunpack.c.l.b16 %v1551
    %v6621 = vunpack.c.l.b16 %v1552
    %v6622 = vunpack.c.l.b16 %v1553
    %v6623 = vunpack.c.l.b16 %v1554
    %v6624 = vunpack.c.l.b16 %v1555
    %v6625 = vunpack.c.l.b16 %v1556
    %v6626 = vunpack.c.l.b16 %v1557
    %v6627 = vunpack.c.l.b16 %v1558
    %v6628 = vunpack.c.l.b16 %v1559
    %v6629 = vunpack.c.l.b16 %v1560
    %v6630 = vunpack.c.l.b16 %v1561
    %v6631 = vunpack.c.l.b16 %v1562
    %v6632 = vunpack.c.l.b16 %v1563
    %v6633 = vunpack.c.l.b16 %v1564
    %v6634 = vunpack.c.l.b16 %v1565
    %v6635 = vunpack.c.l.b16 %v1566
    %v6636 = vunpack.c.l.b16 %v1567
    %v6637 = vunpack.c.l.b16 %v1568
    %v6638 = vunpack.c.l.b16 %v1569
    %v6639 = vunpack.c.l.b16 %v1570
    %v6640 = vunpack.c.l.b16 %v1571
    %v6641 = vunpack.c.l.b16 %v1572
    %v6642 = vunpack.c.l.b16 %v1573
    %v6643 = vunpack.c.l.b16 %v1574
    %v6644 = vunpack.c.l.b16 %v1575
    %v6645 = vunpack.c.l.b16 %v1576
    %v6646 = vunpack.c.l.b16 %v1577
    %v6647 = vunpack.c.l.b16 %v1578
    %v6648 = vunpack.c.l.b16 %v1579
    %v6649 = vunpack.c.l.b16 %v1580
    %v6650 = vunpack.c.l.b16 %v1581
    %v6651 = vunpack.c.l.b16 %v1582
    %v6652 = vunpack.c.l.b16 %v1583
    %v6653 = vunpack.c.l.b16 %v1584
    %v6654 = vunpack.c.l.b16 %v1585
    %v6655 = vunpack.c.l.b16 %v1586
    %v6656 = vunpack.c.l.b16 %v1587
    %v6657 = vunpack.c.l.b16 %v1588
    %v6658 = vunpack.c.l.b16 %v1589
    %v6659 = vunpack.c.l.b16 %v1590
    %v6660 = vunpack.c.l.b16 %v1591
    %v6661 = vunpack.c.l.b16 %v1592
    %v6662 = vunpack.c.l.b16 %v1593
    %v6663 = vunpack.c.l.b16 %v1594
    %v6664 = vunpack.c.l.b16 %v1595
    %v6665 = vunpack.c.l.b16 %v1596
    %v6666 = vunpack.c.l.b16 %v1597
    %v6667 = vunpack.c.l.b16 %v1598
    %v6668 = vunpack.c.l.b16 %v1599
    %v6669 = vunpack.c.l.b16 %v1600
    %v6670 = vunpack.c.l.b16 %v1601
    %v6671 = vunpack.c.l.b16 %v1602
    %v6672 = vunpack.c.l.b16 %v1603
    %v6673 = vunpack.c.l.b16 %v1604
    %v6674 = vunpack.c.l.b16 %v1605
    %v6675 = vunpack.c.l.b16 %v1606
    %v6676 = vunpack.c.l.b16 %v1607
    %v6677 = vunpack.c.l.b16 %v1608
    %v6678 = vunpack.c.l.b16 %v1609
    %v6679 = vunpack.c.l.b16 %v1610
    %v6680 = vunpack.c.l.b16 %v1611
    %v6681 = vunpack.c.l.b16 %v1612
    %v6682 = vunpack.c.l.b16 %v1613
    %v6683 = vunpack.c.l.b16 %v1614
    %v6684 = vunpack.c.l.b16 %v1615
    %v6685 = vunpack.c.l.b16 %v1616
    %v6686 = vunpack.c.l.b16 %v1617
    %v6687 = vunpack.c.l.b16 %v1618
    %v6688 = vunpack.c.l.b16 %v1619
    %v6689 = vunpack.c.l.b16 %v1620
    %v6690 = vunpack.c.l.b16 %v1621
    %v6691 = vunpack.c.l.b16 %v1622
    %v6692 = vunpack.c.l.b16 %v1623
    %v6693 = vunpack.c.l.b16 %v1624
    %v6694 = vunpack.c.l.b16 %v1625
    %v6695 = vunpack.c.l.b16 %v1626
    %v6696 = vunpack.c.l.b16 %v1627
    %v6697 = vunpack.c.l.b16 %v1628
    %v6698 = vunpack.c.l.b16 %v1629
    %v6699 = vunpack.c.l.b16 %v1630
    %v6700 = vunpack.c.l.b16 %v1631
    %v6701 = vunpack.c.l.b16 %v1632
    %v6702 = vunpack.c.l.b16 %v1633
    %v6703 = vunpack.c.l.b16 %v1634
    %v6704 = vunpack.c.l.b16 %v1635
    %v6705 = vunpack.c.l.b16 %v1636
    %v6706 = vunpack.c.l.b16 %v1637
    %v6707 = vunpack.c.l.b16 %v1638
    %v6708 = vunpack.c.l.b16 %v1639
    %v6709 = vunpack.c.l.b16 %v1640
    %v6710 = vunpack.c.l.b16 %v1641
    %v6711 = vunpack.c.l.b16 %v1642
    %v6712 = vunpack.c.l.b16 %v1643
    %v6713 = vunpack.c.l.b16 %v1644
    %v6714 = vunpack.c.l.b16 %v1645
    %v6715 = vunpack.c.l.b16 %v1646
    %v6716 = vunpack.c.l.b16 %v1647
    %v6717 = vunpack.c.l.b16 %v1648
    %v6718 = vunpack.c.l.b16 %v1649
    %v6719 = vunpack.c.l.b16 %v1650
    %v6720 = vunpack.c.l.b16 %v1651
    %v6721 = vunpack.c.l.b16 %v1652
    %v6722 = vunpack.c.l.b16 %v1653
    %v6723 = vunpack.c.l.b16 %v1654
    %v6724 = vunpack.c.l.b16 %v1655
    %v6725 = vunpack.c.l.b16 %v1656
    %v6726 = vunpack.c.l.b16 %v1657
    %v6727 = vunpack.c.l.b16 %v1658
    %v6728 = vunpack.c.l.b16 %v1659
    %v6729 = vunpack.c.l.b16 %v1660
    %v6730 = vunpack.c.l.b16 %v1661
    %v6731 = vunpack.c.l.b16 %v1662
    %v6732 = vunpack.c.l.b16 %v1663
    %v6733 = vunpack.c.l.b16 %v1664
    %v6734 = vunpack.c.l.b16 %v1665
    %v6735 = vunpack.c.l.b16 %v1666
    %v6736 = vunpack.c.l.b16 %v1667
    %v6737 = vunpack.c.l.b16 %v1668
    %v6738 = vunpack.c.l.b16 %v1669
    %v6739 = vunpack.c.l.b16 %v1670
    %v6740 = vunpack.c.l.b16 %v1671
    %v6741 = vunpack.c.l.b16 %v1672
    %v6742 = vunpack.c.l.b16 %v1673
    %v6743 = vunpack.c.l.b16 %v1674
    %v6744 = vunpack.c.l.b16 %v1675
    %v6745 = vunpack.c.l.b16 %v1676
    %v6746 = vunpack.c.l.b16 %v1677
    %v6747 = vunpack.c.l.b16 %v1678
    %v6748 = vunpack.c.l.b16 %v1679
    %v6749 = vunpack.c.l.b16 %v1680
    %v6750 = vunpack.c.l.b16 %v1681
    %v6751 = vunpack.c.l.b16 %v1682
    %v6752 = vunpack.c.l.b16 %v1683
    %v6753 = vunpack.c.l.b16 %v1684
    %v6754 = vunpack.c.l.b16 %v1685
    %v6755 = vunpack.c.l.b16 %v1686
    %v6756 = vunpack.c.l.b16 %v1687
    %v6757 = vunpack.c.l.b16 %v1688
    %v6758 = vunpack.c.l.b16 %v1689
    %v6759 = vunpack.c.l.b16 %v1690
    %v6760 = vunpack.c.l.b16 %v1691
    %v6761 = vunpack.c.l.b16 %v1692
    %v6762 = vunpack.c.l.b16 %v1693
    %v6763 = vunpack.c.l.b16 %v1694
    %v6764 = vunpack.c.l.b16 %v1695
    %v6765 = vunpack.c.l.b16 %v1696
    %v6766 = vunpack.c.l.b16 %v1697
    %v6767 = vunpack.c.l.b16 %v1698
    %v6768 = vunpack.c.l.b16 %v1699
    %v6769 = vunpack.c.l.b16 %v1700
    %v6770 = vunpack.c.l.b16 %v1701
    %v6771 = vunpack.c.l.b16 %v1702
    %v6772 = vunpack.c.l.b16 %v1703
    %v6773 = vunpack.c.l.b16 %v1704
    %v6774 = vunpack.c.l.b16 %v1705
    %v6775 = vunpack.c.l.b16 %v1706
    %v6776 = vunpack.c.l.b16 %v1707
    %v6777 = vunpack.c.l.b16 %v1708
    %v6778 = vunpack.c.l.b16 %v1709
    %v6779 = vunpack.c.l.b16 %v1710
    %v6780 = vunpack.c.l.b16 %v1711
    %v6781 = vunpack.c.l.b16 %v1712
    %v6782 = vunpack.c.l.b16 %v1713
    %v6783 = vunpack.c.l.b16 %v1714
    %v6784 = vunpack.c.l.b16 %v1715
    %v6785 = vunpack.c.l.b16 %v1716
    %v6786 = vunpack.c.l.b16 %v1717
    %v6787 = vunpack.c.l.b16 %v1718
    %v6788 = vunpack.c.l.b16 %v1719
    %v6789 = vunpack.c.l.b16 %v1720
    %v6790 = vunpack.c.l.b16 %v1721
    %v6791 = vunpack.c.l.b16 %v1722
    %v6792 = vunpack.c.l.b16 %v1723
    %v6793 = vunpack.c.l.b16 %v1724
    %v6794 = vunpack.c.l.b16 %v1725
    %v6795 = vunpack.c.l.b16 %v1726
    %v6796 = vunpack.c.l.b16 %v1727
    %v6797 = vunpack.c.l.b16 %v1728
    %v6798 = vunpack.c.l.b16 %v1729
    %v6799 = vunpack.c.l.b16 %v1730
    %v6800 = vunpack.c.l.b16 %v1731
    %v6801 = vunpack.c.l.b16 %v1732
    %v6802 = vunpack.c.l.b16 %v1733
    %v6803 = vunpack.c.l.b16 %v1734
    %v6804 = vunpack.c.l.b16 %v1735
    %v6805 = vunpack.c.l.b16 %v1736
    %v6806 = vunpack.c.l.b16 %v1737
    %v6807 = vunpack.c.l.b16 %v1738
    %v6808 = vunpack.c.l.b16 %v1739
    %v6809 = vunpack.c.l.b16 %v1740
    %v6810 = vunpack.c.l.b16 %v1741
    %v6811 = vunpack.c.l.b16 %v1742
    %v6812 = vunpack.c.l.b16 %v1743
    %v6813 = vunpack.c.l.b16 %v1744
    %v6814 = vunpack.c.l.b16 %v1745
    %v6815 = vunpack.c.l.b16 %v1746
    %v6816 = vunpack.c.l.b16 %v1747
    %v6817 = vunpack.c.l.b16 %v1748
    %v6818 = vunpack.c.l.b16 %v1749
    %v6819 = vunpack.c.l.b16 %v1750
    %v6820 = vunpack.c.l.b16 %v1751
    %v6821 = vunpack.c.l.b16 %v1752
    %v6822 = vunpack.c.l.b16 %v1753
    %v6823 = vunpack.c.l.b16 %v1754
    %v6824 = vunpack.c.l.b16 %v1755
    %v6825 = vunpack.c.l.b16 %v1756
    %v6826 = vunpack.c.l.b16 %v1757
    %v6827 = vunpack.c.l.b16 %v1758
    %v6828 = vunpack.c.l.b16 %v1759
    %v6829 = vunpack.c.l.b16 %v1760
    %v6830 = vunpack.c.l.b16 %v1761
    %v6831 = vunpack.c.l.b16 %v1762
    %v6832 = vunpack.c.l.b16 %v1763
    %v6833 = vunpack.c.l.b16 %v1764
    %v6834 = vunpack.c.l.b16 %v1765
    %v6835 = vunpack.c.l.b16 %v1766
    %v6836 = vunpack.c.l.b16 %v1767
    %v6837 = vunpack.c.l.b16 %v1768
    %v6838 = vunpack.c.l.b16 %v1769
    %v6839 = vunpack.c.l.b16 %v1770
    %v6840 = vunpack.c.l.b16 %v1771
    %v6841 = vunpack.c.l.b16 %v1772
    %v6842 = vunpack.c.l.b16 %v1773
    %v6843 = vunpack.c.l.b16 %v1774
    %v6844 = vunpack.c.l.b16 %v1775
    %v6845 = vunpack.c.l.b16 %v1776
    %v6846 = vunpack.c.l.b16 %v1777
    %v6847 = vunpack.c.l.b16 %v1778
    %v6848 = vunpack.c.l.b16 %v1779
    %v6849 = vunpack.c.l.b16 %v1780
    %v6850 = vunpack.c.l.b16 %v1781
    %v6851 = vunpack.c.l.b16 %v1782
    %v6852 = vunpack.c.l.b16 %v1783
    %v6853 = vunpack.c.l.b16 %v1784
    %v6854 = vunpack.c.l.b16 %v1785
    %v6855 = vunpack.c.l.b16 %v1786
    %v6856 = vunpack.c.l.b16 %v1787
    %v6857 = vunpack.c.l.b16 %v1788
    %v6858 = vunpack.c.l.b16 %v1789
    %v6859 = vunpack.c.l.b16 %v1790
    %v6860 = vunpack.c.l.b16 %v1791
    %v6861 = vunpack.c.l.b16 %v1792
    %v6862 = vunpack.c.l.b16 %v1793
    %v6863 = vunpack.c.l.b16 %v1794
    %v6864 = vunpack.c.l.b16 %v1795
    %v6865 = vunpack.c.l.b16 %v1796
    %v6866 = vunpack.c.l.b16 %v1797
    %v6867 = vunpack.c.l.b16 %v1798
    %v6868 = vunpack.c.l.b16 %v1799
    %v6869 = vunpack.c.l.b16 %v1800
    %v6870 = vunpack.c.l.b16 %v1801
    %v6871 = vunpack.c.l.b16 %v1802
    %v6872 = vunpack.c.l.b16 %v1803
    %v6873 = vunpack.c.l.b16 %v1804
    %v6874 = vunpack.c.l.b16 %v1805
    %v6875 = vunpack.c.l.b16 %v1806
    %v6876 = vunpack.c.l.b16 %v1807
    %v6877 = vunpack.c.l.b16 %v1808
    %v6878 = vunpack.c.l.b16 %v1809
    %v6879 = vunpack.c.l.b16 %v1810
    %v6880 = vunpack.c.l.b16 %v1811
    %v6881 = vunpack.c.l.b16 %v1812
    %v6882 = vunpack.c.l.b16 %v1813
    %v6883 = vunpack.c.l.b16 %v1814
    %v6884 = vunpack.c.l.b16 %v1815
    %v6885 = vunpack.c.l.b16 %v1816
    %v6886 = vunpack.c.l.b16 %v1817
    %v6887 = vunpack.c.l.b16 %v1818
    %v6888 = vunpack.c.l.b16 %v1819
    %v6889 = vunpack.c.l.b16 %v1820
    %v6890 = vunpack.c.l.b16 %v1821
    %v6891 = vunpack.c.l.b16 %v1822
    %v6892 = vunpack.c.l.b16 %v1823
    %v6893 = vunpack.c.l.b16 %v1824
    %v6894 = vunpack.c.l.b16 %v1825
    %v6895 = vunpack.c.l.b16 %v1826
    %v6896 = vunpack.c.l.b16 %v1827
    %v6897 = vunpack.c.l.b16 %v1828
    %v6898 = vunpack.c.l.b16 %v1829
    %v6899 = vunpack.c.l.b16 %v1830
    %v6900 = vunpack.c.l.b16 %v1831
    %v6901 = vunpack.c.l.b16 %v1832
    %v6902 = vunpack.c.l.b16 %v1833
    %v6903 = vunpack.c.l.b16 %v1834
    %v6904 = vunpack.c.l.b16 %v1835
    %v6905 = vunpack.c.l.b16 %v1836
    %v6906 = vunpack.c.l.b16 %v1837
    %v6907 = vunpack.c.l.b16 %v1838
    %v6908 = vunpack.c.l.b16 %v1839
    %v6909 = vunpack.c.l.b16 %v1840
    %v6910 = vunpack.c.l.b16 %v1841
    %v6911 = vunpack.c.l.b16 %v1842
    %v6912 = vunpack.c.l.b16 %v1843
    %v6913 = vunpack.c.l.b16 %v1844
    %v6914 = vunpack.c.l.b16 %v1845
    %v6915 = vunpack.c.l.b16 %v1846
    %v6916 = vunpack.c.l.b16 %v1847
    %v6917 = vunpack.c.l.b16 %v1848
    %v6918 = vunpack.c.l.b16 %v1849
    %v6919 = vunpack.c.l.b16 %v1850
    %v6920 = vunpack.c.l.b16 %v1851
    %v6921 = vunpack.c.l.b16 %v1852
    %v6922 = vunpack.c.l.b16 %v1853
    %v6923 = vunpack.c.l.b16 %v1854
    %v6924 = vunpack.c.l.b16 %v1855
    %v6925 = vunpack.c.l.b16 %v1856
    %v6926 = vunpack.c.l.b16 %v1857
    %v6927 = vunpack.c.l.b16 %v1858
    %v6928 = vunpack.c.l.b16 %v1859
    %v6929 = vunpack.c.l.b16 %v1860
    %v6930 = vunpack.c.l.b16 %v1861
    %v6931 = vunpack.c.l.b16 %v1862
    %v6932 = vunpack.c.l.b16 %v1863
    %v6933 = vunpack.c.l.b16 %v1864
    %v6934 = vunpack.c.l.b16 %v1865
    %v6935 = vunpack.c.l.b16 %v1866
    %v6936 = vunpack.c.l.b16 %v1867
    %v6937 = vunpack.c.l.b16 %v1868
    %v6938 = vunpack.c.l.b16 %v1869
    %v6939 = vunpack.c.l.b16 %v1870
    %v6940 = vunpack.c.l.b16 %v1871
    %v6941 = vunpack.c.l.b16 %v1872
    %v6942 = vunpack.c.l.b16 %v1873
    %v6943 = vunpack.c.l.b16 %v1874
    %v6944 = vunpack.c.l.b16 %v1875
    %v6945 = vunpack.c.l.b16 %v1876
    %v6946 = vunpack.c.l.b16 %v1877
    %v6947 = vunpack.c.l.b16 %v1878
    %v6948 = vunpack.c.l.b16 %v1879
    %v6949 = vunpack.c.l.b16 %v1880
    %v6950 = vunpack.c.l.b16 %v1881
    %v6951 = vunpack.c.l.b16 %v1882
    %v6952 = vunpack.c.l.b16 %v1883
    %v6953 = vunpack.c.l.b16 %v1884
    %v6954 = vunpack.c.l.b16 %v1885
    %v6955 = vunpack.c.l.b16 %v1886
    %v6956 = vunpack.c.l.b16 %v1887
    %v6957 = vunpack.c.l.b16 %v1888
    %v6958 = vunpack.c.l.b16 %v1889
    %v6959 = vunpack.c.l.b16 %v1890
    %v6960 = vunpack.c.l.b16 %v1891
    %v6961 = vunpack.c.l.b16 %v1892
    %v6962 = vunpack.c.l.b16 %v1893
    %v6963 = vunpack.c.l.b16 %v1894
    %v6964 = vunpack.c.l.b16 %v1895
    %v6965 = vunpack.c.l.b16 %v1896
    %v6966 = vunpack.c.l.b16 %v1897
    %v6967 = vunpack.c.l.b16 %v1898
    %v6968 = vunpack.c.l.b16 %v1899
    %v6969 = vunpack.c.l.b16 %v1900
    %v6970 = vunpack.c.l.b16 %v1901
    %v6971 = vunpack.c.l.b16 %v1902
    %v6972 = vunpack.c.l.b16 %v1903
    %v6973 = vunpack.c.l.b16 %v1904
    %v6974 = vunpack.c.l.b16 %v1905
    %v6975 = vunpack.c.l.b16 %v1906
    %v6976 = vunpack.c.l.b16 %v1907
    %v6977 = vunpack.c.l.b16 %v1908
    %v6978 = vunpack.c.l.b16 %v1909
    %v6979 = vunpack.c.l.b16 %v1910
    %v6980 = vunpack.c.l.b16 %v1911
    %v6981 = vunpack.c.l.b16 %v1912
    %v6982 = vunpack.c.l.b16 %v1913
    %v6983 = vunpack.c.l.b16 %v1914
    %v6984 = vunpack.c.l.b16 %v1915
    %v6985 = vunpack.c.l.b16 %v1916
    %v6986 = vunpack.c.l.b16 %v1917
    %v6987 = vunpack.c.l.b16 %v1918
    %v6988 = vunpack.c.l.b16 %v1919
    %v6989 = vunpack.c.l.b16 %v1920
    %v6990 = vunpack.c.l.b16 %v1921
    %v6991 = vunpack.c.l.b16 %v1922
    %v6992 = vunpack.c.l.b16 %v1923
    %v6993 = vunpack.c.l.b16 %v1924
    %v6994 = vunpack.c.l.b16 %v1925
    %v6995 = vunpack.c.l.b16 %v1926
    %v6996 = vunpack.c.l.b16 %v1927
    %v6997 = vunpack.c.l.b16 %v1928
    %v6998 = vunpack.c.l.b16 %v1929
    %v6999 = vunpack.c.l.b16 %v1930
    %v7000 = vunpack.c.l.b16 %v1931
    %v7001 = vunpack.c.l.b16 %v1932
    %v7002 = vunpack.c.l.b16 %v1933
    %v7003 = vunpack.c.l.b16 %v1934
    %v7004 = vunpack.c.l.b16 %v1935
    %v7005 = vunpack.c.l.b16 %v1936
    %v7006 = vunpack.c.l.b16 %v1937
    %v7007 = vunpack.c.l.b16 %v1938
    %v7008 = vunpack.c.l.b16 %v1939
    %v7009 = vunpack.c.l.b16 %v1940
    %v7010 = vunpack.c.l.b16 %v1941
    %v7011 = vunpack.c.l.b16 %v1942
    %v7012 = vunpack.c.l.b16 %v1943
    %v7013 = vunpack.c.l.b16 %v1944
    %v7014 = vunpack.c.l.b16 %v1945
    %v7015 = vunpack.c.l.b16 %v1946
    %v7016 = vunpack.c.l.b16 %v1947
    %v7017 = vunpack.c.l.b16 %v1948
    %v7018 = vunpack.c.l.b16 %v1949
    %v7019 = vunpack.c.l.b16 %v1950
    %v7020 = vunpack.c.l.b16 %v1951
    %v7021 = vunpack.c.l.b16 %v1952
    %v7022 = vunpack.c.l.b16 %v1953
    %v7023 = vunpack.c.l.b16 %v1954
    %v7024 = vunpack.c.l.b16 %v1955
    %v7025 = vunpack.c.l.b16 %v1956
    %v7026 = vunpack.c.l.b16 %v1957
    %v7027 = vunpack.c.l.b16 %v1958
    %v7028 = vunpack.c.l.b16 %v1959
    %v7029 = vunpack.c.l.b16 %v1960
    %v7030 = vunpack.c.l.b16 %v1961
    %v7031 = vunpack.c.l.b16 %v1962
    %v7032 = vunpack.c.l.b16 %v1963
    %v7033 = vunpack.c.l.b16 %v1964
    %v7034 = vunpack.c.l.b16 %v1965
    %v7035 = vunpack.c.l.b16 %v1966
    %v7036 = vunpack.c.l.b16 %v1967
    %v7037 = vunpack.c.l.b16 %v1968
    %v7038 = vunpack.c.l.b16 %v1969
    %v7039 = vunpack.c.l.b16 %v1970
    %v7040 = vunpack.c.l.b16 %v1971
    %v7041 = vunpack.c.l.b16 %v1972
    %v7042 = vunpack.c.l.b16 %v1973
    %v7043 = vunpack.c.l.b16 %v1974
    %v7044 = vunpack.c.l.b16 %v1975
    %v7045 = vunpack.c.l.b16 %v1976
    %v7046 = vunpack.c.l.b16 %v1977
    %v7047 = vunpack.c.l.b16 %v1978
    %v7048 = vunpack.c.l.b16 %v1979
    %v7049 = vunpack.c.l.b16 %v1980
    %v7050 = vunpack.c.l.b16 %v1981
    %v7051 = vunpack.c.l.b16 %v1982
    %v7052 = vunpack.c.l.b16 %v1983
    %v7053 = vunpack.c.l.b16 %v1984
    %v7054 = vunpack.c.l.b16 %v1985
    %v7055 = vunpack.c.l.b16 %v1986
    %v7056 = vunpack.c.l.b16 %v1987
    %v7057 = vunpack.c.l.b16 %v1988
    %v7058 = vunpack.c.l.b16 %v1989
    %v7059 = vunpack.c.l.b16 %v1990
    %v7060 = vunpack.c.l.b16 %v1991
    %v7061 = vunpack.c.l.b16 %v1992
    %v7062 = vunpack.c.l.b16 %v1993
    %v7063 = vunpack.c.l.b16 %v1994
    %v7064 = vunpack.c.l.b16 %v1995
    %v7065 = vunpack.c.l.b16 %v1996
    %v7066 = vunpack.c.l.b16 %v1997
    %v7067 = vunpack.c.l.b16 %v1998
    %v7068 = vunpack.c.l.b16 %v1999
    %v7069 = vunpack.c.l.b16 %v2000
    %v7070 = vunpack.c.l.b16 %v2001
    %v7071 = vunpack.c.l.b16 %v2002
    %v7072 = vunpack.c.l.b16 %v2003
    %v7073 = vunpack.c.l.b16 %v2004
    %v7074 = vunpack.c.l.b16 %v2005
    %v7075 = vunpack.c.l.b16 %v2006
    %v7076 = vunpack.c.l.b16 %v2007
    %v7077 = vunpack.c.l.b16 %v2008
    %v7078 = vunpack.c.l.b16 %v2009
    %v7079 = vunpack.c.l.b16 %v2010
    %v7080 = vunpack.c.l.b16 %v2011
    %v7081 = vunpack.c.l.b16 %v2012
    %v7082 = vunpack.c.l.b16 %v2013
    %v7083 = vunpack.c.l.b16 %v2014
    %v7084 = vunpack.c.l.b16 %v2015
    %v7085 = vunpack.c.l.b16 %v2016
    %v7086 = vunpack.c.l.b16 %v2017
    %v7087 = vunpack.c.l.b16 %v2018
    %v7088 = vunpack.c.l.b16 %v2019
    %v7089 = vunpack.c.l.b16 %v2020
    %v7090 = vunpack.c.l.b16 %v2021
    %v7091 = vunpack.c.l.b16 %v2022
    %v7092 = vunpack.c.l.b16 %v2023
    %v7093 = vunpack.c.l.b16 %v2024
    %v7094 = vunpack.c.l.b16 %v2025
    %v7095 = vunpack.c.l.b16 %v2026
    %v7096 = vunpack.c.l.b16 %v2027
    %v7097 = vunpack.c.l.b16 %v2028
    %v7098 = vunpack.c.l.b16 %v2029
    %v7099 = vunpack.c.l.b16 %v2030
    %v7100 = vunpack.c.l.b16 %v2031
    %v7101 = vunpack.c.l.b16 %v2032
    %v7102 = vunpack.c.l.b16 %v2033
    %v7103 = vunpack.c.l.b16 %v2034
    %v7104 = vunpack.c.l.b16 %v2035
    %v7105 = vunpack.c.l.b16 %v2036
    %v7106 = vunpack.c.l.b16 %v2037
    %v7107 = vunpack.c.l.b16 %v2038
    %v7108 = vunpack.c.l.b16 %v2039
    %v7109 = vunpack.c.l.b16 %v2040
    %v7110 = vunpack.c.l.b16 %v2041
    %v7111 = vunpack.c.l.b16 %v2042
    %v7112 = vunpack.c.l.b16 %v2043
    %v7113 = vunpack.c.l.b16 %v2044
    %v7114 = vunpack.c.l.b16 %v2045
    %v7115 = vunpack.c.l.b16 %v2046
    %v7116 = vunpack.c.l.b16 %v2047
    %v7117 = vunpack.c.l.b16 %v2048
    %v7118 = vunpack.c.l.b16 %v2049
    %v7119 = vunpack.c.l.b16 %v2050
    %v7120 = vunpack.c.l.b16 %v2051
    %v7121 = vunpack.c.l.b16 %v2052
    %v7122 = vunpack.c.l.b16 %v2053
    %v7123 = vunpack.c.l.b16 %v2054
    %v7124 = vunpack.c.l.b16 %v2055
    %v7125 = vunpack.c.l.b16 %v2056
    %v7126 = vunpack.c.l.b16 %v2057
    %v7127 = vunpack.c.l.b16 %v2058
    %v7128 = vunpack.c.l.b16 %v2059
    %v7129 = vunpack.c.l.b16 %v2060
    %v7130 = vunpack.c.l.b16 %v2061
    %v7131 = vunpack.c.l.b16 %v2062
    %v7132 = vunpack.c.l.b16 %v2063
    %v7133 = vunpack.c.l.b16 %v2064
    %v7134 = vunpack.c.l.b16 %v2065
    %v7135 = vunpack.c.l.b16 %v2066
    %v7136 = vunpack.c.l.b16 %v2067
    %v7137 = vunpack.c.l.b16 %v2068
    %v7138 = vunpack.c.l.b16 %v2069
    %v7139 = vunpack.c.l.b16 %v2070
    %v7140 = vunpack.c.l.b16 %v2071
    %v7141 = vunpack.c.l.b16 %v2072
    %v7142 = vunpack.c.l.b16 %v2073
    %v7143 = vunpack.c.l.b16 %v2074
    %v7144 = vunpack.c.l.b16 %v2075
    %v7145 = vunpack.c.l.b16 %v2076
    %v7146 = vunpack.c.l.b16 %v2077
    %v7147 = vunpack.c.l.b16 %v2078
    %v7148 = vunpack.c.l.b16 %v2079
    %v7149 = vunpack.c.l.b16 %v2080
    %v7150 = vunpack.c.l.b16 %v2081
    %v7151 = vunpack.c.l.b16 %v2082
    %v7152 = vunpack.c.l.b16 %v2083
    %v7153 = vunpack.c.l.b16 %v2084
    %v7154 = vunpack.c.l.b16 %v2085
    %v7155 = vunpack.c.l.b16 %v2086
    %v7156 = vunpack.c.l.b16 %v2087
    %v7157 = vunpack.c.l.b16 %v2088
    %v7158 = vunpack.c.l.b16 %v2089
    %v7159 = vunpack.c.l.b16 %v2090
    %v7160 = vunpack.c.l.b16 %v2091
    %v7161 = vunpack.c.l.b16 %v2092
    %v7162 = vunpack.c.l.b16 %v2093
    %v7163 = vunpack.c.l.b16 %v2094
    %v7164 = vunpack.c.l.b16 %v2095
    %v7165 = vunpack.c.l.b16 %v2096
    %v7166 = vunpack.c.l.b16 %v2097
    %v7167 = vunpack.c.l.b16 %v2098
    %v7168 = vunpack.c.l.b16 %v2099
    %v7169 = vunpack.c.l.b16 %v2100
    %v7170 = vunpack.c.l.b16 %v2101
    %v7171 = vunpack.c.l.b16 %v2102
    %v7172 = vunpack.c.l.b16 %v2103
    %v7173 = vunpack.c.l.b16 %v2104
    %v7174 = vunpack.c.l.b16 %v2105
    %v7175 = vunpack.c.l.b16 %v2106
    %v7176 = vunpack.c.l.b16 %v2107
    %v7177 = vunpack.c.l.b16 %v2108
    %v7178 = vunpack.c.l.b16 %v2109
    %v7179 = vunpack.c.l.b16 %v2110
    %v7180 = vunpack.c.l.b16 %v2111
    %v7181 = vunpack.c.l.b16 %v2112
    %v7182 = vunpack.c.l.b16 %v2113
    %v7183 = vunpack.c.l.b16 %v2114
    %v7184 = vunpack.c.l.b16 %v2115
    %v7185 = vunpack.c.l.b16 %v2116
    %v7186 = vunpack.c.l.b16 %v2117
    %v7187 = vunpack.c.l.b16 %v2118
    %v7188 = vunpack.c.l.b16 %v2119
    %v7189 = vunpack.c.l.b16 %v2120
    %v7190 = vunpack.c.l.b16 %v2121
    %v7191 = vunpack.c.l.b16 %v2122
    %v7192 = vunpack.c.l.b16 %v2123
    %v7193 = vunpack.c.l.b16 %v2124
    %v7194 = vunpack.c.l.b16 %v2125
    %v7195 = vunpack.c.l.b16 %v2126
    %v7196 = vunpack.c.l.b16 %v2127
    %v7197 = vunpack.c.l.b16 %v2128
    %v7198 = vunpack.c.l.b16 %v2129
    %v7199 = vunpack.c.l.b16 %v2130
    %v7200 = vunpack.c.l.b16 %v2131
    %v7201 = vunpack.c.l.b16 %v2132
    %v7202 = vunpack.c.l.b16 %v2133
    %v7203 = vunpack.c.l.b16 %v2134
    %v7204 = vunpack.c.l.b16 %v2135
    %v7205 = vunpack.c.l.b16 %v2136
    %v7206 = vunpack.c.l.b16 %v2137
    %v7207 = vunpack.c.l.b16 %v2138
    %v7208 = vunpack.c.l.b16 %v2139
    %v7209 = vunpack.c.l.b16 %v2140
    %v7210 = vunpack.c.l.b16 %v2141
    %v7211 = vunpack.c.l.b16 %v2142
    %v7212 = vunpack.c.l.b16 %v2143
    %v7213 = vunpack.c.l.b16 %v2144
    %v7214 = vunpack.c.l.b16 %v2145
    %v7215 = vunpack.c.l.b16 %v2146
    %v7216 = vunpack.c.l.b16 %v2147
    %v7217 = vunpack.c.l.b16 %v2148
    %v7218 = vunpack.c.l.b16 %v2149
    %v7219 = vunpack.c.l.b16 %v2150
    %v7220 = vunpack.c.l.b16 %v2151
    %v7221 = vunpack.c.l.b16 %v2152
    %v7222 = vunpack.c.l.b16 %v2153
    %v7223 = vunpack.c.l.b16 %v2154
    %v7224 = vunpack.c.l.b16 %v2155
    %v7225 = vunpack.c.l.b16 %v2156
    %v7226 = vunpack.c.l.b16 %v2157
    %v7227 = vunpack.c.l.b16 %v2158
    %v7228 = vunpack.c.l.b16 %v2159
    %v7229 = vunpack.c.l.b16 %v2160
    %v7230 = vunpack.c.l.b16 %v2161
    %v7231 = vunpack.c.l.b16 %v2162
    %v7232 = vunpack.c.l.b16 %v2163
    %v7233 = vunpack.c.l.b16 %v2164
    %v7234 = vunpack.c.l.b16 %v2165
    %v7235 = vunpack.c.l.b16 %v2166
    %v7236 = vunpack.c.l.b16 %v2167
    %v7237 = vunpack.c.l.b16 %v2168
    %v7238 = vunpack.c.l.b16 %v2169
    %v7239 = vunpack.c.l.b16 %v2170
    %v7240 = vunpack.c.l.b16 %v2171
    %v7241 = vunpack.c.l.b16 %v2172
    %v7242 = vunpack.c.l.b16 %v2173
    %v7243 = vunpack.c.l.b16 %v2174
    %v7244 = vunpack.c.l.b16 %v2175
    %v7245 = vunpack.c.l.b16 %v2176
    %v7246 = vunpack.c.l.b16 %v2177
    %v7247 = vunpack.c.l.b16 %v2178
    %v7248 = vunpack.c.l.b16 %v2179
    %v7249 = vunpack.c.l.b16 %v2180
    %v7250 = vunpack.c.l.b16 %v2181
    %v7251 = vunpack.c.l.b16 %v2182
    %v7252 = vunpack.c.l.b16 %v2183
    %v7253 = vunpack.c.l.b16 %v2184
    %v7254 = vunpack.c.l.b16 %v2185
    %v7255 = vunpack.c.l.b16 %v2186
    %v7256 = vunpack.c.l.b16 %v2187
    %v7257 = vunpack.c.l.b16 %v2188
    %v7258 = vunpack.c.l.b16 %v2189
    %v7259 = vunpack.c.l.b16 %v2190
    %v7260 = vunpack.c.l.b16 %v2191
    %v7261 = vunpack.c.l.b16 %v2192
    %v7262 = vunpack.c.l.b16 %v2193
    %v7263 = vunpack.c.l.b16 %v2194
    %v7264 = vunpack.c.l.b16 %v2195
    %v7265 = vunpack.c.l.b16 %v2196
    %v7266 = vunpack.c.l.b16 %v2197
    %v7267 = vunpack.c.l.b16 %v2198
    %v7268 = vunpack.c.l.b16 %v2199
    %v7269 = vunpack.c.l.b16 %v2200
    %v7270 = vunpack.c.l.b16 %v2201
    %v7271 = vunpack.c.l.b16 %v2202
    %v7272 = vunpack.c.l.b16 %v2203
    %v7273 = vunpack.c.l.b16 %v2204
    %v7274 = vunpack.c.l.b16 %v2205
    %v7275 = vunpack.c.l.b16 %v2206
    %v7276 = vunpack.c.l.b16 %v2207
    %v7277 = vunpack.c.l.b16 %v2208
    %v7278 = vunpack.c.l.b16 %v2209
    %v7279 = vunpack.c.l.b16 %v2210
    %v7280 = vunpack.c.l.b16 %v2211
    %v7281 = vunpack.c.l.b16 %v2212
    %v7282 = vunpack.c.l.b16 %v2213
    %v7283 = vunpack.c.l.b16 %v2214
    %v7284 = vunpack.c.l.b16 %v2215
    %v7285 = vunpack.c.l.b16 %v2216
    %v7286 = vunpack.c.l.b16 %v2217
    %v7287 = vunpack.c.l.b16 %v2218
    %v7288 = vunpack.c.l.b16 %v2219
    %v7289 = vunpack.c.l.b16 %v2220
    %v7290 = vunpack.c.l.b16 %v2221
    %v7291 = vunpack.c.l.b16 %v2222
    %v7292 = vunpack.c.l.b16 %v2223
    %v7293 = vunpack.c.l.b16 %v2224
    %v7294 = vunpack.c.l.b16 %v2225
    %v7295 = vunpack.c.l.b16 %v2226
    %v7296 = vunpack.c.l.b16 %v2227
    %v7297 = vunpack.c.l.b16 %v2228
    %v7298 = vunpack.c.l.b16 %v2229
    %v7299 = vunpack.c.l.b16 %v2230
    %v7300 = vunpack.c.l.b16 %v2231
    %v7301 = vunpack.c.l.b16 %v2232
    %v7302 = vunpack.c.l.b16 %v2233
    %v7303 = vunpack.c.l.b16 %v2234
    %v7304 = vunpack.c.l.b16 %v2235
    %v7305 = vunpack.c.l.b16 %v2236
    %v7306 = vunpack.c.l.b16 %v2237
    %v7307 = vunpack.c.l.b16 %v2238
    %v7308 = vunpack.c.l.b16 %v2239
    %v7309 = vunpack.c.l.b16 %v2240
    %v7310 = vunpack.c.l.b16 %v2241
    %v7311 = vunpack.c.l.b16 %v2242
    %v7312 = vunpack.c.l.b16 %v2243
    %v7313 = vunpack.c.l.b16 %v2244
    %v7314 = vunpack.c.l.b16 %v2245
    %v7315 = vunpack.c.l.b16 %v2246
    %v7316 = vunpack.c.l.b16 %v2247
    %v7317 = vunpack.c.l.b16 %v2248
    %v7318 = vunpack.c.l.b16 %v2249
    %v7319 = vunpack.c.l.b16 %v2250
    %v7320 = vunpack.c.l.b16 %v2251
    %v7321 = vunpack.c.l.b16 %v2252
    %v7322 = vunpack.c.l.b16 %v2253
    %v7323 = vunpack.c.l.b16 %v2254
    %v7324 = vunpack.c.l.b16 %v2255
    %v7325 = vunpack.c.l.b16 %v2256
    %v7326 = vunpack.c.l.b16 %v2257
    %v7327 = vunpack.c.l.b16 %v2258
    %v7328 = vunpack.c.l.b16 %v2259
    %v7329 = vunpack.c.l.b16 %v2260
    %v7330 = vunpack.c.l.b16 %v2261
    %v7331 = vunpack.c.l.b16 %v2262
    %v7332 = vunpack.c.l.b16 %v2263
    %v7333 = vunpack.c.l.b16 %v2264
    %v7334 = vunpack.c.l.b16 %v2265
    %v7335 = vunpack.c.l.b16 %v2266
    %v7336 = vunpack.c.l.b16 %v2267
    %v7337 = vunpack.c.l.b16 %v2268
    %v7338 = vunpack.c.l.b16 %v2269
    %v7339 = vunpack.c.l.b16 %v2270
    %v7340 = vunpack.c.l.b16 %v2271
    %v7341 = vunpack.c.l.b16 %v2272
    %v7342 = vunpack.c.l.b16 %v2273
    %v7343 = vunpack.c.l.b16 %v2274
    %v7344 = vunpack.c.l.b16 %v2275
    %v7345 = vunpack.c.l.b16 %v2276
    %v7346 = vunpack.c.l.b16 %v2277
    %v7347 = vunpack.c.l.b16 %v2278
    %v7348 = vunpack.c.l.b16 %v2279
    %v7349 = vunpack.c.l.b16 %v2280
    %v7350 = vunpack.c.l.b16 %v2281
    %v7351 = vunpack.c.l.b16 %v2282
    %v7352 = vunpack.c.l.b16 %v2283
    %v7353 = vunpack.c.l.b16 %v2284
    %v7354 = vunpack.c.l.b16 %v2285
    %v7355 = vunpack.c.l.b16 %v2286
    %v7356 = vunpack.c.l.b16 %v2287
    %v7357 = vunpack.c.l.b16 %v2288
    %v7358 = vunpack.c.l.b16 %v2289
    %v7359 = vunpack.c.l.b16 %v2290
    %v7360 = vunpack.c.l.b16 %v2291
    %v7361 = vunpack.c.l.b16 %v2292
    %v7362 = vunpack.c.l.b16 %v2293
    %v7363 = vunpack.c.l.b16 %v2294
    %v7364 = vunpack.c.l.b16 %v2295
    %v7365 = vunpack.c.l.b16 %v2296
    %v7366 = vunpack.c.l.b16 %v2297
    %v7367 = vunpack.c.l.b16 %v2298
    %v7368 = vunpack.c.l.b16 %v2299
    %v7369 = vunpack.c.l.b16 %v2300
    %v7370 = vunpack.c.l.b16 %v2301
    %v7371 = vunpack.c.l.b16 %v2302
    %v7372 = vunpack.c.l.b16 %v2303
    %v7373 = vunpack.c.l.b16 %v2304
    %v7374 = vunpack.c.l.b16 %v2305
    %v7375 = vunpack.c.l.b16 %v2306
    %v7376 = vunpack.c.l.b16 %v2307
    %v7377 = vunpack.c.l.b16 %v2308
    %v7378 = vunpack.c.l.b16 %v2309
    %v7379 = vunpack.c.l.b16 %v2310
    %v7380 = vunpack.c.l.b16 %v2311
    %v7381 = vunpack.c.l.b16 %v2312
    %v7382 = vunpack.c.l.b16 %v2313
    %v7383 = vunpack.c.l.b16 %v2314
    %v7384 = vunpack.c.l.b16 %v2315
    %v7385 = vunpack.c.l.b16 %v2316
    %v7386 = vunpack.c.l.b16 %v2317
    %v7387 = vunpack.c.l.b16 %v2318
    %v7388 = vunpack.c.l.b16 %v2319
    %v7389 = vunpack.c.l.b16 %v2320
    %v7390 = vunpack.c.l.b16 %v2321
    %v7391 = vunpack.c.l.b16 %v2322
    %v7392 = vunpack.c.l.b16 %v2323
    %v7393 = vunpack.c.l.b16 %v2324
    %v7394 = vunpack.c.l.b16 %v2325
    %v7395 = vunpack.c.l.b16 %v2326
    %v7396 = vunpack.c.l.b16 %v2327
    %v7397 = vunpack.c.l.b16 %v2328
    %v7398 = vunpack.c.l.b16 %v2329
    %v7399 = vunpack.c.l.b16 %v2330
    %v7400 = vunpack.c.l.b16 %v2331
    %v7401 = vunpack.c.l.b16 %v2332
    %v7402 = vunpack.c.l.b16 %v2333
    %v7403 = vunpack.c.l.b16 %v2334
    %v7404 = vunpack.c.l.b16 %v2335
    %v7405 = vunpack.c.l.b16 %v2336
    %v7406 = vunpack.c.l.b16 %v2337
    %v7407 = vunpack.c.l.b16 %v2338
    %v7408 = vunpack.c.l.b16 %v2339
    %v7409 = vunpack.c.l.b16 %v2340
    %v7410 = vunpack.c.l.b16 %v2341
    %v7411 = vunpack.c.l.b16 %v2342
    %v7412 = vunpack.c.l.b16 %v2343
    %v7413 = vunpack.c.l.b16 %v2344
    %v7414 = vunpack.c.l.b16 %v2345
    %v7415 = vunpack.c.l.b16 %v2346
    %v7416 = vunpack.c.l.b16 %v2347
    %v7417 = vunpack.c.l.b16 %v2348
    %v7418 = vunpack.c.l.b16 %v2349
    %v7419 = vunpack.c.l.b16 %v2350
    %v7420 = vunpack.c.l.b16 %v2351
    %v7421 = vunpack.c.l.b16 %v2352
    %v7422 = vunpack.c.l.b16 %v2353
    %v7423 = vunpack.c.l.b16 %v2354
    %v7424 = vunpack.c.l.b16 %v2355
    %v7425 = vunpack.c.l.b16 %v2356
    %v7426 = vunpack.c.l.b16 %v2357
    %v7427 = vunpack.c.l.b16 %v2358
    %v7428 = vunpack.c.l.b16 %v2359
    %v7429 = vunpack.c.l.b16 %v2360
    %v7430 = vunpack.c.l.b16 %v2361
    %v7431 = vunpack.c.l.b16 %v2362
    %v7432 = vunpack.c.l.b16 %v2363
    %v7433 = vunpack.c.l.b16 %v2364
    %v7434 = vunpack.c.l.b16 %v2365
    %v7435 = vunpack.c.l.b16 %v2366
    %v7436 = vunpack.c.l.b16 %v2367
    %v7437 = vunpack.c.l.b16 %v2368
    %v7438 = vunpack.c.l.b16 %v2369
    %v7439 = vunpack.c.l.b16 %v2370
    %v7440 = vunpack.c.l.b16 %v2371
    %v7441 = vunpack.c.l.b16 %v2372
    %v7442 = vunpack.c.l.b16 %v2373
    %v7443 = vunpack.c.l.b16 %v2374
    %v7444 = vunpack.c.l.b16 %v2375
    %v7445 = vunpack.c.l.b16 %v2376
    %v7446 = vunpack.c.l.b16 %v2377
    %v7447 = vunpack.c.l.b16 %v2378
    %v7448 = vunpack.c.l.b16 %v2379
    %v7449 = vunpack.c.l.b16 %v2380
    %v7450 = vunpack.c.l.b16 %v2381
    %v7451 = vunpack.c.l.b16 %v2382
    %v7452 = vunpack.c.l.b16 %v2383
    %v7453 = vunpack.c.l.b16 %v2384
    %v7454 = vunpack.c.l.b16 %v2385
    %v7455 = vunpack.c.l.b16 %v2386
    %v7456 = vunpack.c.l.b16 %v2387
    %v7457 = vunpack.c.l.b16 %v2388
    %v7458 = vunpack.c.l.b16 %v2389
    %v7459 = vunpack.c.l.b16 %v2390
    %v7460 = vunpack.c.l.b16 %v2391
    %v7461 = vunpack.c.l.b16 %v2392
    %v7462 = vunpack.c.l.b16 %v2393
    %v7463 = vunpack.c.l.b16 %v2394
    %v7464 = vunpack.c.l.b16 %v2395
    %v7465 = vunpack.c.l.b16 %v2396
    %v7466 = vunpack.c.l.b16 %v2397
    %v7467 = vunpack.c.l.b16 %v2398
    %v7468 = vunpack.c.l.b16 %v2399
    %v7469 = vunpack.c.l.b16 %v2400
    %v7470 = vpack.c.b16 %v5105, %v5104
    %v7471 = vpack.c.b16 %v5107, %v5106
    %v7472 = vpack.c.b16 %v5109, %v5108
    %v7473 = vpack.c.b16 %v5111, %v5110
    %v7474 = vpack.c.b16 %v5113, %v5112
    %v7475 = vpack.c.b16 %v5115, %v5114
    %v7476 = vpack.c.b16 %v5117, %v5116
    %v7477 = vpack.c.b16 %v5119, %v5118
    %v7478 = vpack.c.b16 %v5121, %v5120
    %v7479 = vpack.c.b16 %v5123, %v5122
    %v7480 = vpack.c.b16 %v5125, %v5124
    %v7481 = vpack.c.b16 %v5127, %v5126
    %v7482 = vpack.c.b16 %v5129, %v5128
    %v7483 = vpack.c.b16 %v5131, %v5130
    %v7484 = vpack.c.b16 %v5133, %v5132
    %v7485 = vpack.c.b16 %v5135, %v5134
    %v7486 = vpack.c.b16 %v5137, %v5136
    %v7487 = vpack.c.b16 %v5139, %v5138
    %v7488 = vpack.c.b16 %v5141, %v5140
    %v7489 = vpack.c.b16 %v5143, %v5142
    %v7490 = vpack.c.b16 %v5145, %v5144
    %v7491 = vpack.c.b16 %v5147, %v5146
    %v7492 = vpack.c.b16 %v5149, %v5148
    %v7493 = vpack.c.b16 %v5151, %v5150
    %v7494 = vpack.c.b16 %v5153, %v5152
    %v7495 = vpack.c.b16 %v5155, %v5154
    %v7496 = vpack.c.b16 %v5157, %v5156
    %v7497 = vpack.c.b16 %v5159, %v5158
    %v7498 = vpack.c.b16 %v5161, %v5160
    %v7499 = vpack.c.b16 %v5163, %v5162
    %v7500 = vpack.c.b16 %v5165, %v5164
    %v7501 = vpack.c.b16 %v5167, %v5166
    %v7502 = vpack.c.b16 %v5169, %v5168
    %v7503 = vpack.c.b16 %v5171, %v5170
    %v7504 = vpack.c.b16 %v5173, %v5172
    %v7505 = vpack.c.b16 %v5175, %v5174
    %v7506 = vpack.c.b16 %v5177, %v5176
    %v7507 = vpack.c.b16 %v5179, %v5178
    %v7508 = vpack.c.b16 %v5181, %v5180
    %v7509 = vpack.c.b16 %v5183, %v5182
    %v7510 = vpack.c.b16 %v5185, %v5184
    %v7511 = vpack.c.b16 %v5187, %v5186
    %v7512 = vpack.c.b16 %v5189, %v5188
    %v7513 = vpack.c.b16 %v5191, %v5190
    %v7514 = vpack.c.b16 %v5193, %v5192
    %v7515 = vpack.c.b16 %v5195, %v5194
    %v7516 = vpack.c.b16 %v5197, %v5196
    %v7517 = vpack.c.b16 %v5199, %v5198
    %v7518 = vpack.c.b16 %v5201, %v5200
    %v7519 = vpack.c.b16 %v5203, %v5202
    %v7520 = vpack.c.b16 %v5205, %v5204
    %v7521 = vpack.c.b16 %v5207, %v5206
    %v7522 = vpack.c.b16 %v5209, %v5208
    %v7523 = vpack.c.b16 %v5211, %v5210
    %v7524 = vpack.c.b16 %v5213, %v5212
    %v7525 = vpack.c.b16 %v5215, %v5214
    %v7526 = vpack.c.b16 %v5217, %v5216
    %v7527 = vpack.c.b16 %v5219, %v5218
    %v7528 = vpack.c.b16 %v5221, %v5220
    %v7529 = vpack.c.b16 %v5223, %v5222
    %v7530 = vpack.c.b16 %v5225, %v5224
    %v7531 = vpack.c.b16 %v5227, %v5226
    %v7532 = vpack.c.b16 %v5229, %v5228
    %v7533 = vpack.c.b16 %v5231, %v5230
    %v7534 = vpack.c.b16 %v5233, %v5232
    %v7535 = vpack.c.b16 %v5235, %v5234
    %v7536 = vpack.c.b16 %v5237, %v5236
    %v7537 = vpack.c.b16 %v5239, %v5238
    %v7538 = vpack.c.b16 %v5241, %v5240
    %v7539 = vpack.c.b16 %v5243, %v5242
    %v7540 = vpack.c.b16 %v5245, %v5244
    %v7541 = vpack.c.b16 %v5247, %v5246
    %v7542 = vpack.c.b16 %v5249, %v5248
    %v7543 = vpack.c.b16 %v5251, %v5250
    %v7544 = vpack.c.b16 %v5253, %v5252
    %v7545 = vpack.c.b16 %v5255, %v5254
    %v7546 = vpack.c.b16 %v5257, %v5256
    %v7547 = vpack.c.b16 %v5259, %v5258
    %v7548 = vpack.c.b16 %v5261, %v5260
    %v7549 = vpack.c.b16 %v5263, %v5262
    %v7550 = vpack.c.b16 %v5265, %v5264
    %v7551 = vpack.c.b16 %v5267, %v5266
    %v7552 = vpack.c.b16 %v5269, %v5268
    %v7553 = vpack.c.b16 %v5271, %v5270
    %v7554 = vpack.c.b16 %v5273, %v5272
    %v7555 = vpack.c.b16 %v5275, %v5274
    %v7556 = vpack.c.b16 %v5277, %v5276
    %v7557 = vpack.c.b16 %v5279, %v5278
    %v7558 = vpack.c.b16 %v5281, %v5280
    %v7559 = vpack.c.b16 %v5283, %v5282
    %v7560 = vpack.c.b16 %v5285, %v5284
    %v7561 = vpack.c.b16 %v5287, %v5286
    %v7562 = vpack.c.b16 %v5289, %v5288
    %v7563 = vpack.c.b16 %v5291, %v5290
    %v7564 = vpack.c.b16 %v5293, %v5292
    %v7565 = vpack.c.b16 %v5295, %v5294
    %v7566 = vpack.c.b16 %v5297, %v5296
    %v7567 = vpack.c.b16 %v5299, %v5298
    %v7568 = vpack.c.b16 %v5301, %v5300
    %v7569 = vpack.c.b16 %v5303, %v5302
    %v7570 = vpack.c.b16 %v5305, %v5304
    %v7571 = vpack.c.b16 %v5307, %v5306
    %v7572 = vpack.c.b16 %v5309, %v5308
    %v7573 = vpack.c.b16 %v5311, %v5310
    %v7574 = vpack.c.b16 %v5313, %v5312
    %v7575 = vpack.c.b16 %v5315, %v5314
    %v7576 = vpack.c.b16 %v5317, %v5316
    %v7577 = vpack.c.b16 %v5319, %v5318
    %v7578 = vpack.c.b16 %v5321, %v5320
    %v7579 = vpack.c.b16 %v5323, %v5322
    %v7580 = vpack.c.b16 %v5325, %v5324
    %v7581 = vpack.c.b16 %v5327, %v5326
    %v7582 = vpack.c.b16 %v5329, %v5328
    %v7583 = vpack.c.b16 %v5331, %v5330
    %v7584 = vpack.c.b16 %v5333, %v5332
    %v7585 = vpack.c.b16 %v5335, %v5334
    %v7586 = vpack.c.b16 %v5337, %v5336
    %v7587 = vpack.c.b16 %v5339, %v5338
    %v7588 = vpack.c.b16 %v5341, %v5340
    %v7589 = vpack.c.b16 %v5343, %v5342
    %v7590 = vpack.c.b16 %v5345, %v5344
    %v7591 = vpack.c.b16 %v5347, %v5346
    %v7592 = vpack.c.b16 %v5349, %v5348
    %v7593 = vpack.c.b16 %v5351, %v5350
    %v7594 = vpack.c.b16 %v5353, %v5352
    %v7595 = vpack.c.b16 %v5355, %v5354
    %v7596 = vpack.c.b16 %v5357, %v5356
    %v7597 = vpack.c.b16 %v5359, %v5358
    %v7598 = vpack.c.b16 %v5361, %v5360
    %v7599 = vpack.c.b16 %v5363, %v5362
    %v7600 = vpack.c.b16 %v5365, %v5364
    %v7601 = vpack.c.b16 %v5367, %v5366
    %v7602 = vpack.c.b16 %v5369, %v5368
    %v7603 = vpack.c.b16 %v5371, %v5370
    %v7604 = vpack.c.b16 %v5373, %v5372
    %v7605 = vpack.c.b16 %v5375, %v5374
    %v7606 = vpack.c.b16 %v5377, %v5376
    %v7607 = vpack.c.b16 %v5379, %v5378
    %v7608 = vpack.c.b16 %v5381, %v5380
    %v7609 = vpack.c.b16 %v5383, %v5382
    %v7610 = vpack.c.b16 %v5385, %v5384
    %v7611 = vpack.c.b16 %v5387, %v5386
    %v7612 = vpack.c.b16 %v5389, %v5388
    %v7613 = vpack.c.b16 %v5391, %v5390
    %v7614 = vpack.c.b16 %v5393, %v5392
    %v7615 = vpack.c.b16 %v5395, %v5394
    %v7616 = vpack.c.b16 %v5397, %v5396
    %v7617 = vpack.c.b16 %v5399, %v5398
    %v7618 = vpack.c.b16 %v5401, %v5400
    %v7619 = vpack.c.b16 %v5403, %v5402
    %v7620 = vpack.c.b16 %v5405, %v5404
    %v7621 = vpack.c.b16 %v5407, %v5406
    %v7622 = vpack.c.b16 %v5409, %v5408
    %v7623 = vpack.c.b16 %v5411, %v5410
    %v7624 = vpack.c.b16 %v5413, %v5412
    %v7625 = vpack.c.b16 %v5415, %v5414
    %v7626 = vpack.c.b16 %v5417, %v5416
    %v7627 = vpack.c.b16 %v5419, %v5418
    %v7628 = vpack.c.b16 %v5421, %v5420
    %v7629 = vpack.c.b16 %v5423, %v5422
    %v7630 = vpack.c.b16 %v5425, %v5424
    %v7631 = vpack.c.b16 %v5427, %v5426
    %v7632 = vpack.c.b16 %v5429, %v5428
    %v7633 = vpack.c.b16 %v5431, %v5430
    %v7634 = vpack.c.b16 %v5433, %v5432
    %v7635 = vpack.c.b16 %v5435, %v5434
    %v7636 = vpack.c.b16 %v5437, %v5436
    %v7637 = vpack.c.b16 %v5439, %v5438
    %v7638 = vpack.c.b16 %v5441, %v5440
    %v7639 = vpack.c.b16 %v5443, %v5442
    %v7640 = vpack.c.b16 %v5445, %v5444
    %v7641 = vpack.c.b16 %v5447, %v5446
    %v7642 = vpack.c.b16 %v5449, %v5448
    %v7643 = vpack.c.b16 %v5451, %v5450
    %v7644 = vpack.c.b16 %v5453, %v5452
    %v7645 = vpack.c.b16 %v5455, %v5454
    %v7646 = vpack.c.b16 %v5457, %v5456
    %v7647 = vpack.c.b16 %v5459, %v5458
    %v7648 = vpack.c.b16 %v5461, %v5460
    %v7649 = vpack.c.b16 %v5463, %v5462
    %v7650 = vpack.c.b16 %v5465, %v5464
    %v7651 = vpack.c.b16 %v5467, %v5466
    %v7652 = vpack.c.b16 %v5469, %v5468
    %v7653 = vpack.c.b16 %v5471, %v5470
    %v7654 = vpack.c.b16 %v5473, %v5472
    %v7655 = vpack.c.b16 %v5475, %v5474
    %v7656 = vpack.c.b16 %v5477, %v5476
    %v7657 = vpack.c.b16 %v5479, %v5478
    %v7658 = vpack.c.b16 %v5481, %v5480
    %v7659 = vpack.c.b16 %v5483, %v5482
    %v7660 = vpack.c.b16 %v5485, %v5484
    %v7661 = vpack.c.b16 %v5487, %v5486
    %v7662 = vpack.c.b16 %v5489, %v5488
    %v7663 = vpack.c.b16 %v5491, %v5490
    %v7664 = vpack.c.b16 %v5493, %v5492
    %v7665 = vpack.c.b16 %v5495, %v5494
    %v7666 = vpack.c.b16 %v5497, %v5496
    %v7667 = vpack.c.b16 %v5499, %v5498
    %v7668 = vpack.c.b16 %v5501, %v5500
    %v7669 = vpack.c.b16 %v5503, %v5502
    %v7670 = vpack.c.b16 %v5505, %v5504
    %v7671 = vpack.c.b16 %v5507, %v5506
    %v7672 = vpack.c.b16 %v5509, %v5508
    %v7673 = vpack.c.b16 %v5511, %v5510
    %v7674 = vpack.c.b16 %v5513, %v5512
    %v7675 = vpack.c.b16 %v5515, %v5514
    %v7676 = vpack.c.b16 %v5517, %v5516
    %v7677 = vpack.c.b16 %v5519, %v5518
    %v7678 = vpack.c.b16 %v5521, %v5520
    %v7679 = vpack.c.b16 %v5523, %v5522
    %v7680 = vpack.c.b16 %v5525, %v5524
    %v7681 = vpack.c.b16 %v5527, %v5526
    %v7682 = vpack.c.b16 %v5529, %v5528
    %v7683 = vpack.c.b16 %v5531, %v5530
    %v7684 = vpack.c.b16 %v5533, %v5532
    %v7685 = vpack.c.b16 %v5535, %v5534
    %v7686 = vpack.c.b16 %v5537, %v5536
    %v7687 = vpack.c.b16 %v5539, %v5538
    %v7688 = vpack.c.b16 %v5541, %v5540
    %v7689 = vpack.c.b16 %v5543, %v5542
    %v7690 = vpack.c.b16 %v5545, %v5544
    %v7691 = vpack.c.b16 %v5547, %v5546
    %v7692 = vpack.c.b16 %v5549, %v5548
    %v7693 = vpack.c.b16 %v5551, %v5550
    %v7694 = vpack.c.b16 %v5553, %v5552
    %v7695 = vpack.c.b16 %v5555, %v5554
    %v7696 = vpack.c.b16 %v5557, %v5556
    %v7697 = vpack.c.b16 %v5559, %v5558
    %v7698 = vpack.c.b16 %v5561, %v5560
    %v7699 = vpack.c.b16 %v5563, %v5562
    %v7700 = vpack.c.b16 %v5565, %v5564
    %v7701 = vpack.c.b16 %v5567, %v5566
    %v7702 = vpack.c.b16 %v5569, %v5568
    %v7703 = vpack.c.b16 %v5571, %v5570
    %v7704 = vpack.c.b16 %v5573, %v5572
    %v7705 = vpack.c.b16 %v5575, %v5574
    %v7706 = vpack.c.b16 %v5577, %v5576
    %v7707 = vpack.c.b16 %v5579, %v5578
    %v7708 = vpack.c.b16 %v5581, %v5580
    %v7709 = vpack.c.b16 %v5583, %v5582
    %v7710 = vpack.c.b16 %v5585, %v5584
    %v7711 = vpack.c.b16 %v5587, %v5586
    %v7712 = vpack.c.b16 %v5589, %v5588
    %v7713 = vpack.c.b16 %v5591, %v5590
    %v7714 = vpack.c.b16 %v5593, %v5592
    %v7715 = vpack.c.b16 %v5595, %v5594
    %v7716 = vpack.c.b16 %v5597, %v5596
    %v7717 = vpack.c.b16 %v5599, %v5598
    %v7718 = vpack.c.b16 %v5601, %v5600
    %v7719 = vpack.c.b16 %v5603, %v5602
    %v7720 = vpack.c.b16 %v5605, %v5604
    %v7721 = vpack.c.b16 %v5607, %v5606
    %v7722 = vpack.c.b16 %v5609, %v5608
    %v7723 = vpack.c.b16 %v5611, %v5610
    %v7724 = vpack.c.b16 %v5613, %v5612
    %v7725 = vpack.c.b16 %v5615, %v5614
    %v7726 = vpack.c.b16 %v5617, %v5616
    %v7727 = vpack.c.b16 %v5619, %v5618
    %v7728 = vpack.c.b16 %v5621, %v5620
    %v7729 = vpack.c.b16 %v5623, %v5622
    %v7730 = vpack.c.b16 %v5625, %v5624
    %v7731 = vpack.c.b16 %v5627, %v5626
    %v7732 = vpack.c.b16 %v5629, %v5628
    %v7733 = vpack.c.b16 %v5631, %v5630
    %v7734 = vpack.c.b16 %v5633, %v5632
    %v7735 = vpack.c.b16 %v5635, %v5634
    %v7736 = vpack.c.b16 %v5637, %v5636
    %v7737 = vpack.c.b16 %v5639, %v5638
    %v7738 = vpack.c.b16 %v5641, %v5640
    %v7739 = vpack.c.b16 %v5643, %v5642
    %v7740 = vpack.c.b16 %v5645, %v5644
    %v7741 = vpack.c.b16 %v5647, %v5646
    %v7742 = vpack.c.b16 %v5649, %v5648
    %v7743 = vpack.c.b16 %v5651, %v5650
    %v7744 = vpack.c.b16 %v5653, %v5652
    %v7745 = vpack.c.b16 %v5655, %v5654
    %v7746 = vpack.c.b16 %v5657, %v5656
    %v7747 = vpack.c.b16 %v5659, %v5658
    %v7748 = vpack.c.b16 %v5661, %v5660
    %v7749 = vpack.c.b16 %v5663, %v5662
    %v7750 = vpack.c.b16 %v5665, %v5664
    %v7751 = vpack.c.b16 %v5667, %v5666
    %v7752 = vpack.c.b16 %v5669, %v5668
    %v7753 = vpack.c.b16 %v5671, %v5670
    %v7754 = vpack.c.b16 %v5673, %v5672
    %v7755 = vpack.c.b16 %v5675, %v5674
    %v7756 = vpack.c.b16 %v5677, %v5676
    %v7757 = vpack.c.b16 %v5679, %v5678
    %v7758 = vpack.c.b16 %v5681, %v5680
    %v7759 = vpack.c.b16 %v5683, %v5682
    %v7760 = vpack.c.b16 %v5685, %v5684
    %v7761 = vpack.c.b16 %v5687, %v5686
    %v7762 = vpack.c.b16 %v5689, %v5688
    %v7763 = vpack.c.b16 %v5691, %v5690
    %v7764 = vpack.c.b16 %v5693, %v5692
    %v7765 = vpack.c.b16 %v5695, %v5694
    %v7766 = vpack.c.b16 %v5697, %v5696
    %v7767 = vpack.c.b16 %v5699, %v5698
    %v7768 = vpack.c.b16 %v5701, %v5700
    %v7769 = vpack.c.b16 %v5703, %v5702
    %v7770 = vpack.c.b16 %v5705, %v5704
    %v7771 = vpack.c.b16 %v5707, %v5706
    %v7772 = vpack.c.b16 %v5709, %v5708
    %v7773 = vpack.c.b16 %v5711, %v5710
    %v7774 = vpack.c.b16 %v5713, %v5712
    %v7775 = vpack.c.b16 %v5715, %v5714
    %v7776 = vpack.c.b16 %v5717, %v5716
    %v7777 = vpack.c.b16 %v5719, %v5718
    %v7778 = vpack.c.b16 %v5721, %v5720
    %v7779 = vpack.c.b16 %v5723, %v5722
    %v7780 = vpack.c.b16 %v5725, %v5724
    %v7781 = vpack.c.b16 %v5727, %v5726
    %v7782 = vpack.c.b16 %v5729, %v5728
    %v7783 = vpack.c.b16 %v5731, %v5730
    %v7784 = vpack.c.b16 %v5733, %v5732
    %v7785 = vpack.c.b16 %v5735, %v5734
    %v7786 = vpack.c.b16 %v5737, %v5736
    %v7787 = vpack.c.b16 %v5739, %v5738
    %v7788 = vpack.c.b16 %v5741, %v5740
    %v7789 = vpack.c.b16 %v5743, %v5742
    %v7790 = vpack.c.b16 %v5745, %v5744
    %v7791 = vpack.c.b16 %v5747, %v5746
    %v7792 = vpack.c.b16 %v5749, %v5748
    %v7793 = vpack.c.b16 %v5751, %v5750
    %v7794 = vpack.c.b16 %v5753, %v5752
    %v7795 = vpack.c.b16 %v5755, %v5754
    %v7796 = vpack.c.b16 %v5757, %v5756
    %v7797 = vpack.c.b16 %v5759, %v5758
    %v7798 = vpack.c.b16 %v5761, %v5760
    %v7799 = vpack.c.b16 %v5763, %v5762
    %v7800 = vpack.c.b16 %v5765, %v5764
    %v7801 = vpack.c.b16 %v5767, %v5766
    %v7802 = vpack.c.b16 %v5769, %v5768
    %v7803 = vpack.c.b16 %v5771, %v5770
    %v7804 = vpack.c.b16 %v5773, %v5772
    %v7805 = vpack.c.b16 %v5775, %v5774
    %v7806 = vpack.c.b16 %v5777, %v5776
    %v7807 = vpack.c.b16 %v5779, %v5778
    %v7808 = vpack.c.b16 %v5781, %v5780
    %v7809 = vpack.c.b16 %v5783, %v5782
    %v7810 = vpack.c.b16 %v5785, %v5784
    %v7811 = vpack.c.b16 %v5787, %v5786
    %v7812 = vpack.c.b16 %v5789, %v5788
    %v7813 = vpack.c.b16 %v5791, %v5790
    %v7814 = vpack.c.b16 %v5793, %v5792
    %v7815 = vpack.c.b16 %v5795, %v5794
    %v7816 = vpack.c.b16 %v5797, %v5796
    %v7817 = vpack.c.b16 %v5799, %v5798
    %v7818 = vpack.c.b16 %v5801, %v5800
    %v7819 = vpack.c.b16 %v5803, %v5802
    %v7820 = vpack.c.b16 %v5805, %v5804
    %v7821 = vpack.c.b16 %v5807, %v5806
    %v7822 = vpack.c.b16 %v5809, %v5808
    %v7823 = vpack.c.b16 %v5811, %v5810
    %v7824 = vpack.c.b16 %v5813, %v5812
    %v7825 = vpack.c.b16 %v5815, %v5814
    %v7826 = vpack.c.b16 %v5817, %v5816
    %v7827 = vpack.c.b16 %v5819, %v5818
    %v7828 = vpack.c.b16 %v5821, %v5820
    %v7829 = vpack.c.b16 %v5823, %v5822
    %v7830 = vpack.c.b16 %v5825, %v5824
    %v7831 = vpack.c.b16 %v5827, %v5826
    %v7832 = vpack.c.b16 %v5829, %v5828
    %v7833 = vpack.c.b16 %v5831, %v5830
    %v7834 = vpack.c.b16 %v5833, %v5832
    %v7835 = vpack.c.b16 %v5835, %v5834
    %v7836 = vpack.c.b16 %v5837, %v5836
    %v7837 = vpack.c.b16 %v5839, %v5838
    %v7838 = vpack.c.b16 %v5841, %v5840
    %v7839 = vpack.c.b16 %v5843, %v5842
    %v7840 = vpack.c.b16 %v5845, %v5844
    %v7841 = vpack.c.b16 %v5847, %v5846
    %v7842 = vpack.c.b16 %v5849, %v5848
    %v7843 = vpack.c.b16 %v5851, %v5850
    %v7844 = vpack.c.b16 %v5853, %v5852
    %v7845 = vpack.c.b16 %v5855, %v5854
    %v7846 = vpack.c.b16 %v5857, %v5856
    %v7847 = vpack.c.b16 %v5859, %v5858
    %v7848 = vpack.c.b16 %v5861, %v5860
    %v7849 = vpack.c.b16 %v5863, %v5862
    %v7850 = vpack.c.b16 %v5865, %v5864
    %v7851 = vpack.c.b16 %v5867, %v5866
    %v7852 = vpack.c.b16 %v5869, %v5868
    %v7853 = vpack.c.b16 %v5871, %v5870
    %v7854 = vpack.c.b16 %v5873, %v5872
    %v7855 = vpack.c.b16 %v5875, %v5874
    %v7856 = vpack.c.b16 %v5877, %v5876
    %v7857 = vpack.c.b16 %v5879, %v5878
    %v7858 = vpack.c.b16 %v5881, %v5880
    %v7859 = vpack.c.b16 %v5883, %v5882
    %v7860 = vpack.c.b16 %v5885, %v5884
    %v7861 = vpack.c.b16 %v5887, %v5886
    %v7862 = vpack.c.b16 %v5889, %v5888
    %v7863 = vpack.c.b16 %v5891, %v5890
    %v7864 = vpack.c.b16 %v5893, %v5892
    %v7865 = vpack.c.b16 %v5895, %v5894
    %v7866 = vpack.c.b16 %v5897, %v5896
    %v7867 = vpack.c.b16 %v5899, %v5898
    %v7868 = vpack.c.b16 %v5901, %v5900
    %v7869 = vpack.c.b16 %v5903, %v5902
    %v7870 = vpack.c.b16 %v5905, %v5904
    %v7871 = vpack.c.b16 %v5907, %v5906
    %v7872 = vpack.c.b16 %v5909, %v5908
    %v7873 = vpack.c.b16 %v5911, %v5910
    %v7874 = vpack.c.b16 %v5913, %v5912
    %v7875 = vpack.c.b16 %v5915, %v5914
    %v7876 = vpack.c.b16 %v5917, %v5916
    %v7877 = vpack.c.b16 %v5919, %v5918
    %v7878 = vpack.c.b16 %v5921, %v5920
    %v7879 = vpack.c.b16 %v5923, %v5922
    %v7880 = vpack.c.b16 %v5925, %v5924
    %v7881 = vpack.c.b16 %v5927, %v5926
    %v7882 = vpack.c.b16 %v5929, %v5928
    %v7883 = vpack.c.b16 %v5931, %v5930
    %v7884 = vpack.c.b16 %v5933, %v5932
    %v7885 = vpack.c.b16 %v5935, %v5934
    %v7886 = vpack.c.b16 %v5937, %v5936
    %v7887 = vpack.c.b16 %v5939, %v5938
    %v7888 = vpack.c.b16 %v5941, %v5940
    %v7889 = vpack.c.b16 %v5943, %v5942
    %v7890 = vpack.c.b16 %v5945, %v5944
    %v7891 = vpack.c.b16 %v5947, %v5946
    %v7892 = vpack.c.b16 %v5949, %v5948
    %v7893 = vpack.c.b16 %v5951, %v5950
    %v7894 = vpack.c.b16 %v5953, %v5952
    %v7895 = vpack.c.b16 %v5955, %v5954
    %v7896 = vpack.c.b16 %v5957, %v5956
    %v7897 = vpack.c.b16 %v5959, %v5958
    %v7898 = vpack.c.b16 %v5961, %v5960
    %v7899 = vpack.c.b16 %v5963, %v5962
    %v7900 = vpack.c.b16 %v5965, %v5964
    %v7901 = vpack.c.b16 %v5967, %v5966
    %v7902 = vpack.c.b16 %v5969, %v5968
    %v7903 = vpack.c.b16 %v5971, %v5970
    %v7904 = vpack.c.b16 %v5973, %v5972
    %v7905 = vpack.c.b16 %v5975, %v5974
    %v7906 = vpack.c.b16 %v5977, %v5976
    %v7907 = vpack.c.b16 %v5979, %v5978
    %v7908 = vpack.c.b16 %v5981, %v5980
    %v7909 = vpack.c.b16 %v5983, %v5982
    %v7910 = vpack.c.b16 %v5985, %v5984
    %v7911 = vpack.c.b16 %v5987, %v5986
    %v7912 = vpack.c.b16 %v5989, %v5988
    %v7913 = vpack.c.b16 %v5991, %v5990
    %v7914 = vpack.c.b16 %v5993, %v5992
    %v7915 = vpack.c.b16 %v5995, %v5994
    %v7916 = vpack.c.b16 %v5997, %v5996
    %v7917 = vpack.c.b16 %v5999, %v5998
    %v7918 = vpack.c.b16 %v6001, %v6000
    %v7919 = vpack.c.b16 %v6003, %v6002
    %v7920 = vpack.c.b16 %v6005, %v6004
    %v7921 = vpack.c.b16 %v6007, %v6006
    %v7922 = vpack.c.b16 %v6009, %v6008
    %v7923 = vpack.c.b16 %v6011, %v6010
    %v7924 = vpack.c.b16 %v6013, %v6012
    %v7925 = vpack.c.b16 %v6015, %v6014
    %v7926 = vpack.c.b16 %v6017, %v6016
    %v7927 = vpack.c.b16 %v6019, %v6018
    %v7928 = vpack.c.b16 %v6021, %v6020
    %v7929 = vpack.c.b16 %v6023, %v6022
    %v7930 = vpack.c.b16 %v6025, %v6024
    %v7931 = vpack.c.b16 %v6027, %v6026
    %v7932 = vpack.c.b16 %v6029, %v6028
    %v7933 = vpack.c.b16 %v6031, %v6030
    %v7934 = vpack.c.b16 %v6033, %v6032
    %v7935 = vpack.c.b16 %v6035, %v6034
    %v7936 = vpack.c.b16 %v6037, %v6036
    %v7937 = vpack.c.b16 %v6039, %v6038
    %v7938 = vpack.c.b16 %v6041, %v6040
    %v7939 = vpack.c.b16 %v6043, %v6042
    %v7940 = vpack.c.b16 %v6045, %v6044
    %v7941 = vpack.c.b16 %v6047, %v6046
    %v7942 = vpack.c.b16 %v6049, %v6048
    %v7943 = vpack.c.b16 %v6051, %v6050
    %v7944 = vpack.c.b16 %v6053, %v6052
    %v7945 = vpack.c.b16 %v6055, %v6054
    %v7946 = vpack.c.b16 %v6057, %v6056
    %v7947 = vpack.c.b16 %v6059, %v6058
    %v7948 = vpack.c.b16 %v6061, %v6060
    %v7949 = vpack.c.b16 %v6063, %v6062
    %v7950 = vpack.c.b16 %v6065, %v6064
    %v7951 = vpack.c.b16 %v6067, %v6066
    %v7952 = vpack.c.b16 %v6069, %v6068
    %v7953 = vpack.c.b16 %v6071, %v6070
    %v7954 = vpack.c.b16 %v6073, %v6072
    %v7955 = vpack.c.b16 %v6075, %v6074
    %v7956 = vpack.c.b16 %v6077, %v6076
    %v7957 = vpack.c.b16 %v6079, %v6078
    %v7958 = vpack.c.b16 %v6081, %v6080
    %v7959 = vpack.c.b16 %v6083, %v6082
    %v7960 = vpack.c.b16 %v6085, %v6084
    %v7961 = vpack.c.b16 %v6087, %v6086
    %v7962 = vpack.c.b16 %v6089, %v6088
    %v7963 = vpack.c.b16 %v6091, %v6090
    %v7964 = vpack.c.b16 %v6093, %v6092
    %v7965 = vpack.c.b16 %v6095, %v6094
    %v7966 = vpack.c.b16 %v6097, %v6096
    %v7967 = vpack.c.b16 %v6099, %v6098
    %v7968 = vpack.c.b16 %v6101, %v6100
    %v7969 = vpack.c.b16 %v6103, %v6102
    %v7970 = vpack.c.b16 %v6105, %v6104
    %v7971 = vpack.c.b16 %v6107, %v6106
    %v7972 = vpack.c.b16 %v6109, %v6108
    %v7973 = vpack.c.b16 %v6111, %v6110
    %v7974 = vpack.c.b16 %v6113, %v6112
    %v7975 = vpack.c.b16 %v6115, %v6114
    %v7976 = vpack.c.b16 %v6117, %v6116
    %v7977 = vpack.c.b16 %v6119, %v6118
    %v7978 = vpack.c.b16 %v6121, %v6120
    %v7979 = vpack.c.b16 %v6123, %v6122
    %v7980 = vpack.c.b16 %v6125, %v6124
    %v7981 = vpack.c.b16 %v6127, %v6126
    %v7982 = vpack.c.b16 %v6129, %v6128
    %v7983 = vpack.c.b16 %v6131, %v6130
    %v7984 = vpack.c.b16 %v6133, %v6132
    %v7985 = vpack.c.b16 %v6135, %v6134
    %v7986 = vpack.c.b16 %v6137, %v6136
    %v7987 = vpack.c.b16 %v6139, %v6138
    %v7988 = vpack.c.b16 %v6141, %v6140
    %v7989 = vpack.c.b16 %v6143, %v6142
    %v7990 = vpack.c.b16 %v6145, %v6144
    %v7991 = vpack.c.b16 %v6147, %v6146
    %v7992 = vpack.c.b16 %v6149, %v6148
    %v7993 = vpack.c.b16 %v6151, %v6150
    %v7994 = vpack.c.b16 %v6153, %v6152
    %v7995 = vpack.c.b16 %v6155, %v6154
    %v7996 = vpack.c.b16 %v6157, %v6156
    %v7997 = vpack.c.b16 %v6159, %v6158
    %v7998 = vpack.c.b16 %v6161, %v6160
    %v7999 = vpack.c.b16 %v6163, %v6162
    %v8000 = vpack.c.b16 %v6165, %v6164
    %v8001 = vpack.c.b16 %v6167, %v6166
    %v8002 = vpack.c.b16 %v6169, %v6168
    %v8003 = vpack.c.b16 %v6171, %v6170
    %v8004 = vpack.c.b16 %v6173, %v6172
    %v8005 = vpack.c.b16 %v6175, %v6174
    %v8006 = vpack.c.b16 %v6177, %v6176
    %v8007 = vpack.c.b16 %v6179, %v6178
    %v8008 = vpack.c.b16 %v6181, %v6180
    %v8009 = vpack.c.b16 %v6183, %v6182
    %v8010 = vpack.c.b16 %v6185, %v6184
    %v8011 = vpack.c.b16 %v6187, %v6186
    %v8012 = vpack.c.b16 %v6189, %v6188
    %v8013 = vpack.c.b16 %v6191, %v6190
    %v8014 = vpack.c.b16 %v6193, %v6192
    %v8015 = vpack.c.b16 %v6195, %v6194
    %v8016 = vpack.c.b16 %v6197, %v6196
    %v8017 = vpack.c.b16 %v6199, %v6198
    %v8018 = vpack.c.b16 %v6201, %v6200
    %v8019 = vpack.c.b16 %v6203, %v6202
    %v8020 = vpack.c.b16 %v6205, %v6204
    %v8021 = vpack.c.b16 %v6207, %v6206
    %v8022 = vpack.c.b16 %v6209, %v6208
    %v8023 = vpack.c.b16 %v6211, %v6210
    %v8024 = vpack.c.b16 %v6213, %v6212
    %v8025 = vpack.c.b16 %v6215, %v6214
    %v8026 = vpack.c.b16 %v6217, %v6216
    %v8027 = vpack.c.b16 %v6219, %v6218
    %v8028 = vpack.c.b16 %v6221, %v6220
    %v8029 = vpack.c.b16 %v6223, %v6222
    %v8030 = vpack.c.b16 %v6225, %v6224
    %v8031 = vpack.c.b16 %v6227, %v6226
    %v8032 = vpack.c.b16 %v6229, %v6228
    %v8033 = vpack.c.b16 %v6231, %v6230
    %v8034 = vpack.c.b16 %v6233, %v6232
    %v8035 = vpack.c.b16 %v6235, %v6234
    %v8036 = vpack.c.b16 %v6237, %v6236
    %v8037 = vpack.c.b16 %v6239, %v6238
    %v8038 = vpack.c.b16 %v6241, %v6240
    %v8039 = vpack.c.b16 %v6243, %v6242
    %v8040 = vpack.c.b16 %v6245, %v6244
    %v8041 = vpack.c.b16 %v6247, %v6246
    %v8042 = vpack.c.b16 %v6249, %v6248
    %v8043 = vpack.c.b16 %v6251, %v6250
    %v8044 = vpack.c.b16 %v6253, %v6252
    %v8045 = vpack.c.b16 %v6255, %v6254
    %v8046 = vpack.c.b16 %v6257, %v6256
    %v8047 = vpack.c.b16 %v6259, %v6258
    %v8048 = vpack.c.b16 %v6261, %v6260
    %v8049 = vpack.c.b16 %v6263, %v6262
    %v8050 = vpack.c.b16 %v6265, %v6264
    %v8051 = vpack.c.b16 %v6267, %v6266
    %v8052 = vpack.c.b16 %v6269, %v6268
    %v8053 = vpack.c.b16 %v6271, %v6270
    %v8054 = vpack.c.b16 %v6273, %v6272
    %v8055 = vpack.c.b16 %v6275, %v6274
    %v8056 = vpack.c.b16 %v6277, %v6276
    %v8057 = vpack.c.b16 %v6279, %v6278
    %v8058 = vpack.c.b16 %v6281, %v6280
    %v8059 = vpack.c.b16 %v6283, %v6282
    %v8060 = vpack.c.b16 %v6285, %v6284
    %v8061 = vpack.c.b16 %v6287, %v6286
    %v8062 = vpack.c.b16 %v6289, %v6288
    %v8063 = vpack.c.b16 %v6291, %v6290
    %v8064 = vpack.c.b16 %v6293, %v6292
    %v8065 = vpack.c.b16 %v6295, %v6294
    %v8066 = vpack.c.b16 %v6297, %v6296
    %v8067 = vpack.c.b16 %v6299, %v6298
    %v8068 = vpack.c.b16 %v6301, %v6300
    %v8069 = vpack.c.b16 %v6303, %v6302
    %v8070 = vpack.c.b16 %v6305, %v6304
    %v8071 = vpack.c.b16 %v6307, %v6306
    %v8072 = vpack.c.b16 %v6309, %v6308
    %v8073 = vpack.c.b16 %v6311, %v6310
    %v8074 = vpack.c.b16 %v6313, %v6312
    %v8075 = vpack.c.b16 %v6315, %v6314
    %v8076 = vpack.c.b16 %v6317, %v6316
    %v8077 = vpack.c.b16 %v6319, %v6318
    %v8078 = vpack.c.b16 %v6321, %v6320
    %v8079 = vpack.c.b16 %v6323, %v6322
    %v8080 = vpack.c.b16 %v6325, %v6324
    %v8081 = vpack.c.b16 %v6327, %v6326
    %v8082 = vpack.c.b16 %v6329, %v6328
    %v8083 = vpack.c.b16 %v6331, %v6330
    %v8084 = vpack.c.b16 %v6333, %v6332
    %v8085 = vpack.c.b16 %v6335, %v6334
    %v8086 = vpack.c.b16 %v6337, %v6336
    %v8087 = vpack.c.b16 %v6339, %v6338
    %v8088 = vpack.c.b16 %v6341, %v6340
    %v8089 = vpack.c.b16 %v6343, %v6342
    %v8090 = vpack.c.b16 %v6345, %v6344
    %v8091 = vpack.c.b16 %v6347, %v6346
    %v8092 = vpack.c.b16 %v6349, %v6348
    %v8093 = vpack.c.b16 %v6351, %v6350
    %v8094 = vpack.c.b16 %v6353, %v6352
    %v8095 = vpack.c.b16 %v6355, %v6354
    %v8096 = vpack.c.b16 %v6357, %v6356
    %v8097 = vpack.c.b16 %v6359, %v6358
    %v8098 = vpack.c.b16 %v6361, %v6360
    %v8099 = vpack.c.b16 %v6363, %v6362
    %v8100 = vpack.c.b16 %v6365, %v6364
    %v8101 = vpack.c.b16 %v6367, %v6366
    %v8102 = vpack.c.b16 %v6369, %v6368
    %v8103 = vpack.c.b16 %v6371, %v6370
    %v8104 = vpack.c.b16 %v6373, %v6372
    %v8105 = vpack.c.b16 %v6375, %v6374
    %v8106 = vpack.c.b16 %v6377, %v6376
    %v8107 = vpack.c.b16 %v6379, %v6378
    %v8108 = vpack.c.b16 %v6381, %v6380
    %v8109 = vpack.c.b16 %v6383, %v6382
    %v8110 = vpack.c.b16 %v6385, %v6384
    %v8111 = vpack.c.b16 %v6387, %v6386
    %v8112 = vpack.c.b16 %v6389, %v6388
    %v8113 = vpack.c.b16 %v6391, %v6390
    %v8114 = vpack.c.b16 %v6393, %v6392
    %v8115 = vpack.c.b16 %v6395, %v6394
    %v8116 = vpack.c.b16 %v6397, %v6396
    %v8117 = vpack.c.b16 %v6399, %v6398
    %v8118 = vpack.c.b16 %v6401, %v6400
    %v8119 = vpack.c.b16 %v6403, %v6402
    %v8120 = vpack.c.b16 %v6405, %v6404
    %v8121 = vpack.c.b16 %v6407, %v6406
    %v8122 = vpack.c.b16 %v6409, %v6408
    %v8123 = vpack.c.b16 %v6411, %v6410
    %v8124 = vpack.c.b16 %v6413, %v6412
    %v8125 = vpack.c.b16 %v6415, %v6414
    %v8126 = vpack.c.b16 %v6417, %v6416
    %v8127 = vpack.c.b16 %v6419, %v6418
    %v8128 = vpack.c.b16 %v6421, %v6420
    %v8129 = vpack.c.b16 %v6423, %v6422
    %v8130 = vpack.c.b16 %v6425, %v6424
    %v8131 = vpack.c.b16 %v6427, %v6426
    %v8132 = vpack.c.b16 %v6429, %v6428
    %v8133 = vpack.c.b16 %v6431, %v6430
    %v8134 = vpack.c.b16 %v6433, %v6432
    %v8135 = vpack.c.b16 %v6435, %v6434
    %v8136 = vpack.c.b16 %v6437, %v6436
    %v8137 = vpack.c.b16 %v6439, %v6438
    %v8138 = vpack.c.b16 %v6441, %v6440
    %v8139 = vpack.c.b16 %v6443, %v6442
    %v8140 = vpack.c.b16 %v6445, %v6444
    %v8141 = vpack.c.b16 %v6447, %v6446
    %v8142 = vpack.c.b16 %v6449, %v6448
    %v8143 = vpack.c.b16 %v6451, %v6450
    %v8144 = vpack.c.b16 %v6453, %v6452
    %v8145 = vpack.c.b16 %v6455, %v6454
    %v8146 = vpack.c.b16 %v6457, %v6456
    %v8147 = vpack.c.b16 %v6459, %v6458
    %v8148 = vpack.c.b16 %v6461, %v6460
    %v8149 = vpack.c.b16 %v6463, %v6462
    %v8150 = vpack.c.b16 %v6465, %v6464
    %v8151 = vpack.c.b16 %v6467, %v6466
    %v8152 = vpack.c.b16 %v6469, %v6468
    %v8153 = vpack.c.b16 %v6471, %v6470
    %v8154 = vpack.c.b16 %v6473, %v6472
    %v8155 = vpack.c.b16 %v6475, %v6474
    %v8156 = vpack.c.b16 %v6477, %v6476
    %v8157 = vpack.c.b16 %v6479, %v6478
    %v8158 = vpack.c.b16 %v6481, %v6480
    %v8159 = vpack.c.b16 %v6483, %v6482
    %v8160 = vpack.c.b16 %v6485, %v6484
    %v8161 = vpack.c.b16 %v6487, %v6486
    %v8162 = vpack.c.b16 %v6489, %v6488
    %v8163 = vpack.c.b16 %v6491, %v6490
    %v8164 = vpack.c.b16 %v6493, %v6492
    %v8165 = vpack.c.b16 %v6495, %v6494
    %v8166 = vpack.c.b16 %v6497, %v6496
    %v8167 = vpack.c.b16 %v6499, %v6498
    %v8168 = vpack.c.b16 %v6501, %v6500
    %v8169 = vpack.c.b16 %v6503, %v6502
    %v8170 = vpack.c.b16 %v6505, %v6504
    %v8171 = vpack.c.b16 %v6507, %v6506
    %v8172 = vpack.c.b16 %v6509, %v6508
    %v8173 = vpack.c.b16 %v6511, %v6510
    %v8174 = vpack.c.b16 %v6513, %v6512
    %v8175 = vpack.c.b16 %v6515, %v6514
    %v8176 = vpack.c.b16 %v6517, %v6516
    %v8177 = vpack.c.b16 %v6519, %v6518
    %v8178 = vpack.c.b16 %v6521, %v6520
    %v8179 = vpack.c.b16 %v6523, %v6522
    %v8180 = vpack.c.b16 %v6525, %v6524
    %v8181 = vpack.c.b16 %v6527, %v6526
    %v8182 = vpack.c.b16 %v6529, %v6528
    %v8183 = vpack.c.b16 %v6531, %v6530
    %v8184 = vpack.c.b16 %v6533, %v6532
    %v8185 = vpack.c.b16 %v6535, %v6534
    %v8186 = vpack.c.b16 %v6537, %v6536
    %v8187 = vpack.c.b16 %v6539, %v6538
    %v8188 = vpack.c.b16 %v6541, %v6540
    %v8189 = vpack.c.b16 %v6543, %v6542
    %v8190 = vpack.c.b16 %v6545, %v6544
    %v8191 = vpack.c.b16 %v6547, %v6546
    %v8192 = vpack.c.b16 %v6549, %v6548
    %v8193 = vpack.c.b16 %v6551, %v6550
    %v8194 = vpack.c.b16 %v6553, %v6552
    %v8195 = vpack.c.b16 %v6555, %v6554
    %v8196 = vpack.c.b16 %v6557, %v6556
    %v8197 = vpack.c.b16 %v6559, %v6558
    %v8198 = vpack.c.b16 %v6561, %v6560
    %v8199 = vpack.c.b16 %v6563, %v6562
    %v8200 = vpack.c.b16 %v6565, %v6564
    %v8201 = vpack.c.b16 %v6567, %v6566
    %v8202 = vpack.c.b16 %v6569, %v6568
    %v8203 = vpack.c.b16 %v6571, %v6570
    %v8204 = vpack.c.b16 %v6573, %v6572
    %v8205 = vpack.c.b16 %v6575, %v6574
    %v8206 = vpack.c.b16 %v6577, %v6576
    %v8207 = vpack.c.b16 %v6579, %v6578
    %v8208 = vpack.c.b16 %v6581, %v6580
    %v8209 = vpack.c.b16 %v6583, %v6582
    %v8210 = vpack.c.b16 %v6585, %v6584
    %v8211 = vpack.c.b16 %v6587, %v6586
    %v8212 = vpack.c.b16 %v6589, %v6588
    %v8213 = vpack.c.b16 %v6591, %v6590
    %v8214 = vpack.c.b16 %v6593, %v6592
    %v8215 = vpack.c.b16 %v6595, %v6594
    %v8216 = vpack.c.b16 %v6597, %v6596
    %v8217 = vpack.c.b16 %v6599, %v6598
    %v8218 = vpack.c.b16 %v6601, %v6600
    %v8219 = vpack.c.b16 %v6603, %v6602
    %v8220 = vpack.c.b16 %v6605, %v6604
    %v8221 = vpack.c.b16 %v6607, %v6606
    %v8222 = vpack.c.b16 %v6609, %v6608
    %v8223 = vpack.c.b16 %v6611, %v6610
    %v8224 = vpack.c.b16 %v6613, %v6612
    %v8225 = vpack.c.b16 %v6615, %v6614
    %v8226 = vpack.c.b16 %v6617, %v6616
    %v8227 = vpack.c.b16 %v6619, %v6618
    %v8228 = vpack.c.b16 %v6621, %v6620
    %v8229 = vpack.c.b16 %v6623, %v6622
    %v8230 = vpack.c.b16 %v6625, %v6624
    %v8231 = vpack.c.b16 %v6627, %v6626
    %v8232 = vpack.c.b16 %v6629, %v6628
    %v8233 = vpack.c.b16 %v6631, %v6630
    %v8234 = vpack.c.b16 %v6633, %v6632
    %v8235 = vpack.c.b16 %v6635, %v6634
    %v8236 = vpack.c.b16 %v6637, %v6636
    %v8237 = vpack.c.b16 %v6639, %v6638
    %v8238 = vpack.c.b16 %v6641, %v6640
    %v8239 = vpack.c.b16 %v6643, %v6642
    %v8240 = vpack.c.b16 %v6645, %v6644
    %v8241 = vpack.c.b16 %v6647, %v6646
    %v8242 = vpack.c.b16 %v6649, %v6648
    %v8243 = vpack.c.b16 %v6651, %v6650
    %v8244 = vpack.c.b16 %v6653, %v6652
    %v8245 = vpack.c.b16 %v6655, %v6654
    %v8246 = vpack.c.b16 %v6657, %v6656
    %v8247 = vpack.c.b16 %v6659, %v6658
    %v8248 = vpack.c.b16 %v6661, %v6660
    %v8249 = vpack.c.b16 %v6663, %v6662
    %v8250 = vpack.c.b16 %v6665, %v6664
    %v8251 = vpack.c.b16 %v6667, %v6666
    %v8252 = vpack.c.b16 %v6669, %v6668
    %v8253 = vpack.c.b16 %v6671, %v6670
    %v8254 = vpack.c.b16 %v6673, %v6672
    %v8255 = vpack.c.b16 %v6675, %v6674
    %v8256 = vpack.c.b16 %v6677, %v6676
    %v8257 = vpack.c.b16 %v6679, %v6678
    %v8258 = vpack.c.b16 %v6681, %v6680
    %v8259 = vpack.c.b16 %v6683, %v6682
    %v8260 = vpack.c.b16 %v6685, %v6684
    %v8261 = vpack.c.b16 %v6687, %v6686
    %v8262 = vpack.c.b16 %v6689, %v6688
    %v8263 = vpack.c.b16 %v6691, %v6690
    %v8264 = vpack.c.b16 %v6693, %v6692
    %v8265 = vpack.c.b16 %v6695, %v6694
    %v8266 = vpack.c.b16 %v6697, %v6696
    %v8267 = vpack.c.b16 %v6699, %v6698
    %v8268 = vpack.c.b16 %v6701, %v6700
    %v8269 = vpack.c.b16 %v6703, %v6702
    %v8270 = vpack.c.b16 %v6705, %v6704
    %v8271 = vpack.c.b16 %v6707, %v6706
    %v8272 = vpack.c.b16 %v6709, %v6708
    %v8273 = vpack.c.b16 %v6711, %v6710
    %v8274 = vpack.c.b16 %v6713, %v6712
    %v8275 = vpack.c.b16 %v6715, %v6714
    %v8276 = vpack.c.b16 %v6717, %v6716
    %v8277 = vpack.c.b16 %v6719, %v6718
    %v8278 = vpack.c.b16 %v6721, %v6720
    %v8279 = vpack.c.b16 %v6723, %v6722
    %v8280 = vpack.c.b16 %v6725, %v6724
    %v8281 = vpack.c.b16 %v6727, %v6726
    %v8282 = vpack.c.b16 %v6729, %v6728
    %v8283 = vpack.c.b16 %v6731, %v6730
    %v8284 = vpack.c.b16 %v6733, %v6732
    %v8285 = vpack.c.b16 %v6735, %v6734
    %v8286 = vpack.c.b16 %v6737, %v6736
    %v8287 = vpack.c.b16 %v6739, %v6738
    %v8288 = vpack.c.b16 %v6741, %v6740
    %v8289 = vpack.c.b16 %v6743, %v6742
    %v8290 = vpack.c.b16 %v6745, %v6744
    %v8291 = vpack.c.b16 %v6747, %v6746
    %v8292 = vpack.c.b16 %v6749, %v6748
    %v8293 = vpack.c.b16 %v6751, %v6750
    %v8294 = vpack.c.b16 %v6753, %v6752
    %v8295 = vpack.c.b16 %v6755, %v6754
    %v8296 = vpack.c.b16 %v6757, %v6756
    %v8297 = vpack.c.b16 %v6759, %v6758
    %v8298 = vpack.c.b16 %v6761, %v6760
    %v8299 = vpack.c.b16 %v6763, %v6762
    %v8300 = vpack.c.b16 %v6765, %v6764
    %v8301 = vpack.c.b16 %v6767, %v6766
    %v8302 = vpack.c.b16 %v6769, %v6768
    %v8303 = vpack.c.b16 %v6771, %v6770
    %v8304 = vpack.c.b16 %v6773, %v6772
    %v8305 = vpack.c.b16 %v6775, %v6774
    %v8306 = vpack.c.b16 %v6777, %v6776
    %v8307 = vpack.c.b16 %v6779, %v6778
    %v8308 = vpack.c.b16 %v6781, %v6780
    %v8309 = vpack.c.b16 %v6783, %v6782
    %v8310 = vpack.c.b16 %v6785, %v6784
    %v8311 = vpack.c.b16 %v6787, %v6786
    %v8312 = vpack.c.b16 %v6789, %v6788
    %v8313 = vpack.c.b16 %v6791, %v6790
    %v8314 = vpack.c.b16 %v6793, %v6792
    %v8315 = vpack.c.b16 %v6795, %v6794
    %v8316 = vpack.c.b16 %v6797, %v6796
    %v8317 = vpack.c.b16 %v6799, %v6798
    %v8318 = vpack.c.b16 %v6801, %v6800
    %v8319 = vpack.c.b16 %v6803, %v6802
    %v8320 = vpack.c.b16 %v6805, %v6804
    %v8321 = vpack.c.b16 %v6807, %v6806
    %v8322 = vpack.c.b16 %v6809, %v6808
    %v8323 = vpack.c.b16 %v6811, %v6810
    %v8324 = vpack.c.b16 %v6813, %v6812
    %v8325 = vpack.c.b16 %v6815, %v6814
    %v8326 = vpack.c.b16 %v6817, %v6816
    %v8327 = vpack.c.b16 %v6819, %v6818
    %v8328 = vpack.c.b16 %v6821, %v6820
    %v8329 = vpack.c.b16 %v6823, %v6822
    %v8330 = vpack.c.b16 %v6825, %v6824
    %v8331 = vpack.c.b16 %v6827, %v6826
    %v8332 = vpack.c.b16 %v6829, %v6828
    %v8333 = vpack.c.b16 %v6831, %v6830
    %v8334 = vpack.c.b16 %v6833, %v6832
    %v8335 = vpack.c.b16 %v6835, %v6834
    %v8336 = vpack.c.b16 %v6837, %v6836
    %v8337 = vpack.c.b16 %v6839, %v6838
    %v8338 = vpack.c.b16 %v6841, %v6840
    %v8339 = vpack.c.b16 %v6843, %v6842
    %v8340 = vpack.c.b16 %v6845, %v6844
    %v8341 = vpack.c.b16 %v6847, %v6846
    %v8342 = vpack.c.b16 %v6849, %v6848
    %v8343 = vpack.c.b16 %v6851, %v6850
    %v8344 = vpack.c.b16 %v6853, %v6852
    %v8345 = vpack.c.b16 %v6855, %v6854
    %v8346 = vpack.c.b16 %v6857, %v6856
    %v8347 = vpack.c.b16 %v6859, %v6858
    %v8348 = vpack.c.b16 %v6861, %v6860
    %v8349 = vpack.c.b16 %v6863, %v6862
    %v8350 = vpack.c.b16 %v6865, %v6864
    %v8351 = vpack.c.b16 %v6867, %v6866
    %v8352 = vpack.c.b16 %v6869, %v6868
    %v8353 = vpack.c.b16 %v6871, %v6870
    %v8354 = vpack.c.b16 %v6873, %v6872
    %v8355 = vpack.c.b16 %v6875, %v6874
    %v8356 = vpack.c.b16 %v6877, %v6876
    %v8357 = vpack.c.b16 %v6879, %v6878
    %v8358 = vpack.c.b16 %v6881, %v6880
    %v8359 = vpack.c.b16 %v6883, %v6882
    %v8360 = vpack.c.b16 %v6885, %v6884
    %v8361 = vpack.c.b16 %v6887, %v6886
    %v8362 = vpack.c.b16 %v6889, %v6888
    %v8363 = vpack.c.b16 %v6891, %v6890
    %v8364 = vpack.c.b16 %v6893, %v6892
    %v8365 = vpack.c.b16 %v6895, %v6894
    %v8366 = vpack.c.b16 %v6897, %v6896
    %v8367 = vpack.c.b16 %v6899, %v6898
    %v8368 = vpack.c.b16 %v6901, %v6900
    %v8369 = vpack.c.b16 %v6903, %v6902
    %v8370 = vpack.c.b16 %v6905, %v6904
    %v8371 = vpack.c.b16 %v6907, %v6906
    %v8372 = vpack.c.b16 %v6909, %v6908
    %v8373 = vpack.c.b16 %v6911, %v6910
    %v8374 = vpack.c.b16 %v6913, %v6912
    %v8375 = vpack.c.b16 %v6915, %v6914
    %v8376 = vpack.c.b16 %v6917, %v6916
    %v8377 = vpack.c.b16 %v6919, %v6918
    %v8378 = vpack.c.b16 %v6921, %v6920
    %v8379 = vpack.c.b16 %v6923, %v6922
    %v8380 = vpack.c.b16 %v6925, %v6924
    %v8381 = vpack.c.b16 %v6927, %v6926
    %v8382 = vpack.c.b16 %v6929, %v6928
    %v8383 = vpack.c.b16 %v6931, %v6930
    %v8384 = vpack.c.b16 %v6933, %v6932
    %v8385 = vpack.c.b16 %v6935, %v6934
    %v8386 = vpack.c.b16 %v6937, %v6936
    %v8387 = vpack.c.b16 %v6939, %v6938
    %v8388 = vpack.c.b16 %v6941, %v6940
    %v8389 = vpack.c.b16 %v6943, %v6942
    %v8390 = vpack.c.b16 %v6945, %v6944
    %v8391 = vpack.c.b16 %v6947, %v6946
    %v8392 = vpack.c.b16 %v6949, %v6948
    %v8393 = vpack.c.b16 %v6951, %v6950
    %v8394 = vpack.c.b16 %v6953, %v6952
    %v8395 = vpack.c.b16 %v6955, %v6954
    %v8396 = vpack.c.b16 %v6957, %v6956
    %v8397 = vpack.c.b16 %v6959, %v6958
    %v8398 = vpack.c.b16 %v6961, %v6960
    %v8399 = vpack.c.b16 %v6963, %v6962
    %v8400 = vpack.c.b16 %v6965, %v6964
    %v8401 = vpack.c.b16 %v6967, %v6966
    %v8402 = vpack.c.b16 %v6969, %v6968
    %v8403 = vpack.c.b16 %v6971, %v6970
    %v8404 = vpack.c.b16 %v6973, %v6972
    %v8405 = vpack.c.b16 %v6975, %v6974
    %v8406 = vpack.c.b16 %v6977, %v6976
    %v8407 = vpack.c.b16 %v6979, %v6978
    %v8408 = vpack.c.b16 %v6981, %v6980
    %v8409 = vpack.c.b16 %v6983, %v6982
    %v8410 = vpack.c.b16 %v6985, %v6984
    %v8411 = vpack.c.b16 %v6987, %v6986
    %v8412 = vpack.c.b16 %v6989, %v6988
    %v8413 = vpack.c.b16 %v6991, %v6990
    %v8414 = vpack.c.b16 %v6993, %v6992
    %v8415 = vpack.c.b16 %v6995, %v6994
    %v8416 = vpack.c.b16 %v6997, %v6996
    %v8417 = vpack.c.b16 %v6999, %v6998
    %v8418 = vpack.c.b16 %v7001, %v7000
    %v8419 = vpack.c.b16 %v7003, %v7002
    %v8420 = vpack.c.b16 %v7005, %v7004
    %v8421 = vpack.c.b16 %v7007, %v7006
    %v8422 = vpack.c.b16 %v7009, %v7008
    %v8423 = vpack.c.b16 %v7011, %v7010
    %v8424 = vpack.c.b16 %v7013, %v7012
    %v8425 = vpack.c.b16 %v7015, %v7014
    %v8426 = vpack.c.b16 %v7017, %v7016
    %v8427 = vpack.c.b16 %v7019, %v7018
    %v8428 = vpack.c.b16 %v7021, %v7020
    %v8429 = vpack.c.b16 %v7023, %v7022
    %v8430 = vpack.c.b16 %v7025, %v7024
    %v8431 = vpack.c.b16 %v7027, %v7026
    %v8432 = vpack.c.b16 %v7029, %v7028
    %v8433 = vpack.c.b16 %v7031, %v7030
    %v8434 = vpack.c.b16 %v7033, %v7032
    %v8435 = vpack.c.b16 %v7035, %v7034
    %v8436 = vpack.c.b16 %v7037, %v7036
    %v8437 = vpack.c.b16 %v7039, %v7038
    %v8438 = vpack.c.b16 %v7041, %v7040
    %v8439 = vpack.c.b16 %v7043, %v7042
    %v8440 = vpack.c.b16 %v7045, %v7044
    %v8441 = vpack.c.b16 %v7047, %v7046
    %v8442 = vpack.c.b16 %v7049, %v7048
    %v8443 = vpack.c.b16 %v7051, %v7050
    %v8444 = vpack.c.b16 %v7053, %v7052
    %v8445 = vpack.c.b16 %v7055, %v7054
    %v8446 = vpack.c.b16 %v7057, %v7056
    %v8447 = vpack.c.b16 %v7059, %v7058
    %v8448 = vpack.c.b16 %v7061, %v7060
    %v8449 = vpack.c.b16 %v7063, %v7062
    %v8450 = vpack.c.b16 %v7065, %v7064
    %v8451 = vpack.c.b16 %v7067, %v7066
    %v8452 = vpack.c.b16 %v7069, %v7068
    %v8453 = vpack.c.b16 %v7071, %v7070
    %v8454 = vpack.c.b16 %v7073, %v7072
    %v8455 = vpack.c.b16 %v7075, %v7074
    %v8456 = vpack.c.b16 %v7077, %v7076
    %v8457 = vpack.c.b16 %v7079, %v7078
    %v8458 = vpack.c.b16 %v7081, %v7080
    %v8459 = vpack.c.b16 %v7083, %v7082
    %v8460 = vpack.c.b16 %v7085, %v7084
    %v8461 = vpack.c.b16 %v7087, %v7086
    %v8462 = vpack.c.b16 %v7089, %v7088
    %v8463 = vpack.c.b16 %v7091, %v7090
    %v8464 = vpack.c.b16 %v7093, %v7092
    %v8465 = vpack.c.b16 %v7095, %v7094
    %v8466 = vpack.c.b16 %v7097, %v7096
    %v8467 = vpack.c.b16 %v7099, %v7098
    %v8468 = vpack.c.b16 %v7101, %v7100
    %v8469 = vpack.c.b16 %v7103, %v7102
    %v8470 = vpack.c.b16 %v7105, %v7104
    %v8471 = vpack.c.b16 %v7107, %v7106
    %v8472 = vpack.c.b16 %v7109, %v7108
    %v8473 = vpack.c.b16 %v7111, %v7110
    %v8474 = vpack.c.b16 %v7113, %v7112
    %v8475 = vpack.c.b16 %v7115, %v7114
    %v8476 = vpack.c.b16 %v7117, %v7116
    %v8477 = vpack.c.b16 %v7119, %v7118
    %v8478 = vpack.c.b16 %v7121, %v7120
    %v8479 = vpack.c.b16 %v7123, %v7122
    %v8480 = vpack.c.b16 %v7125, %v7124
    %v8481 = vpack.c.b16 %v7127, %v7126
    %v8482 = vpack.c.b16 %v7129, %v7128
    %v8483 = vpack.c.b16 %v7131, %v7130
    %v8484 = vpack.c.b16 %v7133, %v7132
    %v8485 = vpack.c.b16 %v7135, %v7134
    %v8486 = vpack.c.b16 %v7137, %v7136
    %v8487 = vpack.c.b16 %v7139, %v7138
    %v8488 = vpack.c.b16 %v7141, %v7140
    %v8489 = vpack.c.b16 %v7143, %v7142
    %v8490 = vpack.c.b16 %v7145, %v7144
    %v8491 = vpack.c.b16 %v7147, %v7146
    %v8492 = vpack.c.b16 %v7149, %v7148
    %v8493 = vpack.c.b16 %v7151, %v7150
    %v8494 = vpack.c.b16 %v7153, %v7152
    %v8495 = vpack.c.b16 %v7155, %v7154
    %v8496 = vpack.c.b16 %v7157, %v7156
    %v8497 = vpack.c.b16 %v7159, %v7158
    %v8498 = vpack.c.b16 %v7161, %v7160
    %v8499 = vpack.c.b16 %v7163, %v7162
    %v8500 = vpack.c.b16 %v7165, %v7164
    %v8501 = vpack.c.b16 %v7167, %v7166
    %v8502 = vpack.c.b16 %v7169, %v7168
    %v8503 = vpack.c.b16 %v7171, %v7170
    %v8504 = vpack.c.b16 %v7173, %v7172
    %v8505 = vpack.c.b16 %v7175, %v7174
    %v8506 = vpack.c.b16 %v7177, %v7176
    %v8507 = vpack.c.b16 %v7179, %v7178
    %v8508 = vpack.c.b16 %v7181, %v7180
    %v8509 = vpack.c.b16 %v7183, %v7182
    %v8510 = vpack.c.b16 %v7185, %v7184
    %v8511 = vpack.c.b16 %v7187, %v7186
    %v8512 = vpack.c.b16 %v7189, %v7188
    %v8513 = vpack.c.b16 %v7191, %v7190
    %v8514 = vpack.c.b16 %v7193, %v7192
    %v8515 = vpack.c.b16 %v7195, %v7194
    %v8516 = vpack.c.b16 %v7197, %v7196
    %v8517 = vpack.c.b16 %v7199, %v7198
    %v8518 = vpack.c.b16 %v7201, %v7200
    %v8519 = vpack.c.b16 %v7203, %v7202
    %v8520 = vpack.c.b16 %v7205, %v7204
    %v8521 = vpack.c.b16 %v7207, %v7206
    %v8522 = vpack.c.b16 %v7209, %v7208
    %v8523 = vpack.c.b16 %v7211, %v7210
    %v8524 = vpack.c.b16 %v7213, %v7212
    %v8525 = vpack.c.b16 %v7215, %v7214
    %v8526 = vpack.c.b16 %v7217, %v7216
    %v8527 = vpack.c.b16 %v7219, %v7218
    %v8528 = vpack.c.b16 %v7221, %v7220
    %v8529 = vpack.c.b16 %v7223, %v7222
    %v8530 = vpack.c.b16 %v7225, %v7224
    %v8531 = vpack.c.b16 %v7227, %v7226
    %v8532 = vpack.c.b16 %v7229, %v7228
    %v8533 = vpack.c.b16 %v7231, %v7230
    %v8534 = vpack.c.b16 %v7233, %v7232
    %v8535 = vpack.c.b16 %v7235, %v7234
    %v8536 = vpack.c.b16 %v7237, %v7236
    %v8537 = vpack.c.b16 %v7239, %v7238
    %v8538 = vpack.c.b16 %v7241, %v7240
    %v8539 = vpack.c.b16 %v7243, %v7242
    %v8540 = vpack.c.b16 %v7245, %v7244
    %v8541 = vpack.c.b16 %v7247, %v7246
    %v8542 = vpack.c.b16 %v7249, %v7248
    %v8543 = vpack.c.b16 %v7251, %v7250
    %v8544 = vpack.c.b16 %v7253, %v7252
    %v8545 = vpack.c.b16 %v7255, %v7254
    %v8546 = vpack.c.b16 %v7257, %v7256
    %v8547 = vpack.c.b16 %v7259, %v7258
    %v8548 = vpack.c.b16 %v7261, %v7260
    %v8549 = vpack.c.b16 %v7263, %v7262
    %v8550 = vpack.c.b16 %v7265, %v7264
    %v8551 = vpack.c.b16 %v7267, %v7266
    %v8552 = vpack.c.b16 %v7269, %v7268
    %v8553 = vpack.c.b16 %v7271, %v7270
    %v8554 = vpack.c.b16 %v7273, %v7272
    %v8555 = vpack.c.b16 %v7275, %v7274
    %v8556 = vpack.c.b16 %v7277, %v7276
    %v8557 = vpack.c.b16 %v7279, %v7278
    %v8558 = vpack.c.b16 %v7281, %v7280
    %v8559 = vpack.c.b16 %v7283, %v7282
    %v8560 = vpack.c.b16 %v7285, %v7284
    %v8561 = vpack.c.b16 %v7287, %v7286
    %v8562 = vpack.c.b16 %v7289, %v7288
    %v8563 = vpack.c.b16 %v7291, %v7290
    %v8564 = vpack.c.b16 %v7293, %v7292
    %v8565 = vpack.c.b16 %v7295, %v7294
    %v8566 = vpack.c.b16 %v7297, %v7296
    %v8567 = vpack.c.b16 %v7299, %v7298
    %v8568 = vpack.c.b16 %v7301, %v7300
    %v8569 = vpack.c.b16 %v7303, %v7302
    %v8570 = vpack.c.b16 %v7305, %v7304
    %v8571 = vpack.c.b16 %v7307, %v7306
    %v8572 = vpack.c.b16 %v7309, %v7308
    %v8573 = vpack.c.b16 %v7311, %v7310
    %v8574 = vpack.c.b16 %v7313, %v7312
    %v8575 = vpack.c.b16 %v7315, %v7314
    %v8576 = vpack.c.b16 %v7317, %v7316
    %v8577 = vpack.c.b16 %v7319, %v7318
    %v8578 = vpack.c.b16 %v7321, %v7320
    %v8579 = vpack.c.b16 %v7323, %v7322
    %v8580 = vpack.c.b16 %v7325, %v7324
    %v8581 = vpack.c.b16 %v7327, %v7326
    %v8582 = vpack.c.b16 %v7329, %v7328
    %v8583 = vpack.c.b16 %v7331, %v7330
    %v8584 = vpack.c.b16 %v7333, %v7332
    %v8585 = vpack.c.b16 %v7335, %v7334
    %v8586 = vpack.c.b16 %v7337, %v7336
    %v8587 = vpack.c.b16 %v7339, %v7338
    %v8588 = vpack.c.b16 %v7341, %v7340
    %v8589 = vpack.c.b16 %v7343, %v7342
    %v8590 = vpack.c.b16 %v7345, %v7344
    %v8591 = vpack.c.b16 %v7347, %v7346
    %v8592 = vpack.c.b16 %v7349, %v7348
    %v8593 = vpack.c.b16 %v7351, %v7350
    %v8594 = vpack.c.b16 %v7353, %v7352
    %v8595 = vpack.c.b16 %v7355, %v7354
    %v8596 = vpack.c.b16 %v7357, %v7356
    %v8597 = vpack.c.b16 %v7359, %v7358
    %v8598 = vpack.c.b16 %v7361, %v7360
    %v8599 = vpack.c.b16 %v7363, %v7362
    %v8600 = vpack.c.b16 %v7365, %v7364
    %v8601 = vpack.c.b16 %v7367, %v7366
    %v8602 = vpack.c.b16 %v7369, %v7368
    %v8603 = vpack.c.b16 %v7371, %v7370
    %v8604 = vpack.c.b16 %v7373, %v7372
    %v8605 = vpack.c.b16 %v7375, %v7374
    %v8606 = vpack.c.b16 %v7377, %v7376
    %v8607 = vpack.c.b16 %v7379, %v7378
    %v8608 = vpack.c.b16 %v7381, %v7380
    %v8609 = vpack.c.b16 %v7383, %v7382
    %v8610 = vpack.c.b16 %v7385, %v7384
    %v8611 = vpack.c.b16 %v7387, %v7386
    %v8612 = vpack.c.b16 %v7389, %v7388
    %v8613 = vpack.c.b16 %v7391, %v7390
    %v8614 = vpack.c.b16 %v7393, %v7392
    %v8615 = vpack.c.b16 %v7395, %v7394
    %v8616 = vpack.c.b16 %v7397, %v7396
    %v8617 = vpack.c.b16 %v7399, %v7398
    %v8618 = vpack.c.b16 %v7401, %v7400
    %v8619 = vpack.c.b16 %v7403, %v7402
    %v8620 = vpack.c.b16 %v7405, %v7404
    %v8621 = vpack.c.b16 %v7407, %v7406
    %v8622 = vpack.c.b16 %v7409, %v7408
    %v8623 = vpack.c.b16 %v7411, %v7410
    %v8624 = vpack.c.b16 %v7413, %v7412
    %v8625 = vpack.c.b16 %v7415, %v7414
    %v8626 = vpack.c.b16 %v7417, %v7416
    %v8627 = vpack.c.b16 %v7419, %v7418
    %v8628 = vpack.c.b16 %v7421, %v7420
    %v8629 = vpack.c.b16 %v7423, %v7422
    %v8630 = vpack.c.b16 %v7425, %v7424
    %v8631 = vpack.c.b16 %v7427, %v7426
    %v8632 = vpack.c.b16 %v7429, %v7428
    %v8633 = vpack.c.b16 %v7431, %v7430
    %v8634 = vpack.c.b16 %v7433, %v7432
    %v8635 = vpack.c.b16 %v7435, %v7434
    %v8636 = vpack.c.b16 %v7437, %v7436
    %v8637 = vpack.c.b16 %v7439, %v7438
    %v8638 = vpack.c.b16 %v7441, %v7440
    %v8639 = vpack.c.b16 %v7443, %v7442
    %v8640 = vpack.c.b16 %v7445, %v7444
    %v8641 = vpack.c.b16 %v7447, %v7446
    %v8642 = vpack.c.b16 %v7449, %v7448
    %v8643 = vpack.c.b16 %v7451, %v7450
    %v8644 = vpack.c.b16 %v7453, %v7452
    %v8645 = vpack.c.b16 %v7455, %v7454
    %v8646 = vpack.c.b16 %v7457, %v7456
    %v8647 = vpack.c.b16 %v7459, %v7458
    %v8648 = vpack.c.b16 %v7461, %v7460
    %v8649 = vpack.c.b16 %v7463, %v7462
    %v8650 = vpack.c.b16 %v7465, %v7464
    %v8651 = vpack.c.b16 %v7467, %v7466
    %v8652 = vpack.c.b16 %v7469, %v7468
    %vm9836 = vcmask 916480
    %v9837 = vsel %vm9836, %v2590, 0
    %9839 = vmatpush.bf16.msra.mxu0 %v7477
    %9840 = vmatpush.bf16.msra.mxu0 %v7476
    %9841 = vmatpush.bf16.msra.mxu0 %v7475
    %9842 = vmatpush.bf16.msra.mxu0 %v7474
    %9843 = vmatpush.bf16.msra.mxu0 %v7473
    %9844 = vmatpush.bf16.msra.mxu0 %v7472
    %9845 = vmatpush.bf16.msra.mxu0 %v7471
    %9846 = vmatpush.bf16.msra.mxu0 %v7470
    %9847 = vmatmul.bf16.gmra.mxu0 %v2407
    %v9848 = vpop.f32.mrf.mxu0
    %v9849 = vadd.f32 %v2403, %v9848
    %v9850 = vpop.f32.mrf.mxu0
    %9851 = vdwg.mxu0
    %9852 = vmatpush.bf16.msra.mxu0 %v7485
    %9853 = vmatpush.bf16.msra.mxu0 %v7484
    %9854 = vmatpush.bf16.msra.mxu0 %v7483
    %9855 = vmatpush.bf16.msra.mxu0 %v7482
    %9856 = vmatpush.bf16.msra.mxu0 %v7481
    %9857 = vmatpush.bf16.msra.mxu0 %v7480
    %9858 = vmatpush.bf16.msra.mxu0 %v7479
    %9859 = vmatpush.bf16.msra.mxu0 %v7478
    %9860 = vmatmul.bf16.gmra.mxu0 %v2408
    %v9861 = vpop.f32.mrf.mxu0
    %v9862 = vadd.f32 %v9849, %v9861
    %v9863 = vpop.f32.mrf.mxu0
    %9864 = vdwg.mxu0
    %9865 = vmatpush.bf16.msra.mxu0 %v7493
    %9866 = vmatpush.bf16.msra.mxu0 %v7492
    %9867 = vmatpush.bf16.msra.mxu0 %v7491
    %9868 = vmatpush.bf16.msra.mxu0 %v7490
    %9869 = vmatpush.bf16.msra.mxu0 %v7489
    %9870 = vmatpush.bf16.msra.mxu0 %v7488
    %9871 = vmatpush.bf16.msra.mxu0 %v7487
    %9872 = vmatpush.bf16.msra.mxu0 %v7486
    %9873 = vmatmul.bf16.gmra.mxu0 %v2409
    %v9874 = vpop.f32.mrf.mxu0
    %v9875 = vadd.f32 %v9862, %v9874
    %v9876 = vpop.f32.mrf.mxu0
    %9877 = vdwg.mxu0
    %9878 = vmatpush.bf16.msra.mxu0 %v7501
    %9879 = vmatpush.bf16.msra.mxu0 %v7500
    %9880 = vmatpush.bf16.msra.mxu0 %v7499
    %9881 = vmatpush.bf16.msra.mxu0 %v7498
    %9882 = vmatpush.bf16.msra.mxu0 %v7497
    %9883 = vmatpush.bf16.msra.mxu0 %v7496
    %9884 = vmatpush.bf16.msra.mxu0 %v7495
    %9885 = vmatpush.bf16.msra.mxu0 %v7494
    %9886 = vmatmul.bf16.gmra.mxu0 %v2410
    %v9887 = vpop.f32.mrf.mxu0
    %v9888 = vadd.f32 %v9875, %v9887
    %v9889 = vpop.f32.mrf.mxu0
    %9890 = vdwg.mxu0
    %9891 = vmatpush.bf16.msra.mxu0 %v7509
    %9892 = vmatpush.bf16.msra.mxu0 %v7508
    %9893 = vmatpush.bf16.msra.mxu0 %v7507
    %9894 = vmatpush.bf16.msra.mxu0 %v7506
    %9895 = vmatpush.bf16.msra.mxu0 %v7505
    %9896 = vmatpush.bf16.msra.mxu0 %v7504
    %9897 = vmatpush.bf16.msra.mxu0 %v7503
    %9898 = vmatpush.bf16.msra.mxu0 %v7502
    %9899 = vmatmul.bf16.gmra.mxu0 %v2411
    %v9900 = vpop.f32.mrf.mxu0
    %v9901 = vadd.f32 %v9888, %v9900
    %v9902 = vpop.f32.mrf.mxu0
    %9903 = vdwg.mxu0
    %9904 = vmatpush.bf16.msra.mxu0 %v7517
    %9905 = vmatpush.bf16.msra.mxu0 %v7516
    %9906 = vmatpush.bf16.msra.mxu0 %v7515
    %9907 = vmatpush.bf16.msra.mxu0 %v7514
    %9908 = vmatpush.bf16.msra.mxu0 %v7513
    %9909 = vmatpush.bf16.msra.mxu0 %v7512
    %9910 = vmatpush.bf16.msra.mxu0 %v7511
    %9911 = vmatpush.bf16.msra.mxu0 %v7510
    %9912 = vmatmul.bf16.gmra.mxu0 %v2412
    %v9913 = vpop.f32.mrf.mxu0
    %v9914 = vadd.f32 %v9901, %v9913
    %v9915 = vpop.f32.mrf.mxu0
    %9916 = vdwg.mxu0
    %9917 = vmatpush.bf16.msra.mxu0 %v7525
    %9918 = vmatpush.bf16.msra.mxu0 %v7524
    %9919 = vmatpush.bf16.msra.mxu0 %v7523
    %9920 = vmatpush.bf16.msra.mxu0 %v7522
    %9921 = vmatpush.bf16.msra.mxu0 %v7521
    %9922 = vmatpush.bf16.msra.mxu0 %v7520
    %9923 = vmatpush.bf16.msra.mxu0 %v7519
    %9924 = vmatpush.bf16.msra.mxu0 %v7518
    %9925 = vmatmul.bf16.gmra.mxu0 %v2413
    %v9926 = vpop.f32.mrf.mxu0
    %v9927 = vadd.f32 %v9914, %v9926
    %v9928 = vpop.f32.mrf.mxu0
    %9929 = vdwg.mxu0
    %9930 = vmatpush.bf16.msra.mxu0 %v7533
    %9931 = vmatpush.bf16.msra.mxu0 %v7532
    %9932 = vmatpush.bf16.msra.mxu0 %v7531
    %9933 = vmatpush.bf16.msra.mxu0 %v7530
    %9934 = vmatpush.bf16.msra.mxu0 %v7529
    %9935 = vmatpush.bf16.msra.mxu0 %v7528
    %9936 = vmatpush.bf16.msra.mxu0 %v7527
    %9937 = vmatpush.bf16.msra.mxu0 %v7526
    %9938 = vmatmul.bf16.gmra.mxu0 %v2414
    %v9939 = vpop.f32.mrf.mxu0
    %v9940 = vadd.f32 %v9927, %v9939
    %v9941 = vpop.f32.mrf.mxu0
    %9942 = vdwg.mxu0
    %9943 = vmatpush.bf16.msra.mxu0 %v7541
    %9944 = vmatpush.bf16.msra.mxu0 %v7540
    %9945 = vmatpush.bf16.msra.mxu0 %v7539
    %9946 = vmatpush.bf16.msra.mxu0 %v7538
    %9947 = vmatpush.bf16.msra.mxu0 %v7537
    %9948 = vmatpush.bf16.msra.mxu0 %v7536
    %9949 = vmatpush.bf16.msra.mxu0 %v7535
    %9950 = vmatpush.bf16.msra.mxu0 %v7534
    %9951 = vmatmul.bf16.gmra.mxu0 %v2417
    %v9952 = vpop.f32.mrf.mxu0
    %v9953 = vadd.f32 %v9940, %v9952
    %v9954 = vpop.f32.mrf.mxu0
    %9955 = vdwg.mxu0
    %9956 = vmatpush.bf16.msra.mxu0 %v7549
    %9957 = vmatpush.bf16.msra.mxu0 %v7548
    %9958 = vmatpush.bf16.msra.mxu0 %v7547
    %9959 = vmatpush.bf16.msra.mxu0 %v7546
    %9960 = vmatpush.bf16.msra.mxu0 %v7545
    %9961 = vmatpush.bf16.msra.mxu0 %v7544
    %9962 = vmatpush.bf16.msra.mxu0 %v7543
    %9963 = vmatpush.bf16.msra.mxu0 %v7542
    %9964 = vmatmul.bf16.gmra.mxu0 %v2418
    %v9965 = vpop.f32.mrf.mxu0
    %v9966 = vadd.f32 %v9953, %v9965
    %v9967 = vpop.f32.mrf.mxu0
    %9968 = vdwg.mxu0
    %9969 = vmatpush.bf16.msra.mxu0 %v7557
    %9970 = vmatpush.bf16.msra.mxu0 %v7556
    %9971 = vmatpush.bf16.msra.mxu0 %v7555
    %9972 = vmatpush.bf16.msra.mxu0 %v7554
    %9973 = vmatpush.bf16.msra.mxu0 %v7553
    %9974 = vmatpush.bf16.msra.mxu0 %v7552
    %9975 = vmatpush.bf16.msra.mxu0 %v7551
    %9976 = vmatpush.bf16.msra.mxu0 %v7550
    %9977 = vmatmul.bf16.gmra.mxu0 %v2419
    %v9978 = vpop.f32.mrf.mxu0
    %v9979 = vadd.f32 %v9966, %v9978
    %v9980 = vpop.f32.mrf.mxu0
    %9981 = vdwg.mxu0
    %9982 = vmatpush.bf16.msra.mxu0 %v7565
    %9983 = vmatpush.bf16.msra.mxu0 %v7564
    %9984 = vmatpush.bf16.msra.mxu0 %v7563
    %9985 = vmatpush.bf16.msra.mxu0 %v7562
    %9986 = vmatpush.bf16.msra.mxu0 %v7561
    %9987 = vmatpush.bf16.msra.mxu0 %v7560
    %9988 = vmatpush.bf16.msra.mxu0 %v7559
    %9989 = vmatpush.bf16.msra.mxu0 %v7558
    %9990 = vmatmul.bf16.gmra.mxu0 %v2420
    %v9991 = vpop.f32.mrf.mxu0
    %v9992 = vadd.f32 %v9979, %v9991
    %v9993 = vpop.f32.mrf.mxu0
    %9994 = vdwg.mxu0
    %9995 = vmatpush.bf16.msra.mxu0 %v7573
    %9996 = vmatpush.bf16.msra.mxu0 %v7572
    %9997 = vmatpush.bf16.msra.mxu0 %v7571
    %9998 = vmatpush.bf16.msra.mxu0 %v7570
    %9999 = vmatpush.bf16.msra.mxu0 %v7569
    %10000 = vmatpush.bf16.msra.mxu0 %v7568
    %10001 = vmatpush.bf16.msra.mxu0 %v7567
    %10002 = vmatpush.bf16.msra.mxu0 %v7566
    %10003 = vmatmul.bf16.gmra.mxu0 %v2421
    %v10004 = vpop.f32.mrf.mxu0
    %v10005 = vadd.f32 %v9992, %v10004
    %v10006 = vpop.f32.mrf.mxu0
    %10007 = vdwg.mxu0
    %10008 = vmatpush.bf16.msra.mxu0 %v7581
    %10009 = vmatpush.bf16.msra.mxu0 %v7580
    %10010 = vmatpush.bf16.msra.mxu0 %v7579
    %10011 = vmatpush.bf16.msra.mxu0 %v7578
    %10012 = vmatpush.bf16.msra.mxu0 %v7577
    %10013 = vmatpush.bf16.msra.mxu0 %v7576
    %10014 = vmatpush.bf16.msra.mxu0 %v7575
    %10015 = vmatpush.bf16.msra.mxu0 %v7574
    %10016 = vmatmul.bf16.gmra.mxu0 %v2422
    %v10017 = vpop.f32.mrf.mxu0
    %v10018 = vadd.f32 %v10005, %v10017
    %v10019 = vpop.f32.mrf.mxu0
    %10020 = vdwg.mxu0
    %10021 = vmatpush.bf16.msra.mxu0 %v7589
    %10022 = vmatpush.bf16.msra.mxu0 %v7588
    %10023 = vmatpush.bf16.msra.mxu0 %v7587
    %10024 = vmatpush.bf16.msra.mxu0 %v7586
    %10025 = vmatpush.bf16.msra.mxu0 %v7585
    %10026 = vmatpush.bf16.msra.mxu0 %v7584
    %10027 = vmatpush.bf16.msra.mxu0 %v7583
    %10028 = vmatpush.bf16.msra.mxu0 %v7582
    %10029 = vmatmul.bf16.gmra.mxu0 %v2423
    %v10030 = vpop.f32.mrf.mxu0
    %v10031 = vadd.f32 %v10018, %v10030
    %v10032 = vpop.f32.mrf.mxu0
    %10033 = vdwg.mxu0
    %10034 = vmatpush.bf16.msra.mxu0 %v7597
    %10035 = vmatpush.bf16.msra.mxu0 %v7596
    %10036 = vmatpush.bf16.msra.mxu0 %v7595
    %10037 = vmatpush.bf16.msra.mxu0 %v7594
    %10038 = vmatpush.bf16.msra.mxu0 %v7593
    %10039 = vmatpush.bf16.msra.mxu0 %v7592
    %10040 = vmatpush.bf16.msra.mxu0 %v7591
    %10041 = vmatpush.bf16.msra.mxu0 %v7590
    %10042 = vmatmul.bf16.gmra.mxu0 %v2424
    %v10043 = vpop.f32.mrf.mxu0
    %v10044 = vadd.f32 %v10031, %v10043
    %v10045 = vpop.f32.mrf.mxu0
    %10046 = vdwg.mxu0
    %10047 = vmatpush.bf16.msra.mxu0 %v7605
    %10048 = vmatpush.bf16.msra.mxu0 %v7604
    %10049 = vmatpush.bf16.msra.mxu0 %v7603
    %10050 = vmatpush.bf16.msra.mxu0 %v7602
    %10051 = vmatpush.bf16.msra.mxu0 %v7601
    %10052 = vmatpush.bf16.msra.mxu0 %v7600
    %10053 = vmatpush.bf16.msra.mxu0 %v7599
    %10054 = vmatpush.bf16.msra.mxu0 %v7598
    %10055 = vmatmul.bf16.gmra.mxu0 %v2427
    %v10056 = vpop.f32.mrf.mxu0
    %v10057 = vadd.f32 %v10044, %v10056
    %v10058 = vpop.f32.mrf.mxu0
    %10059 = vdwg.mxu0
    %10060 = vmatpush.bf16.msra.mxu0 %v7613
    %10061 = vmatpush.bf16.msra.mxu0 %v7612
    %10062 = vmatpush.bf16.msra.mxu0 %v7611
    %10063 = vmatpush.bf16.msra.mxu0 %v7610
    %10064 = vmatpush.bf16.msra.mxu0 %v7609
    %10065 = vmatpush.bf16.msra.mxu0 %v7608
    %10066 = vmatpush.bf16.msra.mxu0 %v7607
    %10067 = vmatpush.bf16.msra.mxu0 %v7606
    %10068 = vmatmul.bf16.gmra.mxu0 %v2428
    %v10069 = vpop.f32.mrf.mxu0
    %v10070 = vadd.f32 %v10057, %v10069
    %v10071 = vpop.f32.mrf.mxu0
    %10072 = vdwg.mxu0
    %10073 = vmatpush.bf16.msra.mxu0 %v7621
    %10074 = vmatpush.bf16.msra.mxu0 %v7620
    %10075 = vmatpush.bf16.msra.mxu0 %v7619
    %10076 = vmatpush.bf16.msra.mxu0 %v7618
    %10077 = vmatpush.bf16.msra.mxu0 %v7617
    %10078 = vmatpush.bf16.msra.mxu0 %v7616
    %10079 = vmatpush.bf16.msra.mxu0 %v7615
    %10080 = vmatpush.bf16.msra.mxu0 %v7614
    %10081 = vmatmul.bf16.gmra.mxu0 %v2429
    %v10082 = vpop.f32.mrf.mxu0
    %v10083 = vadd.f32 %v10070, %v10082
    %v10084 = vpop.f32.mrf.mxu0
    %10085 = vdwg.mxu0
    %10086 = vmatpush.bf16.msra.mxu0 %v7629
    %10087 = vmatpush.bf16.msra.mxu0 %v7628
    %10088 = vmatpush.bf16.msra.mxu0 %v7627
    %10089 = vmatpush.bf16.msra.mxu0 %v7626
    %10090 = vmatpush.bf16.msra.mxu0 %v7625
    %10091 = vmatpush.bf16.msra.mxu0 %v7624
    %10092 = vmatpush.bf16.msra.mxu0 %v7623
    %10093 = vmatpush.bf16.msra.mxu0 %v7622
    %10094 = vmatmul.bf16.gmra.mxu0 %v2430
    %v10095 = vpop.f32.mrf.mxu0
    %v10096 = vadd.f32 %v10083, %v10095
    %v10097 = vpop.f32.mrf.mxu0
    %10098 = vdwg.mxu0
    %10099 = vmatpush.bf16.msra.mxu0 %v7637
    %10100 = vmatpush.bf16.msra.mxu0 %v7636
    %10101 = vmatpush.bf16.msra.mxu0 %v7635
    %10102 = vmatpush.bf16.msra.mxu0 %v7634
    %10103 = vmatpush.bf16.msra.mxu0 %v7633
    %10104 = vmatpush.bf16.msra.mxu0 %v7632
    %10105 = vmatpush.bf16.msra.mxu0 %v7631
    %10106 = vmatpush.bf16.msra.mxu0 %v7630
    %10107 = vmatmul.bf16.gmra.mxu0 %v2431
    %v10108 = vpop.f32.mrf.mxu0
    %v10109 = vadd.f32 %v10096, %v10108
    %v10110 = vpop.f32.mrf.mxu0
    %10111 = vdwg.mxu0
    %10112 = vmatpush.bf16.msra.mxu0 %v7645
    %10113 = vmatpush.bf16.msra.mxu0 %v7644
    %10114 = vmatpush.bf16.msra.mxu0 %v7643
    %10115 = vmatpush.bf16.msra.mxu0 %v7642
    %10116 = vmatpush.bf16.msra.mxu0 %v7641
    %10117 = vmatpush.bf16.msra.mxu0 %v7640
    %10118 = vmatpush.bf16.msra.mxu0 %v7639
    %10119 = vmatpush.bf16.msra.mxu0 %v7638
    %10120 = vmatmul.bf16.gmra.mxu0 %v2432
    %v10121 = vpop.f32.mrf.mxu0
    %v10122 = vadd.f32 %v10109, %v10121
    %v10123 = vpop.f32.mrf.mxu0
    %10124 = vdwg.mxu0
    %10125 = vmatpush.bf16.msra.mxu0 %v7653
    %10126 = vmatpush.bf16.msra.mxu0 %v7652
    %10127 = vmatpush.bf16.msra.mxu0 %v7651
    %10128 = vmatpush.bf16.msra.mxu0 %v7650
    %10129 = vmatpush.bf16.msra.mxu0 %v7649
    %10130 = vmatpush.bf16.msra.mxu0 %v7648
    %10131 = vmatpush.bf16.msra.mxu0 %v7647
    %10132 = vmatpush.bf16.msra.mxu0 %v7646
    %10133 = vmatmul.bf16.gmra.mxu0 %v2433
    %v10134 = vpop.f32.mrf.mxu0
    %v10135 = vadd.f32 %v10122, %v10134
    %v10136 = vpop.f32.mrf.mxu0
    %10137 = vdwg.mxu0
    %10138 = vmatpush.bf16.msra.mxu0 %v7661
    %10139 = vmatpush.bf16.msra.mxu0 %v7660
    %10140 = vmatpush.bf16.msra.mxu0 %v7659
    %10141 = vmatpush.bf16.msra.mxu0 %v7658
    %10142 = vmatpush.bf16.msra.mxu0 %v7657
    %10143 = vmatpush.bf16.msra.mxu0 %v7656
    %10144 = vmatpush.bf16.msra.mxu0 %v7655
    %10145 = vmatpush.bf16.msra.mxu0 %v7654
    %10146 = vmatmul.bf16.gmra.mxu0 %v2434
    %v10147 = vpop.f32.mrf.mxu0
    %v10148 = vadd.f32 %v10135, %v10147
    %v10149 = vpop.f32.mrf.mxu0
    %10150 = vdwg.mxu0
    %10151 = vmatpush.bf16.msra.mxu0 %v7669
    %10152 = vmatpush.bf16.msra.mxu0 %v7668
    %10153 = vmatpush.bf16.msra.mxu0 %v7667
    %10154 = vmatpush.bf16.msra.mxu0 %v7666
    %10155 = vmatpush.bf16.msra.mxu0 %v7665
    %10156 = vmatpush.bf16.msra.mxu0 %v7664
    %10157 = vmatpush.bf16.msra.mxu0 %v7663
    %10158 = vmatpush.bf16.msra.mxu0 %v7662
    %10159 = vmatmul.bf16.gmra.mxu0 %v2437
    %v10160 = vpop.f32.mrf.mxu0
    %v10161 = vadd.f32 %v10148, %v10160
    %v10162 = vpop.f32.mrf.mxu0
    %10163 = vdwg.mxu0
    %10164 = vmatpush.bf16.msra.mxu0 %v7677
    %10165 = vmatpush.bf16.msra.mxu0 %v7676
    %10166 = vmatpush.bf16.msra.mxu0 %v7675
    %10167 = vmatpush.bf16.msra.mxu0 %v7674
    %10168 = vmatpush.bf16.msra.mxu0 %v7673
    %10169 = vmatpush.bf16.msra.mxu0 %v7672
    %10170 = vmatpush.bf16.msra.mxu0 %v7671
    %10171 = vmatpush.bf16.msra.mxu0 %v7670
    %10172 = vmatmul.bf16.gmra.mxu0 %v2438
    %v10173 = vpop.f32.mrf.mxu0
    %v10174 = vadd.f32 %v10161, %v10173
    %v10175 = vpop.f32.mrf.mxu0
    %10176 = vdwg.mxu0
    %10177 = vmatpush.bf16.msra.mxu0 %v7685
    %10178 = vmatpush.bf16.msra.mxu0 %v7684
    %10179 = vmatpush.bf16.msra.mxu0 %v7683
    %10180 = vmatpush.bf16.msra.mxu0 %v7682
    %10181 = vmatpush.bf16.msra.mxu0 %v7681
    %10182 = vmatpush.bf16.msra.mxu0 %v7680
    %10183 = vmatpush.bf16.msra.mxu0 %v7679
    %10184 = vmatpush.bf16.msra.mxu0 %v7678
    %10185 = vmatmul.bf16.gmra.mxu0 %v2439
    %v10186 = vpop.f32.mrf.mxu0
    %v10187 = vadd.f32 %v10174, %v10186
    %v10188 = vpop.f32.mrf.mxu0
    %10189 = vdwg.mxu0
    %10190 = vmatpush.bf16.msra.mxu0 %v7693
    %10191 = vmatpush.bf16.msra.mxu0 %v7692
    %10192 = vmatpush.bf16.msra.mxu0 %v7691
    %10193 = vmatpush.bf16.msra.mxu0 %v7690
    %10194 = vmatpush.bf16.msra.mxu0 %v7689
    %10195 = vmatpush.bf16.msra.mxu0 %v7688
    %10196 = vmatpush.bf16.msra.mxu0 %v7687
    %10197 = vmatpush.bf16.msra.mxu0 %v7686
    %10198 = vmatmul.bf16.gmra.mxu0 %v2440
    %v10199 = vpop.f32.mrf.mxu0
    %v10200 = vadd.f32 %v10187, %v10199
    %v10201 = vpop.f32.mrf.mxu0
    %10202 = vdwg.mxu0
    %10203 = vmatpush.bf16.msra.mxu0 %v7701
    %10204 = vmatpush.bf16.msra.mxu0 %v7700
    %10205 = vmatpush.bf16.msra.mxu0 %v7699
    %10206 = vmatpush.bf16.msra.mxu0 %v7698
    %10207 = vmatpush.bf16.msra.mxu0 %v7697
    %10208 = vmatpush.bf16.msra.mxu0 %v7696
    %10209 = vmatpush.bf16.msra.mxu0 %v7695
    %10210 = vmatpush.bf16.msra.mxu0 %v7694
    %10211 = vmatmul.bf16.gmra.mxu0 %v2441
    %v10212 = vpop.f32.mrf.mxu0
    %v10213 = vadd.f32 %v10200, %v10212
    %v10214 = vpop.f32.mrf.mxu0
    %10215 = vdwg.mxu0
    %10216 = vmatpush.bf16.msra.mxu0 %v7709
    %10217 = vmatpush.bf16.msra.mxu0 %v7708
    %10218 = vmatpush.bf16.msra.mxu0 %v7707
    %10219 = vmatpush.bf16.msra.mxu0 %v7706
    %10220 = vmatpush.bf16.msra.mxu0 %v7705
    %10221 = vmatpush.bf16.msra.mxu0 %v7704
    %10222 = vmatpush.bf16.msra.mxu0 %v7703
    %10223 = vmatpush.bf16.msra.mxu0 %v7702
    %10224 = vmatmul.bf16.gmra.mxu0 %v2442
    %v10225 = vpop.f32.mrf.mxu0
    %v10226 = vadd.f32 %v10213, %v10225
    %v10227 = vpop.f32.mrf.mxu0
    %10228 = vdwg.mxu0
    %10229 = vmatpush.bf16.msra.mxu0 %v7717
    %10230 = vmatpush.bf16.msra.mxu0 %v7716
    %10231 = vmatpush.bf16.msra.mxu0 %v7715
    %10232 = vmatpush.bf16.msra.mxu0 %v7714
    %10233 = vmatpush.bf16.msra.mxu0 %v7713
    %10234 = vmatpush.bf16.msra.mxu0 %v7712
    %10235 = vmatpush.bf16.msra.mxu0 %v7711
    %10236 = vmatpush.bf16.msra.mxu0 %v7710
    %10237 = vmatmul.bf16.gmra.mxu0 %v2443
    %v10238 = vpop.f32.mrf.mxu0
    %v10239 = vadd.f32 %v10226, %v10238
    %v10240 = vpop.f32.mrf.mxu0
    %10241 = vdwg.mxu0
    %10242 = vmatpush.bf16.msra.mxu0 %v7725
    %10243 = vmatpush.bf16.msra.mxu0 %v7724
    %10244 = vmatpush.bf16.msra.mxu0 %v7723
    %10245 = vmatpush.bf16.msra.mxu0 %v7722
    %10246 = vmatpush.bf16.msra.mxu0 %v7721
    %10247 = vmatpush.bf16.msra.mxu0 %v7720
    %10248 = vmatpush.bf16.msra.mxu0 %v7719
    %10249 = vmatpush.bf16.msra.mxu0 %v7718
    %10250 = vmatmul.bf16.gmra.mxu0 %v2444
    %v10251 = vpop.f32.mrf.mxu0
    %v10252 = vadd.f32 %v10239, %v10251
    %v10253 = vpop.f32.mrf.mxu0
    %10254 = vdwg.mxu0
    %10255 = vmatpush.bf16.msra.mxu0 %v7733
    %10256 = vmatpush.bf16.msra.mxu0 %v7732
    %10257 = vmatpush.bf16.msra.mxu0 %v7731
    %10258 = vmatpush.bf16.msra.mxu0 %v7730
    %10259 = vmatpush.bf16.msra.mxu0 %v7729
    %10260 = vmatpush.bf16.msra.mxu0 %v7728
    %10261 = vmatpush.bf16.msra.mxu0 %v7727
    %10262 = vmatpush.bf16.msra.mxu0 %v7726
    %10263 = vmatmul.bf16.gmra.mxu0 %v2447
    %v10264 = vpop.f32.mrf.mxu0
    %v10265 = vadd.f32 %v10252, %v10264
    %v10266 = vpop.f32.mrf.mxu0
    %10267 = vdwg.mxu0
    %10268 = vmatpush.bf16.msra.mxu0 %v7741
    %10269 = vmatpush.bf16.msra.mxu0 %v7740
    %10270 = vmatpush.bf16.msra.mxu0 %v7739
    %10271 = vmatpush.bf16.msra.mxu0 %v7738
    %10272 = vmatpush.bf16.msra.mxu0 %v7737
    %10273 = vmatpush.bf16.msra.mxu0 %v7736
    %10274 = vmatpush.bf16.msra.mxu0 %v7735
    %10275 = vmatpush.bf16.msra.mxu0 %v7734
    %10276 = vmatmul.bf16.gmra.mxu0 %v2448
    %v10277 = vpop.f32.mrf.mxu0
    %v10278 = vadd.f32 %v10265, %v10277
    %v10279 = vpop.f32.mrf.mxu0
    %10280 = vdwg.mxu0
    %10281 = vmatpush.bf16.msra.mxu0 %v7749
    %10282 = vmatpush.bf16.msra.mxu0 %v7748
    %10283 = vmatpush.bf16.msra.mxu0 %v7747
    %10284 = vmatpush.bf16.msra.mxu0 %v7746
    %10285 = vmatpush.bf16.msra.mxu0 %v7745
    %10286 = vmatpush.bf16.msra.mxu0 %v7744
    %10287 = vmatpush.bf16.msra.mxu0 %v7743
    %10288 = vmatpush.bf16.msra.mxu0 %v7742
    %10289 = vmatmul.bf16.gmra.mxu0 %v2449
    %v10290 = vpop.f32.mrf.mxu0
    %v10291 = vadd.f32 %v10278, %v10290
    %v10292 = vpop.f32.mrf.mxu0
    %10293 = vdwg.mxu0
    %10294 = vmatpush.bf16.msra.mxu0 %v7757
    %10295 = vmatpush.bf16.msra.mxu0 %v7756
    %10296 = vmatpush.bf16.msra.mxu0 %v7755
    %10297 = vmatpush.bf16.msra.mxu0 %v7754
    %10298 = vmatpush.bf16.msra.mxu0 %v7753
    %10299 = vmatpush.bf16.msra.mxu0 %v7752
    %10300 = vmatpush.bf16.msra.mxu0 %v7751
    %10301 = vmatpush.bf16.msra.mxu0 %v7750
    %10302 = vmatmul.bf16.gmra.mxu0 %v2450
    %v10303 = vpop.f32.mrf.mxu0
    %v10304 = vadd.f32 %v10291, %v10303
    %v10305 = vpop.f32.mrf.mxu0
    %10306 = vdwg.mxu0
    %10307 = vmatpush.bf16.msra.mxu0 %v7765
    %10308 = vmatpush.bf16.msra.mxu0 %v7764
    %10309 = vmatpush.bf16.msra.mxu0 %v7763
    %10310 = vmatpush.bf16.msra.mxu0 %v7762
    %10311 = vmatpush.bf16.msra.mxu0 %v7761
    %10312 = vmatpush.bf16.msra.mxu0 %v7760
    %10313 = vmatpush.bf16.msra.mxu0 %v7759
    %10314 = vmatpush.bf16.msra.mxu0 %v7758
    %10315 = vmatmul.bf16.gmra.mxu0 %v2451
    %v10316 = vpop.f32.mrf.mxu0
    %v10317 = vadd.f32 %v10304, %v10316
    %v10318 = vpop.f32.mrf.mxu0
    %10319 = vdwg.mxu0
    %10320 = vmatpush.bf16.msra.mxu0 %v7773
    %10321 = vmatpush.bf16.msra.mxu0 %v7772
    %10322 = vmatpush.bf16.msra.mxu0 %v7771
    %10323 = vmatpush.bf16.msra.mxu0 %v7770
    %10324 = vmatpush.bf16.msra.mxu0 %v7769
    %10325 = vmatpush.bf16.msra.mxu0 %v7768
    %10326 = vmatpush.bf16.msra.mxu0 %v7767
    %10327 = vmatpush.bf16.msra.mxu0 %v7766
    %10328 = vmatmul.bf16.gmra.mxu0 %v2452
    %v10329 = vpop.f32.mrf.mxu0
    %v10330 = vadd.f32 %v10317, %v10329
    %v10331 = vpop.f32.mrf.mxu0
    %10332 = vdwg.mxu0
    %10333 = vmatpush.bf16.msra.mxu0 %v7781
    %10334 = vmatpush.bf16.msra.mxu0 %v7780
    %10335 = vmatpush.bf16.msra.mxu0 %v7779
    %10336 = vmatpush.bf16.msra.mxu0 %v7778
    %10337 = vmatpush.bf16.msra.mxu0 %v7777
    %10338 = vmatpush.bf16.msra.mxu0 %v7776
    %10339 = vmatpush.bf16.msra.mxu0 %v7775
    %10340 = vmatpush.bf16.msra.mxu0 %v7774
    %10341 = vmatmul.bf16.gmra.mxu0 %v2453
    %v10342 = vpop.f32.mrf.mxu0
    %v10343 = vadd.f32 %v10330, %v10342
    %v10344 = vpop.f32.mrf.mxu0
    %10345 = vdwg.mxu0
    %10346 = vmatpush.bf16.msra.mxu0 %v7789
    %10347 = vmatpush.bf16.msra.mxu0 %v7788
    %10348 = vmatpush.bf16.msra.mxu0 %v7787
    %10349 = vmatpush.bf16.msra.mxu0 %v7786
    %10350 = vmatpush.bf16.msra.mxu0 %v7785
    %10351 = vmatpush.bf16.msra.mxu0 %v7784
    %10352 = vmatpush.bf16.msra.mxu0 %v7783
    %10353 = vmatpush.bf16.msra.mxu0 %v7782
    %10354 = vmatmul.bf16.gmra.mxu0 %v2454
    %v10355 = vpop.f32.mrf.mxu0
    %v10356 = vadd.f32 %v10343, %v10355
    %v10357 = vpop.f32.mrf.mxu0
    %10358 = vdwg.mxu0
    %10359 = vmatpush.bf16.msra.mxu0 %v7797
    %10360 = vmatpush.bf16.msra.mxu0 %v7796
    %10361 = vmatpush.bf16.msra.mxu0 %v7795
    %10362 = vmatpush.bf16.msra.mxu0 %v7794
    %10363 = vmatpush.bf16.msra.mxu0 %v7793
    %10364 = vmatpush.bf16.msra.mxu0 %v7792
    %10365 = vmatpush.bf16.msra.mxu0 %v7791
    %10366 = vmatpush.bf16.msra.mxu0 %v7790
    %10367 = vmatmul.bf16.gmra.mxu0 %v2457
    %v10368 = vpop.f32.mrf.mxu0
    %v10369 = vadd.f32 %v10356, %v10368
    %v10370 = vpop.f32.mrf.mxu0
    %10371 = vdwg.mxu0
    %10372 = vmatpush.bf16.msra.mxu0 %v7805
    %10373 = vmatpush.bf16.msra.mxu0 %v7804
    %10374 = vmatpush.bf16.msra.mxu0 %v7803
    %10375 = vmatpush.bf16.msra.mxu0 %v7802
    %10376 = vmatpush.bf16.msra.mxu0 %v7801
    %10377 = vmatpush.bf16.msra.mxu0 %v7800
    %10378 = vmatpush.bf16.msra.mxu0 %v7799
    %10379 = vmatpush.bf16.msra.mxu0 %v7798
    %10380 = vmatmul.bf16.gmra.mxu0 %v2458
    %v10381 = vpop.f32.mrf.mxu0
    %v10382 = vadd.f32 %v10369, %v10381
    %v10383 = vpop.f32.mrf.mxu0
    %10384 = vdwg.mxu0
    %10385 = vmatpush.bf16.msra.mxu0 %v7813
    %10386 = vmatpush.bf16.msra.mxu0 %v7812
    %10387 = vmatpush.bf16.msra.mxu0 %v7811
    %10388 = vmatpush.bf16.msra.mxu0 %v7810
    %10389 = vmatpush.bf16.msra.mxu0 %v7809
    %10390 = vmatpush.bf16.msra.mxu0 %v7808
    %10391 = vmatpush.bf16.msra.mxu0 %v7807
    %10392 = vmatpush.bf16.msra.mxu0 %v7806
    %10393 = vmatmul.bf16.gmra.mxu0 %v2459
    %v10394 = vpop.f32.mrf.mxu0
    %v10395 = vadd.f32 %v10382, %v10394
    %v10396 = vpop.f32.mrf.mxu0
    %10397 = vdwg.mxu0
    %10398 = vmatpush.bf16.msra.mxu0 %v7821
    %10399 = vmatpush.bf16.msra.mxu0 %v7820
    %10400 = vmatpush.bf16.msra.mxu0 %v7819
    %10401 = vmatpush.bf16.msra.mxu0 %v7818
    %10402 = vmatpush.bf16.msra.mxu0 %v7817
    %10403 = vmatpush.bf16.msra.mxu0 %v7816
    %10404 = vmatpush.bf16.msra.mxu0 %v7815
    %10405 = vmatpush.bf16.msra.mxu0 %v7814
    %10406 = vmatmul.bf16.gmra.mxu0 %v2460
    %v10407 = vpop.f32.mrf.mxu0
    %v10408 = vadd.f32 %v10395, %v10407
    %v10409 = vpop.f32.mrf.mxu0
    %10410 = vdwg.mxu0
    %10411 = vmatpush.bf16.msra.mxu0 %v7829
    %10412 = vmatpush.bf16.msra.mxu0 %v7828
    %10413 = vmatpush.bf16.msra.mxu0 %v7827
    %10414 = vmatpush.bf16.msra.mxu0 %v7826
    %10415 = vmatpush.bf16.msra.mxu0 %v7825
    %10416 = vmatpush.bf16.msra.mxu0 %v7824
    %10417 = vmatpush.bf16.msra.mxu0 %v7823
    %10418 = vmatpush.bf16.msra.mxu0 %v7822
    %10419 = vmatmul.bf16.gmra.mxu0 %v2461
    %v10420 = vpop.f32.mrf.mxu0
    %v10421 = vadd.f32 %v10408, %v10420
    %v10422 = vpop.f32.mrf.mxu0
    %10423 = vdwg.mxu0
    %10424 = vmatpush.bf16.msra.mxu0 %v7837
    %10425 = vmatpush.bf16.msra.mxu0 %v7836
    %10426 = vmatpush.bf16.msra.mxu0 %v7835
    %10427 = vmatpush.bf16.msra.mxu0 %v7834
    %10428 = vmatpush.bf16.msra.mxu0 %v7833
    %10429 = vmatpush.bf16.msra.mxu0 %v7832
    %10430 = vmatpush.bf16.msra.mxu0 %v7831
    %10431 = vmatpush.bf16.msra.mxu0 %v7830
    %10432 = vmatmul.bf16.gmra.mxu0 %v2462
    %v10433 = vpop.f32.mrf.mxu0
    %v10434 = vadd.f32 %v10421, %v10433
    %v10435 = vpop.f32.mrf.mxu0
    %10436 = vdwg.mxu0
    %10437 = vmatpush.bf16.msra.mxu0 %v7845
    %10438 = vmatpush.bf16.msra.mxu0 %v7844
    %10439 = vmatpush.bf16.msra.mxu0 %v7843
    %10440 = vmatpush.bf16.msra.mxu0 %v7842
    %10441 = vmatpush.bf16.msra.mxu0 %v7841
    %10442 = vmatpush.bf16.msra.mxu0 %v7840
    %10443 = vmatpush.bf16.msra.mxu0 %v7839
    %10444 = vmatpush.bf16.msra.mxu0 %v7838
    %10445 = vmatmul.bf16.gmra.mxu0 %v2463
    %v10446 = vpop.f32.mrf.mxu0
    %v10447 = vadd.f32 %v10434, %v10446
    %v10448 = vpop.f32.mrf.mxu0
    %10449 = vdwg.mxu0
    %10450 = vmatpush.bf16.msra.mxu0 %v7853
    %10451 = vmatpush.bf16.msra.mxu0 %v7852
    %10452 = vmatpush.bf16.msra.mxu0 %v7851
    %10453 = vmatpush.bf16.msra.mxu0 %v7850
    %10454 = vmatpush.bf16.msra.mxu0 %v7849
    %10455 = vmatpush.bf16.msra.mxu0 %v7848
    %10456 = vmatpush.bf16.msra.mxu0 %v7847
    %10457 = vmatpush.bf16.msra.mxu0 %v7846
    %10458 = vmatmul.bf16.gmra.mxu0 %v2464
    %v10459 = vpop.f32.mrf.mxu0
    %v10460 = vadd.f32 %v10447, %v10459
    %v10461 = vpop.f32.mrf.mxu0
    %10462 = vdwg.mxu0
    %10463 = vmatpush.bf16.msra.mxu0 %v7861
    %10464 = vmatpush.bf16.msra.mxu0 %v7860
    %10465 = vmatpush.bf16.msra.mxu0 %v7859
    %10466 = vmatpush.bf16.msra.mxu0 %v7858
    %10467 = vmatpush.bf16.msra.mxu0 %v7857
    %10468 = vmatpush.bf16.msra.mxu0 %v7856
    %10469 = vmatpush.bf16.msra.mxu0 %v7855
    %10470 = vmatpush.bf16.msra.mxu0 %v7854
    %10471 = vmatmul.bf16.gmra.mxu0 %v2467
    %v10472 = vpop.f32.mrf.mxu0
    %v10473 = vadd.f32 %v10460, %v10472
    %v10474 = vpop.f32.mrf.mxu0
    %10475 = vdwg.mxu0
    %10476 = vmatpush.bf16.msra.mxu0 %v7869
    %10477 = vmatpush.bf16.msra.mxu0 %v7868
    %10478 = vmatpush.bf16.msra.mxu0 %v7867
    %10479 = vmatpush.bf16.msra.mxu0 %v7866
    %10480 = vmatpush.bf16.msra.mxu0 %v7865
    %10481 = vmatpush.bf16.msra.mxu0 %v7864
    %10482 = vmatpush.bf16.msra.mxu0 %v7863
    %10483 = vmatpush.bf16.msra.mxu0 %v7862
    %10484 = vmatmul.bf16.gmra.mxu0 %v2468
    %v10485 = vpop.f32.mrf.mxu0
    %v10486 = vadd.f32 %v10473, %v10485
    %v10487 = vpop.f32.mrf.mxu0
    %10488 = vdwg.mxu0
    %10489 = vmatpush.bf16.msra.mxu0 %v7877
    %10490 = vmatpush.bf16.msra.mxu0 %v7876
    %10491 = vmatpush.bf16.msra.mxu0 %v7875
    %10492 = vmatpush.bf16.msra.mxu0 %v7874
    %10493 = vmatpush.bf16.msra.mxu0 %v7873
    %10494 = vmatpush.bf16.msra.mxu0 %v7872
    %10495 = vmatpush.bf16.msra.mxu0 %v7871
    %10496 = vmatpush.bf16.msra.mxu0 %v7870
    %10497 = vmatmul.bf16.gmra.mxu0 %v2469
    %v10498 = vpop.f32.mrf.mxu0
    %v10499 = vadd.f32 %v10486, %v10498
    %v10500 = vpop.f32.mrf.mxu0
    %10501 = vdwg.mxu0
    %10502 = vmatpush.bf16.msra.mxu0 %v7885
    %10503 = vmatpush.bf16.msra.mxu0 %v7884
    %10504 = vmatpush.bf16.msra.mxu0 %v7883
    %10505 = vmatpush.bf16.msra.mxu0 %v7882
    %10506 = vmatpush.bf16.msra.mxu0 %v7881
    %10507 = vmatpush.bf16.msra.mxu0 %v7880
    %10508 = vmatpush.bf16.msra.mxu0 %v7879
    %10509 = vmatpush.bf16.msra.mxu0 %v7878
    %10510 = vmatmul.bf16.gmra.mxu0 %v2470
    %v10511 = vpop.f32.mrf.mxu0
    %v10512 = vadd.f32 %v10499, %v10511
    %v10513 = vpop.f32.mrf.mxu0
    %10514 = vdwg.mxu0
    %10515 = vmatpush.bf16.msra.mxu0 %v7893
    %10516 = vmatpush.bf16.msra.mxu0 %v7892
    %10517 = vmatpush.bf16.msra.mxu0 %v7891
    %10518 = vmatpush.bf16.msra.mxu0 %v7890
    %10519 = vmatpush.bf16.msra.mxu0 %v7889
    %10520 = vmatpush.bf16.msra.mxu0 %v7888
    %10521 = vmatpush.bf16.msra.mxu0 %v7887
    %10522 = vmatpush.bf16.msra.mxu0 %v7886
    %10523 = vmatmul.bf16.gmra.mxu0 %v2471
    %v10524 = vpop.f32.mrf.mxu0
    %v10525 = vadd.f32 %v10512, %v10524
    %v10526 = vpop.f32.mrf.mxu0
    %10527 = vdwg.mxu0
    %10528 = vmatpush.bf16.msra.mxu0 %v7901
    %10529 = vmatpush.bf16.msra.mxu0 %v7900
    %10530 = vmatpush.bf16.msra.mxu0 %v7899
    %10531 = vmatpush.bf16.msra.mxu0 %v7898
    %10532 = vmatpush.bf16.msra.mxu0 %v7897
    %10533 = vmatpush.bf16.msra.mxu0 %v7896
    %10534 = vmatpush.bf16.msra.mxu0 %v7895
    %10535 = vmatpush.bf16.msra.mxu0 %v7894
    %10536 = vmatmul.bf16.gmra.mxu0 %v2472
    %v10537 = vpop.f32.mrf.mxu0
    %v10538 = vadd.f32 %v10525, %v10537
    %v10539 = vpop.f32.mrf.mxu0
    %10540 = vdwg.mxu0
    %10541 = vmatpush.bf16.msra.mxu0 %v7909
    %10542 = vmatpush.bf16.msra.mxu0 %v7908
    %10543 = vmatpush.bf16.msra.mxu0 %v7907
    %10544 = vmatpush.bf16.msra.mxu0 %v7906
    %10545 = vmatpush.bf16.msra.mxu0 %v7905
    %10546 = vmatpush.bf16.msra.mxu0 %v7904
    %10547 = vmatpush.bf16.msra.mxu0 %v7903
    %10548 = vmatpush.bf16.msra.mxu0 %v7902
    %10549 = vmatmul.bf16.gmra.mxu0 %v2473
    %v10550 = vpop.f32.mrf.mxu0
    %v10551 = vadd.f32 %v10538, %v10550
    %v10552 = vpop.f32.mrf.mxu0
    %10553 = vdwg.mxu0
    %10554 = vmatpush.bf16.msra.mxu0 %v7917
    %10555 = vmatpush.bf16.msra.mxu0 %v7916
    %10556 = vmatpush.bf16.msra.mxu0 %v7915
    %10557 = vmatpush.bf16.msra.mxu0 %v7914
    %10558 = vmatpush.bf16.msra.mxu0 %v7913
    %10559 = vmatpush.bf16.msra.mxu0 %v7912
    %10560 = vmatpush.bf16.msra.mxu0 %v7911
    %10561 = vmatpush.bf16.msra.mxu0 %v7910
    %10562 = vmatmul.bf16.gmra.mxu0 %v2474
    %v10563 = vpop.f32.mrf.mxu0
    %v10564 = vadd.f32 %v10551, %v10563
    %v10565 = vpop.f32.mrf.mxu0
    %10566 = vdwg.mxu0
    %10567 = vmatpush.bf16.msra.mxu0 %v7925
    %10568 = vmatpush.bf16.msra.mxu0 %v7924
    %10569 = vmatpush.bf16.msra.mxu0 %v7923
    %10570 = vmatpush.bf16.msra.mxu0 %v7922
    %10571 = vmatpush.bf16.msra.mxu0 %v7921
    %10572 = vmatpush.bf16.msra.mxu0 %v7920
    %10573 = vmatpush.bf16.msra.mxu0 %v7919
    %10574 = vmatpush.bf16.msra.mxu0 %v7918
    %10575 = vmatmul.bf16.gmra.mxu0 %v2477
    %v10576 = vpop.f32.mrf.mxu0
    %v10577 = vadd.f32 %v10564, %v10576
    %v10578 = vpop.f32.mrf.mxu0
    %10579 = vdwg.mxu0
    %10580 = vmatpush.bf16.msra.mxu0 %v7933
    %10581 = vmatpush.bf16.msra.mxu0 %v7932
    %10582 = vmatpush.bf16.msra.mxu0 %v7931
    %10583 = vmatpush.bf16.msra.mxu0 %v7930
    %10584 = vmatpush.bf16.msra.mxu0 %v7929
    %10585 = vmatpush.bf16.msra.mxu0 %v7928
    %10586 = vmatpush.bf16.msra.mxu0 %v7927
    %10587 = vmatpush.bf16.msra.mxu0 %v7926
    %10588 = vmatmul.bf16.gmra.mxu0 %v2478
    %v10589 = vpop.f32.mrf.mxu0
    %v10590 = vadd.f32 %v10577, %v10589
    %v10591 = vpop.f32.mrf.mxu0
    %10592 = vdwg.mxu0
    %10593 = vmatpush.bf16.msra.mxu0 %v7941
    %10594 = vmatpush.bf16.msra.mxu0 %v7940
    %10595 = vmatpush.bf16.msra.mxu0 %v7939
    %10596 = vmatpush.bf16.msra.mxu0 %v7938
    %10597 = vmatpush.bf16.msra.mxu0 %v7937
    %10598 = vmatpush.bf16.msra.mxu0 %v7936
    %10599 = vmatpush.bf16.msra.mxu0 %v7935
    %10600 = vmatpush.bf16.msra.mxu0 %v7934
    %10601 = vmatmul.bf16.gmra.mxu0 %v2479
    %v10602 = vpop.f32.mrf.mxu0
    %v10603 = vadd.f32 %v10590, %v10602
    %v10604 = vpop.f32.mrf.mxu0
    %10605 = vdwg.mxu0
    %10606 = vmatpush.bf16.msra.mxu0 %v7949
    %10607 = vmatpush.bf16.msra.mxu0 %v7948
    %10608 = vmatpush.bf16.msra.mxu0 %v7947
    %10609 = vmatpush.bf16.msra.mxu0 %v7946
    %10610 = vmatpush.bf16.msra.mxu0 %v7945
    %10611 = vmatpush.bf16.msra.mxu0 %v7944
    %10612 = vmatpush.bf16.msra.mxu0 %v7943
    %10613 = vmatpush.bf16.msra.mxu0 %v7942
    %10614 = vmatmul.bf16.gmra.mxu0 %v2480
    %v10615 = vpop.f32.mrf.mxu0
    %v10616 = vadd.f32 %v10603, %v10615
    %v10617 = vpop.f32.mrf.mxu0
    %10618 = vdwg.mxu0
    %10619 = vmatpush.bf16.msra.mxu0 %v7957
    %10620 = vmatpush.bf16.msra.mxu0 %v7956
    %10621 = vmatpush.bf16.msra.mxu0 %v7955
    %10622 = vmatpush.bf16.msra.mxu0 %v7954
    %10623 = vmatpush.bf16.msra.mxu0 %v7953
    %10624 = vmatpush.bf16.msra.mxu0 %v7952
    %10625 = vmatpush.bf16.msra.mxu0 %v7951
    %10626 = vmatpush.bf16.msra.mxu0 %v7950
    %10627 = vmatmul.bf16.gmra.mxu0 %v2481
    %v10628 = vpop.f32.mrf.mxu0
    %v10629 = vadd.f32 %v10616, %v10628
    %v10630 = vpop.f32.mrf.mxu0
    %10631 = vdwg.mxu0
    %10632 = vmatpush.bf16.msra.mxu0 %v7965
    %10633 = vmatpush.bf16.msra.mxu0 %v7964
    %10634 = vmatpush.bf16.msra.mxu0 %v7963
    %10635 = vmatpush.bf16.msra.mxu0 %v7962
    %10636 = vmatpush.bf16.msra.mxu0 %v7961
    %10637 = vmatpush.bf16.msra.mxu0 %v7960
    %10638 = vmatpush.bf16.msra.mxu0 %v7959
    %10639 = vmatpush.bf16.msra.mxu0 %v7958
    %10640 = vmatmul.bf16.gmra.mxu0 %v2482
    %v10641 = vpop.f32.mrf.mxu0
    %v10642 = vadd.f32 %v10629, %v10641
    %v10643 = vpop.f32.mrf.mxu0
    %10644 = vdwg.mxu0
    %10645 = vmatpush.bf16.msra.mxu0 %v7973
    %10646 = vmatpush.bf16.msra.mxu0 %v7972
    %10647 = vmatpush.bf16.msra.mxu0 %v7971
    %10648 = vmatpush.bf16.msra.mxu0 %v7970
    %10649 = vmatpush.bf16.msra.mxu0 %v7969
    %10650 = vmatpush.bf16.msra.mxu0 %v7968
    %10651 = vmatpush.bf16.msra.mxu0 %v7967
    %10652 = vmatpush.bf16.msra.mxu0 %v7966
    %10653 = vmatmul.bf16.gmra.mxu0 %v2483
    %v10654 = vpop.f32.mrf.mxu0
    %v10655 = vadd.f32 %v10642, %v10654
    %v10656 = vpop.f32.mrf.mxu0
    %10657 = vdwg.mxu0
    %10658 = vmatpush.bf16.msra.mxu0 %v7981
    %10659 = vmatpush.bf16.msra.mxu0 %v7980
    %10660 = vmatpush.bf16.msra.mxu0 %v7979
    %10661 = vmatpush.bf16.msra.mxu0 %v7978
    %10662 = vmatpush.bf16.msra.mxu0 %v7977
    %10663 = vmatpush.bf16.msra.mxu0 %v7976
    %10664 = vmatpush.bf16.msra.mxu0 %v7975
    %10665 = vmatpush.bf16.msra.mxu0 %v7974
    %10666 = vmatmul.bf16.gmra.mxu0 %v2484
    %v10667 = vpop.f32.mrf.mxu0
    %v10668 = vadd.f32 %v10655, %v10667
    %v10669 = vpop.f32.mrf.mxu0
    %10670 = vdwg.mxu0
    %10671 = vmatpush.bf16.msra.mxu0 %v7989
    %10672 = vmatpush.bf16.msra.mxu0 %v7988
    %10673 = vmatpush.bf16.msra.mxu0 %v7987
    %10674 = vmatpush.bf16.msra.mxu0 %v7986
    %10675 = vmatpush.bf16.msra.mxu0 %v7985
    %10676 = vmatpush.bf16.msra.mxu0 %v7984
    %10677 = vmatpush.bf16.msra.mxu0 %v7983
    %10678 = vmatpush.bf16.msra.mxu0 %v7982
    %10679 = vmatmul.bf16.gmra.mxu0 %v2487
    %v10680 = vpop.f32.mrf.mxu0
    %v10681 = vadd.f32 %v10668, %v10680
    %v10682 = vpop.f32.mrf.mxu0
    %10683 = vdwg.mxu0
    %10684 = vmatpush.bf16.msra.mxu0 %v7997
    %10685 = vmatpush.bf16.msra.mxu0 %v7996
    %10686 = vmatpush.bf16.msra.mxu0 %v7995
    %10687 = vmatpush.bf16.msra.mxu0 %v7994
    %10688 = vmatpush.bf16.msra.mxu0 %v7993
    %10689 = vmatpush.bf16.msra.mxu0 %v7992
    %10690 = vmatpush.bf16.msra.mxu0 %v7991
    %10691 = vmatpush.bf16.msra.mxu0 %v7990
    %10692 = vmatmul.bf16.gmra.mxu0 %v2488
    %v10693 = vpop.f32.mrf.mxu0
    %v10694 = vadd.f32 %v10681, %v10693
    %v10695 = vpop.f32.mrf.mxu0
    %10696 = vdwg.mxu0
    %10697 = vmatpush.bf16.msra.mxu0 %v8005
    %10698 = vmatpush.bf16.msra.mxu0 %v8004
    %10699 = vmatpush.bf16.msra.mxu0 %v8003
    %10700 = vmatpush.bf16.msra.mxu0 %v8002
    %10701 = vmatpush.bf16.msra.mxu0 %v8001
    %10702 = vmatpush.bf16.msra.mxu0 %v8000
    %10703 = vmatpush.bf16.msra.mxu0 %v7999
    %10704 = vmatpush.bf16.msra.mxu0 %v7998
    %10705 = vmatmul.bf16.gmra.mxu0 %v2489
    %v10706 = vpop.f32.mrf.mxu0
    %v10707 = vadd.f32 %v10694, %v10706
    %v10708 = vpop.f32.mrf.mxu0
    %10709 = vdwg.mxu0
    %10710 = vmatpush.bf16.msra.mxu0 %v8013
    %10711 = vmatpush.bf16.msra.mxu0 %v8012
    %10712 = vmatpush.bf16.msra.mxu0 %v8011
    %10713 = vmatpush.bf16.msra.mxu0 %v8010
    %10714 = vmatpush.bf16.msra.mxu0 %v8009
    %10715 = vmatpush.bf16.msra.mxu0 %v8008
    %10716 = vmatpush.bf16.msra.mxu0 %v8007
    %10717 = vmatpush.bf16.msra.mxu0 %v8006
    %10718 = vmatmul.bf16.gmra.mxu0 %v2490
    %v10719 = vpop.f32.mrf.mxu0
    %v10720 = vadd.f32 %v10707, %v10719
    %v10721 = vpop.f32.mrf.mxu0
    %10722 = vdwg.mxu0
    %10723 = vmatpush.bf16.msra.mxu0 %v8021
    %10724 = vmatpush.bf16.msra.mxu0 %v8020
    %10725 = vmatpush.bf16.msra.mxu0 %v8019
    %10726 = vmatpush.bf16.msra.mxu0 %v8018
    %10727 = vmatpush.bf16.msra.mxu0 %v8017
    %10728 = vmatpush.bf16.msra.mxu0 %v8016
    %10729 = vmatpush.bf16.msra.mxu0 %v8015
    %10730 = vmatpush.bf16.msra.mxu0 %v8014
    %10731 = vmatmul.bf16.gmra.mxu0 %v2491
    %v10732 = vpop.f32.mrf.mxu0
    %v10733 = vadd.f32 %v10720, %v10732
    %v10734 = vpop.f32.mrf.mxu0
    %10735 = vdwg.mxu0
    %10736 = vmatpush.bf16.msra.mxu0 %v8029
    %10737 = vmatpush.bf16.msra.mxu0 %v8028
    %10738 = vmatpush.bf16.msra.mxu0 %v8027
    %10739 = vmatpush.bf16.msra.mxu0 %v8026
    %10740 = vmatpush.bf16.msra.mxu0 %v8025
    %10741 = vmatpush.bf16.msra.mxu0 %v8024
    %10742 = vmatpush.bf16.msra.mxu0 %v8023
    %10743 = vmatpush.bf16.msra.mxu0 %v8022
    %10744 = vmatmul.bf16.gmra.mxu0 %v2492
    %v10745 = vpop.f32.mrf.mxu0
    %v10746 = vadd.f32 %v10733, %v10745
    %v10747 = vpop.f32.mrf.mxu0
    %10748 = vdwg.mxu0
    %10749 = vmatpush.bf16.msra.mxu0 %v8037
    %10750 = vmatpush.bf16.msra.mxu0 %v8036
    %10751 = vmatpush.bf16.msra.mxu0 %v8035
    %10752 = vmatpush.bf16.msra.mxu0 %v8034
    %10753 = vmatpush.bf16.msra.mxu0 %v8033
    %10754 = vmatpush.bf16.msra.mxu0 %v8032
    %10755 = vmatpush.bf16.msra.mxu0 %v8031
    %10756 = vmatpush.bf16.msra.mxu0 %v8030
    %10757 = vmatmul.bf16.gmra.mxu0 %v2493
    %v10758 = vpop.f32.mrf.mxu0
    %v10759 = vadd.f32 %v10746, %v10758
    %v10760 = vpop.f32.mrf.mxu0
    %10761 = vdwg.mxu0
    %10762 = vmatpush.bf16.msra.mxu0 %v8045
    %10763 = vmatpush.bf16.msra.mxu0 %v8044
    %10764 = vmatpush.bf16.msra.mxu0 %v8043
    %10765 = vmatpush.bf16.msra.mxu0 %v8042
    %10766 = vmatpush.bf16.msra.mxu0 %v8041
    %10767 = vmatpush.bf16.msra.mxu0 %v8040
    %10768 = vmatpush.bf16.msra.mxu0 %v8039
    %10769 = vmatpush.bf16.msra.mxu0 %v8038
    %10770 = vmatmul.bf16.gmra.mxu0 %v2494
    %v10771 = vpop.f32.mrf.mxu0
    %v10772 = vadd.f32 %v10759, %v10771
    %v10773 = vpop.f32.mrf.mxu0
    %10774 = vdwg.mxu0
    %10775 = vmatpush.bf16.msra.mxu0 %v8053
    %10776 = vmatpush.bf16.msra.mxu0 %v8052
    %10777 = vmatpush.bf16.msra.mxu0 %v8051
    %10778 = vmatpush.bf16.msra.mxu0 %v8050
    %10779 = vmatpush.bf16.msra.mxu0 %v8049
    %10780 = vmatpush.bf16.msra.mxu0 %v8048
    %10781 = vmatpush.bf16.msra.mxu0 %v8047
    %10782 = vmatpush.bf16.msra.mxu0 %v8046
    %10783 = vmatmul.bf16.gmra.mxu0 %v2497
    %v10784 = vpop.f32.mrf.mxu0
    %v10785 = vadd.f32 %v10772, %v10784
    %v10786 = vpop.f32.mrf.mxu0
    %10787 = vdwg.mxu0
    %10788 = vmatpush.bf16.msra.mxu0 %v8061
    %10789 = vmatpush.bf16.msra.mxu0 %v8060
    %10790 = vmatpush.bf16.msra.mxu0 %v8059
    %10791 = vmatpush.bf16.msra.mxu0 %v8058
    %10792 = vmatpush.bf16.msra.mxu0 %v8057
    %10793 = vmatpush.bf16.msra.mxu0 %v8056
    %10794 = vmatpush.bf16.msra.mxu0 %v8055
    %10795 = vmatpush.bf16.msra.mxu0 %v8054
    %10796 = vmatmul.bf16.gmra.mxu0 %v2498
    %v10797 = vpop.f32.mrf.mxu0
    %v10798 = vadd.f32 %v10785, %v10797
    %v10799 = vpop.f32.mrf.mxu0
    %10800 = vdwg.mxu0
    %10801 = vmatpush.bf16.msra.mxu0 %v8069
    %10802 = vmatpush.bf16.msra.mxu0 %v8068
    %10803 = vmatpush.bf16.msra.mxu0 %v8067
    %10804 = vmatpush.bf16.msra.mxu0 %v8066
    %10805 = vmatpush.bf16.msra.mxu0 %v8065
    %10806 = vmatpush.bf16.msra.mxu0 %v8064
    %10807 = vmatpush.bf16.msra.mxu0 %v8063
    %10808 = vmatpush.bf16.msra.mxu0 %v8062
    %10809 = vmatmul.bf16.gmra.mxu0 %v2499
    %v10810 = vpop.f32.mrf.mxu0
    %v10811 = vadd.f32 %v10798, %v10810
    %v10812 = vpop.f32.mrf.mxu0
    %10813 = vdwg.mxu0
    %10814 = vmatpush.bf16.msra.mxu0 %v8077
    %10815 = vmatpush.bf16.msra.mxu0 %v8076
    %10816 = vmatpush.bf16.msra.mxu0 %v8075
    %10817 = vmatpush.bf16.msra.mxu0 %v8074
    %10818 = vmatpush.bf16.msra.mxu0 %v8073
    %10819 = vmatpush.bf16.msra.mxu0 %v8072
    %10820 = vmatpush.bf16.msra.mxu0 %v8071
    %10821 = vmatpush.bf16.msra.mxu0 %v8070
    %10822 = vmatmul.bf16.gmra.mxu0 %v2500
    %v10823 = vpop.f32.mrf.mxu0
    %v10824 = vadd.f32 %v10811, %v10823
    %v10825 = vpop.f32.mrf.mxu0
    %10826 = vdwg.mxu0
    %10827 = vmatpush.bf16.msra.mxu0 %v8085
    %10828 = vmatpush.bf16.msra.mxu0 %v8084
    %10829 = vmatpush.bf16.msra.mxu0 %v8083
    %10830 = vmatpush.bf16.msra.mxu0 %v8082
    %10831 = vmatpush.bf16.msra.mxu0 %v8081
    %10832 = vmatpush.bf16.msra.mxu0 %v8080
    %10833 = vmatpush.bf16.msra.mxu0 %v8079
    %10834 = vmatpush.bf16.msra.mxu0 %v8078
    %10835 = vmatmul.bf16.gmra.mxu0 %v2501
    %v10836 = vpop.f32.mrf.mxu0
    %v10837 = vadd.f32 %v10824, %v10836
    %v10838 = vpop.f32.mrf.mxu0
    %10839 = vdwg.mxu0
    %10840 = vmatpush.bf16.msra.mxu0 %v8093
    %10841 = vmatpush.bf16.msra.mxu0 %v8092
    %10842 = vmatpush.bf16.msra.mxu0 %v8091
    %10843 = vmatpush.bf16.msra.mxu0 %v8090
    %10844 = vmatpush.bf16.msra.mxu0 %v8089
    %10845 = vmatpush.bf16.msra.mxu0 %v8088
    %10846 = vmatpush.bf16.msra.mxu0 %v8087
    %10847 = vmatpush.bf16.msra.mxu0 %v8086
    %10848 = vmatmul.bf16.gmra.mxu0 %v2502
    %v10849 = vpop.f32.mrf.mxu0
    %v10850 = vadd.f32 %v10837, %v10849
    %v10851 = vpop.f32.mrf.mxu0
    %10852 = vdwg.mxu0
    %10853 = vmatpush.bf16.msra.mxu0 %v8101
    %10854 = vmatpush.bf16.msra.mxu0 %v8100
    %10855 = vmatpush.bf16.msra.mxu0 %v8099
    %10856 = vmatpush.bf16.msra.mxu0 %v8098
    %10857 = vmatpush.bf16.msra.mxu0 %v8097
    %10858 = vmatpush.bf16.msra.mxu0 %v8096
    %10859 = vmatpush.bf16.msra.mxu0 %v8095
    %10860 = vmatpush.bf16.msra.mxu0 %v8094
    %10861 = vmatmul.bf16.gmra.mxu0 %v2503
    %v10862 = vpop.f32.mrf.mxu0
    %v10863 = vadd.f32 %v10850, %v10862
    %v10864 = vpop.f32.mrf.mxu0
    %10865 = vdwg.mxu0
    %10866 = vmatpush.bf16.msra.mxu0 %v8109
    %10867 = vmatpush.bf16.msra.mxu0 %v8108
    %10868 = vmatpush.bf16.msra.mxu0 %v8107
    %10869 = vmatpush.bf16.msra.mxu0 %v8106
    %10870 = vmatpush.bf16.msra.mxu0 %v8105
    %10871 = vmatpush.bf16.msra.mxu0 %v8104
    %10872 = vmatpush.bf16.msra.mxu0 %v8103
    %10873 = vmatpush.bf16.msra.mxu0 %v8102
    %10874 = vmatmul.bf16.gmra.mxu0 %v2504
    %v10875 = vpop.f32.mrf.mxu0
    %v10876 = vadd.f32 %v10863, %v10875
    %v10877 = vpop.f32.mrf.mxu0
    %10878 = vdwg.mxu0
    %10879 = vmatpush.bf16.msra.mxu0 %v8117
    %10880 = vmatpush.bf16.msra.mxu0 %v8116
    %10881 = vmatpush.bf16.msra.mxu0 %v8115
    %10882 = vmatpush.bf16.msra.mxu0 %v8114
    %10883 = vmatpush.bf16.msra.mxu0 %v8113
    %10884 = vmatpush.bf16.msra.mxu0 %v8112
    %10885 = vmatpush.bf16.msra.mxu0 %v8111
    %10886 = vmatpush.bf16.msra.mxu0 %v8110
    %10887 = vmatmul.bf16.gmra.mxu0 %v2507
    %v10888 = vpop.f32.mrf.mxu0
    %v10889 = vadd.f32 %v10876, %v10888
    %v10890 = vpop.f32.mrf.mxu0
    %10891 = vdwg.mxu0
    %10892 = vmatpush.bf16.msra.mxu0 %v8125
    %10893 = vmatpush.bf16.msra.mxu0 %v8124
    %10894 = vmatpush.bf16.msra.mxu0 %v8123
    %10895 = vmatpush.bf16.msra.mxu0 %v8122
    %10896 = vmatpush.bf16.msra.mxu0 %v8121
    %10897 = vmatpush.bf16.msra.mxu0 %v8120
    %10898 = vmatpush.bf16.msra.mxu0 %v8119
    %10899 = vmatpush.bf16.msra.mxu0 %v8118
    %10900 = vmatmul.bf16.gmra.mxu0 %v2508
    %v10901 = vpop.f32.mrf.mxu0
    %v10902 = vadd.f32 %v10889, %v10901
    %v10903 = vpop.f32.mrf.mxu0
    %10904 = vdwg.mxu0
    %10905 = vmatpush.bf16.msra.mxu0 %v8133
    %10906 = vmatpush.bf16.msra.mxu0 %v8132
    %10907 = vmatpush.bf16.msra.mxu0 %v8131
    %10908 = vmatpush.bf16.msra.mxu0 %v8130
    %10909 = vmatpush.bf16.msra.mxu0 %v8129
    %10910 = vmatpush.bf16.msra.mxu0 %v8128
    %10911 = vmatpush.bf16.msra.mxu0 %v8127
    %10912 = vmatpush.bf16.msra.mxu0 %v8126
    %10913 = vmatmul.bf16.gmra.mxu0 %v2509
    %v10914 = vpop.f32.mrf.mxu0
    %v10915 = vadd.f32 %v10902, %v10914
    %v10916 = vpop.f32.mrf.mxu0
    %10917 = vdwg.mxu0
    %10918 = vmatpush.bf16.msra.mxu0 %v8141
    %10919 = vmatpush.bf16.msra.mxu0 %v8140
    %10920 = vmatpush.bf16.msra.mxu0 %v8139
    %10921 = vmatpush.bf16.msra.mxu0 %v8138
    %10922 = vmatpush.bf16.msra.mxu0 %v8137
    %10923 = vmatpush.bf16.msra.mxu0 %v8136
    %10924 = vmatpush.bf16.msra.mxu0 %v8135
    %10925 = vmatpush.bf16.msra.mxu0 %v8134
    %10926 = vmatmul.bf16.gmra.mxu0 %v2510
    %v10927 = vpop.f32.mrf.mxu0
    %v10928 = vadd.f32 %v10915, %v10927
    %v10929 = vpop.f32.mrf.mxu0
    %10930 = vdwg.mxu0
    %10931 = vmatpush.bf16.msra.mxu0 %v8149
    %10932 = vmatpush.bf16.msra.mxu0 %v8148
    %10933 = vmatpush.bf16.msra.mxu0 %v8147
    %10934 = vmatpush.bf16.msra.mxu0 %v8146
    %10935 = vmatpush.bf16.msra.mxu0 %v8145
    %10936 = vmatpush.bf16.msra.mxu0 %v8144
    %10937 = vmatpush.bf16.msra.mxu0 %v8143
    %10938 = vmatpush.bf16.msra.mxu0 %v8142
    %10939 = vmatmul.bf16.gmra.mxu0 %v2511
    %v10940 = vpop.f32.mrf.mxu0
    %v10941 = vadd.f32 %v10928, %v10940
    %v10942 = vpop.f32.mrf.mxu0
    %10943 = vdwg.mxu0
    %10944 = vmatpush.bf16.msra.mxu0 %v8157
    %10945 = vmatpush.bf16.msra.mxu0 %v8156
    %10946 = vmatpush.bf16.msra.mxu0 %v8155
    %10947 = vmatpush.bf16.msra.mxu0 %v8154
    %10948 = vmatpush.bf16.msra.mxu0 %v8153
    %10949 = vmatpush.bf16.msra.mxu0 %v8152
    %10950 = vmatpush.bf16.msra.mxu0 %v8151
    %10951 = vmatpush.bf16.msra.mxu0 %v8150
    %10952 = vmatmul.bf16.gmra.mxu0 %v2512
    %v10953 = vpop.f32.mrf.mxu0
    %v10954 = vadd.f32 %v10941, %v10953
    %v10955 = vpop.f32.mrf.mxu0
    %10956 = vdwg.mxu0
    %10957 = vmatpush.bf16.msra.mxu0 %v8165
    %10958 = vmatpush.bf16.msra.mxu0 %v8164
    %10959 = vmatpush.bf16.msra.mxu0 %v8163
    %10960 = vmatpush.bf16.msra.mxu0 %v8162
    %10961 = vmatpush.bf16.msra.mxu0 %v8161
    %10962 = vmatpush.bf16.msra.mxu0 %v8160
    %10963 = vmatpush.bf16.msra.mxu0 %v8159
    %10964 = vmatpush.bf16.msra.mxu0 %v8158
    %10965 = vmatmul.bf16.gmra.mxu0 %v2513
    %v10966 = vpop.f32.mrf.mxu0
    %v10967 = vadd.f32 %v10954, %v10966
    %v10968 = vpop.f32.mrf.mxu0
    %10969 = vdwg.mxu0
    %10970 = vmatpush.bf16.msra.mxu0 %v8173
    %10971 = vmatpush.bf16.msra.mxu0 %v8172
    %10972 = vmatpush.bf16.msra.mxu0 %v8171
    %10973 = vmatpush.bf16.msra.mxu0 %v8170
    %10974 = vmatpush.bf16.msra.mxu0 %v8169
    %10975 = vmatpush.bf16.msra.mxu0 %v8168
    %10976 = vmatpush.bf16.msra.mxu0 %v8167
    %10977 = vmatpush.bf16.msra.mxu0 %v8166
    %10978 = vmatmul.bf16.gmra.mxu0 %v2514
    %v10979 = vpop.f32.mrf.mxu0
    %v10980 = vadd.f32 %v10967, %v10979
    %v10981 = vpop.f32.mrf.mxu0
    %10982 = vdwg.mxu0
    %10983 = vmatpush.bf16.msra.mxu0 %v8181
    %10984 = vmatpush.bf16.msra.mxu0 %v8180
    %10985 = vmatpush.bf16.msra.mxu0 %v8179
    %10986 = vmatpush.bf16.msra.mxu0 %v8178
    %10987 = vmatpush.bf16.msra.mxu0 %v8177
    %10988 = vmatpush.bf16.msra.mxu0 %v8176
    %10989 = vmatpush.bf16.msra.mxu0 %v8175
    %10990 = vmatpush.bf16.msra.mxu0 %v8174
    %10991 = vmatmul.bf16.gmra.mxu0 %v2517
    %v10992 = vpop.f32.mrf.mxu0
    %v10993 = vadd.f32 %v10980, %v10992
    %v10994 = vpop.f32.mrf.mxu0
    %10995 = vdwg.mxu0
    %10996 = vmatpush.bf16.msra.mxu0 %v8189
    %10997 = vmatpush.bf16.msra.mxu0 %v8188
    %10998 = vmatpush.bf16.msra.mxu0 %v8187
    %10999 = vmatpush.bf16.msra.mxu0 %v8186
    %11000 = vmatpush.bf16.msra.mxu0 %v8185
    %11001 = vmatpush.bf16.msra.mxu0 %v8184
    %11002 = vmatpush.bf16.msra.mxu0 %v8183
    %11003 = vmatpush.bf16.msra.mxu0 %v8182
    %11004 = vmatmul.bf16.gmra.mxu0 %v2518
    %v11005 = vpop.f32.mrf.mxu0
    %v11006 = vadd.f32 %v10993, %v11005
    %v11007 = vpop.f32.mrf.mxu0
    %11008 = vdwg.mxu0
    %11009 = vmatpush.bf16.msra.mxu0 %v8197
    %11010 = vmatpush.bf16.msra.mxu0 %v8196
    %11011 = vmatpush.bf16.msra.mxu0 %v8195
    %11012 = vmatpush.bf16.msra.mxu0 %v8194
    %11013 = vmatpush.bf16.msra.mxu0 %v8193
    %11014 = vmatpush.bf16.msra.mxu0 %v8192
    %11015 = vmatpush.bf16.msra.mxu0 %v8191
    %11016 = vmatpush.bf16.msra.mxu0 %v8190
    %11017 = vmatmul.bf16.gmra.mxu0 %v2519
    %v11018 = vpop.f32.mrf.mxu0
    %v11019 = vadd.f32 %v11006, %v11018
    %v11020 = vpop.f32.mrf.mxu0
    %11021 = vdwg.mxu0
    %11022 = vmatpush.bf16.msra.mxu0 %v8205
    %11023 = vmatpush.bf16.msra.mxu0 %v8204
    %11024 = vmatpush.bf16.msra.mxu0 %v8203
    %11025 = vmatpush.bf16.msra.mxu0 %v8202
    %11026 = vmatpush.bf16.msra.mxu0 %v8201
    %11027 = vmatpush.bf16.msra.mxu0 %v8200
    %11028 = vmatpush.bf16.msra.mxu0 %v8199
    %11029 = vmatpush.bf16.msra.mxu0 %v8198
    %11030 = vmatmul.bf16.gmra.mxu0 %v2520
    %v11031 = vpop.f32.mrf.mxu0
    %v11032 = vadd.f32 %v11019, %v11031
    %v11033 = vpop.f32.mrf.mxu0
    %11034 = vdwg.mxu0
    %11035 = vmatpush.bf16.msra.mxu0 %v8213
    %11036 = vmatpush.bf16.msra.mxu0 %v8212
    %11037 = vmatpush.bf16.msra.mxu0 %v8211
    %11038 = vmatpush.bf16.msra.mxu0 %v8210
    %11039 = vmatpush.bf16.msra.mxu0 %v8209
    %11040 = vmatpush.bf16.msra.mxu0 %v8208
    %11041 = vmatpush.bf16.msra.mxu0 %v8207
    %11042 = vmatpush.bf16.msra.mxu0 %v8206
    %11043 = vmatmul.bf16.gmra.mxu0 %v2521
    %v11044 = vpop.f32.mrf.mxu0
    %v11045 = vadd.f32 %v11032, %v11044
    %v11046 = vpop.f32.mrf.mxu0
    %11047 = vdwg.mxu0
    %11048 = vmatpush.bf16.msra.mxu0 %v8221
    %11049 = vmatpush.bf16.msra.mxu0 %v8220
    %11050 = vmatpush.bf16.msra.mxu0 %v8219
    %11051 = vmatpush.bf16.msra.mxu0 %v8218
    %11052 = vmatpush.bf16.msra.mxu0 %v8217
    %11053 = vmatpush.bf16.msra.mxu0 %v8216
    %11054 = vmatpush.bf16.msra.mxu0 %v8215
    %11055 = vmatpush.bf16.msra.mxu0 %v8214
    %11056 = vmatmul.bf16.gmra.mxu0 %v2522
    %v11057 = vpop.f32.mrf.mxu0
    %v11058 = vadd.f32 %v11045, %v11057
    %v11059 = vpop.f32.mrf.mxu0
    %11060 = vdwg.mxu0
    %11061 = vmatpush.bf16.msra.mxu0 %v8229
    %11062 = vmatpush.bf16.msra.mxu0 %v8228
    %11063 = vmatpush.bf16.msra.mxu0 %v8227
    %11064 = vmatpush.bf16.msra.mxu0 %v8226
    %11065 = vmatpush.bf16.msra.mxu0 %v8225
    %11066 = vmatpush.bf16.msra.mxu0 %v8224
    %11067 = vmatpush.bf16.msra.mxu0 %v8223
    %11068 = vmatpush.bf16.msra.mxu0 %v8222
    %11069 = vmatmul.bf16.gmra.mxu0 %v2523
    %v11070 = vpop.f32.mrf.mxu0
    %v11071 = vadd.f32 %v11058, %v11070
    %v11072 = vpop.f32.mrf.mxu0
    %11073 = vdwg.mxu0
    %11074 = vmatpush.bf16.msra.mxu0 %v8237
    %11075 = vmatpush.bf16.msra.mxu0 %v8236
    %11076 = vmatpush.bf16.msra.mxu0 %v8235
    %11077 = vmatpush.bf16.msra.mxu0 %v8234
    %11078 = vmatpush.bf16.msra.mxu0 %v8233
    %11079 = vmatpush.bf16.msra.mxu0 %v8232
    %11080 = vmatpush.bf16.msra.mxu0 %v8231
    %11081 = vmatpush.bf16.msra.mxu0 %v8230
    %11082 = vmatmul.bf16.gmra.mxu0 %v2524
    %v11083 = vpop.f32.mrf.mxu0
    %v11084 = vadd.f32 %v11071, %v11083
    %v11085 = vpop.f32.mrf.mxu0
    %11086 = vdwg.mxu0
    %11087 = vmatpush.bf16.msra.mxu0 %v8245
    %11088 = vmatpush.bf16.msra.mxu0 %v8244
    %11089 = vmatpush.bf16.msra.mxu0 %v8243
    %11090 = vmatpush.bf16.msra.mxu0 %v8242
    %11091 = vmatpush.bf16.msra.mxu0 %v8241
    %11092 = vmatpush.bf16.msra.mxu0 %v8240
    %11093 = vmatpush.bf16.msra.mxu0 %v8239
    %11094 = vmatpush.bf16.msra.mxu0 %v8238
    %11095 = vmatmul.bf16.gmra.mxu0 %v2527
    %v11096 = vpop.f32.mrf.mxu0
    %v11097 = vadd.f32 %v11084, %v11096
    %v11098 = vpop.f32.mrf.mxu0
    %11099 = vdwg.mxu0
    %11100 = vmatpush.bf16.msra.mxu0 %v8253
    %11101 = vmatpush.bf16.msra.mxu0 %v8252
    %11102 = vmatpush.bf16.msra.mxu0 %v8251
    %11103 = vmatpush.bf16.msra.mxu0 %v8250
    %11104 = vmatpush.bf16.msra.mxu0 %v8249
    %11105 = vmatpush.bf16.msra.mxu0 %v8248
    %11106 = vmatpush.bf16.msra.mxu0 %v8247
    %11107 = vmatpush.bf16.msra.mxu0 %v8246
    %11108 = vmatmul.bf16.gmra.mxu0 %v2528
    %v11109 = vpop.f32.mrf.mxu0
    %v11110 = vadd.f32 %v11097, %v11109
    %v11111 = vpop.f32.mrf.mxu0
    %11112 = vdwg.mxu0
    %11113 = vmatpush.bf16.msra.mxu0 %v8261
    %11114 = vmatpush.bf16.msra.mxu0 %v8260
    %11115 = vmatpush.bf16.msra.mxu0 %v8259
    %11116 = vmatpush.bf16.msra.mxu0 %v8258
    %11117 = vmatpush.bf16.msra.mxu0 %v8257
    %11118 = vmatpush.bf16.msra.mxu0 %v8256
    %11119 = vmatpush.bf16.msra.mxu0 %v8255
    %11120 = vmatpush.bf16.msra.mxu0 %v8254
    %11121 = vmatmul.bf16.gmra.mxu0 %v2529
    %v11122 = vpop.f32.mrf.mxu0
    %v11123 = vadd.f32 %v11110, %v11122
    %v11124 = vpop.f32.mrf.mxu0
    %11125 = vdwg.mxu0
    %11126 = vmatpush.bf16.msra.mxu0 %v8269
    %11127 = vmatpush.bf16.msra.mxu0 %v8268
    %11128 = vmatpush.bf16.msra.mxu0 %v8267
    %11129 = vmatpush.bf16.msra.mxu0 %v8266
    %11130 = vmatpush.bf16.msra.mxu0 %v8265
    %11131 = vmatpush.bf16.msra.mxu0 %v8264
    %11132 = vmatpush.bf16.msra.mxu0 %v8263
    %11133 = vmatpush.bf16.msra.mxu0 %v8262
    %11134 = vmatmul.bf16.gmra.mxu0 %v2530
    %v11135 = vpop.f32.mrf.mxu0
    %v11136 = vadd.f32 %v11123, %v11135
    %v11137 = vpop.f32.mrf.mxu0
    %11138 = vdwg.mxu0
    %11139 = vmatpush.bf16.msra.mxu0 %v8277
    %11140 = vmatpush.bf16.msra.mxu0 %v8276
    %11141 = vmatpush.bf16.msra.mxu0 %v8275
    %11142 = vmatpush.bf16.msra.mxu0 %v8274
    %11143 = vmatpush.bf16.msra.mxu0 %v8273
    %11144 = vmatpush.bf16.msra.mxu0 %v8272
    %11145 = vmatpush.bf16.msra.mxu0 %v8271
    %11146 = vmatpush.bf16.msra.mxu0 %v8270
    %11147 = vmatmul.bf16.gmra.mxu0 %v2531
    %v11148 = vpop.f32.mrf.mxu0
    %v11149 = vadd.f32 %v11136, %v11148
    %v11150 = vpop.f32.mrf.mxu0
    %11151 = vdwg.mxu0
    %11152 = vmatpush.bf16.msra.mxu0 %v8285
    %11153 = vmatpush.bf16.msra.mxu0 %v8284
    %11154 = vmatpush.bf16.msra.mxu0 %v8283
    %11155 = vmatpush.bf16.msra.mxu0 %v8282
    %11156 = vmatpush.bf16.msra.mxu0 %v8281
    %11157 = vmatpush.bf16.msra.mxu0 %v8280
    %11158 = vmatpush.bf16.msra.mxu0 %v8279
    %11159 = vmatpush.bf16.msra.mxu0 %v8278
    %11160 = vmatmul.bf16.gmra.mxu0 %v2532
    %v11161 = vpop.f32.mrf.mxu0
    %v11162 = vadd.f32 %v11149, %v11161
    %v11163 = vpop.f32.mrf.mxu0
    %11164 = vdwg.mxu0
    %11165 = vmatpush.bf16.msra.mxu0 %v8293
    %11166 = vmatpush.bf16.msra.mxu0 %v8292
    %11167 = vmatpush.bf16.msra.mxu0 %v8291
    %11168 = vmatpush.bf16.msra.mxu0 %v8290
    %11169 = vmatpush.bf16.msra.mxu0 %v8289
    %11170 = vmatpush.bf16.msra.mxu0 %v8288
    %11171 = vmatpush.bf16.msra.mxu0 %v8287
    %11172 = vmatpush.bf16.msra.mxu0 %v8286
    %11173 = vmatmul.bf16.gmra.mxu0 %v2533
    %v11174 = vpop.f32.mrf.mxu0
    %v11175 = vadd.f32 %v11162, %v11174
    %v11176 = vpop.f32.mrf.mxu0
    %11177 = vdwg.mxu0
    %11178 = vmatpush.bf16.msra.mxu0 %v8301
    %11179 = vmatpush.bf16.msra.mxu0 %v8300
    %11180 = vmatpush.bf16.msra.mxu0 %v8299
    %11181 = vmatpush.bf16.msra.mxu0 %v8298
    %11182 = vmatpush.bf16.msra.mxu0 %v8297
    %11183 = vmatpush.bf16.msra.mxu0 %v8296
    %11184 = vmatpush.bf16.msra.mxu0 %v8295
    %11185 = vmatpush.bf16.msra.mxu0 %v8294
    %11186 = vmatmul.bf16.gmra.mxu0 %v2534
    %v11187 = vpop.f32.mrf.mxu0
    %v11188 = vadd.f32 %v11175, %v11187
    %v11189 = vpop.f32.mrf.mxu0
    %11190 = vdwg.mxu0
    %11191 = vmatpush.bf16.msra.mxu0 %v8309
    %11192 = vmatpush.bf16.msra.mxu0 %v8308
    %11193 = vmatpush.bf16.msra.mxu0 %v8307
    %11194 = vmatpush.bf16.msra.mxu0 %v8306
    %11195 = vmatpush.bf16.msra.mxu0 %v8305
    %11196 = vmatpush.bf16.msra.mxu0 %v8304
    %11197 = vmatpush.bf16.msra.mxu0 %v8303
    %11198 = vmatpush.bf16.msra.mxu0 %v8302
    %11199 = vmatmul.bf16.gmra.mxu0 %v2537
    %v11200 = vpop.f32.mrf.mxu0
    %v11201 = vadd.f32 %v11188, %v11200
    %v11202 = vpop.f32.mrf.mxu0
    %11203 = vdwg.mxu0
    %11204 = vmatpush.bf16.msra.mxu0 %v8317
    %11205 = vmatpush.bf16.msra.mxu0 %v8316
    %11206 = vmatpush.bf16.msra.mxu0 %v8315
    %11207 = vmatpush.bf16.msra.mxu0 %v8314
    %11208 = vmatpush.bf16.msra.mxu0 %v8313
    %11209 = vmatpush.bf16.msra.mxu0 %v8312
    %11210 = vmatpush.bf16.msra.mxu0 %v8311
    %11211 = vmatpush.bf16.msra.mxu0 %v8310
    %11212 = vmatmul.bf16.gmra.mxu0 %v2538
    %v11213 = vpop.f32.mrf.mxu0
    %v11214 = vadd.f32 %v11201, %v11213
    %v11215 = vpop.f32.mrf.mxu0
    %11216 = vdwg.mxu0
    %11217 = vmatpush.bf16.msra.mxu0 %v8325
    %11218 = vmatpush.bf16.msra.mxu0 %v8324
    %11219 = vmatpush.bf16.msra.mxu0 %v8323
    %11220 = vmatpush.bf16.msra.mxu0 %v8322
    %11221 = vmatpush.bf16.msra.mxu0 %v8321
    %11222 = vmatpush.bf16.msra.mxu0 %v8320
    %11223 = vmatpush.bf16.msra.mxu0 %v8319
    %11224 = vmatpush.bf16.msra.mxu0 %v8318
    %11225 = vmatmul.bf16.gmra.mxu0 %v2539
    %v11226 = vpop.f32.mrf.mxu0
    %v11227 = vadd.f32 %v11214, %v11226
    %v11228 = vpop.f32.mrf.mxu0
    %11229 = vdwg.mxu0
    %11230 = vmatpush.bf16.msra.mxu0 %v8333
    %11231 = vmatpush.bf16.msra.mxu0 %v8332
    %11232 = vmatpush.bf16.msra.mxu0 %v8331
    %11233 = vmatpush.bf16.msra.mxu0 %v8330
    %11234 = vmatpush.bf16.msra.mxu0 %v8329
    %11235 = vmatpush.bf16.msra.mxu0 %v8328
    %11236 = vmatpush.bf16.msra.mxu0 %v8327
    %11237 = vmatpush.bf16.msra.mxu0 %v8326
    %11238 = vmatmul.bf16.gmra.mxu0 %v2540
    %v11239 = vpop.f32.mrf.mxu0
    %v11240 = vadd.f32 %v11227, %v11239
    %v11241 = vpop.f32.mrf.mxu0
    %11242 = vdwg.mxu0
    %11243 = vmatpush.bf16.msra.mxu0 %v8341
    %11244 = vmatpush.bf16.msra.mxu0 %v8340
    %11245 = vmatpush.bf16.msra.mxu0 %v8339
    %11246 = vmatpush.bf16.msra.mxu0 %v8338
    %11247 = vmatpush.bf16.msra.mxu0 %v8337
    %11248 = vmatpush.bf16.msra.mxu0 %v8336
    %11249 = vmatpush.bf16.msra.mxu0 %v8335
    %11250 = vmatpush.bf16.msra.mxu0 %v8334
    %11251 = vmatmul.bf16.gmra.mxu0 %v2541
    %v11252 = vpop.f32.mrf.mxu0
    %v11253 = vadd.f32 %v11240, %v11252
    %v11254 = vpop.f32.mrf.mxu0
    %11255 = vdwg.mxu0
    %11256 = vmatpush.bf16.msra.mxu0 %v8349
    %11257 = vmatpush.bf16.msra.mxu0 %v8348
    %11258 = vmatpush.bf16.msra.mxu0 %v8347
    %11259 = vmatpush.bf16.msra.mxu0 %v8346
    %11260 = vmatpush.bf16.msra.mxu0 %v8345
    %11261 = vmatpush.bf16.msra.mxu0 %v8344
    %11262 = vmatpush.bf16.msra.mxu0 %v8343
    %11263 = vmatpush.bf16.msra.mxu0 %v8342
    %11264 = vmatmul.bf16.gmra.mxu0 %v2542
    %v11265 = vpop.f32.mrf.mxu0
    %v11266 = vadd.f32 %v11253, %v11265
    %v11267 = vpop.f32.mrf.mxu0
    %11268 = vdwg.mxu0
    %11269 = vmatpush.bf16.msra.mxu0 %v8357
    %11270 = vmatpush.bf16.msra.mxu0 %v8356
    %11271 = vmatpush.bf16.msra.mxu0 %v8355
    %11272 = vmatpush.bf16.msra.mxu0 %v8354
    %11273 = vmatpush.bf16.msra.mxu0 %v8353
    %11274 = vmatpush.bf16.msra.mxu0 %v8352
    %11275 = vmatpush.bf16.msra.mxu0 %v8351
    %11276 = vmatpush.bf16.msra.mxu0 %v8350
    %11277 = vmatmul.bf16.gmra.mxu0 %v2543
    %v11278 = vpop.f32.mrf.mxu0
    %v11279 = vadd.f32 %v11266, %v11278
    %v11280 = vpop.f32.mrf.mxu0
    %11281 = vdwg.mxu0
    %11282 = vmatpush.bf16.msra.mxu0 %v8365
    %11283 = vmatpush.bf16.msra.mxu0 %v8364
    %11284 = vmatpush.bf16.msra.mxu0 %v8363
    %11285 = vmatpush.bf16.msra.mxu0 %v8362
    %11286 = vmatpush.bf16.msra.mxu0 %v8361
    %11287 = vmatpush.bf16.msra.mxu0 %v8360
    %11288 = vmatpush.bf16.msra.mxu0 %v8359
    %11289 = vmatpush.bf16.msra.mxu0 %v8358
    %11290 = vmatmul.bf16.gmra.mxu0 %v2544
    %v11291 = vpop.f32.mrf.mxu0
    %v11292 = vadd.f32 %v11279, %v11291
    %v11293 = vpop.f32.mrf.mxu0
    %11294 = vdwg.mxu0
    %11295 = vmatpush.bf16.msra.mxu0 %v8373
    %11296 = vmatpush.bf16.msra.mxu0 %v8372
    %11297 = vmatpush.bf16.msra.mxu0 %v8371
    %11298 = vmatpush.bf16.msra.mxu0 %v8370
    %11299 = vmatpush.bf16.msra.mxu0 %v8369
    %11300 = vmatpush.bf16.msra.mxu0 %v8368
    %11301 = vmatpush.bf16.msra.mxu0 %v8367
    %11302 = vmatpush.bf16.msra.mxu0 %v8366
    %11303 = vmatmul.bf16.gmra.mxu0 %v2547
    %v11304 = vpop.f32.mrf.mxu0
    %v11305 = vadd.f32 %v11292, %v11304
    %v11306 = vpop.f32.mrf.mxu0
    %11307 = vdwg.mxu0
    %11308 = vmatpush.bf16.msra.mxu0 %v8381
    %11309 = vmatpush.bf16.msra.mxu0 %v8380
    %11310 = vmatpush.bf16.msra.mxu0 %v8379
    %11311 = vmatpush.bf16.msra.mxu0 %v8378
    %11312 = vmatpush.bf16.msra.mxu0 %v8377
    %11313 = vmatpush.bf16.msra.mxu0 %v8376
    %11314 = vmatpush.bf16.msra.mxu0 %v8375
    %11315 = vmatpush.bf16.msra.mxu0 %v8374
    %11316 = vmatmul.bf16.gmra.mxu0 %v2548
    %v11317 = vpop.f32.mrf.mxu0
    %v11318 = vadd.f32 %v11305, %v11317
    %v11319 = vpop.f32.mrf.mxu0
    %11320 = vdwg.mxu0
    %11321 = vmatpush.bf16.msra.mxu0 %v8389
    %11322 = vmatpush.bf16.msra.mxu0 %v8388
    %11323 = vmatpush.bf16.msra.mxu0 %v8387
    %11324 = vmatpush.bf16.msra.mxu0 %v8386
    %11325 = vmatpush.bf16.msra.mxu0 %v8385
    %11326 = vmatpush.bf16.msra.mxu0 %v8384
    %11327 = vmatpush.bf16.msra.mxu0 %v8383
    %11328 = vmatpush.bf16.msra.mxu0 %v8382
    %11329 = vmatmul.bf16.gmra.mxu0 %v2549
    %v11330 = vpop.f32.mrf.mxu0
    %v11331 = vadd.f32 %v11318, %v11330
    %v11332 = vpop.f32.mrf.mxu0
    %11333 = vdwg.mxu0
    %11334 = vmatpush.bf16.msra.mxu0 %v8397
    %11335 = vmatpush.bf16.msra.mxu0 %v8396
    %11336 = vmatpush.bf16.msra.mxu0 %v8395
    %11337 = vmatpush.bf16.msra.mxu0 %v8394
    %11338 = vmatpush.bf16.msra.mxu0 %v8393
    %11339 = vmatpush.bf16.msra.mxu0 %v8392
    %11340 = vmatpush.bf16.msra.mxu0 %v8391
    %11341 = vmatpush.bf16.msra.mxu0 %v8390
    %11342 = vmatmul.bf16.gmra.mxu0 %v2550
    %v11343 = vpop.f32.mrf.mxu0
    %v11344 = vadd.f32 %v11331, %v11343
    %v11345 = vpop.f32.mrf.mxu0
    %11346 = vdwg.mxu0
    %11347 = vmatpush.bf16.msra.mxu0 %v8405
    %11348 = vmatpush.bf16.msra.mxu0 %v8404
    %11349 = vmatpush.bf16.msra.mxu0 %v8403
    %11350 = vmatpush.bf16.msra.mxu0 %v8402
    %11351 = vmatpush.bf16.msra.mxu0 %v8401
    %11352 = vmatpush.bf16.msra.mxu0 %v8400
    %11353 = vmatpush.bf16.msra.mxu0 %v8399
    %11354 = vmatpush.bf16.msra.mxu0 %v8398
    %11355 = vmatmul.bf16.gmra.mxu0 %v2551
    %v11356 = vpop.f32.mrf.mxu0
    %v11357 = vadd.f32 %v11344, %v11356
    %v11358 = vpop.f32.mrf.mxu0
    %11359 = vdwg.mxu0
    %11360 = vmatpush.bf16.msra.mxu0 %v8413
    %11361 = vmatpush.bf16.msra.mxu0 %v8412
    %11362 = vmatpush.bf16.msra.mxu0 %v8411
    %11363 = vmatpush.bf16.msra.mxu0 %v8410
    %11364 = vmatpush.bf16.msra.mxu0 %v8409
    %11365 = vmatpush.bf16.msra.mxu0 %v8408
    %11366 = vmatpush.bf16.msra.mxu0 %v8407
    %11367 = vmatpush.bf16.msra.mxu0 %v8406
    %11368 = vmatmul.bf16.gmra.mxu0 %v2552
    %v11369 = vpop.f32.mrf.mxu0
    %v11370 = vadd.f32 %v11357, %v11369
    %v11371 = vpop.f32.mrf.mxu0
    %11372 = vdwg.mxu0
    %11373 = vmatpush.bf16.msra.mxu0 %v8421
    %11374 = vmatpush.bf16.msra.mxu0 %v8420
    %11375 = vmatpush.bf16.msra.mxu0 %v8419
    %11376 = vmatpush.bf16.msra.mxu0 %v8418
    %11377 = vmatpush.bf16.msra.mxu0 %v8417
    %11378 = vmatpush.bf16.msra.mxu0 %v8416
    %11379 = vmatpush.bf16.msra.mxu0 %v8415
    %11380 = vmatpush.bf16.msra.mxu0 %v8414
    %11381 = vmatmul.bf16.gmra.mxu0 %v2553
    %v11382 = vpop.f32.mrf.mxu0
    %v11383 = vadd.f32 %v11370, %v11382
    %v11384 = vpop.f32.mrf.mxu0
    %11385 = vdwg.mxu0
    %11386 = vmatpush.bf16.msra.mxu0 %v8429
    %11387 = vmatpush.bf16.msra.mxu0 %v8428
    %11388 = vmatpush.bf16.msra.mxu0 %v8427
    %11389 = vmatpush.bf16.msra.mxu0 %v8426
    %11390 = vmatpush.bf16.msra.mxu0 %v8425
    %11391 = vmatpush.bf16.msra.mxu0 %v8424
    %11392 = vmatpush.bf16.msra.mxu0 %v8423
    %11393 = vmatpush.bf16.msra.mxu0 %v8422
    %11394 = vmatmul.bf16.gmra.mxu0 %v2554
    %v11395 = vpop.f32.mrf.mxu0
    %v11396 = vadd.f32 %v11383, %v11395
    %v11397 = vpop.f32.mrf.mxu0
    %11398 = vdwg.mxu0
    %11399 = vmatpush.bf16.msra.mxu0 %v8437
    %11400 = vmatpush.bf16.msra.mxu0 %v8436
    %11401 = vmatpush.bf16.msra.mxu0 %v8435
    %11402 = vmatpush.bf16.msra.mxu0 %v8434
    %11403 = vmatpush.bf16.msra.mxu0 %v8433
    %11404 = vmatpush.bf16.msra.mxu0 %v8432
    %11405 = vmatpush.bf16.msra.mxu0 %v8431
    %11406 = vmatpush.bf16.msra.mxu0 %v8430
    %11407 = vmatmul.bf16.gmra.mxu0 %v2557
    %v11408 = vpop.f32.mrf.mxu0
    %v11409 = vadd.f32 %v11396, %v11408
    %v11410 = vpop.f32.mrf.mxu0
    %11411 = vdwg.mxu0
    %11412 = vmatpush.bf16.msra.mxu0 %v8445
    %11413 = vmatpush.bf16.msra.mxu0 %v8444
    %11414 = vmatpush.bf16.msra.mxu0 %v8443
    %11415 = vmatpush.bf16.msra.mxu0 %v8442
    %11416 = vmatpush.bf16.msra.mxu0 %v8441
    %11417 = vmatpush.bf16.msra.mxu0 %v8440
    %11418 = vmatpush.bf16.msra.mxu0 %v8439
    %11419 = vmatpush.bf16.msra.mxu0 %v8438
    %11420 = vmatmul.bf16.gmra.mxu0 %v2558
    %v11421 = vpop.f32.mrf.mxu0
    %v11422 = vadd.f32 %v11409, %v11421
    %v11423 = vpop.f32.mrf.mxu0
    %11424 = vdwg.mxu0
    %11425 = vmatpush.bf16.msra.mxu0 %v8453
    %11426 = vmatpush.bf16.msra.mxu0 %v8452
    %11427 = vmatpush.bf16.msra.mxu0 %v8451
    %11428 = vmatpush.bf16.msra.mxu0 %v8450
    %11429 = vmatpush.bf16.msra.mxu0 %v8449
    %11430 = vmatpush.bf16.msra.mxu0 %v8448
    %11431 = vmatpush.bf16.msra.mxu0 %v8447
    %11432 = vmatpush.bf16.msra.mxu0 %v8446
    %11433 = vmatmul.bf16.gmra.mxu0 %v2559
    %v11434 = vpop.f32.mrf.mxu0
    %v11435 = vadd.f32 %v11422, %v11434
    %v11436 = vpop.f32.mrf.mxu0
    %11437 = vdwg.mxu0
    %11438 = vmatpush.bf16.msra.mxu0 %v8461
    %11439 = vmatpush.bf16.msra.mxu0 %v8460
    %11440 = vmatpush.bf16.msra.mxu0 %v8459
    %11441 = vmatpush.bf16.msra.mxu0 %v8458
    %11442 = vmatpush.bf16.msra.mxu0 %v8457
    %11443 = vmatpush.bf16.msra.mxu0 %v8456
    %11444 = vmatpush.bf16.msra.mxu0 %v8455
    %11445 = vmatpush.bf16.msra.mxu0 %v8454
    %11446 = vmatmul.bf16.gmra.mxu0 %v2560
    %v11447 = vpop.f32.mrf.mxu0
    %v11448 = vadd.f32 %v11435, %v11447
    %v11449 = vpop.f32.mrf.mxu0
    %11450 = vdwg.mxu0
    %11451 = vmatpush.bf16.msra.mxu0 %v8469
    %11452 = vmatpush.bf16.msra.mxu0 %v8468
    %11453 = vmatpush.bf16.msra.mxu0 %v8467
    %11454 = vmatpush.bf16.msra.mxu0 %v8466
    %11455 = vmatpush.bf16.msra.mxu0 %v8465
    %11456 = vmatpush.bf16.msra.mxu0 %v8464
    %11457 = vmatpush.bf16.msra.mxu0 %v8463
    %11458 = vmatpush.bf16.msra.mxu0 %v8462
    %11459 = vmatmul.bf16.gmra.mxu0 %v2561
    %v11460 = vpop.f32.mrf.mxu0
    %v11461 = vadd.f32 %v11448, %v11460
    %v11462 = vpop.f32.mrf.mxu0
    %11463 = vdwg.mxu0
    %11464 = vmatpush.bf16.msra.mxu0 %v8477
    %11465 = vmatpush.bf16.msra.mxu0 %v8476
    %11466 = vmatpush.bf16.msra.mxu0 %v8475
    %11467 = vmatpush.bf16.msra.mxu0 %v8474
    %11468 = vmatpush.bf16.msra.mxu0 %v8473
    %11469 = vmatpush.bf16.msra.mxu0 %v8472
    %11470 = vmatpush.bf16.msra.mxu0 %v8471
    %11471 = vmatpush.bf16.msra.mxu0 %v8470
    %11472 = vmatmul.bf16.gmra.mxu0 %v2562
    %v11473 = vpop.f32.mrf.mxu0
    %v11474 = vadd.f32 %v11461, %v11473
    %v11475 = vpop.f32.mrf.mxu0
    %11476 = vdwg.mxu0
    %11477 = vmatpush.bf16.msra.mxu0 %v8485
    %11478 = vmatpush.bf16.msra.mxu0 %v8484
    %11479 = vmatpush.bf16.msra.mxu0 %v8483
    %11480 = vmatpush.bf16.msra.mxu0 %v8482
    %11481 = vmatpush.bf16.msra.mxu0 %v8481
    %11482 = vmatpush.bf16.msra.mxu0 %v8480
    %11483 = vmatpush.bf16.msra.mxu0 %v8479
    %11484 = vmatpush.bf16.msra.mxu0 %v8478
    %11485 = vmatmul.bf16.gmra.mxu0 %v2563
    %v11486 = vpop.f32.mrf.mxu0
    %v11487 = vadd.f32 %v11474, %v11486
    %v11488 = vpop.f32.mrf.mxu0
    %11489 = vdwg.mxu0
    %11490 = vmatpush.bf16.msra.mxu0 %v8493
    %11491 = vmatpush.bf16.msra.mxu0 %v8492
    %11492 = vmatpush.bf16.msra.mxu0 %v8491
    %11493 = vmatpush.bf16.msra.mxu0 %v8490
    %11494 = vmatpush.bf16.msra.mxu0 %v8489
    %11495 = vmatpush.bf16.msra.mxu0 %v8488
    %11496 = vmatpush.bf16.msra.mxu0 %v8487
    %11497 = vmatpush.bf16.msra.mxu0 %v8486
    %11498 = vmatmul.bf16.gmra.mxu0 %v2564
    %v11499 = vpop.f32.mrf.mxu0
    %v11500 = vadd.f32 %v11487, %v11499
    %v11501 = vpop.f32.mrf.mxu0
    %11502 = vdwg.mxu0
    %11503 = vmatpush.bf16.msra.mxu0 %v8501
    %11504 = vmatpush.bf16.msra.mxu0 %v8500
    %11505 = vmatpush.bf16.msra.mxu0 %v8499
    %11506 = vmatpush.bf16.msra.mxu0 %v8498
    %11507 = vmatpush.bf16.msra.mxu0 %v8497
    %11508 = vmatpush.bf16.msra.mxu0 %v8496
    %11509 = vmatpush.bf16.msra.mxu0 %v8495
    %11510 = vmatpush.bf16.msra.mxu0 %v8494
    %11511 = vmatmul.bf16.gmra.mxu0 %v2567
    %v11512 = vpop.f32.mrf.mxu0
    %v11513 = vadd.f32 %v11500, %v11512
    %v11514 = vpop.f32.mrf.mxu0
    %11515 = vdwg.mxu0
    %11516 = vmatpush.bf16.msra.mxu0 %v8509
    %11517 = vmatpush.bf16.msra.mxu0 %v8508
    %11518 = vmatpush.bf16.msra.mxu0 %v8507
    %11519 = vmatpush.bf16.msra.mxu0 %v8506
    %11520 = vmatpush.bf16.msra.mxu0 %v8505
    %11521 = vmatpush.bf16.msra.mxu0 %v8504
    %11522 = vmatpush.bf16.msra.mxu0 %v8503
    %11523 = vmatpush.bf16.msra.mxu0 %v8502
    %11524 = vmatmul.bf16.gmra.mxu0 %v2568
    %v11525 = vpop.f32.mrf.mxu0
    %v11526 = vadd.f32 %v11513, %v11525
    %v11527 = vpop.f32.mrf.mxu0
    %11528 = vdwg.mxu0
    %11529 = vmatpush.bf16.msra.mxu0 %v8517
    %11530 = vmatpush.bf16.msra.mxu0 %v8516
    %11531 = vmatpush.bf16.msra.mxu0 %v8515
    %11532 = vmatpush.bf16.msra.mxu0 %v8514
    %11533 = vmatpush.bf16.msra.mxu0 %v8513
    %11534 = vmatpush.bf16.msra.mxu0 %v8512
    %11535 = vmatpush.bf16.msra.mxu0 %v8511
    %11536 = vmatpush.bf16.msra.mxu0 %v8510
    %11537 = vmatmul.bf16.gmra.mxu0 %v2569
    %v11538 = vpop.f32.mrf.mxu0
    %v11539 = vadd.f32 %v11526, %v11538
    %v11540 = vpop.f32.mrf.mxu0
    %11541 = vdwg.mxu0
    %11542 = vmatpush.bf16.msra.mxu0 %v8525
    %11543 = vmatpush.bf16.msra.mxu0 %v8524
    %11544 = vmatpush.bf16.msra.mxu0 %v8523
    %11545 = vmatpush.bf16.msra.mxu0 %v8522
    %11546 = vmatpush.bf16.msra.mxu0 %v8521
    %11547 = vmatpush.bf16.msra.mxu0 %v8520
    %11548 = vmatpush.bf16.msra.mxu0 %v8519
    %11549 = vmatpush.bf16.msra.mxu0 %v8518
    %11550 = vmatmul.bf16.gmra.mxu0 %v2570
    %v11551 = vpop.f32.mrf.mxu0
    %v11552 = vadd.f32 %v11539, %v11551
    %v11553 = vpop.f32.mrf.mxu0
    %11554 = vdwg.mxu0
    %11555 = vmatpush.bf16.msra.mxu0 %v8533
    %11556 = vmatpush.bf16.msra.mxu0 %v8532
    %11557 = vmatpush.bf16.msra.mxu0 %v8531
    %11558 = vmatpush.bf16.msra.mxu0 %v8530
    %11559 = vmatpush.bf16.msra.mxu0 %v8529
    %11560 = vmatpush.bf16.msra.mxu0 %v8528
    %11561 = vmatpush.bf16.msra.mxu0 %v8527
    %11562 = vmatpush.bf16.msra.mxu0 %v8526
    %11563 = vmatmul.bf16.gmra.mxu0 %v2571
    %v11564 = vpop.f32.mrf.mxu0
    %v11565 = vadd.f32 %v11552, %v11564
    %v11566 = vpop.f32.mrf.mxu0
    %11567 = vdwg.mxu0
    %11568 = vmatpush.bf16.msra.mxu0 %v8541
    %11569 = vmatpush.bf16.msra.mxu0 %v8540
    %11570 = vmatpush.bf16.msra.mxu0 %v8539
    %11571 = vmatpush.bf16.msra.mxu0 %v8538
    %11572 = vmatpush.bf16.msra.mxu0 %v8537
    %11573 = vmatpush.bf16.msra.mxu0 %v8536
    %11574 = vmatpush.bf16.msra.mxu0 %v8535
    %11575 = vmatpush.bf16.msra.mxu0 %v8534
    %11576 = vmatmul.bf16.gmra.mxu0 %v2572
    %v11577 = vpop.f32.mrf.mxu0
    %v11578 = vadd.f32 %v11565, %v11577
    %v11579 = vpop.f32.mrf.mxu0
    %11580 = vdwg.mxu0
    %11581 = vmatpush.bf16.msra.mxu0 %v8549
    %11582 = vmatpush.bf16.msra.mxu0 %v8548
    %11583 = vmatpush.bf16.msra.mxu0 %v8547
    %11584 = vmatpush.bf16.msra.mxu0 %v8546
    %11585 = vmatpush.bf16.msra.mxu0 %v8545
    %11586 = vmatpush.bf16.msra.mxu0 %v8544
    %11587 = vmatpush.bf16.msra.mxu0 %v8543
    %11588 = vmatpush.bf16.msra.mxu0 %v8542
    %11589 = vmatmul.bf16.gmra.mxu0 %v2573
    %v11590 = vpop.f32.mrf.mxu0
    %v11591 = vadd.f32 %v11578, %v11590
    %v11592 = vpop.f32.mrf.mxu0
    %11593 = vdwg.mxu0
    %11594 = vmatpush.bf16.msra.mxu0 %v8557
    %11595 = vmatpush.bf16.msra.mxu0 %v8556
    %11596 = vmatpush.bf16.msra.mxu0 %v8555
    %11597 = vmatpush.bf16.msra.mxu0 %v8554
    %11598 = vmatpush.bf16.msra.mxu0 %v8553
    %11599 = vmatpush.bf16.msra.mxu0 %v8552
    %11600 = vmatpush.bf16.msra.mxu0 %v8551
    %11601 = vmatpush.bf16.msra.mxu0 %v8550
    %11602 = vmatmul.bf16.gmra.mxu0 %v2574
    %v11603 = vpop.f32.mrf.mxu0
    %v11604 = vadd.f32 %v11591, %v11603
    %v11605 = vpop.f32.mrf.mxu0
    %11606 = vdwg.mxu0
    %11607 = vmatpush.bf16.msra.mxu0 %v8565
    %11608 = vmatpush.bf16.msra.mxu0 %v8564
    %11609 = vmatpush.bf16.msra.mxu0 %v8563
    %11610 = vmatpush.bf16.msra.mxu0 %v8562
    %11611 = vmatpush.bf16.msra.mxu0 %v8561
    %11612 = vmatpush.bf16.msra.mxu0 %v8560
    %11613 = vmatpush.bf16.msra.mxu0 %v8559
    %11614 = vmatpush.bf16.msra.mxu0 %v8558
    %11615 = vmatmul.bf16.gmra.mxu0 %v2577
    %v11616 = vpop.f32.mrf.mxu0
    %v11617 = vadd.f32 %v11604, %v11616
    %v11618 = vpop.f32.mrf.mxu0
    %11619 = vdwg.mxu0
    %11620 = vmatpush.bf16.msra.mxu0 %v8573
    %11621 = vmatpush.bf16.msra.mxu0 %v8572
    %11622 = vmatpush.bf16.msra.mxu0 %v8571
    %11623 = vmatpush.bf16.msra.mxu0 %v8570
    %11624 = vmatpush.bf16.msra.mxu0 %v8569
    %11625 = vmatpush.bf16.msra.mxu0 %v8568
    %11626 = vmatpush.bf16.msra.mxu0 %v8567
    %11627 = vmatpush.bf16.msra.mxu0 %v8566
    %11628 = vmatmul.bf16.gmra.mxu0 %v2578
    %v11629 = vpop.f32.mrf.mxu0
    %v11630 = vadd.f32 %v11617, %v11629
    %v11631 = vpop.f32.mrf.mxu0
    %11632 = vdwg.mxu0
    %11633 = vmatpush.bf16.msra.mxu0 %v8581
    %11634 = vmatpush.bf16.msra.mxu0 %v8580
    %11635 = vmatpush.bf16.msra.mxu0 %v8579
    %11636 = vmatpush.bf16.msra.mxu0 %v8578
    %11637 = vmatpush.bf16.msra.mxu0 %v8577
    %11638 = vmatpush.bf16.msra.mxu0 %v8576
    %11639 = vmatpush.bf16.msra.mxu0 %v8575
    %11640 = vmatpush.bf16.msra.mxu0 %v8574
    %11641 = vmatmul.bf16.gmra.mxu0 %v2579
    %v11642 = vpop.f32.mrf.mxu0
    %v11643 = vadd.f32 %v11630, %v11642
    %v11644 = vpop.f32.mrf.mxu0
    %11645 = vdwg.mxu0
    %11646 = vmatpush.bf16.msra.mxu0 %v8589
    %11647 = vmatpush.bf16.msra.mxu0 %v8588
    %11648 = vmatpush.bf16.msra.mxu0 %v8587
    %11649 = vmatpush.bf16.msra.mxu0 %v8586
    %11650 = vmatpush.bf16.msra.mxu0 %v8585
    %11651 = vmatpush.bf16.msra.mxu0 %v8584
    %11652 = vmatpush.bf16.msra.mxu0 %v8583
    %11653 = vmatpush.bf16.msra.mxu0 %v8582
    %11654 = vmatmul.bf16.gmra.mxu0 %v2580
    %v11655 = vpop.f32.mrf.mxu0
    %v11656 = vadd.f32 %v11643, %v11655
    %v11657 = vpop.f32.mrf.mxu0
    %11658 = vdwg.mxu0
    %11659 = vmatpush.bf16.msra.mxu0 %v8597
    %11660 = vmatpush.bf16.msra.mxu0 %v8596
    %11661 = vmatpush.bf16.msra.mxu0 %v8595
    %11662 = vmatpush.bf16.msra.mxu0 %v8594
    %11663 = vmatpush.bf16.msra.mxu0 %v8593
    %11664 = vmatpush.bf16.msra.mxu0 %v8592
    %11665 = vmatpush.bf16.msra.mxu0 %v8591
    %11666 = vmatpush.bf16.msra.mxu0 %v8590
    %11667 = vmatmul.bf16.gmra.mxu0 %v2581
    %v11668 = vpop.f32.mrf.mxu0
    %v11669 = vadd.f32 %v11656, %v11668
    %v11670 = vpop.f32.mrf.mxu0
    %11671 = vdwg.mxu0
    %11672 = vmatpush.bf16.msra.mxu0 %v8605
    %11673 = vmatpush.bf16.msra.mxu0 %v8604
    %11674 = vmatpush.bf16.msra.mxu0 %v8603
    %11675 = vmatpush.bf16.msra.mxu0 %v8602
    %11676 = vmatpush.bf16.msra.mxu0 %v8601
    %11677 = vmatpush.bf16.msra.mxu0 %v8600
    %11678 = vmatpush.bf16.msra.mxu0 %v8599
    %11679 = vmatpush.bf16.msra.mxu0 %v8598
    %11680 = vmatmul.bf16.gmra.mxu0 %v2582
    %v11681 = vpop.f32.mrf.mxu0
    %v11682 = vadd.f32 %v11669, %v11681
    %v11683 = vpop.f32.mrf.mxu0
    %11684 = vdwg.mxu0
    %11685 = vmatpush.bf16.msra.mxu0 %v8613
    %11686 = vmatpush.bf16.msra.mxu0 %v8612
    %11687 = vmatpush.bf16.msra.mxu0 %v8611
    %11688 = vmatpush.bf16.msra.mxu0 %v8610
    %11689 = vmatpush.bf16.msra.mxu0 %v8609
    %11690 = vmatpush.bf16.msra.mxu0 %v8608
    %11691 = vmatpush.bf16.msra.mxu0 %v8607
    %11692 = vmatpush.bf16.msra.mxu0 %v8606
    %11693 = vmatmul.bf16.gmra.mxu0 %v2583
    %v11694 = vpop.f32.mrf.mxu0
    %v11695 = vadd.f32 %v11682, %v11694
    %v11696 = vpop.f32.mrf.mxu0
    %11697 = vdwg.mxu0
    %11698 = vmatpush.bf16.msra.mxu0 %v8621
    %11699 = vmatpush.bf16.msra.mxu0 %v8620
    %11700 = vmatpush.bf16.msra.mxu0 %v8619
    %11701 = vmatpush.bf16.msra.mxu0 %v8618
    %11702 = vmatpush.bf16.msra.mxu0 %v8617
    %11703 = vmatpush.bf16.msra.mxu0 %v8616
    %11704 = vmatpush.bf16.msra.mxu0 %v8615
    %11705 = vmatpush.bf16.msra.mxu0 %v8614
    %11706 = vmatmul.bf16.gmra.mxu0 %v2584
    %v11707 = vpop.f32.mrf.mxu0
    %v11708 = vadd.f32 %v11695, %v11707
    %v11709 = vpop.f32.mrf.mxu0
    %11710 = vdwg.mxu0
    %11711 = vmatpush.bf16.msra.mxu0 %v8629
    %11712 = vmatpush.bf16.msra.mxu0 %v8628
    %11713 = vmatpush.bf16.msra.mxu0 %v8627
    %11714 = vmatpush.bf16.msra.mxu0 %v8626
    %11715 = vmatpush.bf16.msra.mxu0 %v8625
    %11716 = vmatpush.bf16.msra.mxu0 %v8624
    %11717 = vmatpush.bf16.msra.mxu0 %v8623
    %11718 = vmatpush.bf16.msra.mxu0 %v8622
    %11719 = vmatmul.bf16.gmra.mxu0 %v2587
    %v11720 = vpop.f32.mrf.mxu0
    %v11721 = vadd.f32 %v11708, %v11720
    %v11722 = vpop.f32.mrf.mxu0
    %11723 = vdwg.mxu0
    %11724 = vmatpush.bf16.msra.mxu0 %v8637
    %11725 = vmatpush.bf16.msra.mxu0 %v8636
    %11726 = vmatpush.bf16.msra.mxu0 %v8635
    %11727 = vmatpush.bf16.msra.mxu0 %v8634
    %11728 = vmatpush.bf16.msra.mxu0 %v8633
    %11729 = vmatpush.bf16.msra.mxu0 %v8632
    %11730 = vmatpush.bf16.msra.mxu0 %v8631
    %11731 = vmatpush.bf16.msra.mxu0 %v8630
    %11732 = vmatmul.bf16.gmra.mxu0 %v2588
    %v11733 = vpop.f32.mrf.mxu0
    %v11734 = vadd.f32 %v11721, %v11733
    %v11735 = vpop.f32.mrf.mxu0
    %11736 = vdwg.mxu0
    %11737 = vmatpush.bf16.msra.mxu0 %v8645
    %11738 = vmatpush.bf16.msra.mxu0 %v8644
    %11739 = vmatpush.bf16.msra.mxu0 %v8643
    %11740 = vmatpush.bf16.msra.mxu0 %v8642
    %11741 = vmatpush.bf16.msra.mxu0 %v8641
    %11742 = vmatpush.bf16.msra.mxu0 %v8640
    %11743 = vmatpush.bf16.msra.mxu0 %v8639
    %11744 = vmatpush.bf16.msra.mxu0 %v8638
    %11745 = vmatmul.bf16.gmra.mxu0 %v2589
    %v11746 = vpop.f32.mrf.mxu0
    %v11747 = vadd.f32 %v11734, %v11746
    %v11748 = vpop.f32.mrf.mxu0
    %11749 = vdwg.mxu0
    %11750 = vmatpush.bf16.msra.mxu0 0
    %11751 = vmatpush.bf16.msra.mxu0 %v8652
    %11752 = vmatpush.bf16.msra.mxu0 %v8651
    %11753 = vmatpush.bf16.msra.mxu0 %v8650
    %11754 = vmatpush.bf16.msra.mxu0 %v8649
    %11755 = vmatpush.bf16.msra.mxu0 %v8648
    %11756 = vmatpush.bf16.msra.mxu0 %v8647
    %11757 = vmatpush.bf16.msra.mxu0 %v8646
    %11758 = vmatmul.bf16.gmra.mxu0 %v9837
    %v11759 = vpop.f32.mrf.mxu0
    %v11760 = vadd.f32 %v11747, %v11759
    %v11761 = vpop.f32.mrf.mxu0
    %11762 = vdwg.mxu0
    %vm11763 = vcmask 74752
    %11764 = vst.msk [vmem:[#allocation2] sm:$0x3] %vm11763, %v11760
    // Predicated region
    $region14: #{model_forward.3} parent=1 // pred_check
      _
    $region15: #{model_forward.3} parent=1 // pred_check_branch
      %11766 = sbr.rel (0) target = $region17
    $region16: #{model_forward.3} parent=1 // pred_region
      %11768 = vsyncadd [#allocation3], 0
      %s11770 = sshll.u32 [#allocation2], 4
      %s11771 = int_to_ptr.vmem [resolvable:$true] %s11770
      %s11772 = sshll.u32 %s3, 4
      %s11773 = int_to_ptr.hbm [resolvable:$true] %s11772
      %11775 = dma.vmem_to_hbm [thread:$0]  %s11771, 32, %s11773, [#allocation3]
    $region17: #{model_forward.3} parent=1 // pred_fallthru
      _
    // Predicated region
    $region18: #{model_forward.3} parent=1 // pred_check
      _
    $region19: #{model_forward.3} parent=1 // pred_check_branch
      %11777 = sbr.rel (0) target = $region21
    $region20: #{model_forward.3} parent=1 // pred_region
      %11779 = dma.done [#allocation3], 32
    $region21: #{model_forward.3} parent=1 // pred_fallthru
      _
    %11780 = vsyncpa [#allocation3], 1

</llo_original>
